<compile_context>
chip_gen: v6e
topology: v6e:2x2x1
jax: 0.10.0
libtpu: 0.0.40
codegen_flags: <defaults>
</compile_context>

<pallas_src>
import functools
import math

import jax
import jax.numpy as jnp
from jax.experimental import pallas as pl
from jax.experimental.pallas import tpu as pltpu

FEAT_DIM = 1000        # ResNet fc output width (PyTorch)
FEAT_PAD = 1024        # zero-padded, 128-aligned width used inside the kernel


# ---------------------------------------------------------------------------
# One fused kernel for the whole forward pass.  Everything resides in VMEM.
# ---------------------------------------------------------------------------
def _pathnet_fused_kernel(
    # ---------------- inputs ----------------
    cols0_ref,                    # (B*H*W, 9*Cin)  stem im2col patches (f32)
    pool_ref,                     # (B, B*H*W)      global-average-pool matrix (f32)
    w_stem_ref, b_stem_ref,       # (9*Cin, C), (1, C)
    w_b1_ref, b_b1_ref,           # (9*C, C),   (1, C)
    w_b2_ref, b_b2_ref,           # (9*C, C),   (1, C)
    w_fc_ref, b_fc_ref,           # (C, 1024),  (1, 1024)   (1000 zero-padded -> 1024)
    w1_ref, b1_ref,               # (1024, 1024) bf16, (1, 1024) f32   [c1 | c2] layer-1
    w2a_ref, b2a_ref,             # (512, 256)  bf16, (1, 256)          c1 layer-2
    w2b_ref, b2b_ref,             # (512, 256)  bf16, (1, 256)          c2 layer-2
    w3a_ref, b3a_ref,             # (256, Pd)   bf16, (1, Pd)           c1 layer-3
    w3b_ref, b3b_ref,             # (256, Pd)   bf16, (1, Pd)           c2 layer-3
    l1w_ref, l1b_ref,             # (Pd, n1), (1, n1)
    l2w_ref, l2b_ref,             # (Pd, n2), (1, n2)
    # ---------------- outputs ----------------
    feat_ref,                     # (B, 1024)
    f1_ref, f2_ref,               # (B, Pd) x 2
    hz1_ref, hz2_ref,             # (B, n1), (B, n2)
    # ---------------- scratch ----------------
    pad_ref,                      # (B, H+2, W+2, C) f32  zero-bordered conv buffer
    *, B, H, W, C, act_is_sigmoid, output_range, output_shift):

  f32 = jnp.float32
  bf16 = jnp.bfloat16
  relu = lambda v: jnp.maximum(v, 0.0)

  # ----- features stand-in: stem conv (im2col built in the wrapper) -----
  h0 = relu(jnp.dot(cols0_ref[...], w_stem_ref[...],
                    preferred_element_type=f32) + b_stem_ref[...])   # (B*H*W, C)

  # Zero the padded scratch once; the border stays zero, the interior is
  # overwritten per conv.
  pad_ref[...] = jnp.zeros_like(pad_ref)

  def conv3x3(h_flat, w_ref, b_ref):
    # write interior into the zero-bordered VMEM scratch
    pad_ref[:, 1:H + 1, 1:W + 1, :] = h_flat.reshape(B, H, W, C)
    # im2col: 9 shifted windows concatenated along channels -> one MXU matmul
    cols = jnp.concatenate(
        [pad_ref[:, ky:ky + H, kx:kx + W, :]
         for ky in range(3) for kx in range(3)], axis=-1)            # (B,H,W,9C)
    cols = cols.reshape(B * H * W, 9 * C)
    return jnp.dot(cols, w_ref[...], preferred_element_type=f32) + b_ref[...]

  r = relu(conv3x3(h0, w_b1_ref, b_b1_ref))                          # (B*H*W, C)
  h2 = relu(conv3x3(r, w_b2_ref, b_b2_ref) + h0)                     # residual BasicBlock

  # ----- global average pool as a matmul: (B, B*H*W) @ (B*H*W, C) -----
  pooled = jnp.dot(pool_ref[...], h2, preferred_element_type=f32)    # (B, C)

  # ----- fc -> feat (padded 1000 -> 1024; pad columns are exactly zero) -----
  feat = jnp.dot(pooled, w_fc_ref[...],
                 preferred_element_type=f32) + b_fc_ref[...]         # (B, 1024)
  feat_ref[...] = feat

  # ----- classifier_1 / classifier_2 (bf16 weights, f32 accumulate/epilogue).
  #       Dropout layers are identity at inference. Layer 1 of both classifiers
  #       is fused into one (B,1024)@(1024,1024) matmul. -----
  t = jnp.dot(feat.astype(bf16), w1_ref[...],
              preferred_element_type=f32) + b1_ref[...]
  t = relu(t)                                                        # (B, 1024)
  a1 = t[:, :512]                                                    # c1 layer-1 out
  a2 = t[:, 512:]                                                    # c2 layer-1 out

  u1 = relu(jnp.dot(a1.astype(bf16), w2a_ref[...],
                    preferred_element_type=f32) + b2a_ref[...])      # (B, 256)
  u2 = relu(jnp.dot(a2.astype(bf16), w2b_ref[...],
                    preferred_element_type=f32) + b2b_ref[...])

  f1 = relu(jnp.dot(u1.astype(bf16), w3a_ref[...],
                    preferred_element_type=f32) + b3a_ref[...])      # (B, Pd)
  f2 = relu(jnp.dot(u2.astype(bf16), w3b_ref[...],
                    preferred_element_type=f32) + b3b_ref[...])
  f1_ref[...] = f1
  f2_ref[...] = f2

  # ----- hazard heads -----
  z1 = jnp.dot(f1, l1w_ref[...], preferred_element_type=f32) + l1b_ref[...]
  z2 = jnp.dot(f2, l2w_ref[...], preferred_element_type=f32) + l2b_ref[...]
  if act_is_sigmoid:                      # act_1 = act_2 = nn.Sigmoid()
    z1 = jax.nn.sigmoid(z1) * output_range + output_shift
    z2 = jax.nn.sigmoid(z2)
  hz1_ref[...] = z1
  hz2_ref[...] = z2


# ---------------------------------------------------------------------------
# Wrapper: layout plumbing (NCHW->NHWC, stem im2col, GAP matrix) + pallas_call.
# ---------------------------------------------------------------------------
def pathnet_resnet_forward(x_path_nchw, packed, *, act_is_sigmoid=True,
                           output_range=6.0, output_shift=-3.0):
  B, Cin, H, W = x_path_nchw.shape
  C = packed["w_stem"].shape[-1]
  path_dim = packed["w3_1"].shape[-1]
  n1 = packed["l1_w"].shape[-1]
  n2 = packed["l2_w"].shape[-1]

  # Layout plumbing in the wrapper (cheap one-shot XLA ops on the raw input).
  x = jnp.transpose(x_path_nchw, (0, 2, 3, 1)).astype(jnp.float32)   # NHWC
  xp = jnp.pad(x, ((0, 0), (1, 1), (1, 1), (0, 0)))
  cols0 = jnp.concatenate(
      [xp[:, ky:ky + H, kx:kx + W, :] for ky in range(3) for kx in range(3)],
      axis=-1).reshape(B * H * W, 9 * Cin)                           # (BHW, 9*Cin)
  pool = jnp.repeat(jnp.eye(B, dtype=jnp.float32), H * W, axis=1) / float(H * W)

  kernel = functools.partial(
      _pathnet_fused_kernel, B=B, H=H, W=W, C=C,
      act_is_sigmoid=bool(act_is_sigmoid),
      output_range=float(output_range), output_shift=float(output_shift))

  vmem = pl.BlockSpec(memory_space=pltpu.MemorySpace.VMEM)
  inputs = (
      cols0, pool,
      packed["w_stem"], packed["b_stem"],
      packed["w_b1"], packed["b_b1"],
      packed["w_b2"], packed["b_b2"],
      packed["w_fc"], packed["b_fc"],
      packed["w1"], packed["b1"],
      packed["w2_1"], packed["b2_1"],
      packed["w2_2"], packed["b2_2"],
      packed["w3_1"], packed["b3_1"],
      packed["w3_2"], packed["b3_2"],
      packed["l1_w"], packed["l1_b"],
      packed["l2_w"], packed["l2_b"],
  )

  feat_pad, f1, f2, hz1, hz2 = pl.pallas_call(
      kernel,
      out_shape=(
          jax.ShapeDtypeStruct((B, FEAT_PAD), jnp.float32),
          jax.ShapeDtypeStruct((B, path_dim), jnp.float32),
          jax.ShapeDtypeStruct((B, path_dim), jnp.float32),
          jax.ShapeDtypeStruct((B, n1), jnp.float32),
          jax.ShapeDtypeStruct((B, n2), jnp.float32),
      ),
      in_specs=[vmem] * len(inputs),
      out_specs=(vmem, vmem, vmem, vmem, vmem),
      scratch_shapes=[pltpu.VMEM((B, H + 2, W + 2, C), jnp.float32)],
  )(*inputs)

  feat = feat_pad[:, :FEAT_DIM]            # back to (B, 1000)
  return feat, f1, f2, hz1, hz2


# ---------------------------------------------------------------------------
# Deterministic parameter init (PyTorch-Linear-style uniform bounds).
# ---------------------------------------------------------------------------
def _uniform(key, shape, lim):
  return jax.random.uniform(key, shape, jnp.float32, -lim, lim)


def _dense_params(key, fan_in, fan_out):
  kw, kb = jax.random.split(key)
  lim = 1.0 / math.sqrt(fan_in)
  return _uniform(kw, (fan_in, fan_out), lim), _uniform(kb, (1, fan_out), lim)


def _conv_params(key, cin, cout):
  kw, kb = jax.random.split(key)
  lim = 1.0 / math.sqrt(9 * cin)
  return _uniform(kw, (3, 3, cin, cout), lim), _uniform(kb, (1, cout), lim)


def init_params(key, in_ch=4, width=16, path_dim=32,
                num_classes_1=1, num_classes_2=2):
  ks = jax.random.split(key, 12)
  p = {}
  # TODO(synk): `features` in the PyTorch module is a frozen pretrained
  # resnet152; here it is a deterministic tiny frozen ResNet stand-in
  # (stem conv + 1 BasicBlock + GAP + fc->1000), not the real backbone.
  p["stem_w"], p["stem_b"] = _conv_params(ks[0], in_ch, width)
  p["blk_w1"], p["blk_b1"] = _conv_params(ks[1], width, width)
  p["blk_w2"], p["blk_b2"] = _conv_params(ks[2], width, width)
  p["fc_w"], p["fc_b"] = _dense_params(ks[3], width, FEAT_DIM)
  for name, k0 in (("c1", 4), ("c2", 7)):
    w1, b1 = _dense_params(ks[k0], FEAT_DIM, 512)
    w2, b2 = _dense_params(ks[k0 + 1], 512, 256)
    w3, b3 = _dense_params(ks[k0 + 2], 256, path_dim)
    p[name] = {"w1": w1, "b1": b1, "w2": w2, "b2": b2, "w3": w3, "b3": b3}
  p["l1_w"], p["l1_b"] = _dense_params(ks[10], path_dim, num_classes_1)
  p["l2_w"], p["l2_b"] = _dense_params(ks[11], path_dim, num_classes_2)
  p["output_range"] = 6.0    # Parameter([6]),  requires_grad=False  (static)
  p["output_shift"] = -3.0   # Parameter([-3]), requires_grad=False  (static)
  return p


def prepare_params(p):
  """Pack / pad / cast parameters once, outside the jitted forward."""
  bf16 = jnp.bfloat16
  pad_n = FEAT_PAD - FEAT_DIM

  def flat(w):   # (3, 3, Cin, Cout) -> (9*Cin, Cout), im2col tap order (ky, kx)
    return w.reshape(-1, w.shape[-1])

  packed = {
      "w_stem": flat(p["stem_w"]), "b_stem": p["stem_b"],
      "w_b1": flat(p["blk_w1"]), "b_b1": p["blk_b1"],
      "w_b2": flat(p["blk_w2"]), "b_b2": p["blk_b2"],
      # fc 1000 -> 1024 with zero columns (numerically identical)
      "w_fc": jnp.pad(p["fc_w"], ((0, 0), (0, pad_n))),
      "b_fc": jnp.pad(p["fc_b"], ((0, 0), (0, pad_n))),
      # classifier layer-1: zero-pad K 1000->1024, concat c1|c2 along N, bf16
      "w1": jnp.concatenate(
          [jnp.pad(p["c1"]["w1"], ((0, pad_n), (0, 0))),
           jnp.pad(p["c2"]["w1"], ((0, pad_n), (0, 0)))], axis=1).astype(bf16),
      "b1": jnp.concatenate([p["c1"]["b1"], p["c2"]["b1"]], axis=1),
      "w2_1": p["c1"]["w2"].astype(bf16), "b2_1": p["c1"]["b2"],
      "w2_2": p["c2"]["w2"].astype(bf16), "b2_2": p["c2"]["b2"],
      "w3_1": p["c1"]["w3"].astype(bf16), "b3_1": p["c1"]["b3"],
      "w3_2": p["c2"]["w3"].astype(bf16), "b3_2": p["c2"]["b3"],
      "l1_w": p["l1_w"], "l1_b": p["l1_b"],
      "l2_w": p["l2_w"], "l2_b": p["l2_b"],
  }
  return packed


if __name__ == "__main__":
  key = jax.random.PRNGKey(0)
  kx, kp = jax.random.split(key)

  B, C, H, W = 2, 4, 16, 16
  x_path = jax.random.normal(kx, (B, C, H, W), jnp.float32)   # NCHW, like PyTorch
  params = init_params(kp, in_ch=C, width=16, path_dim=32,
                       num_classes_1=1, num_classes_2=2)
  packed = prepare_params(params)

  fwd = jax.jit(functools.partial(
      pathnet_resnet_forward, act_is_sigmoid=True,
      output_range=params["output_range"],       # static Python floats
      output_shift=params["output_shift"]))

  outs = jax.block_until_ready(fwd(x_path, packed))

  x_feat, f1, f2, h1, h2 = outs
  assert x_feat.shape == (B, 1000)
  assert f1.shape == (B, 32) and f2.shape == (B, 32)
  assert h1.shape == (B, 1) and h2.shape == (B, 2)
  assert jnp.all(jnp.isfinite(x_feat)) and jnp.all(jnp.isfinite(f1))
  assert jnp.all(jnp.isfinite(h1)) and jnp.all(jnp.isfinite(h2))
  # hazard_1 = sigmoid(.)*6 - 3 -> (-3, 3);  hazard_2 = sigmoid(.) -> (0, 1)
  assert jnp.all(h1 > -3.0) and jnp.all(h1 < 3.0)
  assert jnp.all(h2 > 0.0) and jnp.all(h2 < 1.0)

  print("KERNEL_OK")
</pallas_src>

<mosaic_0001>
module attributes {stable_mosaic.version = 11 : i64} {
  func.func @_pathnet_fused_kernel(%arg0: memref<512x36xf32, #tpu.memory_space<vmem>>, %arg1: memref<2x512xf32, #tpu.memory_space<vmem>>, %arg2: memref<36x16xf32, #tpu.memory_space<vmem>>, %arg3: memref<1x16xf32, #tpu.memory_space<vmem>>, %arg4: memref<144x16xf32, #tpu.memory_space<vmem>>, %arg5: memref<1x16xf32, #tpu.memory_space<vmem>>, %arg6: memref<144x16xf32, #tpu.memory_space<vmem>>, %arg7: memref<1x16xf32, #tpu.memory_space<vmem>>, %arg8: memref<16x1024xf32, #tpu.memory_space<vmem>>, %arg9: memref<1x1024xf32, #tpu.memory_space<vmem>>, %arg10: memref<1024x1024xbf16, #tpu.memory_space<vmem>>, %arg11: memref<1x1024xf32, #tpu.memory_space<vmem>>, %arg12: memref<512x256xbf16, #tpu.memory_space<vmem>>, %arg13: memref<1x256xf32, #tpu.memory_space<vmem>>, %arg14: memref<512x256xbf16, #tpu.memory_space<vmem>>, %arg15: memref<1x256xf32, #tpu.memory_space<vmem>>, %arg16: memref<256x32xbf16, #tpu.memory_space<vmem>>, %arg17: memref<1x32xf32, #tpu.memory_space<vmem>>, %arg18: memref<256x32xbf16, #tpu.memory_space<vmem>>, %arg19: memref<1x32xf32, #tpu.memory_space<vmem>>, %arg20: memref<32x1xf32, #tpu.memory_space<vmem>>, %arg21: memref<1x1xf32, #tpu.memory_space<vmem>>, %arg22: memref<32x2xf32, #tpu.memory_space<vmem>>, %arg23: memref<1x2xf32, #tpu.memory_space<vmem>>, %arg24: memref<2x1024xf32, #tpu.memory_space<vmem>>, %arg25: memref<2x32xf32, #tpu.memory_space<vmem>>, %arg26: memref<2x32xf32, #tpu.memory_space<vmem>>, %arg27: memref<2x1xf32, #tpu.memory_space<vmem>>, %arg28: memref<2x2xf32, #tpu.memory_space<vmem>>, %arg29: memref<2x18x18x16xf32, #tpu.memory_space<vmem>>) attributes {dimension_semantics = [], scalar_prefetch = 0 : i64, scratch_operands = 1 : i64, tpu.core_type = #tpu.core_type<tc>} {
    %c0 = arith.constant 0 : index
    %c0_0 = arith.constant 0 : index
    %0 = vector.load %arg0[%c0, %c0_0] : memref<512x36xf32, #tpu.memory_space<vmem>>, vector<512x36xf32>
    %c0_1 = arith.constant 0 : index
    %c0_2 = arith.constant 0 : index
    %1 = vector.load %arg2[%c0_1, %c0_2] : memref<36x16xf32, #tpu.memory_space<vmem>>, vector<36x16xf32>
    %cst = arith.constant dense<0.000000e+00> : vector<512x16xf32>
    %2 = tpu.matmul %0, %1, %cst {dimension_numbers = #tpu.dot_dimension_numbers<[1], [0], [0], [1], [0, 0, 1, 1], [], []>} : vector<512x36xf32>, vector<36x16xf32>, vector<512x16xf32> -> vector<512x16xf32>
    %c0_3 = arith.constant 0 : index
    %c0_4 = arith.constant 0 : index
    %3 = vector.load %arg3[%c0_3, %c0_4] : memref<1x16xf32, #tpu.memory_space<vmem>>, vector<1x16xf32>
    %4 = vector.broadcast %3 : vector<1x16xf32> to vector<512x16xf32>
    %5 = arith.addf %2, %4 : vector<512x16xf32>
    %cst_5 = arith.constant 0.000000e+00 : f32
    %6 = vector.broadcast %cst_5 : f32 to vector<512x16xf32>
    %7 = arith.maximumf %5, %6 : vector<512x16xf32>
    %cst_6 = arith.constant 0.000000e+00 : f32
    %8 = vector.broadcast %cst_6 : f32 to vector<2x18x18x16xf32>
    %c0_7 = arith.constant 0 : index
    %c0_8 = arith.constant 0 : index
    %c0_9 = arith.constant 0 : index
    %c0_10 = arith.constant 0 : index
    %9 = vector.load %arg29[%c0_7, %c0_8, %c0_9, %c0_10] : memref<2x18x18x16xf32, #tpu.memory_space<vmem>>, vector<2x18x18x16xf32>
    tpu.vector_store %arg29[%c0_7, %c0_8, %c0_9, %c0_10], %8 {strides = array<i32>} : memref<2x18x18x16xf32, #tpu.memory_space<vmem>>, vector<2x18x18x16xf32>,
    %10 = vector.shape_cast %7 : vector<512x16xf32> to vector<2x16x16x16xf32>
    %c0_11 = arith.constant 0 : index
    %c1 = arith.constant 1 : index
    %c1_12 = arith.constant 1 : index
    %c0_13 = arith.constant 0 : index
    %11 = vector.load %arg29[%c0_11, %c1, %c1_12, %c0_13] : memref<2x18x18x16xf32, #tpu.memory_space<vmem>>, vector<2x16x16x16xf32>
    tpu.vector_store %arg29[%c0_11, %c1, %c1_12, %c0_13], %10 {strides = array<i32>} : memref<2x18x18x16xf32, #tpu.memory_space<vmem>>, vector<2x16x16x16xf32>,
    %c0_14 = arith.constant 0 : index
    %c0_15 = arith.constant 0 : index
    %c0_16 = arith.constant 0 : index
    %c0_17 = arith.constant 0 : index
    %12 = vector.load %arg29[%c0_14, %c0_15, %c0_16, %c0_17] : memref<2x18x18x16xf32, #tpu.memory_space<vmem>>, vector<2x16x16x16xf32>
    %c0_18 = arith.constant 0 : index
    %c0_19 = arith.constant 0 : index
    %c1_20 = arith.constant 1 : index
    %c0_21 = arith.constant 0 : index
    %13 = vector.load %arg29[%c0_18, %c0_19, %c1_20, %c0_21] : memref<2x18x18x16xf32, #tpu.memory_space<vmem>>, vector<2x16x16x16xf32>
    %c0_22 = arith.constant 0 : index
    %c0_23 = arith.constant 0 : index
    %c2 = arith.constant 2 : index
    %c0_24 = arith.constant 0 : index
    %14 = vector.load %arg29[%c0_22, %c0_23, %c2, %c0_24] : memref<2x18x18x16xf32, #tpu.memory_space<vmem>>, vector<2x16x16x16xf32>
    %c0_25 = arith.constant 0 : index
    %c1_26 = arith.constant 1 : index
    %c0_27 = arith.constant 0 : index
    %c0_28 = arith.constant 0 : index
    %15 = vector.load %arg29[%c0_25, %c1_26, %c0_27, %c0_28] : memref<2x18x18x16xf32, #tpu.memory_space<vmem>>, vector<2x16x16x16xf32>
    %c0_29 = arith.constant 0 : index
    %c1_30 = arith.constant 1 : index
    %c1_31 = arith.constant 1 : index
    %c0_32 = arith.constant 0 : index
    %16 = vector.load %arg29[%c0_29, %c1_30, %c1_31, %c0_32] : memref<2x18x18x16xf32, #tpu.memory_space<vmem>>, vector<2x16x16x16xf32>
    %c0_33 = arith.constant 0 : index
    %c1_34 = arith.constant 1 : index
    %c2_35 = arith.constant 2 : index
    %c0_36 = arith.constant 0 : index
    %17 = vector.load %arg29[%c0_33, %c1_34, %c2_35, %c0_36] : memref<2x18x18x16xf32, #tpu.memory_space<vmem>>, vector<2x16x16x16xf32>
    %c0_37 = arith.constant 0 : index
    %c2_38 = arith.constant 2 : index
    %c0_39 = arith.constant 0 : index
    %c0_40 = arith.constant 0 : index
    %18 = vector.load %arg29[%c0_37, %c2_38, %c0_39, %c0_40] : memref<2x18x18x16xf32, #tpu.memory_space<vmem>>, vector<2x16x16x16xf32>
    %c0_41 = arith.constant 0 : index
    %c2_42 = arith.constant 2 : index
    %c1_43 = arith.constant 1 : index
    %c0_44 = arith.constant 0 : index
    %19 = vector.load %arg29[%c0_41, %c2_42, %c1_43, %c0_44] : memref<2x18x18x16xf32, #tpu.memory_space<vmem>>, vector<2x16x16x16xf32>
    %c0_45 = arith.constant 0 : index
    %c2_46 = arith.constant 2 : index
    %c2_47 = arith.constant 2 : index
    %c0_48 = arith.constant 0 : index
    %20 = vector.load %arg29[%c0_45, %c2_46, %c2_47, %c0_48] : memref<2x18x18x16xf32, #tpu.memory_space<vmem>>, vector<2x16x16x16xf32>
    %21 = tpu.concatenate %12, %13, %14, %15, %16, %17, %18, %19, %20 in 3 : vector<2x16x16x16xf32>, vector<2x16x16x16xf32>, vector<2x16x16x16xf32>, vector<2x16x16x16xf32>, vector<2x16x16x16xf32>, vector<2x16x16x16xf32>, vector<2x16x16x16xf32>, vector<2x16x16x16xf32>, vector<2x16x16x16xf32> -> vector<2x16x16x144xf32>
    %22 = vector.shape_cast %21 : vector<2x16x16x144xf32> to vector<512x144xf32>
    %c0_49 = arith.constant 0 : index
    %c0_50 = arith.constant 0 : index
    %23 = vector.load %arg4[%c0_49, %c0_50] : memref<144x16xf32, #tpu.memory_space<vmem>>, vector<144x16xf32>
    %cst_51 = arith.constant dense<0.000000e+00> : vector<512x16xf32>
    %24 = tpu.matmul %22, %23, %cst_51 {dimension_numbers = #tpu.dot_dimension_numbers<[1], [0], [0], [1], [0, 0, 1, 1], [], []>} : vector<512x144xf32>, vector<144x16xf32>, vector<512x16xf32> -> vector<512x16xf32>
    %c0_52 = arith.constant 0 : index
    %c0_53 = arith.constant 0 : index
    %25 = vector.load %arg5[%c0_52, %c0_53] : memref<1x16xf32, #tpu.memory_space<vmem>>, vector<1x16xf32>
    %26 = vector.broadcast %25 : vector<1x16xf32> to vector<512x16xf32>
    %27 = arith.addf %24, %26 : vector<512x16xf32>
    %cst_54 = arith.constant 0.000000e+00 : f32
    %28 = vector.broadcast %cst_54 : f32 to vector<512x16xf32>
    %29 = arith.maximumf %27, %28 : vector<512x16xf32>
    %30 = vector.shape_cast %29 : vector<512x16xf32> to vector<2x16x16x16xf32>
    %c0_55 = arith.constant 0 : index
    %c1_56 = arith.constant 1 : index
    %c1_57 = arith.constant 1 : index
    %c0_58 = arith.constant 0 : index
    %31 = vector.load %arg29[%c0_55, %c1_56, %c1_57, %c0_58] : memref<2x18x18x16xf32, #tpu.memory_space<vmem>>, vector<2x16x16x16xf32>
    tpu.vector_store %arg29[%c0_55, %c1_56, %c1_57, %c0_58], %30 {strides = array<i32>} : memref<2x18x18x16xf32, #tpu.memory_space<vmem>>, vector<2x16x16x16xf32>,
    %c0_59 = arith.constant 0 : index
    %c0_60 = arith.constant 0 : index
    %c0_61 = arith.constant 0 : index
    %c0_62 = arith.constant 0 : index
    %32 = vector.load %arg29[%c0_59, %c0_60, %c0_61, %c0_62] : memref<2x18x18x16xf32, #tpu.memory_space<vmem>>, vector<2x16x16x16xf32>
    %c0_63 = arith.constant 0 : index
    %c0_64 = arith.constant 0 : index
    %c1_65 = arith.constant 1 : index
    %c0_66 = arith.constant 0 : index
    %33 = vector.load %arg29[%c0_63, %c0_64, %c1_65, %c0_66] : memref<2x18x18x16xf32, #tpu.memory_space<vmem>>, vector<2x16x16x16xf32>
    %c0_67 = arith.constant 0 : index
    %c0_68 = arith.constant 0 : index
    %c2_69 = arith.constant 2 : index
    %c0_70 = arith.constant 0 : index
    %34 = vector.load %arg29[%c0_67, %c0_68, %c2_69, %c0_70] : memref<2x18x18x16xf32, #tpu.memory_space<vmem>>, vector<2x16x16x16xf32>
    %c0_71 = arith.constant 0 : index
    %c1_72 = arith.constant 1 : index
    %c0_73 = arith.constant 0 : index
    %c0_74 = arith.constant 0 : index
    %35 = vector.load %arg29[%c0_71, %c1_72, %c0_73, %c0_74] : memref<2x18x18x16xf32, #tpu.memory_space<vmem>>, vector<2x16x16x16xf32>
    %c0_75 = arith.constant 0 : index
    %c1_76 = arith.constant 1 : index
    %c1_77 = arith.constant 1 : index
    %c0_78 = arith.constant 0 : index
    %36 = vector.load %arg29[%c0_75, %c1_76, %c1_77, %c0_78] : memref<2x18x18x16xf32, #tpu.memory_space<vmem>>, vector<2x16x16x16xf32>
    %c0_79 = arith.constant 0 : index
    %c1_80 = arith.constant 1 : index
    %c2_81 = arith.constant 2 : index
    %c0_82 = arith.constant 0 : index
    %37 = vector.load %arg29[%c0_79, %c1_80, %c2_81, %c0_82] : memref<2x18x18x16xf32, #tpu.memory_space<vmem>>, vector<2x16x16x16xf32>
    %c0_83 = arith.constant 0 : index
    %c2_84 = arith.constant 2 : index
    %c0_85 = arith.constant 0 : index
    %c0_86 = arith.constant 0 : index
    %38 = vector.load %arg29[%c0_83, %c2_84, %c0_85, %c0_86] : memref<2x18x18x16xf32, #tpu.memory_space<vmem>>, vector<2x16x16x16xf32>
    %c0_87 = arith.constant 0 : index
    %c2_88 = arith.constant 2 : index
    %c1_89 = arith.constant 1 : index
    %c0_90 = arith.constant 0 : index
    %39 = vector.load %arg29[%c0_87, %c2_88, %c1_89, %c0_90] : memref<2x18x18x16xf32, #tpu.memory_space<vmem>>, vector<2x16x16x16xf32>
    %c0_91 = arith.constant 0 : index
    %c2_92 = arith.constant 2 : index
    %c2_93 = arith.constant 2 : index
    %c0_94 = arith.constant 0 : index
    %40 = vector.load %arg29[%c0_91, %c2_92, %c2_93, %c0_94] : memref<2x18x18x16xf32, #tpu.memory_space<vmem>>, vector<2x16x16x16xf32>
    %41 = tpu.concatenate %32, %33, %34, %35, %36, %37, %38, %39, %40 in 3 : vector<2x16x16x16xf32>, vector<2x16x16x16xf32>, vector<2x16x16x16xf32>, vector<2x16x16x16xf32>, vector<2x16x16x16xf32>, vector<2x16x16x16xf32>, vector<2x16x16x16xf32>, vector<2x16x16x16xf32>, vector<2x16x16x16xf32> -> vector<2x16x16x144xf32>
    %42 = vector.shape_cast %41 : vector<2x16x16x144xf32> to vector<512x144xf32>
    %c0_95 = arith.constant 0 : index
    %c0_96 = arith.constant 0 : index
    %43 = vector.load %arg6[%c0_95, %c0_96] : memref<144x16xf32, #tpu.memory_space<vmem>>, vector<144x16xf32>
    %cst_97 = arith.constant dense<0.000000e+00> : vector<512x16xf32>
    %44 = tpu.matmul %42, %43, %cst_97 {dimension_numbers = #tpu.dot_dimension_numbers<[1], [0], [0], [1], [0, 0, 1, 1], [], []>} : vector<512x144xf32>, vector<144x16xf32>, vector<512x16xf32> -> vector<512x16xf32>
    %c0_98 = arith.constant 0 : index
    %c0_99 = arith.constant 0 : index
    %45 = vector.load %arg7[%c0_98, %c0_99] : memref<1x16xf32, #tpu.memory_space<vmem>>, vector<1x16xf32>
    %46 = vector.broadcast %45 : vector<1x16xf32> to vector<512x16xf32>
    %47 = arith.addf %44, %46 : vector<512x16xf32>
    %48 = arith.addf %47, %7 : vector<512x16xf32>
    %cst_100 = arith.constant 0.000000e+00 : f32
    %49 = vector.broadcast %cst_100 : f32 to vector<512x16xf32>
    %50 = arith.maximumf %48, %49 : vector<512x16xf32>
    %c0_101 = arith.constant 0 : index
    %c0_102 = arith.constant 0 : index
    %51 = vector.load %arg1[%c0_101, %c0_102] : memref<2x512xf32, #tpu.memory_space<vmem>>, vector<2x512xf32>
    %cst_103 = arith.constant dense<0.000000e+00> : vector<2x16xf32>
    %52 = tpu.matmul %51, %50, %cst_103 {dimension_numbers = #tpu.dot_dimension_numbers<[1], [0], [0], [1], [0, 0, 1, 1], [], []>} : vector<2x512xf32>, vector<512x16xf32>, vector<2x16xf32> -> vector<2x16xf32>
    %c0_104 = arith.constant 0 : index
    %c0_105 = arith.constant 0 : index
    %53 = vector.load %arg8[%c0_104, %c0_105] : memref<16x1024xf32, #tpu.memory_space<vmem>>, vector<16x1024xf32>
    %cst_106 = arith.constant dense<0.000000e+00> : vector<2x1024xf32>
    %54 = tpu.matmul %52, %53, %cst_106 {dimension_numbers = #tpu.dot_dimension_numbers<[1], [0], [0], [1], [0, 0, 1, 1], [], []>} : vector<2x16xf32>, vector<16x1024xf32>, vector<2x1024xf32> -> vector<2x1024xf32>
    %c0_107 = arith.constant 0 : index
    %c0_108 = arith.constant 0 : index
    %55 = vector.load %arg9[%c0_107, %c0_108] : memref<1x1024xf32, #tpu.memory_space<vmem>>, vector<1x1024xf32>
    %56 = vector.broadcast %55 : vector<1x1024xf32> to vector<2x1024xf32>
    %57 = arith.addf %54, %56 : vector<2x1024xf32>
    %c0_109 = arith.constant 0 : index
    %c0_110 = arith.constant 0 : index
    %58 = vector.load %arg24[%c0_109, %c0_110] : memref<2x1024xf32, #tpu.memory_space<vmem>>, vector<2x1024xf32>
    tpu.vector_store %arg24[%c0_109, %c0_110], %57 {strides = array<i32>} : memref<2x1024xf32, #tpu.memory_space<vmem>>, vector<2x1024xf32>,
    %59 = arith.truncf %57 : vector<2x1024xf32> to vector<2x1024xbf16>
    %c0_111 = arith.constant 0 : index
    %c0_112 = arith.constant 0 : index
    %60 = vector.load %arg10[%c0_111, %c0_112] : memref<1024x1024xbf16, #tpu.memory_space<vmem>>, vector<1024x1024xbf16>
    %cst_113 = arith.constant dense<0.000000e+00> : vector<2x1024xf32>
    %61 = tpu.matmul %59, %60, %cst_113 {dimension_numbers = #tpu.dot_dimension_numbers<[1], [0], [0], [1], [0, 0, 1, 1], [], []>} : vector<2x1024xbf16>, vector<1024x1024xbf16>, vector<2x1024xf32> -> vector<2x1024xf32>
    %c0_114 = arith.constant 0 : index
    %c0_115 = arith.constant 0 : index
    %62 = vector.load %arg11[%c0_114, %c0_115] : memref<1x1024xf32, #tpu.memory_space<vmem>>, vector<1x1024xf32>
    %63 = vector.broadcast %62 : vector<1x1024xf32> to vector<2x1024xf32>
    %64 = arith.addf %61, %63 : vector<2x1024xf32>
    %cst_116 = arith.constant 0.000000e+00 : f32
    %65 = vector.broadcast %cst_116 : f32 to vector<2x1024xf32>
    %66 = arith.maximumf %64, %65 : vector<2x1024xf32>
    %67 = vector.extract_strided_slice %66 {offsets = [0, 0], sizes = [2, 512], strides = [1, 1]} : vector<2x1024xf32> to vector<2x512xf32>
    %68 = vector.extract_strided_slice %66 {offsets = [0, 512], sizes = [2, 512], strides = [1, 1]} : vector<2x1024xf32> to vector<2x512xf32>
    %69 = arith.truncf %67 : vector<2x512xf32> to vector<2x512xbf16>
    %c0_117 = arith.constant 0 : index
    %c0_118 = arith.constant 0 : index
    %70 = vector.load %arg12[%c0_117, %c0_118] : memref<512x256xbf16, #tpu.memory_space<vmem>>, vector<512x256xbf16>
    %cst_119 = arith.constant dense<0.000000e+00> : vector<2x256xf32>
    %71 = tpu.matmul %69, %70, %cst_119 {dimension_numbers = #tpu.dot_dimension_numbers<[1], [0], [0], [1], [0, 0, 1, 1], [], []>} : vector<2x512xbf16>, vector<512x256xbf16>, vector<2x256xf32> -> vector<2x256xf32>
    %c0_120 = arith.constant 0 : index
    %c0_121 = arith.constant 0 : index
    %72 = vector.load %arg13[%c0_120, %c0_121] : memref<1x256xf32, #tpu.memory_space<vmem>>, vector<1x256xf32>
    %73 = vector.broadcast %72 : vector<1x256xf32> to vector<2x256xf32>
    %74 = arith.addf %71, %73 : vector<2x256xf32>
    %cst_122 = arith.constant 0.000000e+00 : f32
    %75 = vector.broadcast %cst_122 : f32 to vector<2x256xf32>
    %76 = arith.maximumf %74, %75 : vector<2x256xf32>
    %77 = arith.truncf %68 : vector<2x512xf32> to vector<2x512xbf16>
    %c0_123 = arith.constant 0 : index
    %c0_124 = arith.constant 0 : index
    %78 = vector.load %arg14[%c0_123, %c0_124] : memref<512x256xbf16, #tpu.memory_space<vmem>>, vector<512x256xbf16>
    %cst_125 = arith.constant dense<0.000000e+00> : vector<2x256xf32>
    %79 = tpu.matmul %77, %78, %cst_125 {dimension_numbers = #tpu.dot_dimension_numbers<[1], [0], [0], [1], [0, 0, 1, 1], [], []>} : vector<2x512xbf16>, vector<512x256xbf16>, vector<2x256xf32> -> vector<2x256xf32>
    %c0_126 = arith.constant 0 : index
    %c0_127 = arith.constant 0 : index
    %80 = vector.load %arg15[%c0_126, %c0_127] : memref<1x256xf32, #tpu.memory_space<vmem>>, vector<1x256xf32>
    %81 = vector.broadcast %80 : vector<1x256xf32> to vector<2x256xf32>
    %82 = arith.addf %79, %81 : vector<2x256xf32>
    %cst_128 = arith.constant 0.000000e+00 : f32
    %83 = vector.broadcast %cst_128 : f32 to vector<2x256xf32>
    %84 = arith.maximumf %82, %83 : vector<2x256xf32>
    %85 = arith.truncf %76 : vector<2x256xf32> to vector<2x256xbf16>
    %c0_129 = arith.constant 0 : index
    %c0_130 = arith.constant 0 : index
    %86 = vector.load %arg16[%c0_129, %c0_130] : memref<256x32xbf16, #tpu.memory_space<vmem>>, vector<256x32xbf16>
    %cst_131 = arith.constant dense<0.000000e+00> : vector<2x32xf32>
    %87 = tpu.matmul %85, %86, %cst_131 {dimension_numbers = #tpu.dot_dimension_numbers<[1], [0], [0], [1], [0, 0, 1, 1], [], []>} : vector<2x256xbf16>, vector<256x32xbf16>, vector<2x32xf32> -> vector<2x32xf32>
    %c0_132 = arith.constant 0 : index
    %c0_133 = arith.constant 0 : index
    %88 = vector.load %arg17[%c0_132, %c0_133] : memref<1x32xf32, #tpu.memory_space<vmem>>, vector<1x32xf32>
    %89 = vector.broadcast %88 : vector<1x32xf32> to vector<2x32xf32>
    %90 = arith.addf %87, %89 : vector<2x32xf32>
    %cst_134 = arith.constant 0.000000e+00 : f32
    %91 = vector.broadcast %cst_134 : f32 to vector<2x32xf32>
    %92 = arith.maximumf %90, %91 : vector<2x32xf32>
    %93 = arith.truncf %84 : vector<2x256xf32> to vector<2x256xbf16>
    %c0_135 = arith.constant 0 : index
    %c0_136 = arith.constant 0 : index
    %94 = vector.load %arg18[%c0_135, %c0_136] : memref<256x32xbf16, #tpu.memory_space<vmem>>, vector<256x32xbf16>
    %cst_137 = arith.constant dense<0.000000e+00> : vector<2x32xf32>
    %95 = tpu.matmul %93, %94, %cst_137 {dimension_numbers = #tpu.dot_dimension_numbers<[1], [0], [0], [1], [0, 0, 1, 1], [], []>} : vector<2x256xbf16>, vector<256x32xbf16>, vector<2x32xf32> -> vector<2x32xf32>
    %c0_138 = arith.constant 0 : index
    %c0_139 = arith.constant 0 : index
    %96 = vector.load %arg19[%c0_138, %c0_139] : memref<1x32xf32, #tpu.memory_space<vmem>>, vector<1x32xf32>
    %97 = vector.broadcast %96 : vector<1x32xf32> to vector<2x32xf32>
    %98 = arith.addf %95, %97 : vector<2x32xf32>
    %cst_140 = arith.constant 0.000000e+00 : f32
    %99 = vector.broadcast %cst_140 : f32 to vector<2x32xf32>
    %100 = arith.maximumf %98, %99 : vector<2x32xf32>
    %c0_141 = arith.constant 0 : index
    %c0_142 = arith.constant 0 : index
    %101 = vector.load %arg25[%c0_141, %c0_142] : memref<2x32xf32, #tpu.memory_space<vmem>>, vector<2x32xf32>
    tpu.vector_store %arg25[%c0_141, %c0_142], %92 {strides = array<i32>} : memref<2x32xf32, #tpu.memory_space<vmem>>, vector<2x32xf32>,
    %c0_143 = arith.constant 0 : index
    %c0_144 = arith.constant 0 : index
    %102 = vector.load %arg26[%c0_143, %c0_144] : memref<2x32xf32, #tpu.memory_space<vmem>>, vector<2x32xf32>
    tpu.vector_store %arg26[%c0_143, %c0_144], %100 {strides = array<i32>} : memref<2x32xf32, #tpu.memory_space<vmem>>, vector<2x32xf32>,
    %c0_145 = arith.constant 0 : index
    %c0_146 = arith.constant 0 : index
    %103 = vector.load %arg20[%c0_145, %c0_146] : memref<32x1xf32, #tpu.memory_space<vmem>>, vector<32x1xf32>
    %cst_147 = arith.constant dense<0.000000e+00> : vector<2x1xf32>
    %104 = tpu.matmul %92, %103, %cst_147 {dimension_numbers = #tpu.dot_dimension_numbers<[1], [0], [0], [1], [0, 0, 1, 1], [], []>} : vector<2x32xf32>, vector<32x1xf32>, vector<2x1xf32> -> vector<2x1xf32>
    %c0_148 = arith.constant 0 : index
    %c0_149 = arith.constant 0 : index
    %105 = vector.load %arg21[%c0_148, %c0_149] : memref<1x1xf32, #tpu.memory_space<vmem>>, vector<1x1xf32>
    %106 = vector.broadcast %105 : vector<1x1xf32> to vector<2x1xf32>
    %107 = arith.addf %104, %106 : vector<2x1xf32>
    %c0_150 = arith.constant 0 : index
    %c0_151 = arith.constant 0 : index
    %108 = vector.load %arg22[%c0_150, %c0_151] : memref<32x2xf32, #tpu.memory_space<vmem>>, vector<32x2xf32>
    %cst_152 = arith.constant dense<0.000000e+00> : vector<2x2xf32>
    %109 = tpu.matmul %100, %108, %cst_152 {dimension_numbers = #tpu.dot_dimension_numbers<[1], [0], [0], [1], [0, 0, 1, 1], [], []>} : vector<2x32xf32>, vector<32x2xf32>, vector<2x2xf32> -> vector<2x2xf32>
    %c0_153 = arith.constant 0 : index
    %c0_154 = arith.constant 0 : index
    %110 = vector.load %arg23[%c0_153, %c0_154] : memref<1x2xf32, #tpu.memory_space<vmem>>, vector<1x2xf32>
    %111 = vector.broadcast %110 : vector<1x2xf32> to vector<2x2xf32>
    %112 = arith.addf %109, %111 : vector<2x2xf32>
    %113 = arith.negf %107 : vector<2x1xf32>
    %114 = math.exp %113 : vector<2x1xf32>
    %cst_155 = arith.constant 1.000000e+00 : f32
    %115 = vector.broadcast %cst_155 : f32 to vector<2x1xf32>
    %116 = arith.addf %115, %114 : vector<2x1xf32>
    %117 = arith.divf %115, %116 : vector<2x1xf32>
    %cst_156 = arith.constant 6.000000e+00 : f32
    %118 = vector.broadcast %cst_156 : f32 to vector<2x1xf32>
    %119 = arith.mulf %117, %118 : vector<2x1xf32>
    %cst_157 = arith.constant -3.000000e+00 : f32
    %120 = vector.broadcast %cst_157 : f32 to vector<2x1xf32>
    %121 = arith.addf %119, %120 : vector<2x1xf32>
    %122 = arith.negf %112 : vector<2x2xf32>
    %123 = math.exp %122 : vector<2x2xf32>
    %cst_158 = arith.constant 1.000000e+00 : f32
    %124 = vector.broadcast %cst_158 : f32 to vector<2x2xf32>
    %125 = arith.addf %124, %123 : vector<2x2xf32>
    %126 = arith.divf %124, %125 : vector<2x2xf32>
    %c0_159 = arith.constant 0 : index
    %c0_160 = arith.constant 0 : index
    %127 = vector.load %arg27[%c0_159, %c0_160] : memref<2x1xf32, #tpu.memory_space<vmem>>, vector<2x1xf32>
    tpu.vector_store %arg27[%c0_159, %c0_160], %121 {strides = array<i32>} : memref<2x1xf32, #tpu.memory_space<vmem>>, vector<2x1xf32>,
    %c0_161 = arith.constant 0 : index
    %c0_162 = arith.constant 0 : index
    %128 = vector.load %arg28[%c0_161, %c0_162] : memref<2x2xf32, #tpu.memory_space<vmem>>, vector<2x2xf32>
    tpu.vector_store %arg28[%c0_161, %c0_162], %126 {strides = array<i32>} : memref<2x2xf32, #tpu.memory_space<vmem>>, vector<2x2xf32>,
    return
  }
}

</mosaic_0001>

<llo_original>
// kernel: pathnet_resnet_forward.1
$region0: #{pathnet_resnet_forward.1}
  #allocation0 [shape = 'u32[]', space=smem, size = 0x4, offset = 0x4, fixed_abs, tag = 'smem constant byte address 0x4 - core index']
  #allocation1 [shape = 'u32[144,128]{1,0:T(1,128)}', space=vmem, size = 0x12000, scoped, tag = 'internal scratch']
  #allocation2 [shape = 'f32[2,18,18,16]{3,2,1,0:T(8,128)}', space=vmem, size = 0x6c000, scoped, tag = 'scratch operand']
  #allocation3 [shape = 'f32[1,1]{1,0:T(1,128)S(1)}', space=vmem, size = 0x200, scoped, tag = 'scoped memory for pathnet_resnet_forward.1']
  %s0 = inlined_call_operand.vmem [shape: f32[512,36], index: 0, kind: input, shape index: {}]
  %s1 = inlined_call_operand.vmem [shape: f32[2,512], index: 1, kind: input, shape index: {}]
  %s2 = inlined_call_operand.vmem [shape: f32[36,16], index: 2, kind: input, shape index: {}]
  %s3 = inlined_call_operand.vmem [shape: f32[1,16], index: 3, kind: input, shape index: {}]
  %s4 = inlined_call_operand.vmem [shape: f32[144,16], index: 4, kind: input, shape index: {}]
  %s5 = inlined_call_operand.vmem [shape: f32[1,16], index: 5, kind: input, shape index: {}]
  %s6 = inlined_call_operand.vmem [shape: f32[144,16], index: 6, kind: input, shape index: {}]
  %s7 = inlined_call_operand.vmem [shape: f32[1,16], index: 7, kind: input, shape index: {}]
  %s8 = inlined_call_operand.vmem [shape: f32[16,1024], index: 8, kind: input, shape index: {}]
  %s9 = inlined_call_operand.vmem [shape: f32[1,1024], index: 9, kind: input, shape index: {}]
  %s10 = inlined_call_operand.vmem [shape: bf16[1024,1024], index: 10, kind: input, shape index: {}]
  %s11 = inlined_call_operand.vmem [shape: f32[1,1024], index: 11, kind: input, shape index: {}]
  %s12 = inlined_call_operand.vmem [shape: bf16[512,256], index: 12, kind: input, shape index: {}]
  %s13 = inlined_call_operand.vmem [shape: f32[1,256], index: 13, kind: input, shape index: {}]
  %s14 = inlined_call_operand.vmem [shape: bf16[512,256], index: 14, kind: input, shape index: {}]
  %s15 = inlined_call_operand.vmem [shape: f32[1,256], index: 15, kind: input, shape index: {}]
  %s16 = inlined_call_operand.vmem [shape: bf16[256,32], index: 16, kind: input, shape index: {}]
  %s17 = inlined_call_operand.vmem [shape: f32[1,32], index: 17, kind: input, shape index: {}]
  %s18 = inlined_call_operand.vmem [shape: bf16[256,32], index: 18, kind: input, shape index: {}]
  %s19 = inlined_call_operand.vmem [shape: f32[1,32], index: 19, kind: input, shape index: {}]
  %s20 = inlined_call_operand.vmem [shape: f32[32,1], index: 20, kind: input, shape index: {}]
  %s21 = inlined_call_operand.<no memory space> [shape: f32[1,1], index: 21, kind: input, shape index: {}]
  %s22 = inlined_call_operand.vmem [shape: f32[32,2], index: 22, kind: input, shape index: {}]
  %s23 = inlined_call_operand.vmem [shape: f32[1,2], index: 23, kind: input, shape index: {}]
  %s24 = inlined_call_operand.hbm [shape: f32[2,1024], index: 24, kind: output, shape index: {0}]
  %s25 = inlined_call_operand.hbm [shape: f32[2,32], index: 25, kind: output, shape index: {1}]
  %s26 = inlined_call_operand.hbm [shape: f32[2,32], index: 26, kind: output, shape index: {2}]
  %s27 = inlined_call_operand.vmem [shape: f32[2,1], index: 27, kind: output, shape index: {3}]
  %s28 = inlined_call_operand.hbm [shape: f32[2,2], index: 28, kind: output, shape index: {4}]
  %29 = xla_tuple %s24, %s25, %s26, %s27, %s28
  %s30 = sld [smem:[#allocation0]]
  $region138: #{pathnet_resnet_forward.1} parent=0
    _
  %s32 = ssub.s32 1, %s30
  %s33 = scalar_select 0, %s32, %s30
  %v34 = vstv %s21
  %35 = vst [vmem:[#allocation3] sm:$0x1] %v34
  $region1: #{pathnet_resnet_forward.1} parent=0
    #allocation4 [shape = 'u8[8192]{0}', space=vmem, size = 0x2000, scoped, tag = 'output window, operand 0, single buffered']
    #allocation5 [shape = 's32[1]{0}', space=sflag, size = 0x4, scoped, tag = 'scoped memory for pathnet_resnet_forward.1']
    #allocation6 [shape = 'u8[1024]{0}', space=vmem, size = 0x400, scoped, tag = 'output window, operand 1, single buffered']
    #allocation7 [shape = 's32[1]{0}', space=sflag, size = 0x4, scoped, tag = 'scoped memory for pathnet_resnet_forward.1']
    #allocation8 [shape = 'u8[1024]{0}', space=vmem, size = 0x400, scoped, tag = 'output window, operand 2, single buffered']
    #allocation9 [shape = 'u8[1024]{0}', space=vmem, size = 0x400, scoped, tag = 'output window, operand 4, single buffered']
    #allocation10 [shape = 's32[1]{0}', space=sflag, size = 0x4, scoped, tag = 'scoped memory for pathnet_resnet_forward.1']
    %36 = vsyncpa [#allocation5], 0
    %37 = vsyncpa [#allocation7], 0
    %38 = vsyncpa [#allocation10], 0
    // Predicated region
    $region2: #{pathnet_resnet_forward.1} parent=1 // pred_check
      _
    $region3: #{pathnet_resnet_forward.1} parent=1 // pred_check_branch
      %40 = sbr.rel (0) target = $region5
    $region4: #{pathnet_resnet_forward.1} parent=1 // pred_region
      _
    $region5: #{pathnet_resnet_forward.1} parent=1 // pred_fallthru
      _
    // Predicated region
    $region6: #{pathnet_resnet_forward.1} parent=1 // pred_check
      _
    $region7: #{pathnet_resnet_forward.1} parent=1 // pred_check_branch
      %42 = sbr.rel (0) target = $region9
    $region8: #{pathnet_resnet_forward.1} parent=1 // pred_region
      _
    $region9: #{pathnet_resnet_forward.1} parent=1 // pred_fallthru
      _
    // Predicated region
    $region10: #{pathnet_resnet_forward.1} parent=1 // pred_check
      _
    $region11: #{pathnet_resnet_forward.1} parent=1 // pred_check_branch
      %44 = sbr.rel (0) target = $region13
    $region12: #{pathnet_resnet_forward.1} parent=1 // pred_region
      _
    $region13: #{pathnet_resnet_forward.1} parent=1 // pred_fallthru
      _
    // Predicated region
    $region14: #{pathnet_resnet_forward.1} parent=1 // pred_check
      _
    $region15: #{pathnet_resnet_forward.1} parent=1 // pred_check_branch
      %46 = sbr.rel (0) target = $region17
    $region16: #{pathnet_resnet_forward.1} parent=1 // pred_region
      _
    $region17: #{pathnet_resnet_forward.1} parent=1 // pred_fallthru
      _
    // Predicated region
    $region18: #{pathnet_resnet_forward.1} parent=1 // pred_check
      _
    $region19: #{pathnet_resnet_forward.1} parent=1 // pred_check_branch
      %48 = sbr.rel (0) target = $region21
    $region20: #{pathnet_resnet_forward.1} parent=1 // pred_region
      _
    $region21: #{pathnet_resnet_forward.1} parent=1 // pred_fallthru
      _
    // Predicated region
    $region22: #{pathnet_resnet_forward.1} parent=1 // pred_check
      _
    $region23: #{pathnet_resnet_forward.1} parent=1 // pred_check_branch
      %50 = sbr.rel (0) target = $region25
    $region24: #{pathnet_resnet_forward.1} parent=1 // pred_region
      _
    $region25: #{pathnet_resnet_forward.1} parent=1 // pred_fallthru
      _
    // Predicated region
    $region26: #{pathnet_resnet_forward.1} parent=1 // pred_check
      _
    $region27: #{pathnet_resnet_forward.1} parent=1 // pred_check_branch
      %52 = sbr.rel (0) target = $region29
    $region28: #{pathnet_resnet_forward.1} parent=1 // pred_region
      _
    $region29: #{pathnet_resnet_forward.1} parent=1 // pred_fallthru
      _
    // Predicated region
    $region30: #{pathnet_resnet_forward.1} parent=1 // pred_check
      _
    $region31: #{pathnet_resnet_forward.1} parent=1 // pred_check_branch
      %54 = sbr.rel (0) target = $region33
    $region32: #{pathnet_resnet_forward.1} parent=1 // pred_region
      _
    $region33: #{pathnet_resnet_forward.1} parent=1 // pred_fallthru
      _
    // Predicated region
    $region34: #{pathnet_resnet_forward.1} parent=1 // pred_check
      _
    $region35: #{pathnet_resnet_forward.1} parent=1 // pred_check_branch
      %56 = sbr.rel (0) target = $region37
    $region36: #{pathnet_resnet_forward.1} parent=1 // pred_region
      _
    $region37: #{pathnet_resnet_forward.1} parent=1 // pred_fallthru
      _
    // Predicated region
    $region38: #{pathnet_resnet_forward.1} parent=1 // pred_check
      _
    $region39: #{pathnet_resnet_forward.1} parent=1 // pred_check_branch
      %58 = sbr.rel (0) target = $region41
    $region40: #{pathnet_resnet_forward.1} parent=1 // pred_region
      _
    $region41: #{pathnet_resnet_forward.1} parent=1 // pred_fallthru
      _
    // Predicated region
    $region42: #{pathnet_resnet_forward.1} parent=1 // pred_check
      _
    $region43: #{pathnet_resnet_forward.1} parent=1 // pred_check_branch
      %60 = sbr.rel (0) target = $region45
    $region44: #{pathnet_resnet_forward.1} parent=1 // pred_region
      _
    $region45: #{pathnet_resnet_forward.1} parent=1 // pred_fallthru
      _
    // Predicated region
    $region46: #{pathnet_resnet_forward.1} parent=1 // pred_check
      _
    $region47: #{pathnet_resnet_forward.1} parent=1 // pred_check_branch
      %62 = sbr.rel (0) target = $region49
    $region48: #{pathnet_resnet_forward.1} parent=1 // pred_region
      _
    $region49: #{pathnet_resnet_forward.1} parent=1 // pred_fallthru
      _
    // Predicated region
    $region50: #{pathnet_resnet_forward.1} parent=1 // pred_check
      _
    $region51: #{pathnet_resnet_forward.1} parent=1 // pred_check_branch
      %64 = sbr.rel (0) target = $region53
    $region52: #{pathnet_resnet_forward.1} parent=1 // pred_region
      _
    $region53: #{pathnet_resnet_forward.1} parent=1 // pred_fallthru
      _
    // Predicated region
    $region54: #{pathnet_resnet_forward.1} parent=1 // pred_check
      _
    $region55: #{pathnet_resnet_forward.1} parent=1 // pred_check_branch
      %66 = sbr.rel (0) target = $region57
    $region56: #{pathnet_resnet_forward.1} parent=1 // pred_region
      _
    $region57: #{pathnet_resnet_forward.1} parent=1 // pred_fallthru
      _
    // Predicated region
    $region58: #{pathnet_resnet_forward.1} parent=1 // pred_check
      _
    $region59: #{pathnet_resnet_forward.1} parent=1 // pred_check_branch
      %68 = sbr.rel (0) target = $region61
    $region60: #{pathnet_resnet_forward.1} parent=1 // pred_region
      _
    $region61: #{pathnet_resnet_forward.1} parent=1 // pred_fallthru
      _
    // Predicated region
    $region62: #{pathnet_resnet_forward.1} parent=1 // pred_check
      _
    $region63: #{pathnet_resnet_forward.1} parent=1 // pred_check_branch
      %70 = sbr.rel (0) target = $region65
    $region64: #{pathnet_resnet_forward.1} parent=1 // pred_region
      _
    $region65: #{pathnet_resnet_forward.1} parent=1 // pred_fallthru
      _
    // Predicated region
    $region66: #{pathnet_resnet_forward.1} parent=1 // pred_check
      _
    $region67: #{pathnet_resnet_forward.1} parent=1 // pred_check_branch
      %72 = sbr.rel (0) target = $region69
    $region68: #{pathnet_resnet_forward.1} parent=1 // pred_region
      _
    $region69: #{pathnet_resnet_forward.1} parent=1 // pred_fallthru
      _
    // Predicated region
    $region70: #{pathnet_resnet_forward.1} parent=1 // pred_check
      _
    $region71: #{pathnet_resnet_forward.1} parent=1 // pred_check_branch
      %74 = sbr.rel (0) target = $region73
    $region72: #{pathnet_resnet_forward.1} parent=1 // pred_region
      _
    $region73: #{pathnet_resnet_forward.1} parent=1 // pred_fallthru
      _
    // Predicated region
    $region74: #{pathnet_resnet_forward.1} parent=1 // pred_check
      _
    $region75: #{pathnet_resnet_forward.1} parent=1 // pred_check_branch
      %76 = sbr.rel (0) target = $region77
    $region76: #{pathnet_resnet_forward.1} parent=1 // pred_region
      _
    $region77: #{pathnet_resnet_forward.1} parent=1 // pred_fallthru
      _
    // Predicated region
    $region78: #{pathnet_resnet_forward.1} parent=1 // pred_check
      _
    $region79: #{pathnet_resnet_forward.1} parent=1 // pred_check_branch
      %78 = sbr.rel (0) target = $region81
    $region80: #{pathnet_resnet_forward.1} parent=1 // pred_region
      _
    $region81: #{pathnet_resnet_forward.1} parent=1 // pred_fallthru
      _
    // Predicated region
    $region82: #{pathnet_resnet_forward.1} parent=1 // pred_check
      _
    $region83: #{pathnet_resnet_forward.1} parent=1 // pred_check_branch
      %80 = sbr.rel (0) target = $region85
    $region84: #{pathnet_resnet_forward.1} parent=1 // pred_region
      _
    $region85: #{pathnet_resnet_forward.1} parent=1 // pred_fallthru
      _
    // Predicated region
    $region86: #{pathnet_resnet_forward.1} parent=1 // pred_check
      _
    $region87: #{pathnet_resnet_forward.1} parent=1 // pred_check_branch
      %82 = sbr.rel (0) target = $region89
    $region88: #{pathnet_resnet_forward.1} parent=1 // pred_region
      _
    $region89: #{pathnet_resnet_forward.1} parent=1 // pred_fallthru
      _
    // Predicated region
    $region90: #{pathnet_resnet_forward.1} parent=1 // pred_check
      _
    $region91: #{pathnet_resnet_forward.1} parent=1 // pred_check_branch
      %84 = sbr.rel (0) target = $region93
    $region92: #{pathnet_resnet_forward.1} parent=1 // pred_region
      _
    $region93: #{pathnet_resnet_forward.1} parent=1 // pred_fallthru
      _
    // Predicated region
    $region94: #{pathnet_resnet_forward.1} parent=1 // pred_check
      _
    $region95: #{pathnet_resnet_forward.1} parent=1 // pred_check_branch
      %86 = sbr.rel (0) target = $region97
    $region96: #{pathnet_resnet_forward.1} parent=1 // pred_region
      _
    $region97: #{pathnet_resnet_forward.1} parent=1 // pred_fallthru
      _
    %v88 = vld [vmem:[%s0] sm:$0xff]
    %v89 = vld [vmem:[%s0 + $0x8] sm:$0xff]
    %v90 = vld [vmem:[%s0 + $0x10] sm:$0xff]
    %v91 = vld [vmem:[%s0 + $0x18] sm:$0xff]
    %v92 = vld [vmem:[%s0 + $0x20] sm:$0xff]
    %v93 = vld [vmem:[%s0 + $0x28] sm:$0xff]
    %v94 = vld [vmem:[%s0 + $0x30] sm:$0xff]
    %v95 = vld [vmem:[%s0 + $0x38] sm:$0xff]
    %v96 = vld [vmem:[%s0 + $0x40] sm:$0xff]
    %v97 = vld [vmem:[%s0 + $0x48] sm:$0xff]
    %v98 = vld [vmem:[%s0 + $0x50] sm:$0xff]
    %v99 = vld [vmem:[%s0 + $0x58] sm:$0xff]
    %v100 = vld [vmem:[%s0 + $0x60] sm:$0xff]
    %v101 = vld [vmem:[%s0 + $0x68] sm:$0xff]
    %v102 = vld [vmem:[%s0 + $0x70] sm:$0xff]
    %v103 = vld [vmem:[%s0 + $0x78] sm:$0xff]
    %v104 = vld [vmem:[%s0 + $0x80] sm:$0xff]
    %v105 = vld [vmem:[%s0 + $0x88] sm:$0xff]
    %v106 = vld [vmem:[%s0 + $0x90] sm:$0xff]
    %v107 = vld [vmem:[%s0 + $0x98] sm:$0xff]
    %v108 = vld [vmem:[%s0 + $0xa0] sm:$0xff]
    %v109 = vld [vmem:[%s0 + $0xa8] sm:$0xff]
    %v110 = vld [vmem:[%s0 + $0xb0] sm:$0xff]
    %v111 = vld [vmem:[%s0 + $0xb8] sm:$0xff]
    %v112 = vld [vmem:[%s0 + $0xc0] sm:$0xff]
    %v113 = vld [vmem:[%s0 + $0xc8] sm:$0xff]
    %v114 = vld [vmem:[%s0 + $0xd0] sm:$0xff]
    %v115 = vld [vmem:[%s0 + $0xd8] sm:$0xff]
    %v116 = vld [vmem:[%s0 + $0xe0] sm:$0xff]
    %v117 = vld [vmem:[%s0 + $0xe8] sm:$0xff]
    %v118 = vld [vmem:[%s0 + $0xf0] sm:$0xff]
    %v119 = vld [vmem:[%s0 + $0xf8] sm:$0xff]
    %v120 = vld [vmem:[%s0 + $0x100] sm:$0xff]
    %v121 = vld [vmem:[%s0 + $0x108] sm:$0xff]
    %v122 = vld [vmem:[%s0 + $0x110] sm:$0xff]
    %v123 = vld [vmem:[%s0 + $0x118] sm:$0xff]
    %v124 = vld [vmem:[%s0 + $0x120] sm:$0xff]
    %v125 = vld [vmem:[%s0 + $0x128] sm:$0xff]
    %v126 = vld [vmem:[%s0 + $0x130] sm:$0xff]
    %v127 = vld [vmem:[%s0 + $0x138] sm:$0xff]
    %v128 = vld [vmem:[%s0 + $0x140] sm:$0xff]
    %v129 = vld [vmem:[%s0 + $0x148] sm:$0xff]
    %v130 = vld [vmem:[%s0 + $0x150] sm:$0xff]
    %v131 = vld [vmem:[%s0 + $0x158] sm:$0xff]
    %v132 = vld [vmem:[%s0 + $0x160] sm:$0xff]
    %v133 = vld [vmem:[%s0 + $0x168] sm:$0xff]
    %v134 = vld [vmem:[%s0 + $0x170] sm:$0xff]
    %v135 = vld [vmem:[%s0 + $0x178] sm:$0xff]
    %v136 = vld [vmem:[%s0 + $0x180] sm:$0xff]
    %v137 = vld [vmem:[%s0 + $0x188] sm:$0xff]
    %v138 = vld [vmem:[%s0 + $0x190] sm:$0xff]
    %v139 = vld [vmem:[%s0 + $0x198] sm:$0xff]
    %v140 = vld [vmem:[%s0 + $0x1a0] sm:$0xff]
    %v141 = vld [vmem:[%s0 + $0x1a8] sm:$0xff]
    %v142 = vld [vmem:[%s0 + $0x1b0] sm:$0xff]
    %v143 = vld [vmem:[%s0 + $0x1b8] sm:$0xff]
    %v144 = vld [vmem:[%s0 + $0x1c0] sm:$0xff]
    %v145 = vld [vmem:[%s0 + $0x1c8] sm:$0xff]
    %v146 = vld [vmem:[%s0 + $0x1d0] sm:$0xff]
    %v147 = vld [vmem:[%s0 + $0x1d8] sm:$0xff]
    %v148 = vld [vmem:[%s0 + $0x1e0] sm:$0xff]
    %v149 = vld [vmem:[%s0 + $0x1e8] sm:$0xff]
    %v150 = vld [vmem:[%s0 + $0x1f0] sm:$0xff]
    %v151 = vld [vmem:[%s0 + $0x1f8] sm:$0xff]
    %v152 = vld [vmem:[%s2] sm:$0xff]
    %v153 = vld [vmem:[%s2 + $0x8] sm:$0xff]
    %v154 = vld [vmem:[%s2 + $0x10] sm:$0xff]
    %v155 = vld [vmem:[%s2 + $0x18] sm:$0xff]
    %v156 = vld [vmem:[%s2 + $0x20] sm:$0xf]
    %v157 = vld [vmem:[%s3] sm:$0x1]
    %v159 = vlaneseq
    %v160 = vshrl.u32 %v159, 7
    %v161 = vsub.s32 0, %v160
    %v162 = vrot.slane %v157, %v161
    %vm164 = vcmask 293888
    %v166 = vsel %vm164, %v88, 0
    %v169 = vsel %vm164, %v89, 0
    %v172 = vsel %vm164, %v90, 0
    %v175 = vsel %vm164, %v91, 0
    %v178 = vsel %vm164, %v92, 0
    %v181 = vsel %vm164, %v93, 0
    %v184 = vsel %vm164, %v94, 0
    %v187 = vsel %vm164, %v95, 0
    %v190 = vsel %vm164, %v96, 0
    %v193 = vsel %vm164, %v97, 0
    %v196 = vsel %vm164, %v98, 0
    %v199 = vsel %vm164, %v99, 0
    %v202 = vsel %vm164, %v100, 0
    %v205 = vsel %vm164, %v101, 0
    %v208 = vsel %vm164, %v102, 0
    %v211 = vsel %vm164, %v103, 0
    %v214 = vsel %vm164, %v104, 0
    %v217 = vsel %vm164, %v105, 0
    %v220 = vsel %vm164, %v106, 0
    %v223 = vsel %vm164, %v107, 0
    %v226 = vsel %vm164, %v108, 0
    %v229 = vsel %vm164, %v109, 0
    %v232 = vsel %vm164, %v110, 0
    %v235 = vsel %vm164, %v111, 0
    %v238 = vsel %vm164, %v112, 0
    %v241 = vsel %vm164, %v113, 0
    %v244 = vsel %vm164, %v114, 0
    %v247 = vsel %vm164, %v115, 0
    %v250 = vsel %vm164, %v116, 0
    %v253 = vsel %vm164, %v117, 0
    %v256 = vsel %vm164, %v118, 0
    %v259 = vsel %vm164, %v119, 0
    %v262 = vsel %vm164, %v120, 0
    %v265 = vsel %vm164, %v121, 0
    %v268 = vsel %vm164, %v122, 0
    %v271 = vsel %vm164, %v123, 0
    %v274 = vsel %vm164, %v124, 0
    %v277 = vsel %vm164, %v125, 0
    %v280 = vsel %vm164, %v126, 0
    %v283 = vsel %vm164, %v127, 0
    %v286 = vsel %vm164, %v128, 0
    %v289 = vsel %vm164, %v129, 0
    %v292 = vsel %vm164, %v130, 0
    %v295 = vsel %vm164, %v131, 0
    %v298 = vsel %vm164, %v132, 0
    %v301 = vsel %vm164, %v133, 0
    %v304 = vsel %vm164, %v134, 0
    %v307 = vsel %vm164, %v135, 0
    %v310 = vsel %vm164, %v136, 0
    %v313 = vsel %vm164, %v137, 0
    %v316 = vsel %vm164, %v138, 0
    %v319 = vsel %vm164, %v139, 0
    %v322 = vsel %vm164, %v140, 0
    %v325 = vsel %vm164, %v141, 0
    %v328 = vsel %vm164, %v142, 0
    %v331 = vsel %vm164, %v143, 0
    %v334 = vsel %vm164, %v144, 0
    %v337 = vsel %vm164, %v145, 0
    %v340 = vsel %vm164, %v146, 0
    %v343 = vsel %vm164, %v147, 0
    %v346 = vsel %vm164, %v148, 0
    %v349 = vsel %vm164, %v149, 0
    %v352 = vsel %vm164, %v150, 0
    %v355 = vsel %vm164, %v151, 0
    %vm357 = vcmask 1043456
    %v359 = vsel %vm357, %v156, 0
    %361 = vmatprep.subr.mxu0 0.0
    %362 = vmatpush1.msra.mxu0 0.0
    %363 = vmatprep.subr.mxu0 0.0
    %364 = vmatpush1.msra.mxu0 0.0
    %365 = vmatprep.subr.mxu0 0.0
    %366 = vmatpush1.msra.mxu0 0.0
    %367 = vmatprep.subr.mxu0 0.0
    %368 = vmatpush1.msra.mxu0 0.0
    %369 = vmatprep.subr.mxu0 0.0
    %370 = vmatpush1.msra.mxu0 0.0
    %371 = vmatprep.subr.mxu0 0.0
    %372 = vmatpush1.msra.mxu0 0.0
    %373 = vmatprep.subr.mxu0 0.0
    %374 = vmatpush1.msra.mxu0 0.0
    %375 = vmatprep.subr.mxu0 0.0
    %376 = vmatpush1.msra.mxu0 0.0
    %377 = vmatprep.subr.mxu0 0.0
    %378 = vmatpush1.msra.mxu0 0.0
    %379 = vmatprep.subr.mxu0 0.0
    %380 = vmatpush1.msra.mxu0 0.0
    %381 = vmatprep.subr.mxu0 0.0
    %382 = vmatpush1.msra.mxu0 0.0
    %383 = vmatprep.subr.mxu0 0.0
    %384 = vmatpush1.msra.mxu0 %v359
    %385 = vmatprep.subr.mxu0 0.0
    %386 = vmatpush1.msra.mxu0 %v155
    %387 = vmatprep.subr.mxu0 0.0
    %388 = vmatpush1.msra.mxu0 %v154
    %389 = vmatprep.subr.mxu0 0.0
    %390 = vmatpush1.msra.mxu0 %v153
    %391 = vmatprep.subr.mxu0 0.0
    %392 = vmatpush1.msra.mxu0 %v152
    %393 = vmatprep.subr.mxu0 0.0
    %394 = vmatpush2.msra.mxu0 0.0
    %395 = vmatprep.subr.mxu0 0.0
    %396 = vmatpush2.msra.mxu0 0.0
    %397 = vmatprep.subr.mxu0 0.0
    %398 = vmatpush2.msra.mxu0 0.0
    %399 = vmatprep.subr.mxu0 0.0
    %400 = vmatpush2.msra.mxu0 0.0
    %401 = vmatprep.subr.mxu0 0.0
    %402 = vmatpush2.msra.mxu0 0.0
    %403 = vmatprep.subr.mxu0 0.0
    %404 = vmatpush2.msra.mxu0 0.0
    %405 = vmatprep.subr.mxu0 0.0
    %406 = vmatpush2.msra.mxu0 0.0
    %407 = vmatprep.subr.mxu0 0.0
    %408 = vmatpush2.msra.mxu0 0.0
    %409 = vmatprep.subr.mxu0 0.0
    %410 = vmatpush2.msra.mxu0 0.0
    %411 = vmatprep.subr.mxu0 0.0
    %412 = vmatpush2.msra.mxu0 0.0
    %413 = vmatprep.subr.mxu0 0.0
    %414 = vmatpush2.msra.mxu0 0.0
    %415 = vmatprep.subr.mxu0 0.0
    %416 = vmatpush2.msra.mxu0 0.0
    %417 = vmatprep.subr.mxu0 0.0
    %418 = vmatpush2.msra.mxu0 0.0
    %419 = vmatprep.subr.mxu0 0.0
    %420 = vmatpush2.msra.mxu0 0.0
    %421 = vmatprep.subr.mxu0 0.0
    %422 = vmatpush2.msra.mxu0 0.0
    %423 = vmatprep.subr.mxu0 0.0
    %424 = vmatpush2.msra.mxu0 0.0
    %425 = vmatprep.mubr.f32.mxu0 0.0
    %426 = vmatmul.mubr.f32.gmra.mxu0 %v166
    %v427 = vpop.f32.mrf.mxu0
    %v428 = vadd.f32 %v162, %v427
    %v429 = vpop.f32.mrf.mxu0
    %430 = vmatprep.mubr.f32.mxu0 0.0
    %431 = vmatmul.mubr.f32.gmra.mxu0 %v169
    %v432 = vpop.f32.mrf.mxu0
    %v433 = vadd.f32 %v162, %v432
    %v434 = vpop.f32.mrf.mxu0
    %435 = vmatprep.mubr.f32.mxu0 0.0
    %436 = vmatmul.mubr.f32.gmra.mxu0 %v172
    %v437 = vpop.f32.mrf.mxu0
    %v438 = vadd.f32 %v162, %v437
    %v439 = vpop.f32.mrf.mxu0
    %440 = vmatprep.mubr.f32.mxu0 0.0
    %441 = vmatmul.mubr.f32.gmra.mxu0 %v175
    %v442 = vpop.f32.mrf.mxu0
    %v443 = vadd.f32 %v162, %v442
    %v444 = vpop.f32.mrf.mxu0
    %445 = vmatprep.mubr.f32.mxu0 0.0
    %446 = vmatmul.mubr.f32.gmra.mxu0 %v178
    %v447 = vpop.f32.mrf.mxu0
    %v448 = vadd.f32 %v162, %v447
    %v449 = vpop.f32.mrf.mxu0
    %450 = vmatprep.mubr.f32.mxu0 0.0
    %451 = vmatmul.mubr.f32.gmra.mxu0 %v181
    %v452 = vpop.f32.mrf.mxu0
    %v453 = vadd.f32 %v162, %v452
    %v454 = vpop.f32.mrf.mxu0
    %455 = vmatprep.mubr.f32.mxu0 0.0
    %456 = vmatmul.mubr.f32.gmra.mxu0 %v184
    %v457 = vpop.f32.mrf.mxu0
    %v458 = vadd.f32 %v162, %v457
    %v459 = vpop.f32.mrf.mxu0
    %460 = vmatprep.mubr.f32.mxu0 0.0
    %461 = vmatmul.mubr.f32.gmra.mxu0 %v187
    %v462 = vpop.f32.mrf.mxu0
    %v463 = vadd.f32 %v162, %v462
    %v464 = vpop.f32.mrf.mxu0
    %465 = vmatprep.mubr.f32.mxu0 0.0
    %466 = vmatmul.mubr.f32.gmra.mxu0 %v190
    %v467 = vpop.f32.mrf.mxu0
    %v468 = vadd.f32 %v162, %v467
    %v469 = vpop.f32.mrf.mxu0
    %470 = vmatprep.mubr.f32.mxu0 0.0
    %471 = vmatmul.mubr.f32.gmra.mxu0 %v193
    %v472 = vpop.f32.mrf.mxu0
    %v473 = vadd.f32 %v162, %v472
    %v474 = vpop.f32.mrf.mxu0
    %475 = vmatprep.mubr.f32.mxu0 0.0
    %476 = vmatmul.mubr.f32.gmra.mxu0 %v196
    %v477 = vpop.f32.mrf.mxu0
    %v478 = vadd.f32 %v162, %v477
    %v479 = vpop.f32.mrf.mxu0
    %480 = vmatprep.mubr.f32.mxu0 0.0
    %481 = vmatmul.mubr.f32.gmra.mxu0 %v199
    %v482 = vpop.f32.mrf.mxu0
    %v483 = vadd.f32 %v162, %v482
    %v484 = vpop.f32.mrf.mxu0
    %485 = vmatprep.mubr.f32.mxu0 0.0
    %486 = vmatmul.mubr.f32.gmra.mxu0 %v202
    %v487 = vpop.f32.mrf.mxu0
    %v488 = vadd.f32 %v162, %v487
    %v489 = vpop.f32.mrf.mxu0
    %490 = vmatprep.mubr.f32.mxu0 0.0
    %491 = vmatmul.mubr.f32.gmra.mxu0 %v205
    %v492 = vpop.f32.mrf.mxu0
    %v493 = vadd.f32 %v162, %v492
    %v494 = vpop.f32.mrf.mxu0
    %495 = vmatprep.mubr.f32.mxu0 0.0
    %496 = vmatmul.mubr.f32.gmra.mxu0 %v208
    %v497 = vpop.f32.mrf.mxu0
    %v498 = vadd.f32 %v162, %v497
    %v499 = vpop.f32.mrf.mxu0
    %500 = vmatprep.mubr.f32.mxu0 0.0
    %501 = vmatmul.mubr.f32.gmra.mxu0 %v211
    %v502 = vpop.f32.mrf.mxu0
    %v503 = vadd.f32 %v162, %v502
    %v504 = vpop.f32.mrf.mxu0
    %505 = vmatprep.mubr.f32.mxu0 0.0
    %506 = vmatmul.mubr.f32.gmra.mxu0 %v214
    %v507 = vpop.f32.mrf.mxu0
    %v508 = vadd.f32 %v162, %v507
    %v509 = vpop.f32.mrf.mxu0
    %510 = vmatprep.mubr.f32.mxu0 0.0
    %511 = vmatmul.mubr.f32.gmra.mxu0 %v217
    %v512 = vpop.f32.mrf.mxu0
    %v513 = vadd.f32 %v162, %v512
    %v514 = vpop.f32.mrf.mxu0
    %515 = vmatprep.mubr.f32.mxu0 0.0
    %516 = vmatmul.mubr.f32.gmra.mxu0 %v220
    %v517 = vpop.f32.mrf.mxu0
    %v518 = vadd.f32 %v162, %v517
    %v519 = vpop.f32.mrf.mxu0
    %520 = vmatprep.mubr.f32.mxu0 0.0
    %521 = vmatmul.mubr.f32.gmra.mxu0 %v223
    %v522 = vpop.f32.mrf.mxu0
    %v523 = vadd.f32 %v162, %v522
    %v524 = vpop.f32.mrf.mxu0
    %525 = vmatprep.mubr.f32.mxu0 0.0
    %526 = vmatmul.mubr.f32.gmra.mxu0 %v226
    %v527 = vpop.f32.mrf.mxu0
    %v528 = vadd.f32 %v162, %v527
    %v529 = vpop.f32.mrf.mxu0
    %530 = vmatprep.mubr.f32.mxu0 0.0
    %531 = vmatmul.mubr.f32.gmra.mxu0 %v229
    %v532 = vpop.f32.mrf.mxu0
    %v533 = vadd.f32 %v162, %v532
    %v534 = vpop.f32.mrf.mxu0
    %535 = vmatprep.mubr.f32.mxu0 0.0
    %536 = vmatmul.mubr.f32.gmra.mxu0 %v232
    %v537 = vpop.f32.mrf.mxu0
    %v538 = vadd.f32 %v162, %v537
    %v539 = vpop.f32.mrf.mxu0
    %540 = vmatprep.mubr.f32.mxu0 0.0
    %541 = vmatmul.mubr.f32.gmra.mxu0 %v235
    %v542 = vpop.f32.mrf.mxu0
    %v543 = vadd.f32 %v162, %v542
    %v544 = vpop.f32.mrf.mxu0
    %545 = vmatprep.mubr.f32.mxu0 0.0
    %546 = vmatmul.mubr.f32.gmra.mxu0 %v238
    %v547 = vpop.f32.mrf.mxu0
    %v548 = vadd.f32 %v162, %v547
    %v549 = vpop.f32.mrf.mxu0
    %550 = vmatprep.mubr.f32.mxu0 0.0
    %551 = vmatmul.mubr.f32.gmra.mxu0 %v241
    %v552 = vpop.f32.mrf.mxu0
    %v553 = vadd.f32 %v162, %v552
    %v554 = vpop.f32.mrf.mxu0
    %555 = vmatprep.mubr.f32.mxu0 0.0
    %556 = vmatmul.mubr.f32.gmra.mxu0 %v244
    %v557 = vpop.f32.mrf.mxu0
    %v558 = vadd.f32 %v162, %v557
    %v559 = vpop.f32.mrf.mxu0
    %560 = vmatprep.mubr.f32.mxu0 0.0
    %561 = vmatmul.mubr.f32.gmra.mxu0 %v247
    %v562 = vpop.f32.mrf.mxu0
    %v563 = vadd.f32 %v162, %v562
    %v564 = vpop.f32.mrf.mxu0
    %565 = vmatprep.mubr.f32.mxu0 0.0
    %566 = vmatmul.mubr.f32.gmra.mxu0 %v250
    %v567 = vpop.f32.mrf.mxu0
    %v568 = vadd.f32 %v162, %v567
    %v569 = vpop.f32.mrf.mxu0
    %570 = vmatprep.mubr.f32.mxu0 0.0
    %571 = vmatmul.mubr.f32.gmra.mxu0 %v253
    %v572 = vpop.f32.mrf.mxu0
    %v573 = vadd.f32 %v162, %v572
    %v574 = vpop.f32.mrf.mxu0
    %575 = vmatprep.mubr.f32.mxu0 0.0
    %576 = vmatmul.mubr.f32.gmra.mxu0 %v256
    %v577 = vpop.f32.mrf.mxu0
    %v578 = vadd.f32 %v162, %v577
    %v579 = vpop.f32.mrf.mxu0
    %580 = vmatprep.mubr.f32.mxu0 0.0
    %581 = vmatmul.mubr.f32.gmra.mxu0 %v259
    %v582 = vpop.f32.mrf.mxu0
    %v583 = vadd.f32 %v162, %v582
    %v584 = vpop.f32.mrf.mxu0
    %585 = vmatprep.mubr.f32.mxu0 0.0
    %586 = vmatmul.mubr.f32.gmra.mxu0 %v262
    %v587 = vpop.f32.mrf.mxu0
    %v588 = vadd.f32 %v162, %v587
    %v589 = vpop.f32.mrf.mxu0
    %590 = vmatprep.mubr.f32.mxu0 0.0
    %591 = vmatmul.mubr.f32.gmra.mxu0 %v265
    %v592 = vpop.f32.mrf.mxu0
    %v593 = vadd.f32 %v162, %v592
    %v594 = vpop.f32.mrf.mxu0
    %595 = vmatprep.mubr.f32.mxu0 0.0
    %596 = vmatmul.mubr.f32.gmra.mxu0 %v268
    %v597 = vpop.f32.mrf.mxu0
    %v598 = vadd.f32 %v162, %v597
    %v599 = vpop.f32.mrf.mxu0
    %600 = vmatprep.mubr.f32.mxu0 0.0
    %601 = vmatmul.mubr.f32.gmra.mxu0 %v271
    %v602 = vpop.f32.mrf.mxu0
    %v603 = vadd.f32 %v162, %v602
    %v604 = vpop.f32.mrf.mxu0
    %605 = vmatprep.mubr.f32.mxu0 0.0
    %606 = vmatmul.mubr.f32.gmra.mxu0 %v274
    %v607 = vpop.f32.mrf.mxu0
    %v608 = vadd.f32 %v162, %v607
    %v609 = vpop.f32.mrf.mxu0
    %610 = vmatprep.mubr.f32.mxu0 0.0
    %611 = vmatmul.mubr.f32.gmra.mxu0 %v277
    %v612 = vpop.f32.mrf.mxu0
    %v613 = vadd.f32 %v162, %v612
    %v614 = vpop.f32.mrf.mxu0
    %615 = vmatprep.mubr.f32.mxu0 0.0
    %616 = vmatmul.mubr.f32.gmra.mxu0 %v280
    %v617 = vpop.f32.mrf.mxu0
    %v618 = vadd.f32 %v162, %v617
    %v619 = vpop.f32.mrf.mxu0
    %620 = vmatprep.mubr.f32.mxu0 0.0
    %621 = vmatmul.mubr.f32.gmra.mxu0 %v283
    %v622 = vpop.f32.mrf.mxu0
    %v623 = vadd.f32 %v162, %v622
    %v624 = vpop.f32.mrf.mxu0
    %625 = vmatprep.mubr.f32.mxu0 0.0
    %626 = vmatmul.mubr.f32.gmra.mxu0 %v286
    %v627 = vpop.f32.mrf.mxu0
    %v628 = vadd.f32 %v162, %v627
    %v629 = vpop.f32.mrf.mxu0
    %630 = vmatprep.mubr.f32.mxu0 0.0
    %631 = vmatmul.mubr.f32.gmra.mxu0 %v289
    %v632 = vpop.f32.mrf.mxu0
    %v633 = vadd.f32 %v162, %v632
    %v634 = vpop.f32.mrf.mxu0
    %635 = vmatprep.mubr.f32.mxu0 0.0
    %636 = vmatmul.mubr.f32.gmra.mxu0 %v292
    %v637 = vpop.f32.mrf.mxu0
    %v638 = vadd.f32 %v162, %v637
    %v639 = vpop.f32.mrf.mxu0
    %640 = vmatprep.mubr.f32.mxu0 0.0
    %641 = vmatmul.mubr.f32.gmra.mxu0 %v295
    %v642 = vpop.f32.mrf.mxu0
    %v643 = vadd.f32 %v162, %v642
    %v644 = vpop.f32.mrf.mxu0
    %645 = vmatprep.mubr.f32.mxu0 0.0
    %646 = vmatmul.mubr.f32.gmra.mxu0 %v298
    %v647 = vpop.f32.mrf.mxu0
    %v648 = vadd.f32 %v162, %v647
    %v649 = vpop.f32.mrf.mxu0
    %650 = vmatprep.mubr.f32.mxu0 0.0
    %651 = vmatmul.mubr.f32.gmra.mxu0 %v301
    %v652 = vpop.f32.mrf.mxu0
    %v653 = vadd.f32 %v162, %v652
    %v654 = vpop.f32.mrf.mxu0
    %655 = vmatprep.mubr.f32.mxu0 0.0
    %656 = vmatmul.mubr.f32.gmra.mxu0 %v304
    %v657 = vpop.f32.mrf.mxu0
    %v658 = vadd.f32 %v162, %v657
    %v659 = vpop.f32.mrf.mxu0
    %660 = vmatprep.mubr.f32.mxu0 0.0
    %661 = vmatmul.mubr.f32.gmra.mxu0 %v307
    %v662 = vpop.f32.mrf.mxu0
    %v663 = vadd.f32 %v162, %v662
    %v664 = vpop.f32.mrf.mxu0
    %665 = vmatprep.mubr.f32.mxu0 0.0
    %666 = vmatmul.mubr.f32.gmra.mxu0 %v310
    %v667 = vpop.f32.mrf.mxu0
    %v668 = vadd.f32 %v162, %v667
    %v669 = vpop.f32.mrf.mxu0
    %670 = vmatprep.mubr.f32.mxu0 0.0
    %671 = vmatmul.mubr.f32.gmra.mxu0 %v313
    %v672 = vpop.f32.mrf.mxu0
    %v673 = vadd.f32 %v162, %v672
    %v674 = vpop.f32.mrf.mxu0
    %675 = vmatprep.mubr.f32.mxu0 0.0
    %676 = vmatmul.mubr.f32.gmra.mxu0 %v316
    %v677 = vpop.f32.mrf.mxu0
    %v678 = vadd.f32 %v162, %v677
    %v679 = vpop.f32.mrf.mxu0
    %680 = vmatprep.mubr.f32.mxu0 0.0
    %681 = vmatmul.mubr.f32.gmra.mxu0 %v319
    %v682 = vpop.f32.mrf.mxu0
    %v683 = vadd.f32 %v162, %v682
    %v684 = vpop.f32.mrf.mxu0
    %685 = vmatprep.mubr.f32.mxu0 0.0
    %686 = vmatmul.mubr.f32.gmra.mxu0 %v322
    %v687 = vpop.f32.mrf.mxu0
    %v688 = vadd.f32 %v162, %v687
    %v689 = vpop.f32.mrf.mxu0
    %690 = vmatprep.mubr.f32.mxu0 0.0
    %691 = vmatmul.mubr.f32.gmra.mxu0 %v325
    %v692 = vpop.f32.mrf.mxu0
    %v693 = vadd.f32 %v162, %v692
    %v694 = vpop.f32.mrf.mxu0
    %695 = vmatprep.mubr.f32.mxu0 0.0
    %696 = vmatmul.mubr.f32.gmra.mxu0 %v328
    %v697 = vpop.f32.mrf.mxu0
    %v698 = vadd.f32 %v162, %v697
    %v699 = vpop.f32.mrf.mxu0
    %700 = vmatprep.mubr.f32.mxu0 0.0
    %701 = vmatmul.mubr.f32.gmra.mxu0 %v331
    %v702 = vpop.f32.mrf.mxu0
    %v703 = vadd.f32 %v162, %v702
    %v704 = vpop.f32.mrf.mxu0
    %705 = vmatprep.mubr.f32.mxu0 0.0
    %706 = vmatmul.mubr.f32.gmra.mxu0 %v334
    %v707 = vpop.f32.mrf.mxu0
    %v708 = vadd.f32 %v162, %v707
    %v709 = vpop.f32.mrf.mxu0
    %710 = vmatprep.mubr.f32.mxu0 0.0
    %711 = vmatmul.mubr.f32.gmra.mxu0 %v337
    %v712 = vpop.f32.mrf.mxu0
    %v713 = vadd.f32 %v162, %v712
    %v714 = vpop.f32.mrf.mxu0
    %715 = vmatprep.mubr.f32.mxu0 0.0
    %716 = vmatmul.mubr.f32.gmra.mxu0 %v340
    %v717 = vpop.f32.mrf.mxu0
    %v718 = vadd.f32 %v162, %v717
    %v719 = vpop.f32.mrf.mxu0
    %720 = vmatprep.mubr.f32.mxu0 0.0
    %721 = vmatmul.mubr.f32.gmra.mxu0 %v343
    %v722 = vpop.f32.mrf.mxu0
    %v723 = vadd.f32 %v162, %v722
    %v724 = vpop.f32.mrf.mxu0
    %725 = vmatprep.mubr.f32.mxu0 0.0
    %726 = vmatmul.mubr.f32.gmra.mxu0 %v346
    %v727 = vpop.f32.mrf.mxu0
    %v728 = vadd.f32 %v162, %v727
    %v729 = vpop.f32.mrf.mxu0
    %730 = vmatprep.mubr.f32.mxu0 0.0
    %731 = vmatmul.mubr.f32.gmra.mxu0 %v349
    %v732 = vpop.f32.mrf.mxu0
    %v733 = vadd.f32 %v162, %v732
    %v734 = vpop.f32.mrf.mxu0
    %735 = vmatprep.mubr.f32.mxu0 0.0
    %736 = vmatmul.mubr.f32.gmra.mxu0 %v352
    %v737 = vpop.f32.mrf.mxu0
    %v738 = vadd.f32 %v162, %v737
    %v739 = vpop.f32.mrf.mxu0
    %740 = vmatprep.mubr.f32.mxu0 0.0
    %741 = vmatmul.mubr.f32.gmra.mxu0 %v355
    %v742 = vpop.f32.mrf.mxu0
    %v743 = vadd.f32 %v162, %v742
    %v744 = vpop.f32.mrf.mxu0
    %745 = vdwg.mxu0
    %v746 = vmax.f32 %v428, 0.0
    %v747 = vmax.f32 %v433, 0.0
    %v748 = vmax.f32 %v438, 0.0
    %v749 = vmax.f32 %v443, 0.0
    %v750 = vmax.f32 %v448, 0.0
    %v751 = vmax.f32 %v453, 0.0
    %v752 = vmax.f32 %v458, 0.0
    %v753 = vmax.f32 %v463, 0.0
    %v754 = vmax.f32 %v468, 0.0
    %v755 = vmax.f32 %v473, 0.0
    %v756 = vmax.f32 %v478, 0.0
    %v757 = vmax.f32 %v483, 0.0
    %v758 = vmax.f32 %v488, 0.0
    %v759 = vmax.f32 %v493, 0.0
    %v760 = vmax.f32 %v498, 0.0
    %v761 = vmax.f32 %v503, 0.0
    %v762 = vmax.f32 %v508, 0.0
    %v763 = vmax.f32 %v513, 0.0
    %v764 = vmax.f32 %v518, 0.0
    %v765 = vmax.f32 %v523, 0.0
    %v766 = vmax.f32 %v528, 0.0
    %v767 = vmax.f32 %v533, 0.0
    %v768 = vmax.f32 %v538, 0.0
    %v769 = vmax.f32 %v543, 0.0
    %v770 = vmax.f32 %v548, 0.0
    %v771 = vmax.f32 %v553, 0.0
    %v772 = vmax.f32 %v558, 0.0
    %v773 = vmax.f32 %v563, 0.0
    %v774 = vmax.f32 %v568, 0.0
    %v775 = vmax.f32 %v573, 0.0
    %v776 = vmax.f32 %v578, 0.0
    %v777 = vmax.f32 %v583, 0.0
    %v778 = vmax.f32 %v588, 0.0
    %v779 = vmax.f32 %v593, 0.0
    %v780 = vmax.f32 %v598, 0.0
    %v781 = vmax.f32 %v603, 0.0
    %v782 = vmax.f32 %v608, 0.0
    %v783 = vmax.f32 %v613, 0.0
    %v784 = vmax.f32 %v618, 0.0
    %v785 = vmax.f32 %v623, 0.0
    %v786 = vmax.f32 %v628, 0.0
    %v787 = vmax.f32 %v633, 0.0
    %v788 = vmax.f32 %v638, 0.0
    %v789 = vmax.f32 %v643, 0.0
    %v790 = vmax.f32 %v648, 0.0
    %v791 = vmax.f32 %v653, 0.0
    %v792 = vmax.f32 %v658, 0.0
    %v793 = vmax.f32 %v663, 0.0
    %v794 = vmax.f32 %v668, 0.0
    %v795 = vmax.f32 %v673, 0.0
    %v796 = vmax.f32 %v678, 0.0
    %v797 = vmax.f32 %v683, 0.0
    %v798 = vmax.f32 %v688, 0.0
    %v799 = vmax.f32 %v693, 0.0
    %v800 = vmax.f32 %v698, 0.0
    %v801 = vmax.f32 %v703, 0.0
    %v802 = vmax.f32 %v708, 0.0
    %v803 = vmax.f32 %v713, 0.0
    %v804 = vmax.f32 %v718, 0.0
    %v805 = vmax.f32 %v723, 0.0
    %v806 = vmax.f32 %v728, 0.0
    %v807 = vmax.f32 %v733, 0.0
    %v808 = vmax.f32 %v738, 0.0
    %v809 = vmax.f32 %v743, 0.0
    %vm810 = vcmask 130048
    %811 = vst.msk [vmem:[#allocation2] sm:$0xff] %vm810, 0.0
    %812 = vst.msk [vmem:[#allocation2 + $0x8] sm:$0xff] %vm810, 0.0
    %vm813 = vcmask 123904
    %814 = vst.msk [vmem:[#allocation2 + $0x10] sm:$0x3] %vm813, 0.0
    %815 = vst.msk [vmem:[#allocation2 + $0x18] sm:$0xff] %vm810, 0.0
    %816 = vst.msk [vmem:[#allocation2 + $0x20] sm:$0xff] %vm810, 0.0
    %817 = vst.msk [vmem:[#allocation2 + $0x28] sm:$0x3] %vm813, 0.0
    %818 = vst.msk [vmem:[#allocation2 + $0x30] sm:$0xff] %vm810, 0.0
    %819 = vst.msk [vmem:[#allocation2 + $0x38] sm:$0xff] %vm810, 0.0
    %820 = vst.msk [vmem:[#allocation2 + $0x40] sm:$0x3] %vm813, 0.0
    %821 = vst.msk [vmem:[#allocation2 + $0x48] sm:$0xff] %vm810, 0.0
    %822 = vst.msk [vmem:[#allocation2 + $0x50] sm:$0xff] %vm810, 0.0
    %823 = vst.msk [vmem:[#allocation2 + $0x58] sm:$0x3] %vm813, 0.0
    %824 = vst.msk [vmem:[#allocation2 + $0x60] sm:$0xff] %vm810, 0.0
    %825 = vst.msk [vmem:[#allocation2 + $0x68] sm:$0xff] %vm810, 0.0
    %826 = vst.msk [vmem:[#allocation2 + $0x70] sm:$0x3] %vm813, 0.0
    %827 = vst.msk [vmem:[#allocation2 + $0x78] sm:$0xff] %vm810, 0.0
    %828 = vst.msk [vmem:[#allocation2 + $0x80] sm:$0xff] %vm810, 0.0
    %829 = vst.msk [vmem:[#allocation2 + $0x88] sm:$0x3] %vm813, 0.0
    %830 = vst.msk [vmem:[#allocation2 + $0x90] sm:$0xff] %vm810, 0.0
    %831 = vst.msk [vmem:[#allocation2 + $0x98] sm:$0xff] %vm810, 0.0
    %832 = vst.msk [vmem:[#allocation2 + $0xa0] sm:$0x3] %vm813, 0.0
    %833 = vst.msk [vmem:[#allocation2 + $0xa8] sm:$0xff] %vm810, 0.0
    %834 = vst.msk [vmem:[#allocation2 + $0xb0] sm:$0xff] %vm810, 0.0
    %835 = vst.msk [vmem:[#allocation2 + $0xb8] sm:$0x3] %vm813, 0.0
    %836 = vst.msk [vmem:[#allocation2 + $0xc0] sm:$0xff] %vm810, 0.0
    %837 = vst.msk [vmem:[#allocation2 + $0xc8] sm:$0xff] %vm810, 0.0
    %838 = vst.msk [vmem:[#allocation2 + $0xd0] sm:$0x3] %vm813, 0.0
    %839 = vst.msk [vmem:[#allocation2 + $0xd8] sm:$0xff] %vm810, 0.0
    %840 = vst.msk [vmem:[#allocation2 + $0xe0] sm:$0xff] %vm810, 0.0
    %841 = vst.msk [vmem:[#allocation2 + $0xe8] sm:$0x3] %vm813, 0.0
    %842 = vst.msk [vmem:[#allocation2 + $0xf0] sm:$0xff] %vm810, 0.0
    %843 = vst.msk [vmem:[#allocation2 + $0xf8] sm:$0xff] %vm810, 0.0
    %844 = vst.msk [vmem:[#allocation2 + $0x100] sm:$0x3] %vm813, 0.0
    %845 = vst.msk [vmem:[#allocation2 + $0x108] sm:$0xff] %vm810, 0.0
    %846 = vst.msk [vmem:[#allocation2 + $0x110] sm:$0xff] %vm810, 0.0
    %847 = vst.msk [vmem:[#allocation2 + $0x118] sm:$0x3] %vm813, 0.0
    %848 = vst.msk [vmem:[#allocation2 + $0x120] sm:$0xff] %vm810, 0.0
    %849 = vst.msk [vmem:[#allocation2 + $0x128] sm:$0xff] %vm810, 0.0
    %850 = vst.msk [vmem:[#allocation2 + $0x130] sm:$0x3] %vm813, 0.0
    %851 = vst.msk [vmem:[#allocation2 + $0x138] sm:$0xff] %vm810, 0.0
    %852 = vst.msk [vmem:[#allocation2 + $0x140] sm:$0xff] %vm810, 0.0
    %853 = vst.msk [vmem:[#allocation2 + $0x148] sm:$0x3] %vm813, 0.0
    %854 = vst.msk [vmem:[#allocation2 + $0x150] sm:$0xff] %vm810, 0.0
    %855 = vst.msk [vmem:[#allocation2 + $0x158] sm:$0xff] %vm810, 0.0
    %856 = vst.msk [vmem:[#allocation2 + $0x160] sm:$0x3] %vm813, 0.0
    %857 = vst.msk [vmem:[#allocation2 + $0x168] sm:$0xff] %vm810, 0.0
    %858 = vst.msk [vmem:[#allocation2 + $0x170] sm:$0xff] %vm810, 0.0
    %859 = vst.msk [vmem:[#allocation2 + $0x178] sm:$0x3] %vm813, 0.0
    %860 = vst.msk [vmem:[#allocation2 + $0x180] sm:$0xff] %vm810, 0.0
    %861 = vst.msk [vmem:[#allocation2 + $0x188] sm:$0xff] %vm810, 0.0
    %862 = vst.msk [vmem:[#allocation2 + $0x190] sm:$0x3] %vm813, 0.0
    %863 = vst.msk [vmem:[#allocation2 + $0x198] sm:$0xff] %vm810, 0.0
    %864 = vst.msk [vmem:[#allocation2 + $0x1a0] sm:$0xff] %vm810, 0.0
    %865 = vst.msk [vmem:[#allocation2 + $0x1a8] sm:$0x3] %vm813, 0.0
    %866 = vst.msk [vmem:[#allocation2 + $0x1b0] sm:$0xff] %vm810, 0.0
    %867 = vst.msk [vmem:[#allocation2 + $0x1b8] sm:$0xff] %vm810, 0.0
    %868 = vst.msk [vmem:[#allocation2 + $0x1c0] sm:$0x3] %vm813, 0.0
    %869 = vst.msk [vmem:[#allocation2 + $0x1c8] sm:$0xff] %vm810, 0.0
    %870 = vst.msk [vmem:[#allocation2 + $0x1d0] sm:$0xff] %vm810, 0.0
    %871 = vst.msk [vmem:[#allocation2 + $0x1d8] sm:$0x3] %vm813, 0.0
    %872 = vst.msk [vmem:[#allocation2 + $0x1e0] sm:$0xff] %vm810, 0.0
    %873 = vst.msk [vmem:[#allocation2 + $0x1e8] sm:$0xff] %vm810, 0.0
    %874 = vst.msk [vmem:[#allocation2 + $0x1f0] sm:$0x3] %vm813, 0.0
    %875 = vst.msk [vmem:[#allocation2 + $0x1f8] sm:$0xff] %vm810, 0.0
    %876 = vst.msk [vmem:[#allocation2 + $0x200] sm:$0xff] %vm810, 0.0
    %877 = vst.msk [vmem:[#allocation2 + $0x208] sm:$0x3] %vm813, 0.0
    %878 = vst.msk [vmem:[#allocation2 + $0x210] sm:$0xff] %vm810, 0.0
    %879 = vst.msk [vmem:[#allocation2 + $0x218] sm:$0xff] %vm810, 0.0
    %880 = vst.msk [vmem:[#allocation2 + $0x220] sm:$0x3] %vm813, 0.0
    %881 = vst.msk [vmem:[#allocation2 + $0x228] sm:$0xff] %vm810, 0.0
    %882 = vst.msk [vmem:[#allocation2 + $0x230] sm:$0xff] %vm810, 0.0
    %883 = vst.msk [vmem:[#allocation2 + $0x238] sm:$0x3] %vm813, 0.0
    %884 = vst.msk [vmem:[#allocation2 + $0x240] sm:$0xff] %vm810, 0.0
    %885 = vst.msk [vmem:[#allocation2 + $0x248] sm:$0xff] %vm810, 0.0
    %886 = vst.msk [vmem:[#allocation2 + $0x250] sm:$0x3] %vm813, 0.0
    %887 = vst.msk [vmem:[#allocation2 + $0x258] sm:$0xff] %vm810, 0.0
    %888 = vst.msk [vmem:[#allocation2 + $0x260] sm:$0xff] %vm810, 0.0
    %889 = vst.msk [vmem:[#allocation2 + $0x268] sm:$0x3] %vm813, 0.0
    %890 = vst.msk [vmem:[#allocation2 + $0x270] sm:$0xff] %vm810, 0.0
    %891 = vst.msk [vmem:[#allocation2 + $0x278] sm:$0xff] %vm810, 0.0
    %892 = vst.msk [vmem:[#allocation2 + $0x280] sm:$0x3] %vm813, 0.0
    %893 = vst.msk [vmem:[#allocation2 + $0x288] sm:$0xff] %vm810, 0.0
    %894 = vst.msk [vmem:[#allocation2 + $0x290] sm:$0xff] %vm810, 0.0
    %895 = vst.msk [vmem:[#allocation2 + $0x298] sm:$0x3] %vm813, 0.0
    %896 = vst.msk [vmem:[#allocation2 + $0x2a0] sm:$0xff] %vm810, 0.0
    %897 = vst.msk [vmem:[#allocation2 + $0x2a8] sm:$0xff] %vm810, 0.0
    %898 = vst.msk [vmem:[#allocation2 + $0x2b0] sm:$0x3] %vm813, 0.0
    %899 = vst.msk [vmem:[#allocation2 + $0x2b8] sm:$0xff] %vm810, 0.0
    %900 = vst.msk [vmem:[#allocation2 + $0x2c0] sm:$0xff] %vm810, 0.0
    %901 = vst.msk [vmem:[#allocation2 + $0x2c8] sm:$0x3] %vm813, 0.0
    %902 = vst.msk [vmem:[#allocation2 + $0x2d0] sm:$0xff] %vm810, 0.0
    %903 = vst.msk [vmem:[#allocation2 + $0x2d8] sm:$0xff] %vm810, 0.0
    %904 = vst.msk [vmem:[#allocation2 + $0x2e0] sm:$0x3] %vm813, 0.0
    %905 = vst.msk [vmem:[#allocation2 + $0x2e8] sm:$0xff] %vm810, 0.0
    %906 = vst.msk [vmem:[#allocation2 + $0x2f0] sm:$0xff] %vm810, 0.0
    %907 = vst.msk [vmem:[#allocation2 + $0x2f8] sm:$0x3] %vm813, 0.0
    %908 = vst.msk [vmem:[#allocation2 + $0x300] sm:$0xff] %vm810, 0.0
    %909 = vst.msk [vmem:[#allocation2 + $0x308] sm:$0xff] %vm810, 0.0
    %910 = vst.msk [vmem:[#allocation2 + $0x310] sm:$0x3] %vm813, 0.0
    %911 = vst.msk [vmem:[#allocation2 + $0x318] sm:$0xff] %vm810, 0.0
    %912 = vst.msk [vmem:[#allocation2 + $0x320] sm:$0xff] %vm810, 0.0
    %913 = vst.msk [vmem:[#allocation2 + $0x328] sm:$0x3] %vm813, 0.0
    %914 = vst.msk [vmem:[#allocation2 + $0x330] sm:$0xff] %vm810, 0.0
    %915 = vst.msk [vmem:[#allocation2 + $0x338] sm:$0xff] %vm810, 0.0
    %916 = vst.msk [vmem:[#allocation2 + $0x340] sm:$0x3] %vm813, 0.0
    %917 = vst.msk [vmem:[#allocation2 + $0x348] sm:$0xff] %vm810, 0.0
    %918 = vst.msk [vmem:[#allocation2 + $0x350] sm:$0xff] %vm810, 0.0
    %919 = vst.msk [vmem:[#allocation2 + $0x358] sm:$0x3] %vm813, 0.0
    %s920 = scalar_lea.vmem [#allocation2], 24
    %921 = vst.msk [vmem:[%s920 + $0x1] sm:$0xff] %vm810, %v746
    %922 = vst.msk [vmem:[%s920 + $0x9] sm:$0xff] %vm810, %v747
    %923 = vst.msk [vmem:[%s920 + $0x19] sm:$0xff] %vm810, %v748
    %924 = vst.msk [vmem:[%s920 + $0x21] sm:$0xff] %vm810, %v749
    %925 = vst.msk [vmem:[%s920 + $0x31] sm:$0xff] %vm810, %v750
    %926 = vst.msk [vmem:[%s920 + $0x39] sm:$0xff] %vm810, %v751
    %927 = vst.msk [vmem:[%s920 + $0x49] sm:$0xff] %vm810, %v752
    %928 = vst.msk [vmem:[%s920 + $0x51] sm:$0xff] %vm810, %v753
    %929 = vst.msk [vmem:[%s920 + $0x61] sm:$0xff] %vm810, %v754
    %930 = vst.msk [vmem:[%s920 + $0x69] sm:$0xff] %vm810, %v755
    %931 = vst.msk [vmem:[%s920 + $0x79] sm:$0xff] %vm810, %v756
    %932 = vst.msk [vmem:[%s920 + $0x81] sm:$0xff] %vm810, %v757
    %933 = vst.msk [vmem:[%s920 + $0x91] sm:$0xff] %vm810, %v758
    %934 = vst.msk [vmem:[%s920 + $0x99] sm:$0xff] %vm810, %v759
    %935 = vst.msk [vmem:[%s920 + $0xa9] sm:$0xff] %vm810, %v760
    %936 = vst.msk [vmem:[%s920 + $0xb1] sm:$0xff] %vm810, %v761
    %937 = vst.msk [vmem:[%s920 + $0xc1] sm:$0xff] %vm810, %v762
    %938 = vst.msk [vmem:[%s920 + $0xc9] sm:$0xff] %vm810, %v763
    %939 = vst.msk [vmem:[%s920 + $0xd9] sm:$0xff] %vm810, %v764
    %940 = vst.msk [vmem:[%s920 + $0xe1] sm:$0xff] %vm810, %v765
    %941 = vst.msk [vmem:[%s920 + $0xf1] sm:$0xff] %vm810, %v766
    %942 = vst.msk [vmem:[%s920 + $0xf9] sm:$0xff] %vm810, %v767
    %943 = vst.msk [vmem:[%s920 + $0x109] sm:$0xff] %vm810, %v768
    %944 = vst.msk [vmem:[%s920 + $0x111] sm:$0xff] %vm810, %v769
    %945 = vst.msk [vmem:[%s920 + $0x121] sm:$0xff] %vm810, %v770
    %946 = vst.msk [vmem:[%s920 + $0x129] sm:$0xff] %vm810, %v771
    %947 = vst.msk [vmem:[%s920 + $0x139] sm:$0xff] %vm810, %v772
    %948 = vst.msk [vmem:[%s920 + $0x141] sm:$0xff] %vm810, %v773
    %949 = vst.msk [vmem:[%s920 + $0x151] sm:$0xff] %vm810, %v774
    %950 = vst.msk [vmem:[%s920 + $0x159] sm:$0xff] %vm810, %v775
    %951 = vst.msk [vmem:[%s920 + $0x169] sm:$0xff] %vm810, %v776
    %952 = vst.msk [vmem:[%s920 + $0x171] sm:$0xff] %vm810, %v777
    %953 = vst.msk [vmem:[%s920 + $0x1b1] sm:$0xff] %vm810, %v778
    %954 = vst.msk [vmem:[%s920 + $0x1b9] sm:$0xff] %vm810, %v779
    %955 = vst.msk [vmem:[%s920 + $0x1c9] sm:$0xff] %vm810, %v780
    %956 = vst.msk [vmem:[%s920 + $0x1d1] sm:$0xff] %vm810, %v781
    %957 = vst.msk [vmem:[%s920 + $0x1e1] sm:$0xff] %vm810, %v782
    %958 = vst.msk [vmem:[%s920 + $0x1e9] sm:$0xff] %vm810, %v783
    %959 = vst.msk [vmem:[%s920 + $0x1f9] sm:$0xff] %vm810, %v784
    %960 = vst.msk [vmem:[%s920 + $0x201] sm:$0xff] %vm810, %v785
    %961 = vst.msk [vmem:[%s920 + $0x211] sm:$0xff] %vm810, %v786
    %962 = vst.msk [vmem:[%s920 + $0x219] sm:$0xff] %vm810, %v787
    %963 = vst.msk [vmem:[%s920 + $0x229] sm:$0xff] %vm810, %v788
    %964 = vst.msk [vmem:[%s920 + $0x231] sm:$0xff] %vm810, %v789
    %965 = vst.msk [vmem:[%s920 + $0x241] sm:$0xff] %vm810, %v790
    %966 = vst.msk [vmem:[%s920 + $0x249] sm:$0xff] %vm810, %v791
    %967 = vst.msk [vmem:[%s920 + $0x259] sm:$0xff] %vm810, %v792
    %968 = vst.msk [vmem:[%s920 + $0x261] sm:$0xff] %vm810, %v793
    %969 = vst.msk [vmem:[%s920 + $0x271] sm:$0xff] %vm810, %v794
    %970 = vst.msk [vmem:[%s920 + $0x279] sm:$0xff] %vm810, %v795
    %971 = vst.msk [vmem:[%s920 + $0x289] sm:$0xff] %vm810, %v796
    %972 = vst.msk [vmem:[%s920 + $0x291] sm:$0xff] %vm810, %v797
    %973 = vst.msk [vmem:[%s920 + $0x2a1] sm:$0xff] %vm810, %v798
    %974 = vst.msk [vmem:[%s920 + $0x2a9] sm:$0xff] %vm810, %v799
    %975 = vst.msk [vmem:[%s920 + $0x2b9] sm:$0xff] %vm810, %v800
    %976 = vst.msk [vmem:[%s920 + $0x2c1] sm:$0xff] %vm810, %v801
    %977 = vst.msk [vmem:[%s920 + $0x2d1] sm:$0xff] %vm810, %v802
    %978 = vst.msk [vmem:[%s920 + $0x2d9] sm:$0xff] %vm810, %v803
    %979 = vst.msk [vmem:[%s920 + $0x2e9] sm:$0xff] %vm810, %v804
    %980 = vst.msk [vmem:[%s920 + $0x2f1] sm:$0xff] %vm810, %v805
    %981 = vst.msk [vmem:[%s920 + $0x301] sm:$0xff] %vm810, %v806
    %982 = vst.msk [vmem:[%s920 + $0x309] sm:$0xff] %vm810, %v807
    %983 = vst.msk [vmem:[%s920 + $0x319] sm:$0xff] %vm810, %v808
    %984 = vst.msk [vmem:[%s920 + $0x321] sm:$0xff] %vm810, %v809
    %v985 = vld [vmem:[#allocation2] sm:$0xff]
    %v986 = vld [vmem:[#allocation2 + $0x8] sm:$0xff]
    %v987 = vld [vmem:[#allocation2 + $0x18] sm:$0xff]
    %v988 = vld [vmem:[#allocation2 + $0x20] sm:$0xff]
    %v989 = vld [vmem:[#allocation2 + $0x30] sm:$0xff]
    %v990 = vld [vmem:[#allocation2 + $0x38] sm:$0xff]
    %v991 = vld [vmem:[#allocation2 + $0x48] sm:$0xff]
    %v992 = vld [vmem:[#allocation2 + $0x50] sm:$0xff]
    %v993 = vld [vmem:[#allocation2 + $0x60] sm:$0xff]
    %v994 = vld [vmem:[#allocation2 + $0x68] sm:$0xff]
    %v995 = vld [vmem:[#allocation2 + $0x78] sm:$0xff]
    %v996 = vld [vmem:[#allocation2 + $0x80] sm:$0xff]
    %v997 = vld [vmem:[#allocation2 + $0x90] sm:$0xff]
    %v998 = vld [vmem:[#allocation2 + $0x98] sm:$0xff]
    %v999 = vld [vmem:[#allocation2 + $0xa8] sm:$0xff]
    %v1000 = vld [vmem:[#allocation2 + $0xb0] sm:$0xff]
    %v1001 = vld [vmem:[#allocation2 + $0xc0] sm:$0xff]
    %v1002 = vld [vmem:[#allocation2 + $0xc8] sm:$0xff]
    %v1003 = vld [vmem:[#allocation2 + $0xd8] sm:$0xff]
    %v1004 = vld [vmem:[#allocation2 + $0xe0] sm:$0xff]
    %v1005 = vld [vmem:[#allocation2 + $0xf0] sm:$0xff]
    %v1006 = vld [vmem:[#allocation2 + $0xf8] sm:$0xff]
    %v1007 = vld [vmem:[#allocation2 + $0x108] sm:$0xff]
    %v1008 = vld [vmem:[#allocation2 + $0x110] sm:$0xff]
    %v1009 = vld [vmem:[#allocation2 + $0x120] sm:$0xff]
    %v1010 = vld [vmem:[#allocation2 + $0x128] sm:$0xff]
    %v1011 = vld [vmem:[#allocation2 + $0x138] sm:$0xff]
    %v1012 = vld [vmem:[#allocation2 + $0x140] sm:$0xff]
    %v1013 = vld [vmem:[#allocation2 + $0x150] sm:$0xff]
    %v1014 = vld [vmem:[#allocation2 + $0x158] sm:$0xff]
    %v1015 = vld [vmem:[#allocation2 + $0x168] sm:$0xff]
    %v1016 = vld [vmem:[#allocation2 + $0x170] sm:$0xff]
    %v1017 = vld [vmem:[#allocation2 + $0x1b0] sm:$0xff]
    %v1018 = vld [vmem:[#allocation2 + $0x1b8] sm:$0xff]
    %v1019 = vld [vmem:[#allocation2 + $0x1c8] sm:$0xff]
    %v1020 = vld [vmem:[#allocation2 + $0x1d0] sm:$0xff]
    %v1021 = vld [vmem:[#allocation2 + $0x1e0] sm:$0xff]
    %v1022 = vld [vmem:[#allocation2 + $0x1e8] sm:$0xff]
    %v1023 = vld [vmem:[#allocation2 + $0x1f8] sm:$0xff]
    %v1024 = vld [vmem:[#allocation2 + $0x200] sm:$0xff]
    %v1025 = vld [vmem:[#allocation2 + $0x210] sm:$0xff]
    %v1026 = vld [vmem:[#allocation2 + $0x218] sm:$0xff]
    %v1027 = vld [vmem:[#allocation2 + $0x228] sm:$0xff]
    %v1028 = vld [vmem:[#allocation2 + $0x230] sm:$0xff]
    %v1029 = vld [vmem:[#allocation2 + $0x240] sm:$0xff]
    %v1030 = vld [vmem:[#allocation2 + $0x248] sm:$0xff]
    %v1031 = vld [vmem:[#allocation2 + $0x258] sm:$0xff]
    %v1032 = vld [vmem:[#allocation2 + $0x260] sm:$0xff]
    %v1033 = vld [vmem:[#allocation2 + $0x270] sm:$0xff]
    %v1034 = vld [vmem:[#allocation2 + $0x278] sm:$0xff]
    %v1035 = vld [vmem:[#allocation2 + $0x288] sm:$0xff]
    %v1036 = vld [vmem:[#allocation2 + $0x290] sm:$0xff]
    %v1037 = vld [vmem:[#allocation2 + $0x2a0] sm:$0xff]
    %v1038 = vld [vmem:[#allocation2 + $0x2a8] sm:$0xff]
    %v1039 = vld [vmem:[#allocation2 + $0x2b8] sm:$0xff]
    %v1040 = vld [vmem:[#allocation2 + $0x2c0] sm:$0xff]
    %v1041 = vld [vmem:[#allocation2 + $0x2d0] sm:$0xff]
    %v1042 = vld [vmem:[#allocation2 + $0x2d8] sm:$0xff]
    %v1043 = vld [vmem:[#allocation2 + $0x2e8] sm:$0xff]
    %v1044 = vld [vmem:[#allocation2 + $0x2f0] sm:$0xff]
    %v1045 = vld [vmem:[#allocation2 + $0x300] sm:$0xff]
    %v1046 = vld [vmem:[#allocation2 + $0x308] sm:$0xff]
    %v1047 = vld [vmem:[#allocation2 + $0x318] sm:$0xff]
    %v1048 = vld [vmem:[#allocation2 + $0x320] sm:$0xff]
    %v1049 = vld [vmem:[#allocation2 + $0x1] sm:$0xff]
    %v1050 = vld [vmem:[#allocation2 + $0x9] sm:$0xff]
    %v1051 = vld [vmem:[#allocation2 + $0x19] sm:$0xff]
    %v1052 = vld [vmem:[#allocation2 + $0x21] sm:$0xff]
    %v1053 = vld [vmem:[#allocation2 + $0x31] sm:$0xff]
    %v1054 = vld [vmem:[#allocation2 + $0x39] sm:$0xff]
    %v1055 = vld [vmem:[#allocation2 + $0x49] sm:$0xff]
    %v1056 = vld [vmem:[#allocation2 + $0x51] sm:$0xff]
    %v1057 = vld [vmem:[#allocation2 + $0x61] sm:$0xff]
    %v1058 = vld [vmem:[#allocation2 + $0x69] sm:$0xff]
    %v1059 = vld [vmem:[#allocation2 + $0x79] sm:$0xff]
    %v1060 = vld [vmem:[#allocation2 + $0x81] sm:$0xff]
    %v1061 = vld [vmem:[#allocation2 + $0x91] sm:$0xff]
    %v1062 = vld [vmem:[#allocation2 + $0x99] sm:$0xff]
    %v1063 = vld [vmem:[#allocation2 + $0xa9] sm:$0xff]
    %v1064 = vld [vmem:[#allocation2 + $0xb1] sm:$0xff]
    %v1065 = vld [vmem:[#allocation2 + $0xc1] sm:$0xff]
    %v1066 = vld [vmem:[#allocation2 + $0xc9] sm:$0xff]
    %v1067 = vld [vmem:[#allocation2 + $0xd9] sm:$0xff]
    %v1068 = vld [vmem:[#allocation2 + $0xe1] sm:$0xff]
    %v1069 = vld [vmem:[#allocation2 + $0xf1] sm:$0xff]
    %v1070 = vld [vmem:[#allocation2 + $0xf9] sm:$0xff]
    %v1071 = vld [vmem:[#allocation2 + $0x109] sm:$0xff]
    %v1072 = vld [vmem:[#allocation2 + $0x111] sm:$0xff]
    %v1073 = vld [vmem:[#allocation2 + $0x121] sm:$0xff]
    %v1074 = vld [vmem:[#allocation2 + $0x129] sm:$0xff]
    %v1075 = vld [vmem:[#allocation2 + $0x139] sm:$0xff]
    %v1076 = vld [vmem:[#allocation2 + $0x141] sm:$0xff]
    %v1077 = vld [vmem:[#allocation2 + $0x151] sm:$0xff]
    %v1078 = vld [vmem:[#allocation2 + $0x159] sm:$0xff]
    %v1079 = vld [vmem:[#allocation2 + $0x169] sm:$0xff]
    %v1080 = vld [vmem:[#allocation2 + $0x171] sm:$0xff]
    %v1081 = vld [vmem:[#allocation2 + $0x1b1] sm:$0xff]
    %v1082 = vld [vmem:[#allocation2 + $0x1b9] sm:$0xff]
    %v1083 = vld [vmem:[#allocation2 + $0x1c9] sm:$0xff]
    %v1084 = vld [vmem:[#allocation2 + $0x1d1] sm:$0xff]
    %v1085 = vld [vmem:[#allocation2 + $0x1e1] sm:$0xff]
    %v1086 = vld [vmem:[#allocation2 + $0x1e9] sm:$0xff]
    %v1087 = vld [vmem:[#allocation2 + $0x1f9] sm:$0xff]
    %v1088 = vld [vmem:[#allocation2 + $0x201] sm:$0xff]
    %v1089 = vld [vmem:[#allocation2 + $0x211] sm:$0xff]
    %v1090 = vld [vmem:[#allocation2 + $0x219] sm:$0xff]
    %v1091 = vld [vmem:[#allocation2 + $0x229] sm:$0xff]
    %v1092 = vld [vmem:[#allocation2 + $0x231] sm:$0xff]
    %v1093 = vld [vmem:[#allocation2 + $0x241] sm:$0xff]
    %v1094 = vld [vmem:[#allocation2 + $0x249] sm:$0xff]
    %v1095 = vld [vmem:[#allocation2 + $0x259] sm:$0xff]
    %v1096 = vld [vmem:[#allocation2 + $0x261] sm:$0xff]
    %v1097 = vld [vmem:[#allocation2 + $0x271] sm:$0xff]
    %v1098 = vld [vmem:[#allocation2 + $0x279] sm:$0xff]
    %v1099 = vld [vmem:[#allocation2 + $0x289] sm:$0xff]
    %v1100 = vld [vmem:[#allocation2 + $0x291] sm:$0xff]
    %v1101 = vld [vmem:[#allocation2 + $0x2a1] sm:$0xff]
    %v1102 = vld [vmem:[#allocation2 + $0x2a9] sm:$0xff]
    %v1103 = vld [vmem:[#allocation2 + $0x2b9] sm:$0xff]
    %v1104 = vld [vmem:[#allocation2 + $0x2c1] sm:$0xff]
    %v1105 = vld [vmem:[#allocation2 + $0x2d1] sm:$0xff]
    %v1106 = vld [vmem:[#allocation2 + $0x2d9] sm:$0xff]
    %v1107 = vld [vmem:[#allocation2 + $0x2e9] sm:$0xff]
    %v1108 = vld [vmem:[#allocation2 + $0x2f1] sm:$0xff]
    %v1109 = vld [vmem:[#allocation2 + $0x301] sm:$0xff]
    %v1110 = vld [vmem:[#allocation2 + $0x309] sm:$0xff]
    %v1111 = vld [vmem:[#allocation2 + $0x319] sm:$0xff]
    %v1112 = vld [vmem:[#allocation2 + $0x321] sm:$0xff]
    %v1113 = vld [vmem:[#allocation2 + $0x2] sm:$0xff]
    %v1114 = vld [vmem:[#allocation2 + $0xa] sm:$0xff]
    %v1115 = vld [vmem:[#allocation2 + $0x1a] sm:$0xff]
    %v1116 = vld [vmem:[#allocation2 + $0x22] sm:$0xff]
    %v1117 = vld [vmem:[#allocation2 + $0x32] sm:$0xff]
    %v1118 = vld [vmem:[#allocation2 + $0x3a] sm:$0xff]
    %v1119 = vld [vmem:[#allocation2 + $0x4a] sm:$0xff]
    %v1120 = vld [vmem:[#allocation2 + $0x52] sm:$0xff]
    %v1121 = vld [vmem:[#allocation2 + $0x62] sm:$0xff]
    %v1122 = vld [vmem:[#allocation2 + $0x6a] sm:$0xff]
    %v1123 = vld [vmem:[#allocation2 + $0x7a] sm:$0xff]
    %v1124 = vld [vmem:[#allocation2 + $0x82] sm:$0xff]
    %v1125 = vld [vmem:[#allocation2 + $0x92] sm:$0xff]
    %v1126 = vld [vmem:[#allocation2 + $0x9a] sm:$0xff]
    %v1127 = vld [vmem:[#allocation2 + $0xaa] sm:$0xff]
    %v1128 = vld [vmem:[#allocation2 + $0xb2] sm:$0xff]
    %v1129 = vld [vmem:[#allocation2 + $0xc2] sm:$0xff]
    %v1130 = vld [vmem:[#allocation2 + $0xca] sm:$0xff]
    %v1131 = vld [vmem:[#allocation2 + $0xda] sm:$0xff]
    %v1132 = vld [vmem:[#allocation2 + $0xe2] sm:$0xff]
    %v1133 = vld [vmem:[#allocation2 + $0xf2] sm:$0xff]
    %v1134 = vld [vmem:[#allocation2 + $0xfa] sm:$0xff]
    %v1135 = vld [vmem:[#allocation2 + $0x10a] sm:$0xff]
    %v1136 = vld [vmem:[#allocation2 + $0x112] sm:$0xff]
    %v1137 = vld [vmem:[#allocation2 + $0x122] sm:$0xff]
    %v1138 = vld [vmem:[#allocation2 + $0x12a] sm:$0xff]
    %v1139 = vld [vmem:[#allocation2 + $0x13a] sm:$0xff]
    %v1140 = vld [vmem:[#allocation2 + $0x142] sm:$0xff]
    %v1141 = vld [vmem:[#allocation2 + $0x152] sm:$0xff]
    %v1142 = vld [vmem:[#allocation2 + $0x15a] sm:$0xff]
    %v1143 = vld [vmem:[#allocation2 + $0x16a] sm:$0xff]
    %v1144 = vld [vmem:[#allocation2 + $0x172] sm:$0xff]
    %v1145 = vld [vmem:[#allocation2 + $0x1b2] sm:$0xff]
    %v1146 = vld [vmem:[#allocation2 + $0x1ba] sm:$0xff]
    %v1147 = vld [vmem:[#allocation2 + $0x1ca] sm:$0xff]
    %v1148 = vld [vmem:[#allocation2 + $0x1d2] sm:$0xff]
    %v1149 = vld [vmem:[#allocation2 + $0x1e2] sm:$0xff]
    %v1150 = vld [vmem:[#allocation2 + $0x1ea] sm:$0xff]
    %v1151 = vld [vmem:[#allocation2 + $0x1fa] sm:$0xff]
    %v1152 = vld [vmem:[#allocation2 + $0x202] sm:$0xff]
    %v1153 = vld [vmem:[#allocation2 + $0x212] sm:$0xff]
    %v1154 = vld [vmem:[#allocation2 + $0x21a] sm:$0xff]
    %v1155 = vld [vmem:[#allocation2 + $0x22a] sm:$0xff]
    %v1156 = vld [vmem:[#allocation2 + $0x232] sm:$0xff]
    %v1157 = vld [vmem:[#allocation2 + $0x242] sm:$0xff]
    %v1158 = vld [vmem:[#allocation2 + $0x24a] sm:$0xff]
    %v1159 = vld [vmem:[#allocation2 + $0x25a] sm:$0xff]
    %v1160 = vld [vmem:[#allocation2 + $0x262] sm:$0xff]
    %v1161 = vld [vmem:[#allocation2 + $0x272] sm:$0xff]
    %v1162 = vld [vmem:[#allocation2 + $0x27a] sm:$0xff]
    %v1163 = vld [vmem:[#allocation2 + $0x28a] sm:$0xff]
    %v1164 = vld [vmem:[#allocation2 + $0x292] sm:$0xff]
    %v1165 = vld [vmem:[#allocation2 + $0x2a2] sm:$0xff]
    %v1166 = vld [vmem:[#allocation2 + $0x2aa] sm:$0xff]
    %v1167 = vld [vmem:[#allocation2 + $0x2ba] sm:$0xff]
    %v1168 = vld [vmem:[#allocation2 + $0x2c2] sm:$0xff]
    %v1169 = vld [vmem:[#allocation2 + $0x2d2] sm:$0xff]
    %v1170 = vld [vmem:[#allocation2 + $0x2da] sm:$0xff]
    %v1171 = vld [vmem:[#allocation2 + $0x2ea] sm:$0xff]
    %v1172 = vld [vmem:[#allocation2 + $0x2f2] sm:$0xff]
    %v1173 = vld [vmem:[#allocation2 + $0x302] sm:$0xff]
    %v1174 = vld [vmem:[#allocation2 + $0x30a] sm:$0xff]
    %v1175 = vld [vmem:[#allocation2 + $0x31a] sm:$0xff]
    %v1176 = vld [vmem:[#allocation2 + $0x322] sm:$0xff]
    %v1177 = vld [vmem:[%s920] sm:$0xff]
    %v1178 = vld [vmem:[%s920 + $0x8] sm:$0xff]
    %v1179 = vld [vmem:[%s920 + $0x18] sm:$0xff]
    %v1180 = vld [vmem:[%s920 + $0x20] sm:$0xff]
    %v1181 = vld [vmem:[%s920 + $0x30] sm:$0xff]
    %v1182 = vld [vmem:[%s920 + $0x38] sm:$0xff]
    %v1183 = vld [vmem:[%s920 + $0x48] sm:$0xff]
    %v1184 = vld [vmem:[%s920 + $0x50] sm:$0xff]
    %v1185 = vld [vmem:[%s920 + $0x60] sm:$0xff]
    %v1186 = vld [vmem:[%s920 + $0x68] sm:$0xff]
    %v1187 = vld [vmem:[%s920 + $0x78] sm:$0xff]
    %v1188 = vld [vmem:[%s920 + $0x80] sm:$0xff]
    %v1189 = vld [vmem:[%s920 + $0x90] sm:$0xff]
    %v1190 = vld [vmem:[%s920 + $0x98] sm:$0xff]
    %v1191 = vld [vmem:[%s920 + $0xa8] sm:$0xff]
    %v1192 = vld [vmem:[%s920 + $0xb0] sm:$0xff]
    %v1193 = vld [vmem:[%s920 + $0xc0] sm:$0xff]
    %v1194 = vld [vmem:[%s920 + $0xc8] sm:$0xff]
    %v1195 = vld [vmem:[%s920 + $0xd8] sm:$0xff]
    %v1196 = vld [vmem:[%s920 + $0xe0] sm:$0xff]
    %v1197 = vld [vmem:[%s920 + $0xf0] sm:$0xff]
    %v1198 = vld [vmem:[%s920 + $0xf8] sm:$0xff]
    %v1199 = vld [vmem:[%s920 + $0x108] sm:$0xff]
    %v1200 = vld [vmem:[%s920 + $0x110] sm:$0xff]
    %v1201 = vld [vmem:[%s920 + $0x120] sm:$0xff]
    %v1202 = vld [vmem:[%s920 + $0x128] sm:$0xff]
    %v1203 = vld [vmem:[%s920 + $0x138] sm:$0xff]
    %v1204 = vld [vmem:[%s920 + $0x140] sm:$0xff]
    %v1205 = vld [vmem:[%s920 + $0x150] sm:$0xff]
    %v1206 = vld [vmem:[%s920 + $0x158] sm:$0xff]
    %v1207 = vld [vmem:[%s920 + $0x168] sm:$0xff]
    %v1208 = vld [vmem:[%s920 + $0x170] sm:$0xff]
    %v1209 = vld [vmem:[%s920 + $0x1b0] sm:$0xff]
    %v1210 = vld [vmem:[%s920 + $0x1b8] sm:$0xff]
    %v1211 = vld [vmem:[%s920 + $0x1c8] sm:$0xff]
    %v1212 = vld [vmem:[%s920 + $0x1d0] sm:$0xff]
    %v1213 = vld [vmem:[%s920 + $0x1e0] sm:$0xff]
    %v1214 = vld [vmem:[%s920 + $0x1e8] sm:$0xff]
    %v1215 = vld [vmem:[%s920 + $0x1f8] sm:$0xff]
    %v1216 = vld [vmem:[%s920 + $0x200] sm:$0xff]
    %v1217 = vld [vmem:[%s920 + $0x210] sm:$0xff]
    %v1218 = vld [vmem:[%s920 + $0x218] sm:$0xff]
    %v1219 = vld [vmem:[%s920 + $0x228] sm:$0xff]
    %v1220 = vld [vmem:[%s920 + $0x230] sm:$0xff]
    %v1221 = vld [vmem:[%s920 + $0x240] sm:$0xff]
    %v1222 = vld [vmem:[%s920 + $0x248] sm:$0xff]
    %v1223 = vld [vmem:[%s920 + $0x258] sm:$0xff]
    %v1224 = vld [vmem:[%s920 + $0x260] sm:$0xff]
    %v1225 = vld [vmem:[%s920 + $0x270] sm:$0xff]
    %v1226 = vld [vmem:[%s920 + $0x278] sm:$0xff]
    %v1227 = vld [vmem:[%s920 + $0x288] sm:$0xff]
    %v1228 = vld [vmem:[%s920 + $0x290] sm:$0xff]
    %v1229 = vld [vmem:[%s920 + $0x2a0] sm:$0xff]
    %v1230 = vld [vmem:[%s920 + $0x2a8] sm:$0xff]
    %v1231 = vld [vmem:[%s920 + $0x2b8] sm:$0xff]
    %v1232 = vld [vmem:[%s920 + $0x2c0] sm:$0xff]
    %v1233 = vld [vmem:[%s920 + $0x2d0] sm:$0xff]
    %v1234 = vld [vmem:[%s920 + $0x2d8] sm:$0xff]
    %v1235 = vld [vmem:[%s920 + $0x2e8] sm:$0xff]
    %v1236 = vld [vmem:[%s920 + $0x2f0] sm:$0xff]
    %v1237 = vld [vmem:[%s920 + $0x300] sm:$0xff]
    %v1238 = vld [vmem:[%s920 + $0x308] sm:$0xff]
    %v1239 = vld [vmem:[%s920 + $0x318] sm:$0xff]
    %v1240 = vld [vmem:[%s920 + $0x320] sm:$0xff]
    %v1241 = vld [vmem:[%s920 + $0x1] sm:$0xff]
    %v1242 = vld [vmem:[%s920 + $0x9] sm:$0xff]
    %v1243 = vld [vmem:[%s920 + $0x19] sm:$0xff]
    %v1244 = vld [vmem:[%s920 + $0x21] sm:$0xff]
    %v1245 = vld [vmem:[%s920 + $0x31] sm:$0xff]
    %v1246 = vld [vmem:[%s920 + $0x39] sm:$0xff]
    %v1247 = vld [vmem:[%s920 + $0x49] sm:$0xff]
    %v1248 = vld [vmem:[%s920 + $0x51] sm:$0xff]
    %v1249 = vld [vmem:[%s920 + $0x61] sm:$0xff]
    %v1250 = vld [vmem:[%s920 + $0x69] sm:$0xff]
    %v1251 = vld [vmem:[%s920 + $0x79] sm:$0xff]
    %v1252 = vld [vmem:[%s920 + $0x81] sm:$0xff]
    %v1253 = vld [vmem:[%s920 + $0x91] sm:$0xff]
    %v1254 = vld [vmem:[%s920 + $0x99] sm:$0xff]
    %v1255 = vld [vmem:[%s920 + $0xa9] sm:$0xff]
    %v1256 = vld [vmem:[%s920 + $0xb1] sm:$0xff]
    %v1257 = vld [vmem:[%s920 + $0xc1] sm:$0xff]
    %v1258 = vld [vmem:[%s920 + $0xc9] sm:$0xff]
    %v1259 = vld [vmem:[%s920 + $0xd9] sm:$0xff]
    %v1260 = vld [vmem:[%s920 + $0xe1] sm:$0xff]
    %v1261 = vld [vmem:[%s920 + $0xf1] sm:$0xff]
    %v1262 = vld [vmem:[%s920 + $0xf9] sm:$0xff]
    %v1263 = vld [vmem:[%s920 + $0x109] sm:$0xff]
    %v1264 = vld [vmem:[%s920 + $0x111] sm:$0xff]
    %v1265 = vld [vmem:[%s920 + $0x121] sm:$0xff]
    %v1266 = vld [vmem:[%s920 + $0x129] sm:$0xff]
    %v1267 = vld [vmem:[%s920 + $0x139] sm:$0xff]
    %v1268 = vld [vmem:[%s920 + $0x141] sm:$0xff]
    %v1269 = vld [vmem:[%s920 + $0x151] sm:$0xff]
    %v1270 = vld [vmem:[%s920 + $0x159] sm:$0xff]
    %v1271 = vld [vmem:[%s920 + $0x169] sm:$0xff]
    %v1272 = vld [vmem:[%s920 + $0x171] sm:$0xff]
    %v1273 = vld [vmem:[%s920 + $0x1b1] sm:$0xff]
    %v1274 = vld [vmem:[%s920 + $0x1b9] sm:$0xff]
    %v1275 = vld [vmem:[%s920 + $0x1c9] sm:$0xff]
    %v1276 = vld [vmem:[%s920 + $0x1d1] sm:$0xff]
    %v1277 = vld [vmem:[%s920 + $0x1e1] sm:$0xff]
    %v1278 = vld [vmem:[%s920 + $0x1e9] sm:$0xff]
    %v1279 = vld [vmem:[%s920 + $0x1f9] sm:$0xff]
    %v1280 = vld [vmem:[%s920 + $0x201] sm:$0xff]
    %v1281 = vld [vmem:[%s920 + $0x211] sm:$0xff]
    %v1282 = vld [vmem:[%s920 + $0x219] sm:$0xff]
    %v1283 = vld [vmem:[%s920 + $0x229] sm:$0xff]
    %v1284 = vld [vmem:[%s920 + $0x231] sm:$0xff]
    %v1285 = vld [vmem:[%s920 + $0x241] sm:$0xff]
    %v1286 = vld [vmem:[%s920 + $0x249] sm:$0xff]
    %v1287 = vld [vmem:[%s920 + $0x259] sm:$0xff]
    %v1288 = vld [vmem:[%s920 + $0x261] sm:$0xff]
    %v1289 = vld [vmem:[%s920 + $0x271] sm:$0xff]
    %v1290 = vld [vmem:[%s920 + $0x279] sm:$0xff]
    %v1291 = vld [vmem:[%s920 + $0x289] sm:$0xff]
    %v1292 = vld [vmem:[%s920 + $0x291] sm:$0xff]
    %v1293 = vld [vmem:[%s920 + $0x2a1] sm:$0xff]
    %v1294 = vld [vmem:[%s920 + $0x2a9] sm:$0xff]
    %v1295 = vld [vmem:[%s920 + $0x2b9] sm:$0xff]
    %v1296 = vld [vmem:[%s920 + $0x2c1] sm:$0xff]
    %v1297 = vld [vmem:[%s920 + $0x2d1] sm:$0xff]
    %v1298 = vld [vmem:[%s920 + $0x2d9] sm:$0xff]
    %v1299 = vld [vmem:[%s920 + $0x2e9] sm:$0xff]
    %v1300 = vld [vmem:[%s920 + $0x2f1] sm:$0xff]
    %v1301 = vld [vmem:[%s920 + $0x301] sm:$0xff]
    %v1302 = vld [vmem:[%s920 + $0x309] sm:$0xff]
    %v1303 = vld [vmem:[%s920 + $0x319] sm:$0xff]
    %v1304 = vld [vmem:[%s920 + $0x321] sm:$0xff]
    %v1305 = vld [vmem:[%s920 + $0x2] sm:$0xff]
    %v1306 = vld [vmem:[%s920 + $0xa] sm:$0xff]
    %v1307 = vld [vmem:[%s920 + $0x1a] sm:$0xff]
    %v1308 = vld [vmem:[%s920 + $0x22] sm:$0xff]
    %v1309 = vld [vmem:[%s920 + $0x32] sm:$0xff]
    %v1310 = vld [vmem:[%s920 + $0x3a] sm:$0xff]
    %v1311 = vld [vmem:[%s920 + $0x4a] sm:$0xff]
    %v1312 = vld [vmem:[%s920 + $0x52] sm:$0xff]
    %v1313 = vld [vmem:[%s920 + $0x62] sm:$0xff]
    %v1314 = vld [vmem:[%s920 + $0x6a] sm:$0xff]
    %v1315 = vld [vmem:[%s920 + $0x7a] sm:$0xff]
    %v1316 = vld [vmem:[%s920 + $0x82] sm:$0xff]
    %v1317 = vld [vmem:[%s920 + $0x92] sm:$0xff]
    %v1318 = vld [vmem:[%s920 + $0x9a] sm:$0xff]
    %v1319 = vld [vmem:[%s920 + $0xaa] sm:$0xff]
    %v1320 = vld [vmem:[%s920 + $0xb2] sm:$0xff]
    %v1321 = vld [vmem:[%s920 + $0xc2] sm:$0xff]
    %v1322 = vld [vmem:[%s920 + $0xca] sm:$0xff]
    %v1323 = vld [vmem:[%s920 + $0xda] sm:$0xff]
    %v1324 = vld [vmem:[%s920 + $0xe2] sm:$0xff]
    %v1325 = vld [vmem:[%s920 + $0xf2] sm:$0xff]
    %v1326 = vld [vmem:[%s920 + $0xfa] sm:$0xff]
    %v1327 = vld [vmem:[%s920 + $0x10a] sm:$0xff]
    %v1328 = vld [vmem:[%s920 + $0x112] sm:$0xff]
    %v1329 = vld [vmem:[%s920 + $0x122] sm:$0xff]
    %v1330 = vld [vmem:[%s920 + $0x12a] sm:$0xff]
    %v1331 = vld [vmem:[%s920 + $0x13a] sm:$0xff]
    %v1332 = vld [vmem:[%s920 + $0x142] sm:$0xff]
    %v1333 = vld [vmem:[%s920 + $0x152] sm:$0xff]
    %v1334 = vld [vmem:[%s920 + $0x15a] sm:$0xff]
    %v1335 = vld [vmem:[%s920 + $0x16a] sm:$0xff]
    %v1336 = vld [vmem:[%s920 + $0x172] sm:$0xff]
    %v1337 = vld [vmem:[%s920 + $0x1b2] sm:$0xff]
    %v1338 = vld [vmem:[%s920 + $0x1ba] sm:$0xff]
    %v1339 = vld [vmem:[%s920 + $0x1ca] sm:$0xff]
    %v1340 = vld [vmem:[%s920 + $0x1d2] sm:$0xff]
    %v1341 = vld [vmem:[%s920 + $0x1e2] sm:$0xff]
    %v1342 = vld [vmem:[%s920 + $0x1ea] sm:$0xff]
    %v1343 = vld [vmem:[%s920 + $0x1fa] sm:$0xff]
    %v1344 = vld [vmem:[%s920 + $0x202] sm:$0xff]
    %v1345 = vld [vmem:[%s920 + $0x212] sm:$0xff]
    %v1346 = vld [vmem:[%s920 + $0x21a] sm:$0xff]
    %v1347 = vld [vmem:[%s920 + $0x22a] sm:$0xff]
    %v1348 = vld [vmem:[%s920 + $0x232] sm:$0xff]
    %v1349 = vld [vmem:[%s920 + $0x242] sm:$0xff]
    %v1350 = vld [vmem:[%s920 + $0x24a] sm:$0xff]
    %v1351 = vld [vmem:[%s920 + $0x25a] sm:$0xff]
    %v1352 = vld [vmem:[%s920 + $0x262] sm:$0xff]
    %v1353 = vld [vmem:[%s920 + $0x272] sm:$0xff]
    %v1354 = vld [vmem:[%s920 + $0x27a] sm:$0xff]
    %v1355 = vld [vmem:[%s920 + $0x28a] sm:$0xff]
    %v1356 = vld [vmem:[%s920 + $0x292] sm:$0xff]
    %v1357 = vld [vmem:[%s920 + $0x2a2] sm:$0xff]
    %v1358 = vld [vmem:[%s920 + $0x2aa] sm:$0xff]
    %v1359 = vld [vmem:[%s920 + $0x2ba] sm:$0xff]
    %v1360 = vld [vmem:[%s920 + $0x2c2] sm:$0xff]
    %v1361 = vld [vmem:[%s920 + $0x2d2] sm:$0xff]
    %v1362 = vld [vmem:[%s920 + $0x2da] sm:$0xff]
    %v1363 = vld [vmem:[%s920 + $0x2ea] sm:$0xff]
    %v1364 = vld [vmem:[%s920 + $0x2f2] sm:$0xff]
    %v1365 = vld [vmem:[%s920 + $0x302] sm:$0xff]
    %v1366 = vld [vmem:[%s920 + $0x30a] sm:$0xff]
    %v1367 = vld [vmem:[%s920 + $0x31a] sm:$0xff]
    %v1368 = vld [vmem:[%s920 + $0x322] sm:$0xff]
    %s1369 = scalar_lea.vmem [#allocation2], 48
    %v1370 = vld [vmem:[%s1369] sm:$0xff]
    %v1371 = vld [vmem:[%s1369 + $0x8] sm:$0xff]
    %v1372 = vld [vmem:[%s1369 + $0x18] sm:$0xff]
    %v1373 = vld [vmem:[%s1369 + $0x20] sm:$0xff]
    %v1374 = vld [vmem:[%s1369 + $0x30] sm:$0xff]
    %v1375 = vld [vmem:[%s1369 + $0x38] sm:$0xff]
    %v1376 = vld [vmem:[%s1369 + $0x48] sm:$0xff]
    %v1377 = vld [vmem:[%s1369 + $0x50] sm:$0xff]
    %v1378 = vld [vmem:[%s1369 + $0x60] sm:$0xff]
    %v1379 = vld [vmem:[%s1369 + $0x68] sm:$0xff]
    %v1380 = vld [vmem:[%s1369 + $0x78] sm:$0xff]
    %v1381 = vld [vmem:[%s1369 + $0x80] sm:$0xff]
    %v1382 = vld [vmem:[%s1369 + $0x90] sm:$0xff]
    %v1383 = vld [vmem:[%s1369 + $0x98] sm:$0xff]
    %v1384 = vld [vmem:[%s1369 + $0xa8] sm:$0xff]
    %v1385 = vld [vmem:[%s1369 + $0xb0] sm:$0xff]
    %v1386 = vld [vmem:[%s1369 + $0xc0] sm:$0xff]
    %v1387 = vld [vmem:[%s1369 + $0xc8] sm:$0xff]
    %v1388 = vld [vmem:[%s1369 + $0xd8] sm:$0xff]
    %v1389 = vld [vmem:[%s1369 + $0xe0] sm:$0xff]
    %v1390 = vld [vmem:[%s1369 + $0xf0] sm:$0xff]
    %v1391 = vld [vmem:[%s1369 + $0xf8] sm:$0xff]
    %v1392 = vld [vmem:[%s1369 + $0x108] sm:$0xff]
    %v1393 = vld [vmem:[%s1369 + $0x110] sm:$0xff]
    %v1394 = vld [vmem:[%s1369 + $0x120] sm:$0xff]
    %v1395 = vld [vmem:[%s1369 + $0x128] sm:$0xff]
    %v1396 = vld [vmem:[%s1369 + $0x138] sm:$0xff]
    %v1397 = vld [vmem:[%s1369 + $0x140] sm:$0xff]
    %v1398 = vld [vmem:[%s1369 + $0x150] sm:$0xff]
    %v1399 = vld [vmem:[%s1369 + $0x158] sm:$0xff]
    %v1400 = vld [vmem:[%s1369 + $0x168] sm:$0xff]
    %v1401 = vld [vmem:[%s1369 + $0x170] sm:$0xff]
    %v1402 = vld [vmem:[%s1369 + $0x1b0] sm:$0xff]
    %v1403 = vld [vmem:[%s1369 + $0x1b8] sm:$0xff]
    %v1404 = vld [vmem:[%s1369 + $0x1c8] sm:$0xff]
    %v1405 = vld [vmem:[%s1369 + $0x1d0] sm:$0xff]
    %v1406 = vld [vmem:[%s1369 + $0x1e0] sm:$0xff]
    %v1407 = vld [vmem:[%s1369 + $0x1e8] sm:$0xff]
    %v1408 = vld [vmem:[%s1369 + $0x1f8] sm:$0xff]
    %v1409 = vld [vmem:[%s1369 + $0x200] sm:$0xff]
    %v1410 = vld [vmem:[%s1369 + $0x210] sm:$0xff]
    %v1411 = vld [vmem:[%s1369 + $0x218] sm:$0xff]
    %v1412 = vld [vmem:[%s1369 + $0x228] sm:$0xff]
    %v1413 = vld [vmem:[%s1369 + $0x230] sm:$0xff]
    %v1414 = vld [vmem:[%s1369 + $0x240] sm:$0xff]
    %v1415 = vld [vmem:[%s1369 + $0x248] sm:$0xff]
    %v1416 = vld [vmem:[%s1369 + $0x258] sm:$0xff]
    %v1417 = vld [vmem:[%s1369 + $0x260] sm:$0xff]
    %v1418 = vld [vmem:[%s1369 + $0x270] sm:$0xff]
    %v1419 = vld [vmem:[%s1369 + $0x278] sm:$0xff]
    %v1420 = vld [vmem:[%s1369 + $0x288] sm:$0xff]
    %v1421 = vld [vmem:[%s1369 + $0x290] sm:$0xff]
    %v1422 = vld [vmem:[%s1369 + $0x2a0] sm:$0xff]
    %v1423 = vld [vmem:[%s1369 + $0x2a8] sm:$0xff]
    %v1424 = vld [vmem:[%s1369 + $0x2b8] sm:$0xff]
    %v1425 = vld [vmem:[%s1369 + $0x2c0] sm:$0xff]
    %v1426 = vld [vmem:[%s1369 + $0x2d0] sm:$0xff]
    %v1427 = vld [vmem:[%s1369 + $0x2d8] sm:$0xff]
    %v1428 = vld [vmem:[%s1369 + $0x2e8] sm:$0xff]
    %v1429 = vld [vmem:[%s1369 + $0x2f0] sm:$0xff]
    %v1430 = vld [vmem:[%s1369 + $0x300] sm:$0xff]
    %v1431 = vld [vmem:[%s1369 + $0x308] sm:$0xff]
    %v1432 = vld [vmem:[%s1369 + $0x318] sm:$0xff]
    %v1433 = vld [vmem:[%s1369 + $0x320] sm:$0xff]
    %v1434 = vld [vmem:[%s1369 + $0x1] sm:$0xff]
    %v1435 = vld [vmem:[%s1369 + $0x9] sm:$0xff]
    %v1436 = vld [vmem:[%s1369 + $0x19] sm:$0xff]
    %v1437 = vld [vmem:[%s1369 + $0x21] sm:$0xff]
    %v1438 = vld [vmem:[%s1369 + $0x31] sm:$0xff]
    %v1439 = vld [vmem:[%s1369 + $0x39] sm:$0xff]
    %v1440 = vld [vmem:[%s1369 + $0x49] sm:$0xff]
    %v1441 = vld [vmem:[%s1369 + $0x51] sm:$0xff]
    %v1442 = vld [vmem:[%s1369 + $0x61] sm:$0xff]
    %v1443 = vld [vmem:[%s1369 + $0x69] sm:$0xff]
    %v1444 = vld [vmem:[%s1369 + $0x79] sm:$0xff]
    %v1445 = vld [vmem:[%s1369 + $0x81] sm:$0xff]
    %v1446 = vld [vmem:[%s1369 + $0x91] sm:$0xff]
    %v1447 = vld [vmem:[%s1369 + $0x99] sm:$0xff]
    %v1448 = vld [vmem:[%s1369 + $0xa9] sm:$0xff]
    %v1449 = vld [vmem:[%s1369 + $0xb1] sm:$0xff]
    %v1450 = vld [vmem:[%s1369 + $0xc1] sm:$0xff]
    %v1451 = vld [vmem:[%s1369 + $0xc9] sm:$0xff]
    %v1452 = vld [vmem:[%s1369 + $0xd9] sm:$0xff]
    %v1453 = vld [vmem:[%s1369 + $0xe1] sm:$0xff]
    %v1454 = vld [vmem:[%s1369 + $0xf1] sm:$0xff]
    %v1455 = vld [vmem:[%s1369 + $0xf9] sm:$0xff]
    %v1456 = vld [vmem:[%s1369 + $0x109] sm:$0xff]
    %v1457 = vld [vmem:[%s1369 + $0x111] sm:$0xff]
    %v1458 = vld [vmem:[%s1369 + $0x121] sm:$0xff]
    %v1459 = vld [vmem:[%s1369 + $0x129] sm:$0xff]
    %v1460 = vld [vmem:[%s1369 + $0x139] sm:$0xff]
    %v1461 = vld [vmem:[%s1369 + $0x141] sm:$0xff]
    %v1462 = vld [vmem:[%s1369 + $0x151] sm:$0xff]
    %v1463 = vld [vmem:[%s1369 + $0x159] sm:$0xff]
    %v1464 = vld [vmem:[%s1369 + $0x169] sm:$0xff]
    %v1465 = vld [vmem:[%s1369 + $0x171] sm:$0xff]
    %v1466 = vld [vmem:[%s1369 + $0x1b1] sm:$0xff]
    %v1467 = vld [vmem:[%s1369 + $0x1b9] sm:$0xff]
    %v1468 = vld [vmem:[%s1369 + $0x1c9] sm:$0xff]
    %v1469 = vld [vmem:[%s1369 + $0x1d1] sm:$0xff]
    %v1470 = vld [vmem:[%s1369 + $0x1e1] sm:$0xff]
    %v1471 = vld [vmem:[%s1369 + $0x1e9] sm:$0xff]
    %v1472 = vld [vmem:[%s1369 + $0x1f9] sm:$0xff]
    %v1473 = vld [vmem:[%s1369 + $0x201] sm:$0xff]
    %v1474 = vld [vmem:[%s1369 + $0x211] sm:$0xff]
    %v1475 = vld [vmem:[%s1369 + $0x219] sm:$0xff]
    %v1476 = vld [vmem:[%s1369 + $0x229] sm:$0xff]
    %v1477 = vld [vmem:[%s1369 + $0x231] sm:$0xff]
    %v1478 = vld [vmem:[%s1369 + $0x241] sm:$0xff]
    %v1479 = vld [vmem:[%s1369 + $0x249] sm:$0xff]
    %v1480 = vld [vmem:[%s1369 + $0x259] sm:$0xff]
    %v1481 = vld [vmem:[%s1369 + $0x261] sm:$0xff]
    %v1482 = vld [vmem:[%s1369 + $0x271] sm:$0xff]
    %v1483 = vld [vmem:[%s1369 + $0x279] sm:$0xff]
    %v1484 = vld [vmem:[%s1369 + $0x289] sm:$0xff]
    %v1485 = vld [vmem:[%s1369 + $0x291] sm:$0xff]
    %v1486 = vld [vmem:[%s1369 + $0x2a1] sm:$0xff]
    %v1487 = vld [vmem:[%s1369 + $0x2a9] sm:$0xff]
    %v1488 = vld [vmem:[%s1369 + $0x2b9] sm:$0xff]
    %v1489 = vld [vmem:[%s1369 + $0x2c1] sm:$0xff]
    %v1490 = vld [vmem:[%s1369 + $0x2d1] sm:$0xff]
    %v1491 = vld [vmem:[%s1369 + $0x2d9] sm:$0xff]
    %v1492 = vld [vmem:[%s1369 + $0x2e9] sm:$0xff]
    %v1493 = vld [vmem:[%s1369 + $0x2f1] sm:$0xff]
    %v1494 = vld [vmem:[%s1369 + $0x301] sm:$0xff]
    %v1495 = vld [vmem:[%s1369 + $0x309] sm:$0xff]
    %v1496 = vld [vmem:[%s1369 + $0x319] sm:$0xff]
    %v1497 = vld [vmem:[%s1369 + $0x321] sm:$0xff]
    %v1498 = vld [vmem:[%s1369 + $0x2] sm:$0xff]
    %v1499 = vld [vmem:[%s1369 + $0xa] sm:$0xff]
    %v1500 = vld [vmem:[%s1369 + $0x1a] sm:$0xff]
    %v1501 = vld [vmem:[%s1369 + $0x22] sm:$0xff]
    %v1502 = vld [vmem:[%s1369 + $0x32] sm:$0xff]
    %v1503 = vld [vmem:[%s1369 + $0x3a] sm:$0xff]
    %v1504 = vld [vmem:[%s1369 + $0x4a] sm:$0xff]
    %v1505 = vld [vmem:[%s1369 + $0x52] sm:$0xff]
    %v1506 = vld [vmem:[%s1369 + $0x62] sm:$0xff]
    %v1507 = vld [vmem:[%s1369 + $0x6a] sm:$0xff]
    %v1508 = vld [vmem:[%s1369 + $0x7a] sm:$0xff]
    %v1509 = vld [vmem:[%s1369 + $0x82] sm:$0xff]
    %v1510 = vld [vmem:[%s1369 + $0x92] sm:$0xff]
    %v1511 = vld [vmem:[%s1369 + $0x9a] sm:$0xff]
    %v1512 = vld [vmem:[%s1369 + $0xaa] sm:$0xff]
    %v1513 = vld [vmem:[%s1369 + $0xb2] sm:$0xff]
    %v1514 = vld [vmem:[%s1369 + $0xc2] sm:$0xff]
    %v1515 = vld [vmem:[%s1369 + $0xca] sm:$0xff]
    %v1516 = vld [vmem:[%s1369 + $0xda] sm:$0xff]
    %v1517 = vld [vmem:[%s1369 + $0xe2] sm:$0xff]
    %v1518 = vld [vmem:[%s1369 + $0xf2] sm:$0xff]
    %v1519 = vld [vmem:[%s1369 + $0xfa] sm:$0xff]
    %v1520 = vld [vmem:[%s1369 + $0x10a] sm:$0xff]
    %v1521 = vld [vmem:[%s1369 + $0x112] sm:$0xff]
    %v1522 = vld [vmem:[%s1369 + $0x122] sm:$0xff]
    %v1523 = vld [vmem:[%s1369 + $0x12a] sm:$0xff]
    %v1524 = vld [vmem:[%s1369 + $0x13a] sm:$0xff]
    %v1525 = vld [vmem:[%s1369 + $0x142] sm:$0xff]
    %v1526 = vld [vmem:[%s1369 + $0x152] sm:$0xff]
    %v1527 = vld [vmem:[%s1369 + $0x15a] sm:$0xff]
    %v1528 = vld [vmem:[%s1369 + $0x16a] sm:$0xff]
    %v1529 = vld [vmem:[%s1369 + $0x172] sm:$0xff]
    %v1530 = vld [vmem:[%s1369 + $0x1b2] sm:$0xff]
    %v1531 = vld [vmem:[%s1369 + $0x1ba] sm:$0xff]
    %v1532 = vld [vmem:[%s1369 + $0x1ca] sm:$0xff]
    %v1533 = vld [vmem:[%s1369 + $0x1d2] sm:$0xff]
    %v1534 = vld [vmem:[%s1369 + $0x1e2] sm:$0xff]
    %v1535 = vld [vmem:[%s1369 + $0x1ea] sm:$0xff]
    %v1536 = vld [vmem:[%s1369 + $0x1fa] sm:$0xff]
    %v1537 = vld [vmem:[%s1369 + $0x202] sm:$0xff]
    %v1538 = vld [vmem:[%s1369 + $0x212] sm:$0xff]
    %v1539 = vld [vmem:[%s1369 + $0x21a] sm:$0xff]
    %v1540 = vld [vmem:[%s1369 + $0x22a] sm:$0xff]
    %v1541 = vld [vmem:[%s1369 + $0x232] sm:$0xff]
    %v1542 = vld [vmem:[%s1369 + $0x242] sm:$0xff]
    %v1543 = vld [vmem:[%s1369 + $0x24a] sm:$0xff]
    %v1544 = vld [vmem:[%s1369 + $0x25a] sm:$0xff]
    %v1545 = vld [vmem:[%s1369 + $0x262] sm:$0xff]
    %v1546 = vld [vmem:[%s1369 + $0x272] sm:$0xff]
    %v1547 = vld [vmem:[%s1369 + $0x27a] sm:$0xff]
    %v1548 = vld [vmem:[%s1369 + $0x28a] sm:$0xff]
    %v1549 = vld [vmem:[%s1369 + $0x292] sm:$0xff]
    %v1550 = vld [vmem:[%s1369 + $0x2a2] sm:$0xff]
    %v1551 = vld [vmem:[%s1369 + $0x2aa] sm:$0xff]
    %v1552 = vld [vmem:[%s1369 + $0x2ba] sm:$0xff]
    %v1553 = vld [vmem:[%s1369 + $0x2c2] sm:$0xff]
    %v1554 = vld [vmem:[%s1369 + $0x2d2] sm:$0xff]
    %v1555 = vld [vmem:[%s1369 + $0x2da] sm:$0xff]
    %v1556 = vld [vmem:[%s1369 + $0x2ea] sm:$0xff]
    %v1557 = vld [vmem:[%s1369 + $0x2f2] sm:$0xff]
    %v1558 = vld [vmem:[%s1369 + $0x302] sm:$0xff]
    %v1559 = vld [vmem:[%s1369 + $0x30a] sm:$0xff]
    %v1560 = vld [vmem:[%s1369 + $0x31a] sm:$0xff]
    %v1561 = vld [vmem:[%s1369 + $0x322] sm:$0xff]
    %1626 = vrot.lane.b32.xlu0 %v1049, 16
    %v1627 = vpop.permute.xlu0 %1626
    %1628 = vrot.lane.b32.xlu0 %v1050, 16
    %v1629 = vpop.permute.xlu0 %1628
    %1630 = vrot.lane.b32.xlu0 %v1051, 16
    %v1631 = vpop.permute.xlu0 %1630
    %1632 = vrot.lane.b32.xlu0 %v1052, 16
    %v1633 = vpop.permute.xlu0 %1632
    %1634 = vrot.lane.b32.xlu0 %v1053, 16
    %v1635 = vpop.permute.xlu0 %1634
    %1636 = vrot.lane.b32.xlu0 %v1054, 16
    %v1637 = vpop.permute.xlu0 %1636
    %1638 = vrot.lane.b32.xlu0 %v1055, 16
    %v1639 = vpop.permute.xlu0 %1638
    %1640 = vrot.lane.b32.xlu0 %v1056, 16
    %v1641 = vpop.permute.xlu0 %1640
    %1642 = vrot.lane.b32.xlu0 %v1057, 16
    %v1643 = vpop.permute.xlu0 %1642
    %1644 = vrot.lane.b32.xlu0 %v1058, 16
    %v1645 = vpop.permute.xlu0 %1644
    %1646 = vrot.lane.b32.xlu0 %v1059, 16
    %v1647 = vpop.permute.xlu0 %1646
    %1648 = vrot.lane.b32.xlu0 %v1060, 16
    %v1649 = vpop.permute.xlu0 %1648
    %1650 = vrot.lane.b32.xlu0 %v1061, 16
    %v1651 = vpop.permute.xlu0 %1650
    %1652 = vrot.lane.b32.xlu0 %v1062, 16
    %v1653 = vpop.permute.xlu0 %1652
    %1654 = vrot.lane.b32.xlu0 %v1063, 16
    %v1655 = vpop.permute.xlu0 %1654
    %1656 = vrot.lane.b32.xlu0 %v1064, 16
    %v1657 = vpop.permute.xlu0 %1656
    %1658 = vrot.lane.b32.xlu0 %v1065, 16
    %v1659 = vpop.permute.xlu0 %1658
    %1660 = vrot.lane.b32.xlu0 %v1066, 16
    %v1661 = vpop.permute.xlu0 %1660
    %1662 = vrot.lane.b32.xlu0 %v1067, 16
    %v1663 = vpop.permute.xlu0 %1662
    %1664 = vrot.lane.b32.xlu0 %v1068, 16
    %v1665 = vpop.permute.xlu0 %1664
    %1666 = vrot.lane.b32.xlu0 %v1069, 16
    %v1667 = vpop.permute.xlu0 %1666
    %1668 = vrot.lane.b32.xlu0 %v1070, 16
    %v1669 = vpop.permute.xlu0 %1668
    %1670 = vrot.lane.b32.xlu0 %v1071, 16
    %v1671 = vpop.permute.xlu0 %1670
    %1672 = vrot.lane.b32.xlu0 %v1072, 16
    %v1673 = vpop.permute.xlu0 %1672
    %1674 = vrot.lane.b32.xlu0 %v1073, 16
    %v1675 = vpop.permute.xlu0 %1674
    %1676 = vrot.lane.b32.xlu0 %v1074, 16
    %v1677 = vpop.permute.xlu0 %1676
    %1678 = vrot.lane.b32.xlu0 %v1075, 16
    %v1679 = vpop.permute.xlu0 %1678
    %1680 = vrot.lane.b32.xlu0 %v1076, 16
    %v1681 = vpop.permute.xlu0 %1680
    %1682 = vrot.lane.b32.xlu0 %v1077, 16
    %v1683 = vpop.permute.xlu0 %1682
    %1684 = vrot.lane.b32.xlu0 %v1078, 16
    %v1685 = vpop.permute.xlu0 %1684
    %1686 = vrot.lane.b32.xlu0 %v1079, 16
    %v1687 = vpop.permute.xlu0 %1686
    %1688 = vrot.lane.b32.xlu0 %v1080, 16
    %v1689 = vpop.permute.xlu0 %1688
    %1690 = vrot.lane.b32.xlu0 %v1081, 16
    %v1691 = vpop.permute.xlu0 %1690
    %1692 = vrot.lane.b32.xlu0 %v1082, 16
    %v1693 = vpop.permute.xlu0 %1692
    %1694 = vrot.lane.b32.xlu0 %v1083, 16
    %v1695 = vpop.permute.xlu0 %1694
    %1696 = vrot.lane.b32.xlu0 %v1084, 16
    %v1697 = vpop.permute.xlu0 %1696
    %1698 = vrot.lane.b32.xlu0 %v1085, 16
    %v1699 = vpop.permute.xlu0 %1698
    %1700 = vrot.lane.b32.xlu0 %v1086, 16
    %v1701 = vpop.permute.xlu0 %1700
    %1702 = vrot.lane.b32.xlu0 %v1087, 16
    %v1703 = vpop.permute.xlu0 %1702
    %1704 = vrot.lane.b32.xlu0 %v1088, 16
    %v1705 = vpop.permute.xlu0 %1704
    %1706 = vrot.lane.b32.xlu0 %v1089, 16
    %v1707 = vpop.permute.xlu0 %1706
    %1708 = vrot.lane.b32.xlu0 %v1090, 16
    %v1709 = vpop.permute.xlu0 %1708
    %1710 = vrot.lane.b32.xlu0 %v1091, 16
    %v1711 = vpop.permute.xlu0 %1710
    %1712 = vrot.lane.b32.xlu0 %v1092, 16
    %v1713 = vpop.permute.xlu0 %1712
    %1714 = vrot.lane.b32.xlu0 %v1093, 16
    %v1715 = vpop.permute.xlu0 %1714
    %1716 = vrot.lane.b32.xlu0 %v1094, 16
    %v1717 = vpop.permute.xlu0 %1716
    %1718 = vrot.lane.b32.xlu0 %v1095, 16
    %v1719 = vpop.permute.xlu0 %1718
    %1720 = vrot.lane.b32.xlu0 %v1096, 16
    %v1721 = vpop.permute.xlu0 %1720
    %1722 = vrot.lane.b32.xlu0 %v1097, 16
    %v1723 = vpop.permute.xlu0 %1722
    %1724 = vrot.lane.b32.xlu0 %v1098, 16
    %v1725 = vpop.permute.xlu0 %1724
    %1726 = vrot.lane.b32.xlu0 %v1099, 16
    %v1727 = vpop.permute.xlu0 %1726
    %1728 = vrot.lane.b32.xlu0 %v1100, 16
    %v1729 = vpop.permute.xlu0 %1728
    %1730 = vrot.lane.b32.xlu0 %v1101, 16
    %v1731 = vpop.permute.xlu0 %1730
    %1732 = vrot.lane.b32.xlu0 %v1102, 16
    %v1733 = vpop.permute.xlu0 %1732
    %1734 = vrot.lane.b32.xlu0 %v1103, 16
    %v1735 = vpop.permute.xlu0 %1734
    %1736 = vrot.lane.b32.xlu0 %v1104, 16
    %v1737 = vpop.permute.xlu0 %1736
    %1738 = vrot.lane.b32.xlu0 %v1105, 16
    %v1739 = vpop.permute.xlu0 %1738
    %1740 = vrot.lane.b32.xlu0 %v1106, 16
    %v1741 = vpop.permute.xlu0 %1740
    %1742 = vrot.lane.b32.xlu0 %v1107, 16
    %v1743 = vpop.permute.xlu0 %1742
    %1744 = vrot.lane.b32.xlu0 %v1108, 16
    %v1745 = vpop.permute.xlu0 %1744
    %1746 = vrot.lane.b32.xlu0 %v1109, 16
    %v1747 = vpop.permute.xlu0 %1746
    %1748 = vrot.lane.b32.xlu0 %v1110, 16
    %v1749 = vpop.permute.xlu0 %1748
    %1750 = vrot.lane.b32.xlu0 %v1111, 16
    %v1751 = vpop.permute.xlu0 %1750
    %1752 = vrot.lane.b32.xlu0 %v1112, 16
    %v1753 = vpop.permute.xlu0 %1752
    %1882 = vrot.lane.b32.xlu0 %v1113, 32
    %v1883 = vpop.permute.xlu0 %1882
    %1884 = vrot.lane.b32.xlu0 %v1114, 32
    %v1885 = vpop.permute.xlu0 %1884
    %1886 = vrot.lane.b32.xlu0 %v1115, 32
    %v1887 = vpop.permute.xlu0 %1886
    %1888 = vrot.lane.b32.xlu0 %v1116, 32
    %v1889 = vpop.permute.xlu0 %1888
    %1890 = vrot.lane.b32.xlu0 %v1117, 32
    %v1891 = vpop.permute.xlu0 %1890
    %1892 = vrot.lane.b32.xlu0 %v1118, 32
    %v1893 = vpop.permute.xlu0 %1892
    %1894 = vrot.lane.b32.xlu0 %v1119, 32
    %v1895 = vpop.permute.xlu0 %1894
    %1896 = vrot.lane.b32.xlu0 %v1120, 32
    %v1897 = vpop.permute.xlu0 %1896
    %1898 = vrot.lane.b32.xlu0 %v1121, 32
    %v1899 = vpop.permute.xlu0 %1898
    %1900 = vrot.lane.b32.xlu0 %v1122, 32
    %v1901 = vpop.permute.xlu0 %1900
    %1902 = vrot.lane.b32.xlu0 %v1123, 32
    %v1903 = vpop.permute.xlu0 %1902
    %1904 = vrot.lane.b32.xlu0 %v1124, 32
    %v1905 = vpop.permute.xlu0 %1904
    %1906 = vrot.lane.b32.xlu0 %v1125, 32
    %v1907 = vpop.permute.xlu0 %1906
    %1908 = vrot.lane.b32.xlu0 %v1126, 32
    %v1909 = vpop.permute.xlu0 %1908
    %1910 = vrot.lane.b32.xlu0 %v1127, 32
    %v1911 = vpop.permute.xlu0 %1910
    %1912 = vrot.lane.b32.xlu0 %v1128, 32
    %v1913 = vpop.permute.xlu0 %1912
    %1914 = vrot.lane.b32.xlu0 %v1129, 32
    %v1915 = vpop.permute.xlu0 %1914
    %1916 = vrot.lane.b32.xlu0 %v1130, 32
    %v1917 = vpop.permute.xlu0 %1916
    %1918 = vrot.lane.b32.xlu0 %v1131, 32
    %v1919 = vpop.permute.xlu0 %1918
    %1920 = vrot.lane.b32.xlu0 %v1132, 32
    %v1921 = vpop.permute.xlu0 %1920
    %1922 = vrot.lane.b32.xlu0 %v1133, 32
    %v1923 = vpop.permute.xlu0 %1922
    %1924 = vrot.lane.b32.xlu0 %v1134, 32
    %v1925 = vpop.permute.xlu0 %1924
    %1926 = vrot.lane.b32.xlu0 %v1135, 32
    %v1927 = vpop.permute.xlu0 %1926
    %1928 = vrot.lane.b32.xlu0 %v1136, 32
    %v1929 = vpop.permute.xlu0 %1928
    %1930 = vrot.lane.b32.xlu0 %v1137, 32
    %v1931 = vpop.permute.xlu0 %1930
    %1932 = vrot.lane.b32.xlu0 %v1138, 32
    %v1933 = vpop.permute.xlu0 %1932
    %1934 = vrot.lane.b32.xlu0 %v1139, 32
    %v1935 = vpop.permute.xlu0 %1934
    %1936 = vrot.lane.b32.xlu0 %v1140, 32
    %v1937 = vpop.permute.xlu0 %1936
    %1938 = vrot.lane.b32.xlu0 %v1141, 32
    %v1939 = vpop.permute.xlu0 %1938
    %1940 = vrot.lane.b32.xlu0 %v1142, 32
    %v1941 = vpop.permute.xlu0 %1940
    %1942 = vrot.lane.b32.xlu0 %v1143, 32
    %v1943 = vpop.permute.xlu0 %1942
    %1944 = vrot.lane.b32.xlu0 %v1144, 32
    %v1945 = vpop.permute.xlu0 %1944
    %1946 = vrot.lane.b32.xlu0 %v1145, 32
    %v1947 = vpop.permute.xlu0 %1946
    %1948 = vrot.lane.b32.xlu0 %v1146, 32
    %v1949 = vpop.permute.xlu0 %1948
    %1950 = vrot.lane.b32.xlu0 %v1147, 32
    %v1951 = vpop.permute.xlu0 %1950
    %1952 = vrot.lane.b32.xlu0 %v1148, 32
    %v1953 = vpop.permute.xlu0 %1952
    %1954 = vrot.lane.b32.xlu0 %v1149, 32
    %v1955 = vpop.permute.xlu0 %1954
    %1956 = vrot.lane.b32.xlu0 %v1150, 32
    %v1957 = vpop.permute.xlu0 %1956
    %1958 = vrot.lane.b32.xlu0 %v1151, 32
    %v1959 = vpop.permute.xlu0 %1958
    %1960 = vrot.lane.b32.xlu0 %v1152, 32
    %v1961 = vpop.permute.xlu0 %1960
    %1962 = vrot.lane.b32.xlu0 %v1153, 32
    %v1963 = vpop.permute.xlu0 %1962
    %1964 = vrot.lane.b32.xlu0 %v1154, 32
    %v1965 = vpop.permute.xlu0 %1964
    %1966 = vrot.lane.b32.xlu0 %v1155, 32
    %v1967 = vpop.permute.xlu0 %1966
    %1968 = vrot.lane.b32.xlu0 %v1156, 32
    %v1969 = vpop.permute.xlu0 %1968
    %1970 = vrot.lane.b32.xlu0 %v1157, 32
    %v1971 = vpop.permute.xlu0 %1970
    %1972 = vrot.lane.b32.xlu0 %v1158, 32
    %v1973 = vpop.permute.xlu0 %1972
    %1974 = vrot.lane.b32.xlu0 %v1159, 32
    %v1975 = vpop.permute.xlu0 %1974
    %1976 = vrot.lane.b32.xlu0 %v1160, 32
    %v1977 = vpop.permute.xlu0 %1976
    %1978 = vrot.lane.b32.xlu0 %v1161, 32
    %v1979 = vpop.permute.xlu0 %1978
    %1980 = vrot.lane.b32.xlu0 %v1162, 32
    %v1981 = vpop.permute.xlu0 %1980
    %1982 = vrot.lane.b32.xlu0 %v1163, 32
    %v1983 = vpop.permute.xlu0 %1982
    %1984 = vrot.lane.b32.xlu0 %v1164, 32
    %v1985 = vpop.permute.xlu0 %1984
    %1986 = vrot.lane.b32.xlu0 %v1165, 32
    %v1987 = vpop.permute.xlu0 %1986
    %1988 = vrot.lane.b32.xlu0 %v1166, 32
    %v1989 = vpop.permute.xlu0 %1988
    %1990 = vrot.lane.b32.xlu0 %v1167, 32
    %v1991 = vpop.permute.xlu0 %1990
    %1992 = vrot.lane.b32.xlu0 %v1168, 32
    %v1993 = vpop.permute.xlu0 %1992
    %1994 = vrot.lane.b32.xlu0 %v1169, 32
    %v1995 = vpop.permute.xlu0 %1994
    %1996 = vrot.lane.b32.xlu0 %v1170, 32
    %v1997 = vpop.permute.xlu0 %1996
    %1998 = vrot.lane.b32.xlu0 %v1171, 32
    %v1999 = vpop.permute.xlu0 %1998
    %2000 = vrot.lane.b32.xlu0 %v1172, 32
    %v2001 = vpop.permute.xlu0 %2000
    %2002 = vrot.lane.b32.xlu0 %v1173, 32
    %v2003 = vpop.permute.xlu0 %2002
    %2004 = vrot.lane.b32.xlu0 %v1174, 32
    %v2005 = vpop.permute.xlu0 %2004
    %2006 = vrot.lane.b32.xlu0 %v1175, 32
    %v2007 = vpop.permute.xlu0 %2006
    %2008 = vrot.lane.b32.xlu0 %v1176, 32
    %v2009 = vpop.permute.xlu0 %2008
    %2138 = vrot.lane.b32.xlu0 %v1177, 48
    %v2139 = vpop.permute.xlu0 %2138
    %2140 = vrot.lane.b32.xlu0 %v1178, 48
    %v2141 = vpop.permute.xlu0 %2140
    %2142 = vrot.lane.b32.xlu0 %v1179, 48
    %v2143 = vpop.permute.xlu0 %2142
    %2144 = vrot.lane.b32.xlu0 %v1180, 48
    %v2145 = vpop.permute.xlu0 %2144
    %2146 = vrot.lane.b32.xlu0 %v1181, 48
    %v2147 = vpop.permute.xlu0 %2146
    %2148 = vrot.lane.b32.xlu0 %v1182, 48
    %v2149 = vpop.permute.xlu0 %2148
    %2150 = vrot.lane.b32.xlu0 %v1183, 48
    %v2151 = vpop.permute.xlu0 %2150
    %2152 = vrot.lane.b32.xlu0 %v1184, 48
    %v2153 = vpop.permute.xlu0 %2152
    %2154 = vrot.lane.b32.xlu0 %v1185, 48
    %v2155 = vpop.permute.xlu0 %2154
    %2156 = vrot.lane.b32.xlu0 %v1186, 48
    %v2157 = vpop.permute.xlu0 %2156
    %2158 = vrot.lane.b32.xlu0 %v1187, 48
    %v2159 = vpop.permute.xlu0 %2158
    %2160 = vrot.lane.b32.xlu0 %v1188, 48
    %v2161 = vpop.permute.xlu0 %2160
    %2162 = vrot.lane.b32.xlu0 %v1189, 48
    %v2163 = vpop.permute.xlu0 %2162
    %2164 = vrot.lane.b32.xlu0 %v1190, 48
    %v2165 = vpop.permute.xlu0 %2164
    %2166 = vrot.lane.b32.xlu0 %v1191, 48
    %v2167 = vpop.permute.xlu0 %2166
    %2168 = vrot.lane.b32.xlu0 %v1192, 48
    %v2169 = vpop.permute.xlu0 %2168
    %2170 = vrot.lane.b32.xlu0 %v1193, 48
    %v2171 = vpop.permute.xlu0 %2170
    %2172 = vrot.lane.b32.xlu0 %v1194, 48
    %v2173 = vpop.permute.xlu0 %2172
    %2174 = vrot.lane.b32.xlu0 %v1195, 48
    %v2175 = vpop.permute.xlu0 %2174
    %2176 = vrot.lane.b32.xlu0 %v1196, 48
    %v2177 = vpop.permute.xlu0 %2176
    %2178 = vrot.lane.b32.xlu0 %v1197, 48
    %v2179 = vpop.permute.xlu0 %2178
    %2180 = vrot.lane.b32.xlu0 %v1198, 48
    %v2181 = vpop.permute.xlu0 %2180
    %2182 = vrot.lane.b32.xlu0 %v1199, 48
    %v2183 = vpop.permute.xlu0 %2182
    %2184 = vrot.lane.b32.xlu0 %v1200, 48
    %v2185 = vpop.permute.xlu0 %2184
    %2186 = vrot.lane.b32.xlu0 %v1201, 48
    %v2187 = vpop.permute.xlu0 %2186
    %2188 = vrot.lane.b32.xlu0 %v1202, 48
    %v2189 = vpop.permute.xlu0 %2188
    %2190 = vrot.lane.b32.xlu0 %v1203, 48
    %v2191 = vpop.permute.xlu0 %2190
    %2192 = vrot.lane.b32.xlu0 %v1204, 48
    %v2193 = vpop.permute.xlu0 %2192
    %2194 = vrot.lane.b32.xlu0 %v1205, 48
    %v2195 = vpop.permute.xlu0 %2194
    %2196 = vrot.lane.b32.xlu0 %v1206, 48
    %v2197 = vpop.permute.xlu0 %2196
    %2198 = vrot.lane.b32.xlu0 %v1207, 48
    %v2199 = vpop.permute.xlu0 %2198
    %2200 = vrot.lane.b32.xlu0 %v1208, 48
    %v2201 = vpop.permute.xlu0 %2200
    %2202 = vrot.lane.b32.xlu0 %v1209, 48
    %v2203 = vpop.permute.xlu0 %2202
    %2204 = vrot.lane.b32.xlu0 %v1210, 48
    %v2205 = vpop.permute.xlu0 %2204
    %2206 = vrot.lane.b32.xlu0 %v1211, 48
    %v2207 = vpop.permute.xlu0 %2206
    %2208 = vrot.lane.b32.xlu0 %v1212, 48
    %v2209 = vpop.permute.xlu0 %2208
    %2210 = vrot.lane.b32.xlu0 %v1213, 48
    %v2211 = vpop.permute.xlu0 %2210
    %2212 = vrot.lane.b32.xlu0 %v1214, 48
    %v2213 = vpop.permute.xlu0 %2212
    %2214 = vrot.lane.b32.xlu0 %v1215, 48
    %v2215 = vpop.permute.xlu0 %2214
    %2216 = vrot.lane.b32.xlu0 %v1216, 48
    %v2217 = vpop.permute.xlu0 %2216
    %2218 = vrot.lane.b32.xlu0 %v1217, 48
    %v2219 = vpop.permute.xlu0 %2218
    %2220 = vrot.lane.b32.xlu0 %v1218, 48
    %v2221 = vpop.permute.xlu0 %2220
    %2222 = vrot.lane.b32.xlu0 %v1219, 48
    %v2223 = vpop.permute.xlu0 %2222
    %2224 = vrot.lane.b32.xlu0 %v1220, 48
    %v2225 = vpop.permute.xlu0 %2224
    %2226 = vrot.lane.b32.xlu0 %v1221, 48
    %v2227 = vpop.permute.xlu0 %2226
    %2228 = vrot.lane.b32.xlu0 %v1222, 48
    %v2229 = vpop.permute.xlu0 %2228
    %2230 = vrot.lane.b32.xlu0 %v1223, 48
    %v2231 = vpop.permute.xlu0 %2230
    %2232 = vrot.lane.b32.xlu0 %v1224, 48
    %v2233 = vpop.permute.xlu0 %2232
    %2234 = vrot.lane.b32.xlu0 %v1225, 48
    %v2235 = vpop.permute.xlu0 %2234
    %2236 = vrot.lane.b32.xlu0 %v1226, 48
    %v2237 = vpop.permute.xlu0 %2236
    %2238 = vrot.lane.b32.xlu0 %v1227, 48
    %v2239 = vpop.permute.xlu0 %2238
    %2240 = vrot.lane.b32.xlu0 %v1228, 48
    %v2241 = vpop.permute.xlu0 %2240
    %2242 = vrot.lane.b32.xlu0 %v1229, 48
    %v2243 = vpop.permute.xlu0 %2242
    %2244 = vrot.lane.b32.xlu0 %v1230, 48
    %v2245 = vpop.permute.xlu0 %2244
    %2246 = vrot.lane.b32.xlu0 %v1231, 48
    %v2247 = vpop.permute.xlu0 %2246
    %2248 = vrot.lane.b32.xlu0 %v1232, 48
    %v2249 = vpop.permute.xlu0 %2248
    %2250 = vrot.lane.b32.xlu0 %v1233, 48
    %v2251 = vpop.permute.xlu0 %2250
    %2252 = vrot.lane.b32.xlu0 %v1234, 48
    %v2253 = vpop.permute.xlu0 %2252
    %2254 = vrot.lane.b32.xlu0 %v1235, 48
    %v2255 = vpop.permute.xlu0 %2254
    %2256 = vrot.lane.b32.xlu0 %v1236, 48
    %v2257 = vpop.permute.xlu0 %2256
    %2258 = vrot.lane.b32.xlu0 %v1237, 48
    %v2259 = vpop.permute.xlu0 %2258
    %2260 = vrot.lane.b32.xlu0 %v1238, 48
    %v2261 = vpop.permute.xlu0 %2260
    %2262 = vrot.lane.b32.xlu0 %v1239, 48
    %v2263 = vpop.permute.xlu0 %2262
    %2264 = vrot.lane.b32.xlu0 %v1240, 48
    %v2265 = vpop.permute.xlu0 %2264
    %2394 = vrot.lane.b32.xlu0 %v1241, 64
    %v2395 = vpop.permute.xlu0 %2394
    %2396 = vrot.lane.b32.xlu0 %v1242, 64
    %v2397 = vpop.permute.xlu0 %2396
    %2398 = vrot.lane.b32.xlu0 %v1243, 64
    %v2399 = vpop.permute.xlu0 %2398
    %2400 = vrot.lane.b32.xlu0 %v1244, 64
    %v2401 = vpop.permute.xlu0 %2400
    %2402 = vrot.lane.b32.xlu0 %v1245, 64
    %v2403 = vpop.permute.xlu0 %2402
    %2404 = vrot.lane.b32.xlu0 %v1246, 64
    %v2405 = vpop.permute.xlu0 %2404
    %2406 = vrot.lane.b32.xlu0 %v1247, 64
    %v2407 = vpop.permute.xlu0 %2406
    %2408 = vrot.lane.b32.xlu0 %v1248, 64
    %v2409 = vpop.permute.xlu0 %2408
    %2410 = vrot.lane.b32.xlu0 %v1249, 64
    %v2411 = vpop.permute.xlu0 %2410
    %2412 = vrot.lane.b32.xlu0 %v1250, 64
    %v2413 = vpop.permute.xlu0 %2412
    %2414 = vrot.lane.b32.xlu0 %v1251, 64
    %v2415 = vpop.permute.xlu0 %2414
    %2416 = vrot.lane.b32.xlu0 %v1252, 64
    %v2417 = vpop.permute.xlu0 %2416
    %2418 = vrot.lane.b32.xlu0 %v1253, 64
    %v2419 = vpop.permute.xlu0 %2418
    %2420 = vrot.lane.b32.xlu0 %v1254, 64
    %v2421 = vpop.permute.xlu0 %2420
    %2422 = vrot.lane.b32.xlu0 %v1255, 64
    %v2423 = vpop.permute.xlu0 %2422
    %2424 = vrot.lane.b32.xlu0 %v1256, 64
    %v2425 = vpop.permute.xlu0 %2424
    %2426 = vrot.lane.b32.xlu0 %v1257, 64
    %v2427 = vpop.permute.xlu0 %2426
    %2428 = vrot.lane.b32.xlu0 %v1258, 64
    %v2429 = vpop.permute.xlu0 %2428
    %2430 = vrot.lane.b32.xlu0 %v1259, 64
    %v2431 = vpop.permute.xlu0 %2430
    %2432 = vrot.lane.b32.xlu0 %v1260, 64
    %v2433 = vpop.permute.xlu0 %2432
    %2434 = vrot.lane.b32.xlu0 %v1261, 64
    %v2435 = vpop.permute.xlu0 %2434
    %2436 = vrot.lane.b32.xlu0 %v1262, 64
    %v2437 = vpop.permute.xlu0 %2436
    %2438 = vrot.lane.b32.xlu0 %v1263, 64
    %v2439 = vpop.permute.xlu0 %2438
    %2440 = vrot.lane.b32.xlu0 %v1264, 64
    %v2441 = vpop.permute.xlu0 %2440
    %2442 = vrot.lane.b32.xlu0 %v1265, 64
    %v2443 = vpop.permute.xlu0 %2442
    %2444 = vrot.lane.b32.xlu0 %v1266, 64
    %v2445 = vpop.permute.xlu0 %2444
    %2446 = vrot.lane.b32.xlu0 %v1267, 64
    %v2447 = vpop.permute.xlu0 %2446
    %2448 = vrot.lane.b32.xlu0 %v1268, 64
    %v2449 = vpop.permute.xlu0 %2448
    %2450 = vrot.lane.b32.xlu0 %v1269, 64
    %v2451 = vpop.permute.xlu0 %2450
    %2452 = vrot.lane.b32.xlu0 %v1270, 64
    %v2453 = vpop.permute.xlu0 %2452
    %2454 = vrot.lane.b32.xlu0 %v1271, 64
    %v2455 = vpop.permute.xlu0 %2454
    %2456 = vrot.lane.b32.xlu0 %v1272, 64
    %v2457 = vpop.permute.xlu0 %2456
    %2458 = vrot.lane.b32.xlu0 %v1273, 64
    %v2459 = vpop.permute.xlu0 %2458
    %2460 = vrot.lane.b32.xlu0 %v1274, 64
    %v2461 = vpop.permute.xlu0 %2460
    %2462 = vrot.lane.b32.xlu0 %v1275, 64
    %v2463 = vpop.permute.xlu0 %2462
    %2464 = vrot.lane.b32.xlu0 %v1276, 64
    %v2465 = vpop.permute.xlu0 %2464
    %2466 = vrot.lane.b32.xlu0 %v1277, 64
    %v2467 = vpop.permute.xlu0 %2466
    %2468 = vrot.lane.b32.xlu0 %v1278, 64
    %v2469 = vpop.permute.xlu0 %2468
    %2470 = vrot.lane.b32.xlu0 %v1279, 64
    %v2471 = vpop.permute.xlu0 %2470
    %2472 = vrot.lane.b32.xlu0 %v1280, 64
    %v2473 = vpop.permute.xlu0 %2472
    %2474 = vrot.lane.b32.xlu0 %v1281, 64
    %v2475 = vpop.permute.xlu0 %2474
    %2476 = vrot.lane.b32.xlu0 %v1282, 64
    %v2477 = vpop.permute.xlu0 %2476
    %2478 = vrot.lane.b32.xlu0 %v1283, 64
    %v2479 = vpop.permute.xlu0 %2478
    %2480 = vrot.lane.b32.xlu0 %v1284, 64
    %v2481 = vpop.permute.xlu0 %2480
    %2482 = vrot.lane.b32.xlu0 %v1285, 64
    %v2483 = vpop.permute.xlu0 %2482
    %2484 = vrot.lane.b32.xlu0 %v1286, 64
    %v2485 = vpop.permute.xlu0 %2484
    %2486 = vrot.lane.b32.xlu0 %v1287, 64
    %v2487 = vpop.permute.xlu0 %2486
    %2488 = vrot.lane.b32.xlu0 %v1288, 64
    %v2489 = vpop.permute.xlu0 %2488
    %2490 = vrot.lane.b32.xlu0 %v1289, 64
    %v2491 = vpop.permute.xlu0 %2490
    %2492 = vrot.lane.b32.xlu0 %v1290, 64
    %v2493 = vpop.permute.xlu0 %2492
    %2494 = vrot.lane.b32.xlu0 %v1291, 64
    %v2495 = vpop.permute.xlu0 %2494
    %2496 = vrot.lane.b32.xlu0 %v1292, 64
    %v2497 = vpop.permute.xlu0 %2496
    %2498 = vrot.lane.b32.xlu0 %v1293, 64
    %v2499 = vpop.permute.xlu0 %2498
    %2500 = vrot.lane.b32.xlu0 %v1294, 64
    %v2501 = vpop.permute.xlu0 %2500
    %2502 = vrot.lane.b32.xlu0 %v1295, 64
    %v2503 = vpop.permute.xlu0 %2502
    %2504 = vrot.lane.b32.xlu0 %v1296, 64
    %v2505 = vpop.permute.xlu0 %2504
    %2506 = vrot.lane.b32.xlu0 %v1297, 64
    %v2507 = vpop.permute.xlu0 %2506
    %2508 = vrot.lane.b32.xlu0 %v1298, 64
    %v2509 = vpop.permute.xlu0 %2508
    %2510 = vrot.lane.b32.xlu0 %v1299, 64
    %v2511 = vpop.permute.xlu0 %2510
    %2512 = vrot.lane.b32.xlu0 %v1300, 64
    %v2513 = vpop.permute.xlu0 %2512
    %2514 = vrot.lane.b32.xlu0 %v1301, 64
    %v2515 = vpop.permute.xlu0 %2514
    %2516 = vrot.lane.b32.xlu0 %v1302, 64
    %v2517 = vpop.permute.xlu0 %2516
    %2518 = vrot.lane.b32.xlu0 %v1303, 64
    %v2519 = vpop.permute.xlu0 %2518
    %2520 = vrot.lane.b32.xlu0 %v1304, 64
    %v2521 = vpop.permute.xlu0 %2520
    %2650 = vrot.lane.b32.xlu0 %v1305, 80
    %v2651 = vpop.permute.xlu0 %2650
    %2652 = vrot.lane.b32.xlu0 %v1306, 80
    %v2653 = vpop.permute.xlu0 %2652
    %2654 = vrot.lane.b32.xlu0 %v1307, 80
    %v2655 = vpop.permute.xlu0 %2654
    %2656 = vrot.lane.b32.xlu0 %v1308, 80
    %v2657 = vpop.permute.xlu0 %2656
    %2658 = vrot.lane.b32.xlu0 %v1309, 80
    %v2659 = vpop.permute.xlu0 %2658
    %2660 = vrot.lane.b32.xlu0 %v1310, 80
    %v2661 = vpop.permute.xlu0 %2660
    %2662 = vrot.lane.b32.xlu0 %v1311, 80
    %v2663 = vpop.permute.xlu0 %2662
    %2664 = vrot.lane.b32.xlu0 %v1312, 80
    %v2665 = vpop.permute.xlu0 %2664
    %2666 = vrot.lane.b32.xlu0 %v1313, 80
    %v2667 = vpop.permute.xlu0 %2666
    %2668 = vrot.lane.b32.xlu0 %v1314, 80
    %v2669 = vpop.permute.xlu0 %2668
    %2670 = vrot.lane.b32.xlu0 %v1315, 80
    %v2671 = vpop.permute.xlu0 %2670
    %2672 = vrot.lane.b32.xlu0 %v1316, 80
    %v2673 = vpop.permute.xlu0 %2672
    %2674 = vrot.lane.b32.xlu0 %v1317, 80
    %v2675 = vpop.permute.xlu0 %2674
    %2676 = vrot.lane.b32.xlu0 %v1318, 80
    %v2677 = vpop.permute.xlu0 %2676
    %2678 = vrot.lane.b32.xlu0 %v1319, 80
    %v2679 = vpop.permute.xlu0 %2678
    %2680 = vrot.lane.b32.xlu0 %v1320, 80
    %v2681 = vpop.permute.xlu0 %2680
    %2682 = vrot.lane.b32.xlu0 %v1321, 80
    %v2683 = vpop.permute.xlu0 %2682
    %2684 = vrot.lane.b32.xlu0 %v1322, 80
    %v2685 = vpop.permute.xlu0 %2684
    %2686 = vrot.lane.b32.xlu0 %v1323, 80
    %v2687 = vpop.permute.xlu0 %2686
    %2688 = vrot.lane.b32.xlu0 %v1324, 80
    %v2689 = vpop.permute.xlu0 %2688
    %2690 = vrot.lane.b32.xlu0 %v1325, 80
    %v2691 = vpop.permute.xlu0 %2690
    %2692 = vrot.lane.b32.xlu0 %v1326, 80
    %v2693 = vpop.permute.xlu0 %2692
    %2694 = vrot.lane.b32.xlu0 %v1327, 80
    %v2695 = vpop.permute.xlu0 %2694
    %2696 = vrot.lane.b32.xlu0 %v1328, 80
    %v2697 = vpop.permute.xlu0 %2696
    %2698 = vrot.lane.b32.xlu0 %v1329, 80
    %v2699 = vpop.permute.xlu0 %2698
    %2700 = vrot.lane.b32.xlu0 %v1330, 80
    %v2701 = vpop.permute.xlu0 %2700
    %2702 = vrot.lane.b32.xlu0 %v1331, 80
    %v2703 = vpop.permute.xlu0 %2702
    %2704 = vrot.lane.b32.xlu0 %v1332, 80
    %v2705 = vpop.permute.xlu0 %2704
    %2706 = vrot.lane.b32.xlu0 %v1333, 80
    %v2707 = vpop.permute.xlu0 %2706
    %2708 = vrot.lane.b32.xlu0 %v1334, 80
    %v2709 = vpop.permute.xlu0 %2708
    %2710 = vrot.lane.b32.xlu0 %v1335, 80
    %v2711 = vpop.permute.xlu0 %2710
    %2712 = vrot.lane.b32.xlu0 %v1336, 80
    %v2713 = vpop.permute.xlu0 %2712
    %2714 = vrot.lane.b32.xlu0 %v1337, 80
    %v2715 = vpop.permute.xlu0 %2714
    %2716 = vrot.lane.b32.xlu0 %v1338, 80
    %v2717 = vpop.permute.xlu0 %2716
    %2718 = vrot.lane.b32.xlu0 %v1339, 80
    %v2719 = vpop.permute.xlu0 %2718
    %2720 = vrot.lane.b32.xlu0 %v1340, 80
    %v2721 = vpop.permute.xlu0 %2720
    %2722 = vrot.lane.b32.xlu0 %v1341, 80
    %v2723 = vpop.permute.xlu0 %2722
    %2724 = vrot.lane.b32.xlu0 %v1342, 80
    %v2725 = vpop.permute.xlu0 %2724
    %2726 = vrot.lane.b32.xlu0 %v1343, 80
    %v2727 = vpop.permute.xlu0 %2726
    %2728 = vrot.lane.b32.xlu0 %v1344, 80
    %v2729 = vpop.permute.xlu0 %2728
    %2730 = vrot.lane.b32.xlu0 %v1345, 80
    %v2731 = vpop.permute.xlu0 %2730
    %2732 = vrot.lane.b32.xlu0 %v1346, 80
    %v2733 = vpop.permute.xlu0 %2732
    %2734 = vrot.lane.b32.xlu0 %v1347, 80
    %v2735 = vpop.permute.xlu0 %2734
    %2736 = vrot.lane.b32.xlu0 %v1348, 80
    %v2737 = vpop.permute.xlu0 %2736
    %2738 = vrot.lane.b32.xlu0 %v1349, 80
    %v2739 = vpop.permute.xlu0 %2738
    %2740 = vrot.lane.b32.xlu0 %v1350, 80
    %v2741 = vpop.permute.xlu0 %2740
    %2742 = vrot.lane.b32.xlu0 %v1351, 80
    %v2743 = vpop.permute.xlu0 %2742
    %2744 = vrot.lane.b32.xlu0 %v1352, 80
    %v2745 = vpop.permute.xlu0 %2744
    %2746 = vrot.lane.b32.xlu0 %v1353, 80
    %v2747 = vpop.permute.xlu0 %2746
    %2748 = vrot.lane.b32.xlu0 %v1354, 80
    %v2749 = vpop.permute.xlu0 %2748
    %2750 = vrot.lane.b32.xlu0 %v1355, 80
    %v2751 = vpop.permute.xlu0 %2750
    %2752 = vrot.lane.b32.xlu0 %v1356, 80
    %v2753 = vpop.permute.xlu0 %2752
    %2754 = vrot.lane.b32.xlu0 %v1357, 80
    %v2755 = vpop.permute.xlu0 %2754
    %2756 = vrot.lane.b32.xlu0 %v1358, 80
    %v2757 = vpop.permute.xlu0 %2756
    %2758 = vrot.lane.b32.xlu0 %v1359, 80
    %v2759 = vpop.permute.xlu0 %2758
    %2760 = vrot.lane.b32.xlu0 %v1360, 80
    %v2761 = vpop.permute.xlu0 %2760
    %2762 = vrot.lane.b32.xlu0 %v1361, 80
    %v2763 = vpop.permute.xlu0 %2762
    %2764 = vrot.lane.b32.xlu0 %v1362, 80
    %v2765 = vpop.permute.xlu0 %2764
    %2766 = vrot.lane.b32.xlu0 %v1363, 80
    %v2767 = vpop.permute.xlu0 %2766
    %2768 = vrot.lane.b32.xlu0 %v1364, 80
    %v2769 = vpop.permute.xlu0 %2768
    %2770 = vrot.lane.b32.xlu0 %v1365, 80
    %v2771 = vpop.permute.xlu0 %2770
    %2772 = vrot.lane.b32.xlu0 %v1366, 80
    %v2773 = vpop.permute.xlu0 %2772
    %2774 = vrot.lane.b32.xlu0 %v1367, 80
    %v2775 = vpop.permute.xlu0 %2774
    %2776 = vrot.lane.b32.xlu0 %v1368, 80
    %v2777 = vpop.permute.xlu0 %2776
    %2906 = vrot.lane.b32.xlu0 %v1370, 96
    %v2907 = vpop.permute.xlu0 %2906
    %2908 = vrot.lane.b32.xlu0 %v1371, 96
    %v2909 = vpop.permute.xlu0 %2908
    %2910 = vrot.lane.b32.xlu0 %v1372, 96
    %v2911 = vpop.permute.xlu0 %2910
    %2912 = vrot.lane.b32.xlu0 %v1373, 96
    %v2913 = vpop.permute.xlu0 %2912
    %2914 = vrot.lane.b32.xlu0 %v1374, 96
    %v2915 = vpop.permute.xlu0 %2914
    %2916 = vrot.lane.b32.xlu0 %v1375, 96
    %v2917 = vpop.permute.xlu0 %2916
    %2918 = vrot.lane.b32.xlu0 %v1376, 96
    %v2919 = vpop.permute.xlu0 %2918
    %2920 = vrot.lane.b32.xlu0 %v1377, 96
    %v2921 = vpop.permute.xlu0 %2920
    %2922 = vrot.lane.b32.xlu0 %v1378, 96
    %v2923 = vpop.permute.xlu0 %2922
    %2924 = vrot.lane.b32.xlu0 %v1379, 96
    %v2925 = vpop.permute.xlu0 %2924
    %2926 = vrot.lane.b32.xlu0 %v1380, 96
    %v2927 = vpop.permute.xlu0 %2926
    %2928 = vrot.lane.b32.xlu0 %v1381, 96
    %v2929 = vpop.permute.xlu0 %2928
    %2930 = vrot.lane.b32.xlu0 %v1382, 96
    %v2931 = vpop.permute.xlu0 %2930
    %2932 = vrot.lane.b32.xlu0 %v1383, 96
    %v2933 = vpop.permute.xlu0 %2932
    %2934 = vrot.lane.b32.xlu0 %v1384, 96
    %v2935 = vpop.permute.xlu0 %2934
    %2936 = vrot.lane.b32.xlu0 %v1385, 96
    %v2937 = vpop.permute.xlu0 %2936
    %2938 = vrot.lane.b32.xlu0 %v1386, 96
    %v2939 = vpop.permute.xlu0 %2938
    %2940 = vrot.lane.b32.xlu0 %v1387, 96
    %v2941 = vpop.permute.xlu0 %2940
    %2942 = vrot.lane.b32.xlu0 %v1388, 96
    %v2943 = vpop.permute.xlu0 %2942
    %2944 = vrot.lane.b32.xlu0 %v1389, 96
    %v2945 = vpop.permute.xlu0 %2944
    %2946 = vrot.lane.b32.xlu0 %v1390, 96
    %v2947 = vpop.permute.xlu0 %2946
    %2948 = vrot.lane.b32.xlu0 %v1391, 96
    %v2949 = vpop.permute.xlu0 %2948
    %2950 = vrot.lane.b32.xlu0 %v1392, 96
    %v2951 = vpop.permute.xlu0 %2950
    %2952 = vrot.lane.b32.xlu0 %v1393, 96
    %v2953 = vpop.permute.xlu0 %2952
    %2954 = vrot.lane.b32.xlu0 %v1394, 96
    %v2955 = vpop.permute.xlu0 %2954
    %2956 = vrot.lane.b32.xlu0 %v1395, 96
    %v2957 = vpop.permute.xlu0 %2956
    %2958 = vrot.lane.b32.xlu0 %v1396, 96
    %v2959 = vpop.permute.xlu0 %2958
    %2960 = vrot.lane.b32.xlu0 %v1397, 96
    %v2961 = vpop.permute.xlu0 %2960
    %2962 = vrot.lane.b32.xlu0 %v1398, 96
    %v2963 = vpop.permute.xlu0 %2962
    %2964 = vrot.lane.b32.xlu0 %v1399, 96
    %v2965 = vpop.permute.xlu0 %2964
    %2966 = vrot.lane.b32.xlu0 %v1400, 96
    %v2967 = vpop.permute.xlu0 %2966
    %2968 = vrot.lane.b32.xlu0 %v1401, 96
    %v2969 = vpop.permute.xlu0 %2968
    %2970 = vrot.lane.b32.xlu0 %v1402, 96
    %v2971 = vpop.permute.xlu0 %2970
    %2972 = vrot.lane.b32.xlu0 %v1403, 96
    %v2973 = vpop.permute.xlu0 %2972
    %2974 = vrot.lane.b32.xlu0 %v1404, 96
    %v2975 = vpop.permute.xlu0 %2974
    %2976 = vrot.lane.b32.xlu0 %v1405, 96
    %v2977 = vpop.permute.xlu0 %2976
    %2978 = vrot.lane.b32.xlu0 %v1406, 96
    %v2979 = vpop.permute.xlu0 %2978
    %2980 = vrot.lane.b32.xlu0 %v1407, 96
    %v2981 = vpop.permute.xlu0 %2980
    %2982 = vrot.lane.b32.xlu0 %v1408, 96
    %v2983 = vpop.permute.xlu0 %2982
    %2984 = vrot.lane.b32.xlu0 %v1409, 96
    %v2985 = vpop.permute.xlu0 %2984
    %2986 = vrot.lane.b32.xlu0 %v1410, 96
    %v2987 = vpop.permute.xlu0 %2986
    %2988 = vrot.lane.b32.xlu0 %v1411, 96
    %v2989 = vpop.permute.xlu0 %2988
    %2990 = vrot.lane.b32.xlu0 %v1412, 96
    %v2991 = vpop.permute.xlu0 %2990
    %2992 = vrot.lane.b32.xlu0 %v1413, 96
    %v2993 = vpop.permute.xlu0 %2992
    %2994 = vrot.lane.b32.xlu0 %v1414, 96
    %v2995 = vpop.permute.xlu0 %2994
    %2996 = vrot.lane.b32.xlu0 %v1415, 96
    %v2997 = vpop.permute.xlu0 %2996
    %2998 = vrot.lane.b32.xlu0 %v1416, 96
    %v2999 = vpop.permute.xlu0 %2998
    %3000 = vrot.lane.b32.xlu0 %v1417, 96
    %v3001 = vpop.permute.xlu0 %3000
    %3002 = vrot.lane.b32.xlu0 %v1418, 96
    %v3003 = vpop.permute.xlu0 %3002
    %3004 = vrot.lane.b32.xlu0 %v1419, 96
    %v3005 = vpop.permute.xlu0 %3004
    %3006 = vrot.lane.b32.xlu0 %v1420, 96
    %v3007 = vpop.permute.xlu0 %3006
    %3008 = vrot.lane.b32.xlu0 %v1421, 96
    %v3009 = vpop.permute.xlu0 %3008
    %3010 = vrot.lane.b32.xlu0 %v1422, 96
    %v3011 = vpop.permute.xlu0 %3010
    %3012 = vrot.lane.b32.xlu0 %v1423, 96
    %v3013 = vpop.permute.xlu0 %3012
    %3014 = vrot.lane.b32.xlu0 %v1424, 96
    %v3015 = vpop.permute.xlu0 %3014
    %3016 = vrot.lane.b32.xlu0 %v1425, 96
    %v3017 = vpop.permute.xlu0 %3016
    %3018 = vrot.lane.b32.xlu0 %v1426, 96
    %v3019 = vpop.permute.xlu0 %3018
    %3020 = vrot.lane.b32.xlu0 %v1427, 96
    %v3021 = vpop.permute.xlu0 %3020
    %3022 = vrot.lane.b32.xlu0 %v1428, 96
    %v3023 = vpop.permute.xlu0 %3022
    %3024 = vrot.lane.b32.xlu0 %v1429, 96
    %v3025 = vpop.permute.xlu0 %3024
    %3026 = vrot.lane.b32.xlu0 %v1430, 96
    %v3027 = vpop.permute.xlu0 %3026
    %3028 = vrot.lane.b32.xlu0 %v1431, 96
    %v3029 = vpop.permute.xlu0 %3028
    %3030 = vrot.lane.b32.xlu0 %v1432, 96
    %v3031 = vpop.permute.xlu0 %3030
    %3032 = vrot.lane.b32.xlu0 %v1433, 96
    %v3033 = vpop.permute.xlu0 %3032
    %3162 = vrot.lane.b32.xlu0 %v1434, 112
    %v3163 = vpop.permute.xlu0 %3162
    %3164 = vrot.lane.b32.xlu0 %v1435, 112
    %v3165 = vpop.permute.xlu0 %3164
    %3166 = vrot.lane.b32.xlu0 %v1436, 112
    %v3167 = vpop.permute.xlu0 %3166
    %3168 = vrot.lane.b32.xlu0 %v1437, 112
    %v3169 = vpop.permute.xlu0 %3168
    %3170 = vrot.lane.b32.xlu0 %v1438, 112
    %v3171 = vpop.permute.xlu0 %3170
    %3172 = vrot.lane.b32.xlu0 %v1439, 112
    %v3173 = vpop.permute.xlu0 %3172
    %3174 = vrot.lane.b32.xlu0 %v1440, 112
    %v3175 = vpop.permute.xlu0 %3174
    %3176 = vrot.lane.b32.xlu0 %v1441, 112
    %v3177 = vpop.permute.xlu0 %3176
    %3178 = vrot.lane.b32.xlu0 %v1442, 112
    %v3179 = vpop.permute.xlu0 %3178
    %3180 = vrot.lane.b32.xlu0 %v1443, 112
    %v3181 = vpop.permute.xlu0 %3180
    %3182 = vrot.lane.b32.xlu0 %v1444, 112
    %v3183 = vpop.permute.xlu0 %3182
    %3184 = vrot.lane.b32.xlu0 %v1445, 112
    %v3185 = vpop.permute.xlu0 %3184
    %3186 = vrot.lane.b32.xlu0 %v1446, 112
    %v3187 = vpop.permute.xlu0 %3186
    %3188 = vrot.lane.b32.xlu0 %v1447, 112
    %v3189 = vpop.permute.xlu0 %3188
    %3190 = vrot.lane.b32.xlu0 %v1448, 112
    %v3191 = vpop.permute.xlu0 %3190
    %3192 = vrot.lane.b32.xlu0 %v1449, 112
    %v3193 = vpop.permute.xlu0 %3192
    %3194 = vrot.lane.b32.xlu0 %v1450, 112
    %v3195 = vpop.permute.xlu0 %3194
    %3196 = vrot.lane.b32.xlu0 %v1451, 112
    %v3197 = vpop.permute.xlu0 %3196
    %3198 = vrot.lane.b32.xlu0 %v1452, 112
    %v3199 = vpop.permute.xlu0 %3198
    %3200 = vrot.lane.b32.xlu0 %v1453, 112
    %v3201 = vpop.permute.xlu0 %3200
    %3202 = vrot.lane.b32.xlu0 %v1454, 112
    %v3203 = vpop.permute.xlu0 %3202
    %3204 = vrot.lane.b32.xlu0 %v1455, 112
    %v3205 = vpop.permute.xlu0 %3204
    %3206 = vrot.lane.b32.xlu0 %v1456, 112
    %v3207 = vpop.permute.xlu0 %3206
    %3208 = vrot.lane.b32.xlu0 %v1457, 112
    %v3209 = vpop.permute.xlu0 %3208
    %3210 = vrot.lane.b32.xlu0 %v1458, 112
    %v3211 = vpop.permute.xlu0 %3210
    %3212 = vrot.lane.b32.xlu0 %v1459, 112
    %v3213 = vpop.permute.xlu0 %3212
    %3214 = vrot.lane.b32.xlu0 %v1460, 112
    %v3215 = vpop.permute.xlu0 %3214
    %3216 = vrot.lane.b32.xlu0 %v1461, 112
    %v3217 = vpop.permute.xlu0 %3216
    %3218 = vrot.lane.b32.xlu0 %v1462, 112
    %v3219 = vpop.permute.xlu0 %3218
    %3220 = vrot.lane.b32.xlu0 %v1463, 112
    %v3221 = vpop.permute.xlu0 %3220
    %3222 = vrot.lane.b32.xlu0 %v1464, 112
    %v3223 = vpop.permute.xlu0 %3222
    %3224 = vrot.lane.b32.xlu0 %v1465, 112
    %v3225 = vpop.permute.xlu0 %3224
    %3226 = vrot.lane.b32.xlu0 %v1466, 112
    %v3227 = vpop.permute.xlu0 %3226
    %3228 = vrot.lane.b32.xlu0 %v1467, 112
    %v3229 = vpop.permute.xlu0 %3228
    %3230 = vrot.lane.b32.xlu0 %v1468, 112
    %v3231 = vpop.permute.xlu0 %3230
    %3232 = vrot.lane.b32.xlu0 %v1469, 112
    %v3233 = vpop.permute.xlu0 %3232
    %3234 = vrot.lane.b32.xlu0 %v1470, 112
    %v3235 = vpop.permute.xlu0 %3234
    %3236 = vrot.lane.b32.xlu0 %v1471, 112
    %v3237 = vpop.permute.xlu0 %3236
    %3238 = vrot.lane.b32.xlu0 %v1472, 112
    %v3239 = vpop.permute.xlu0 %3238
    %3240 = vrot.lane.b32.xlu0 %v1473, 112
    %v3241 = vpop.permute.xlu0 %3240
    %3242 = vrot.lane.b32.xlu0 %v1474, 112
    %v3243 = vpop.permute.xlu0 %3242
    %3244 = vrot.lane.b32.xlu0 %v1475, 112
    %v3245 = vpop.permute.xlu0 %3244
    %3246 = vrot.lane.b32.xlu0 %v1476, 112
    %v3247 = vpop.permute.xlu0 %3246
    %3248 = vrot.lane.b32.xlu0 %v1477, 112
    %v3249 = vpop.permute.xlu0 %3248
    %3250 = vrot.lane.b32.xlu0 %v1478, 112
    %v3251 = vpop.permute.xlu0 %3250
    %3252 = vrot.lane.b32.xlu0 %v1479, 112
    %v3253 = vpop.permute.xlu0 %3252
    %3254 = vrot.lane.b32.xlu0 %v1480, 112
    %v3255 = vpop.permute.xlu0 %3254
    %3256 = vrot.lane.b32.xlu0 %v1481, 112
    %v3257 = vpop.permute.xlu0 %3256
    %3258 = vrot.lane.b32.xlu0 %v1482, 112
    %v3259 = vpop.permute.xlu0 %3258
    %3260 = vrot.lane.b32.xlu0 %v1483, 112
    %v3261 = vpop.permute.xlu0 %3260
    %3262 = vrot.lane.b32.xlu0 %v1484, 112
    %v3263 = vpop.permute.xlu0 %3262
    %3264 = vrot.lane.b32.xlu0 %v1485, 112
    %v3265 = vpop.permute.xlu0 %3264
    %3266 = vrot.lane.b32.xlu0 %v1486, 112
    %v3267 = vpop.permute.xlu0 %3266
    %3268 = vrot.lane.b32.xlu0 %v1487, 112
    %v3269 = vpop.permute.xlu0 %3268
    %3270 = vrot.lane.b32.xlu0 %v1488, 112
    %v3271 = vpop.permute.xlu0 %3270
    %3272 = vrot.lane.b32.xlu0 %v1489, 112
    %v3273 = vpop.permute.xlu0 %3272
    %3274 = vrot.lane.b32.xlu0 %v1490, 112
    %v3275 = vpop.permute.xlu0 %3274
    %3276 = vrot.lane.b32.xlu0 %v1491, 112
    %v3277 = vpop.permute.xlu0 %3276
    %3278 = vrot.lane.b32.xlu0 %v1492, 112
    %v3279 = vpop.permute.xlu0 %3278
    %3280 = vrot.lane.b32.xlu0 %v1493, 112
    %v3281 = vpop.permute.xlu0 %3280
    %3282 = vrot.lane.b32.xlu0 %v1494, 112
    %v3283 = vpop.permute.xlu0 %3282
    %3284 = vrot.lane.b32.xlu0 %v1495, 112
    %v3285 = vpop.permute.xlu0 %3284
    %3286 = vrot.lane.b32.xlu0 %v1496, 112
    %v3287 = vpop.permute.xlu0 %3286
    %3288 = vrot.lane.b32.xlu0 %v1497, 112
    %v3289 = vpop.permute.xlu0 %3288
    %v3354 = vsel %vm810, %v985, %v1627
    %v3355 = vsel %vm810, %v986, %v1629
    %v3356 = vsel %vm810, %v987, %v1631
    %v3357 = vsel %vm810, %v988, %v1633
    %v3358 = vsel %vm810, %v989, %v1635
    %v3359 = vsel %vm810, %v990, %v1637
    %v3360 = vsel %vm810, %v991, %v1639
    %v3361 = vsel %vm810, %v992, %v1641
    %v3362 = vsel %vm810, %v993, %v1643
    %v3363 = vsel %vm810, %v994, %v1645
    %v3364 = vsel %vm810, %v995, %v1647
    %v3365 = vsel %vm810, %v996, %v1649
    %v3366 = vsel %vm810, %v997, %v1651
    %v3367 = vsel %vm810, %v998, %v1653
    %v3368 = vsel %vm810, %v999, %v1655
    %v3369 = vsel %vm810, %v1000, %v1657
    %v3370 = vsel %vm810, %v1001, %v1659
    %v3371 = vsel %vm810, %v1002, %v1661
    %v3372 = vsel %vm810, %v1003, %v1663
    %v3373 = vsel %vm810, %v1004, %v1665
    %v3374 = vsel %vm810, %v1005, %v1667
    %v3375 = vsel %vm810, %v1006, %v1669
    %v3376 = vsel %vm810, %v1007, %v1671
    %v3377 = vsel %vm810, %v1008, %v1673
    %v3378 = vsel %vm810, %v1009, %v1675
    %v3379 = vsel %vm810, %v1010, %v1677
    %v3380 = vsel %vm810, %v1011, %v1679
    %v3381 = vsel %vm810, %v1012, %v1681
    %v3382 = vsel %vm810, %v1013, %v1683
    %v3383 = vsel %vm810, %v1014, %v1685
    %v3384 = vsel %vm810, %v1015, %v1687
    %v3385 = vsel %vm810, %v1016, %v1689
    %v3386 = vsel %vm810, %v1017, %v1691
    %v3387 = vsel %vm810, %v1018, %v1693
    %v3388 = vsel %vm810, %v1019, %v1695
    %v3389 = vsel %vm810, %v1020, %v1697
    %v3390 = vsel %vm810, %v1021, %v1699
    %v3391 = vsel %vm810, %v1022, %v1701
    %v3392 = vsel %vm810, %v1023, %v1703
    %v3393 = vsel %vm810, %v1024, %v1705
    %v3394 = vsel %vm810, %v1025, %v1707
    %v3395 = vsel %vm810, %v1026, %v1709
    %v3396 = vsel %vm810, %v1027, %v1711
    %v3397 = vsel %vm810, %v1028, %v1713
    %v3398 = vsel %vm810, %v1029, %v1715
    %v3399 = vsel %vm810, %v1030, %v1717
    %v3400 = vsel %vm810, %v1031, %v1719
    %v3401 = vsel %vm810, %v1032, %v1721
    %v3402 = vsel %vm810, %v1033, %v1723
    %v3403 = vsel %vm810, %v1034, %v1725
    %v3404 = vsel %vm810, %v1035, %v1727
    %v3405 = vsel %vm810, %v1036, %v1729
    %v3406 = vsel %vm810, %v1037, %v1731
    %v3407 = vsel %vm810, %v1038, %v1733
    %v3408 = vsel %vm810, %v1039, %v1735
    %v3409 = vsel %vm810, %v1040, %v1737
    %v3410 = vsel %vm810, %v1041, %v1739
    %v3411 = vsel %vm810, %v1042, %v1741
    %v3412 = vsel %vm810, %v1043, %v1743
    %v3413 = vsel %vm810, %v1044, %v1745
    %v3414 = vsel %vm810, %v1045, %v1747
    %v3415 = vsel %vm810, %v1046, %v1749
    %v3416 = vsel %vm810, %v1047, %v1751
    %v3417 = vsel %vm810, %v1048, %v1753
    %vm3418 = vcmask 261120
    %v3419 = vsel %vm3418, %v3354, %v1883
    %v3420 = vsel %vm3418, %v3355, %v1885
    %v3421 = vsel %vm3418, %v3356, %v1887
    %v3422 = vsel %vm3418, %v3357, %v1889
    %v3423 = vsel %vm3418, %v3358, %v1891
    %v3424 = vsel %vm3418, %v3359, %v1893
    %v3425 = vsel %vm3418, %v3360, %v1895
    %v3426 = vsel %vm3418, %v3361, %v1897
    %v3427 = vsel %vm3418, %v3362, %v1899
    %v3428 = vsel %vm3418, %v3363, %v1901
    %v3429 = vsel %vm3418, %v3364, %v1903
    %v3430 = vsel %vm3418, %v3365, %v1905
    %v3431 = vsel %vm3418, %v3366, %v1907
    %v3432 = vsel %vm3418, %v3367, %v1909
    %v3433 = vsel %vm3418, %v3368, %v1911
    %v3434 = vsel %vm3418, %v3369, %v1913
    %v3435 = vsel %vm3418, %v3370, %v1915
    %v3436 = vsel %vm3418, %v3371, %v1917
    %v3437 = vsel %vm3418, %v3372, %v1919
    %v3438 = vsel %vm3418, %v3373, %v1921
    %v3439 = vsel %vm3418, %v3374, %v1923
    %v3440 = vsel %vm3418, %v3375, %v1925
    %v3441 = vsel %vm3418, %v3376, %v1927
    %v3442 = vsel %vm3418, %v3377, %v1929
    %v3443 = vsel %vm3418, %v3378, %v1931
    %v3444 = vsel %vm3418, %v3379, %v1933
    %v3445 = vsel %vm3418, %v3380, %v1935
    %v3446 = vsel %vm3418, %v3381, %v1937
    %v3447 = vsel %vm3418, %v3382, %v1939
    %v3448 = vsel %vm3418, %v3383, %v1941
    %v3449 = vsel %vm3418, %v3384, %v1943
    %v3450 = vsel %vm3418, %v3385, %v1945
    %v3451 = vsel %vm3418, %v3386, %v1947
    %v3452 = vsel %vm3418, %v3387, %v1949
    %v3453 = vsel %vm3418, %v3388, %v1951
    %v3454 = vsel %vm3418, %v3389, %v1953
    %v3455 = vsel %vm3418, %v3390, %v1955
    %v3456 = vsel %vm3418, %v3391, %v1957
    %v3457 = vsel %vm3418, %v3392, %v1959
    %v3458 = vsel %vm3418, %v3393, %v1961
    %v3459 = vsel %vm3418, %v3394, %v1963
    %v3460 = vsel %vm3418, %v3395, %v1965
    %v3461 = vsel %vm3418, %v3396, %v1967
    %v3462 = vsel %vm3418, %v3397, %v1969
    %v3463 = vsel %vm3418, %v3398, %v1971
    %v3464 = vsel %vm3418, %v3399, %v1973
    %v3465 = vsel %vm3418, %v3400, %v1975
    %v3466 = vsel %vm3418, %v3401, %v1977
    %v3467 = vsel %vm3418, %v3402, %v1979
    %v3468 = vsel %vm3418, %v3403, %v1981
    %v3469 = vsel %vm3418, %v3404, %v1983
    %v3470 = vsel %vm3418, %v3405, %v1985
    %v3471 = vsel %vm3418, %v3406, %v1987
    %v3472 = vsel %vm3418, %v3407, %v1989
    %v3473 = vsel %vm3418, %v3408, %v1991
    %v3474 = vsel %vm3418, %v3409, %v1993
    %v3475 = vsel %vm3418, %v3410, %v1995
    %v3476 = vsel %vm3418, %v3411, %v1997
    %v3477 = vsel %vm3418, %v3412, %v1999
    %v3478 = vsel %vm3418, %v3413, %v2001
    %v3479 = vsel %vm3418, %v3414, %v2003
    %v3480 = vsel %vm3418, %v3415, %v2005
    %v3481 = vsel %vm3418, %v3416, %v2007
    %v3482 = vsel %vm3418, %v3417, %v2009
    %vm3483 = vcmask 392192
    %v3484 = vsel %vm3483, %v3419, %v2139
    %v3485 = vsel %vm3483, %v3420, %v2141
    %v3486 = vsel %vm3483, %v3421, %v2143
    %v3487 = vsel %vm3483, %v3422, %v2145
    %v3488 = vsel %vm3483, %v3423, %v2147
    %v3489 = vsel %vm3483, %v3424, %v2149
    %v3490 = vsel %vm3483, %v3425, %v2151
    %v3491 = vsel %vm3483, %v3426, %v2153
    %v3492 = vsel %vm3483, %v3427, %v2155
    %v3493 = vsel %vm3483, %v3428, %v2157
    %v3494 = vsel %vm3483, %v3429, %v2159
    %v3495 = vsel %vm3483, %v3430, %v2161
    %v3496 = vsel %vm3483, %v3431, %v2163
    %v3497 = vsel %vm3483, %v3432, %v2165
    %v3498 = vsel %vm3483, %v3433, %v2167
    %v3499 = vsel %vm3483, %v3434, %v2169
    %v3500 = vsel %vm3483, %v3435, %v2171
    %v3501 = vsel %vm3483, %v3436, %v2173
    %v3502 = vsel %vm3483, %v3437, %v2175
    %v3503 = vsel %vm3483, %v3438, %v2177
    %v3504 = vsel %vm3483, %v3439, %v2179
    %v3505 = vsel %vm3483, %v3440, %v2181
    %v3506 = vsel %vm3483, %v3441, %v2183
    %v3507 = vsel %vm3483, %v3442, %v2185
    %v3508 = vsel %vm3483, %v3443, %v2187
    %v3509 = vsel %vm3483, %v3444, %v2189
    %v3510 = vsel %vm3483, %v3445, %v2191
    %v3511 = vsel %vm3483, %v3446, %v2193
    %v3512 = vsel %vm3483, %v3447, %v2195
    %v3513 = vsel %vm3483, %v3448, %v2197
    %v3514 = vsel %vm3483, %v3449, %v2199
    %v3515 = vsel %vm3483, %v3450, %v2201
    %v3516 = vsel %vm3483, %v3451, %v2203
    %v3517 = vsel %vm3483, %v3452, %v2205
    %v3518 = vsel %vm3483, %v3453, %v2207
    %v3519 = vsel %vm3483, %v3454, %v2209
    %v3520 = vsel %vm3483, %v3455, %v2211
    %v3521 = vsel %vm3483, %v3456, %v2213
    %v3522 = vsel %vm3483, %v3457, %v2215
    %v3523 = vsel %vm3483, %v3458, %v2217
    %v3524 = vsel %vm3483, %v3459, %v2219
    %v3525 = vsel %vm3483, %v3460, %v2221
    %v3526 = vsel %vm3483, %v3461, %v2223
    %v3527 = vsel %vm3483, %v3462, %v2225
    %v3528 = vsel %vm3483, %v3463, %v2227
    %v3529 = vsel %vm3483, %v3464, %v2229
    %v3530 = vsel %vm3483, %v3465, %v2231
    %v3531 = vsel %vm3483, %v3466, %v2233
    %v3532 = vsel %vm3483, %v3467, %v2235
    %v3533 = vsel %vm3483, %v3468, %v2237
    %v3534 = vsel %vm3483, %v3469, %v2239
    %v3535 = vsel %vm3483, %v3470, %v2241
    %v3536 = vsel %vm3483, %v3471, %v2243
    %v3537 = vsel %vm3483, %v3472, %v2245
    %v3538 = vsel %vm3483, %v3473, %v2247
    %v3539 = vsel %vm3483, %v3474, %v2249
    %v3540 = vsel %vm3483, %v3475, %v2251
    %v3541 = vsel %vm3483, %v3476, %v2253
    %v3542 = vsel %vm3483, %v3477, %v2255
    %v3543 = vsel %vm3483, %v3478, %v2257
    %v3544 = vsel %vm3483, %v3479, %v2259
    %v3545 = vsel %vm3483, %v3480, %v2261
    %v3546 = vsel %vm3483, %v3481, %v2263
    %v3547 = vsel %vm3483, %v3482, %v2265
    %vm3548 = vcmask 523264
    %v3549 = vsel %vm3548, %v3484, %v2395
    %v3550 = vsel %vm3548, %v3485, %v2397
    %v3551 = vsel %vm3548, %v3486, %v2399
    %v3552 = vsel %vm3548, %v3487, %v2401
    %v3553 = vsel %vm3548, %v3488, %v2403
    %v3554 = vsel %vm3548, %v3489, %v2405
    %v3555 = vsel %vm3548, %v3490, %v2407
    %v3556 = vsel %vm3548, %v3491, %v2409
    %v3557 = vsel %vm3548, %v3492, %v2411
    %v3558 = vsel %vm3548, %v3493, %v2413
    %v3559 = vsel %vm3548, %v3494, %v2415
    %v3560 = vsel %vm3548, %v3495, %v2417
    %v3561 = vsel %vm3548, %v3496, %v2419
    %v3562 = vsel %vm3548, %v3497, %v2421
    %v3563 = vsel %vm3548, %v3498, %v2423
    %v3564 = vsel %vm3548, %v3499, %v2425
    %v3565 = vsel %vm3548, %v3500, %v2427
    %v3566 = vsel %vm3548, %v3501, %v2429
    %v3567 = vsel %vm3548, %v3502, %v2431
    %v3568 = vsel %vm3548, %v3503, %v2433
    %v3569 = vsel %vm3548, %v3504, %v2435
    %v3570 = vsel %vm3548, %v3505, %v2437
    %v3571 = vsel %vm3548, %v3506, %v2439
    %v3572 = vsel %vm3548, %v3507, %v2441
    %v3573 = vsel %vm3548, %v3508, %v2443
    %v3574 = vsel %vm3548, %v3509, %v2445
    %v3575 = vsel %vm3548, %v3510, %v2447
    %v3576 = vsel %vm3548, %v3511, %v2449
    %v3577 = vsel %vm3548, %v3512, %v2451
    %v3578 = vsel %vm3548, %v3513, %v2453
    %v3579 = vsel %vm3548, %v3514, %v2455
    %v3580 = vsel %vm3548, %v3515, %v2457
    %v3581 = vsel %vm3548, %v3516, %v2459
    %v3582 = vsel %vm3548, %v3517, %v2461
    %v3583 = vsel %vm3548, %v3518, %v2463
    %v3584 = vsel %vm3548, %v3519, %v2465
    %v3585 = vsel %vm3548, %v3520, %v2467
    %v3586 = vsel %vm3548, %v3521, %v2469
    %v3587 = vsel %vm3548, %v3522, %v2471
    %v3588 = vsel %vm3548, %v3523, %v2473
    %v3589 = vsel %vm3548, %v3524, %v2475
    %v3590 = vsel %vm3548, %v3525, %v2477
    %v3591 = vsel %vm3548, %v3526, %v2479
    %v3592 = vsel %vm3548, %v3527, %v2481
    %v3593 = vsel %vm3548, %v3528, %v2483
    %v3594 = vsel %vm3548, %v3529, %v2485
    %v3595 = vsel %vm3548, %v3530, %v2487
    %v3596 = vsel %vm3548, %v3531, %v2489
    %v3597 = vsel %vm3548, %v3532, %v2491
    %v3598 = vsel %vm3548, %v3533, %v2493
    %v3599 = vsel %vm3548, %v3534, %v2495
    %v3600 = vsel %vm3548, %v3535, %v2497
    %v3601 = vsel %vm3548, %v3536, %v2499
    %v3602 = vsel %vm3548, %v3537, %v2501
    %v3603 = vsel %vm3548, %v3538, %v2503
    %v3604 = vsel %vm3548, %v3539, %v2505
    %v3605 = vsel %vm3548, %v3540, %v2507
    %v3606 = vsel %vm3548, %v3541, %v2509
    %v3607 = vsel %vm3548, %v3542, %v2511
    %v3608 = vsel %vm3548, %v3543, %v2513
    %v3609 = vsel %vm3548, %v3544, %v2515
    %v3610 = vsel %vm3548, %v3545, %v2517
    %v3611 = vsel %vm3548, %v3546, %v2519
    %v3612 = vsel %vm3548, %v3547, %v2521
    %vm3613 = vcmask 654336
    %v3614 = vsel %vm3613, %v3549, %v2651
    %v3615 = vsel %vm3613, %v3550, %v2653
    %v3616 = vsel %vm3613, %v3551, %v2655
    %v3617 = vsel %vm3613, %v3552, %v2657
    %v3618 = vsel %vm3613, %v3553, %v2659
    %v3619 = vsel %vm3613, %v3554, %v2661
    %v3620 = vsel %vm3613, %v3555, %v2663
    %v3621 = vsel %vm3613, %v3556, %v2665
    %v3622 = vsel %vm3613, %v3557, %v2667
    %v3623 = vsel %vm3613, %v3558, %v2669
    %v3624 = vsel %vm3613, %v3559, %v2671
    %v3625 = vsel %vm3613, %v3560, %v2673
    %v3626 = vsel %vm3613, %v3561, %v2675
    %v3627 = vsel %vm3613, %v3562, %v2677
    %v3628 = vsel %vm3613, %v3563, %v2679
    %v3629 = vsel %vm3613, %v3564, %v2681
    %v3630 = vsel %vm3613, %v3565, %v2683
    %v3631 = vsel %vm3613, %v3566, %v2685
    %v3632 = vsel %vm3613, %v3567, %v2687
    %v3633 = vsel %vm3613, %v3568, %v2689
    %v3634 = vsel %vm3613, %v3569, %v2691
    %v3635 = vsel %vm3613, %v3570, %v2693
    %v3636 = vsel %vm3613, %v3571, %v2695
    %v3637 = vsel %vm3613, %v3572, %v2697
    %v3638 = vsel %vm3613, %v3573, %v2699
    %v3639 = vsel %vm3613, %v3574, %v2701
    %v3640 = vsel %vm3613, %v3575, %v2703
    %v3641 = vsel %vm3613, %v3576, %v2705
    %v3642 = vsel %vm3613, %v3577, %v2707
    %v3643 = vsel %vm3613, %v3578, %v2709
    %v3644 = vsel %vm3613, %v3579, %v2711
    %v3645 = vsel %vm3613, %v3580, %v2713
    %v3646 = vsel %vm3613, %v3581, %v2715
    %v3647 = vsel %vm3613, %v3582, %v2717
    %v3648 = vsel %vm3613, %v3583, %v2719
    %v3649 = vsel %vm3613, %v3584, %v2721
    %v3650 = vsel %vm3613, %v3585, %v2723
    %v3651 = vsel %vm3613, %v3586, %v2725
    %v3652 = vsel %vm3613, %v3587, %v2727
    %v3653 = vsel %vm3613, %v3588, %v2729
    %v3654 = vsel %vm3613, %v3589, %v2731
    %v3655 = vsel %vm3613, %v3590, %v2733
    %v3656 = vsel %vm3613, %v3591, %v2735
    %v3657 = vsel %vm3613, %v3592, %v2737
    %v3658 = vsel %vm3613, %v3593, %v2739
    %v3659 = vsel %vm3613, %v3594, %v2741
    %v3660 = vsel %vm3613, %v3595, %v2743
    %v3661 = vsel %vm3613, %v3596, %v2745
    %v3662 = vsel %vm3613, %v3597, %v2747
    %v3663 = vsel %vm3613, %v3598, %v2749
    %v3664 = vsel %vm3613, %v3599, %v2751
    %v3665 = vsel %vm3613, %v3600, %v2753
    %v3666 = vsel %vm3613, %v3601, %v2755
    %v3667 = vsel %vm3613, %v3602, %v2757
    %v3668 = vsel %vm3613, %v3603, %v2759
    %v3669 = vsel %vm3613, %v3604, %v2761
    %v3670 = vsel %vm3613, %v3605, %v2763
    %v3671 = vsel %vm3613, %v3606, %v2765
    %v3672 = vsel %vm3613, %v3607, %v2767
    %v3673 = vsel %vm3613, %v3608, %v2769
    %v3674 = vsel %vm3613, %v3609, %v2771
    %v3675 = vsel %vm3613, %v3610, %v2773
    %v3676 = vsel %vm3613, %v3611, %v2775
    %v3677 = vsel %vm3613, %v3612, %v2777
    %vm3678 = vcmask 785408
    %v3679 = vsel %vm3678, %v3614, %v2907
    %v3680 = vsel %vm3678, %v3615, %v2909
    %v3681 = vsel %vm3678, %v3616, %v2911
    %v3682 = vsel %vm3678, %v3617, %v2913
    %v3683 = vsel %vm3678, %v3618, %v2915
    %v3684 = vsel %vm3678, %v3619, %v2917
    %v3685 = vsel %vm3678, %v3620, %v2919
    %v3686 = vsel %vm3678, %v3621, %v2921
    %v3687 = vsel %vm3678, %v3622, %v2923
    %v3688 = vsel %vm3678, %v3623, %v2925
    %v3689 = vsel %vm3678, %v3624, %v2927
    %v3690 = vsel %vm3678, %v3625, %v2929
    %v3691 = vsel %vm3678, %v3626, %v2931
    %v3692 = vsel %vm3678, %v3627, %v2933
    %v3693 = vsel %vm3678, %v3628, %v2935
    %v3694 = vsel %vm3678, %v3629, %v2937
    %v3695 = vsel %vm3678, %v3630, %v2939
    %v3696 = vsel %vm3678, %v3631, %v2941
    %v3697 = vsel %vm3678, %v3632, %v2943
    %v3698 = vsel %vm3678, %v3633, %v2945
    %v3699 = vsel %vm3678, %v3634, %v2947
    %v3700 = vsel %vm3678, %v3635, %v2949
    %v3701 = vsel %vm3678, %v3636, %v2951
    %v3702 = vsel %vm3678, %v3637, %v2953
    %v3703 = vsel %vm3678, %v3638, %v2955
    %v3704 = vsel %vm3678, %v3639, %v2957
    %v3705 = vsel %vm3678, %v3640, %v2959
    %v3706 = vsel %vm3678, %v3641, %v2961
    %v3707 = vsel %vm3678, %v3642, %v2963
    %v3708 = vsel %vm3678, %v3643, %v2965
    %v3709 = vsel %vm3678, %v3644, %v2967
    %v3710 = vsel %vm3678, %v3645, %v2969
    %v3711 = vsel %vm3678, %v3646, %v2971
    %v3712 = vsel %vm3678, %v3647, %v2973
    %v3713 = vsel %vm3678, %v3648, %v2975
    %v3714 = vsel %vm3678, %v3649, %v2977
    %v3715 = vsel %vm3678, %v3650, %v2979
    %v3716 = vsel %vm3678, %v3651, %v2981
    %v3717 = vsel %vm3678, %v3652, %v2983
    %v3718 = vsel %vm3678, %v3653, %v2985
    %v3719 = vsel %vm3678, %v3654, %v2987
    %v3720 = vsel %vm3678, %v3655, %v2989
    %v3721 = vsel %vm3678, %v3656, %v2991
    %v3722 = vsel %vm3678, %v3657, %v2993
    %v3723 = vsel %vm3678, %v3658, %v2995
    %v3724 = vsel %vm3678, %v3659, %v2997
    %v3725 = vsel %vm3678, %v3660, %v2999
    %v3726 = vsel %vm3678, %v3661, %v3001
    %v3727 = vsel %vm3678, %v3662, %v3003
    %v3728 = vsel %vm3678, %v3663, %v3005
    %v3729 = vsel %vm3678, %v3664, %v3007
    %v3730 = vsel %vm3678, %v3665, %v3009
    %v3731 = vsel %vm3678, %v3666, %v3011
    %v3732 = vsel %vm3678, %v3667, %v3013
    %v3733 = vsel %vm3678, %v3668, %v3015
    %v3734 = vsel %vm3678, %v3669, %v3017
    %v3735 = vsel %vm3678, %v3670, %v3019
    %v3736 = vsel %vm3678, %v3671, %v3021
    %v3737 = vsel %vm3678, %v3672, %v3023
    %v3738 = vsel %vm3678, %v3673, %v3025
    %v3739 = vsel %vm3678, %v3674, %v3027
    %v3740 = vsel %vm3678, %v3675, %v3029
    %v3741 = vsel %vm3678, %v3676, %v3031
    %v3742 = vsel %vm3678, %v3677, %v3033
    %vm3743 = vcmask 916480
    %v3744 = vsel %vm3743, %v3679, %v3163
    %v3745 = vsel %vm3743, %v3680, %v3165
    %v3746 = vsel %vm3743, %v3681, %v3167
    %v3747 = vsel %vm3743, %v3682, %v3169
    %v3748 = vsel %vm3743, %v3683, %v3171
    %v3749 = vsel %vm3743, %v3684, %v3173
    %v3750 = vsel %vm3743, %v3685, %v3175
    %v3751 = vsel %vm3743, %v3686, %v3177
    %v3752 = vsel %vm3743, %v3687, %v3179
    %v3753 = vsel %vm3743, %v3688, %v3181
    %v3754 = vsel %vm3743, %v3689, %v3183
    %v3755 = vsel %vm3743, %v3690, %v3185
    %v3756 = vsel %vm3743, %v3691, %v3187
    %v3757 = vsel %vm3743, %v3692, %v3189
    %v3758 = vsel %vm3743, %v3693, %v3191
    %v3759 = vsel %vm3743, %v3694, %v3193
    %v3760 = vsel %vm3743, %v3695, %v3195
    %v3761 = vsel %vm3743, %v3696, %v3197
    %v3762 = vsel %vm3743, %v3697, %v3199
    %v3763 = vsel %vm3743, %v3698, %v3201
    %v3764 = vsel %vm3743, %v3699, %v3203
    %v3765 = vsel %vm3743, %v3700, %v3205
    %v3766 = vsel %vm3743, %v3701, %v3207
    %v3767 = vsel %vm3743, %v3702, %v3209
    %v3768 = vsel %vm3743, %v3703, %v3211
    %v3769 = vsel %vm3743, %v3704, %v3213
    %v3770 = vsel %vm3743, %v3705, %v3215
    %v3771 = vsel %vm3743, %v3706, %v3217
    %v3772 = vsel %vm3743, %v3707, %v3219
    %v3773 = vsel %vm3743, %v3708, %v3221
    %v3774 = vsel %vm3743, %v3709, %v3223
    %v3775 = vsel %vm3743, %v3710, %v3225
    %v3776 = vsel %vm3743, %v3711, %v3227
    %v3777 = vsel %vm3743, %v3712, %v3229
    %v3778 = vsel %vm3743, %v3713, %v3231
    %v3779 = vsel %vm3743, %v3714, %v3233
    %v3780 = vsel %vm3743, %v3715, %v3235
    %v3781 = vsel %vm3743, %v3716, %v3237
    %v3782 = vsel %vm3743, %v3717, %v3239
    %v3783 = vsel %vm3743, %v3718, %v3241
    %v3784 = vsel %vm3743, %v3719, %v3243
    %v3785 = vsel %vm3743, %v3720, %v3245
    %v3786 = vsel %vm3743, %v3721, %v3247
    %v3787 = vsel %vm3743, %v3722, %v3249
    %v3788 = vsel %vm3743, %v3723, %v3251
    %v3789 = vsel %vm3743, %v3724, %v3253
    %v3790 = vsel %vm3743, %v3725, %v3255
    %v3791 = vsel %vm3743, %v3726, %v3257
    %v3792 = vsel %vm3743, %v3727, %v3259
    %v3793 = vsel %vm3743, %v3728, %v3261
    %v3794 = vsel %vm3743, %v3729, %v3263
    %v3795 = vsel %vm3743, %v3730, %v3265
    %v3796 = vsel %vm3743, %v3731, %v3267
    %v3797 = vsel %vm3743, %v3732, %v3269
    %v3798 = vsel %vm3743, %v3733, %v3271
    %v3799 = vsel %vm3743, %v3734, %v3273
    %v3800 = vsel %vm3743, %v3735, %v3275
    %v3801 = vsel %vm3743, %v3736, %v3277
    %v3802 = vsel %vm3743, %v3737, %v3279
    %v3803 = vsel %vm3743, %v3738, %v3281
    %v3804 = vsel %vm3743, %v3739, %v3283
    %v3805 = vsel %vm3743, %v3740, %v3285
    %v3806 = vsel %vm3743, %v3741, %v3287
    %v3807 = vsel %vm3743, %v3742, %v3289
    %v3808 = vld [vmem:[%s4] sm:$0xff]
    %v3809 = vld [vmem:[%s4 + $0x8] sm:$0xff]
    %v3810 = vld [vmem:[%s4 + $0x10] sm:$0xff]
    %v3811 = vld [vmem:[%s4 + $0x18] sm:$0xff]
    %v3812 = vld [vmem:[%s4 + $0x20] sm:$0xff]
    %v3813 = vld [vmem:[%s4 + $0x28] sm:$0xff]
    %v3814 = vld [vmem:[%s4 + $0x30] sm:$0xff]
    %v3815 = vld [vmem:[%s4 + $0x38] sm:$0xff]
    %v3816 = vld [vmem:[%s4 + $0x40] sm:$0xff]
    %v3817 = vld [vmem:[%s4 + $0x48] sm:$0xff]
    %v3818 = vld [vmem:[%s4 + $0x50] sm:$0xff]
    %v3819 = vld [vmem:[%s4 + $0x58] sm:$0xff]
    %v3820 = vld [vmem:[%s4 + $0x60] sm:$0xff]
    %v3821 = vld [vmem:[%s4 + $0x68] sm:$0xff]
    %v3822 = vld [vmem:[%s4 + $0x70] sm:$0xff]
    %v3823 = vld [vmem:[%s4 + $0x78] sm:$0xff]
    %v3824 = vld [vmem:[%s4 + $0x80] sm:$0xff]
    %v3825 = vld [vmem:[%s4 + $0x88] sm:$0xff]
    %v3826 = vld [vmem:[%s5] sm:$0x1]
    %v3828 = vlaneseq
    %v3829 = vshrl.u32 %v3828, 7
    %v3830 = vsub.s32 0, %v3829
    %v3831 = vrot.slane %v3826, %v3830
    %v3834 = vsel %vm810, %v1498, 0
    %v3837 = vsel %vm810, %v1499, 0
    %v3840 = vsel %vm810, %v1500, 0
    %v3843 = vsel %vm810, %v1501, 0
    %v3846 = vsel %vm810, %v1502, 0
    %v3849 = vsel %vm810, %v1503, 0
    %v3852 = vsel %vm810, %v1504, 0
    %v3855 = vsel %vm810, %v1505, 0
    %v3858 = vsel %vm810, %v1506, 0
    %v3861 = vsel %vm810, %v1507, 0
    %v3864 = vsel %vm810, %v1508, 0
    %v3867 = vsel %vm810, %v1509, 0
    %v3870 = vsel %vm810, %v1510, 0
    %v3873 = vsel %vm810, %v1511, 0
    %v3876 = vsel %vm810, %v1512, 0
    %v3879 = vsel %vm810, %v1513, 0
    %v3882 = vsel %vm810, %v1514, 0
    %v3885 = vsel %vm810, %v1515, 0
    %v3888 = vsel %vm810, %v1516, 0
    %v3891 = vsel %vm810, %v1517, 0
    %v3894 = vsel %vm810, %v1518, 0
    %v3897 = vsel %vm810, %v1519, 0
    %v3900 = vsel %vm810, %v1520, 0
    %v3903 = vsel %vm810, %v1521, 0
    %v3906 = vsel %vm810, %v1522, 0
    %v3909 = vsel %vm810, %v1523, 0
    %v3912 = vsel %vm810, %v1524, 0
    %v3915 = vsel %vm810, %v1525, 0
    %v3918 = vsel %vm810, %v1526, 0
    %v3921 = vsel %vm810, %v1527, 0
    %v3924 = vsel %vm810, %v1528, 0
    %v3927 = vsel %vm810, %v1529, 0
    %v3930 = vsel %vm810, %v1530, 0
    %v3933 = vsel %vm810, %v1531, 0
    %v3936 = vsel %vm810, %v1532, 0
    %v3939 = vsel %vm810, %v1533, 0
    %v3942 = vsel %vm810, %v1534, 0
    %v3945 = vsel %vm810, %v1535, 0
    %v3948 = vsel %vm810, %v1536, 0
    %v3951 = vsel %vm810, %v1537, 0
    %v3954 = vsel %vm810, %v1538, 0
    %v3957 = vsel %vm810, %v1539, 0
    %v3960 = vsel %vm810, %v1540, 0
    %v3963 = vsel %vm810, %v1541, 0
    %v3966 = vsel %vm810, %v1542, 0
    %v3969 = vsel %vm810, %v1543, 0
    %v3972 = vsel %vm810, %v1544, 0
    %v3975 = vsel %vm810, %v1545, 0
    %v3978 = vsel %vm810, %v1546, 0
    %v3981 = vsel %vm810, %v1547, 0
    %v3984 = vsel %vm810, %v1548, 0
    %v3987 = vsel %vm810, %v1549, 0
    %v3990 = vsel %vm810, %v1550, 0
    %v3993 = vsel %vm810, %v1551, 0
    %v3996 = vsel %vm810, %v1552, 0
    %v3999 = vsel %vm810, %v1553, 0
    %v4002 = vsel %vm810, %v1554, 0
    %v4005 = vsel %vm810, %v1555, 0
    %v4008 = vsel %vm810, %v1556, 0
    %v4011 = vsel %vm810, %v1557, 0
    %v4014 = vsel %vm810, %v1558, 0
    %v4017 = vsel %vm810, %v1559, 0
    %v4020 = vsel %vm810, %v1560, 0
    %v4023 = vsel %vm810, %v1561, 0
    %4025 = vmatprep.subr.mxu0 0.0
    %4026 = vmatpush1.msra.mxu0 %v3823
    %4027 = vmatprep.subr.mxu0 0.0
    %4028 = vmatpush1.msra.mxu0 %v3822
    %4029 = vmatprep.subr.mxu0 0.0
    %4030 = vmatpush1.msra.mxu0 %v3821
    %4031 = vmatprep.subr.mxu0 0.0
    %4032 = vmatpush1.msra.mxu0 %v3820
    %4033 = vmatprep.subr.mxu0 0.0
    %4034 = vmatpush1.msra.mxu0 %v3819
    %4035 = vmatprep.subr.mxu0 0.0
    %4036 = vmatpush1.msra.mxu0 %v3818
    %4037 = vmatprep.subr.mxu0 0.0
    %4038 = vmatpush1.msra.mxu0 %v3817
    %4039 = vmatprep.subr.mxu0 0.0
    %4040 = vmatpush1.msra.mxu0 %v3816
    %4041 = vmatprep.subr.mxu0 0.0
    %4042 = vmatpush1.msra.mxu0 %v3815
    %4043 = vmatprep.subr.mxu0 0.0
    %4044 = vmatpush1.msra.mxu0 %v3814
    %4045 = vmatprep.subr.mxu0 0.0
    %4046 = vmatpush1.msra.mxu0 %v3813
    %4047 = vmatprep.subr.mxu0 0.0
    %4048 = vmatpush1.msra.mxu0 %v3812
    %4049 = vmatprep.subr.mxu0 0.0
    %4050 = vmatpush1.msra.mxu0 %v3811
    %4051 = vmatprep.subr.mxu0 0.0
    %4052 = vmatpush1.msra.mxu0 %v3810
    %4053 = vmatprep.subr.mxu0 0.0
    %4054 = vmatpush1.msra.mxu0 %v3809
    %4055 = vmatprep.subr.mxu0 0.0
    %4056 = vmatpush1.msra.mxu0 %v3808
    %4057 = vmatprep.subr.mxu0 0.0
    %4058 = vmatpush2.msra.mxu0 0.0
    %4059 = vmatprep.subr.mxu0 0.0
    %4060 = vmatpush2.msra.mxu0 0.0
    %4061 = vmatprep.subr.mxu0 0.0
    %4062 = vmatpush2.msra.mxu0 0.0
    %4063 = vmatprep.subr.mxu0 0.0
    %4064 = vmatpush2.msra.mxu0 0.0
    %4065 = vmatprep.subr.mxu0 0.0
    %4066 = vmatpush2.msra.mxu0 0.0
    %4067 = vmatprep.subr.mxu0 0.0
    %4068 = vmatpush2.msra.mxu0 0.0
    %4069 = vmatprep.subr.mxu0 0.0
    %4070 = vmatpush2.msra.mxu0 0.0
    %4071 = vmatprep.subr.mxu0 0.0
    %4072 = vmatpush2.msra.mxu0 0.0
    %4073 = vmatprep.subr.mxu0 0.0
    %4074 = vmatpush2.msra.mxu0 0.0
    %4075 = vmatprep.subr.mxu0 0.0
    %4076 = vmatpush2.msra.mxu0 0.0
    %4077 = vmatprep.subr.mxu0 0.0
    %4078 = vmatpush2.msra.mxu0 0.0
    %4079 = vmatprep.subr.mxu0 0.0
    %4080 = vmatpush2.msra.mxu0 0.0
    %4081 = vmatprep.subr.mxu0 0.0
    %4082 = vmatpush2.msra.mxu0 0.0
    %4083 = vmatprep.subr.mxu0 0.0
    %4084 = vmatpush2.msra.mxu0 0.0
    %4085 = vmatprep.subr.mxu0 0.0
    %4086 = vmatpush2.msra.mxu0 %v3825
    %4087 = vmatprep.subr.mxu0 0.0
    %4088 = vmatpush2.msra.mxu0 %v3824
    %4089 = vmatprep.mubr.f32.mxu0 %v3834
    %4090 = vmatmul.mubr.f32.gmra.mxu0 %v3744
    %v4091 = vpop.f32.mrf.mxu0
    %v4092 = vadd.f32 %v3831, %v4091
    %v4093 = vpop.f32.mrf.mxu0
    %4094 = vmatprep.mubr.f32.mxu0 %v3837
    %4095 = vmatmul.mubr.f32.gmra.mxu0 %v3745
    %v4096 = vpop.f32.mrf.mxu0
    %v4097 = vadd.f32 %v3831, %v4096
    %v4098 = vpop.f32.mrf.mxu0
    %4099 = vmatprep.mubr.f32.mxu0 %v3840
    %4100 = vmatmul.mubr.f32.gmra.mxu0 %v3746
    %v4101 = vpop.f32.mrf.mxu0
    %v4102 = vadd.f32 %v3831, %v4101
    %v4103 = vpop.f32.mrf.mxu0
    %4104 = vmatprep.mubr.f32.mxu0 %v3843
    %4105 = vmatmul.mubr.f32.gmra.mxu0 %v3747
    %v4106 = vpop.f32.mrf.mxu0
    %v4107 = vadd.f32 %v3831, %v4106
    %v4108 = vpop.f32.mrf.mxu0
    %4109 = vmatprep.mubr.f32.mxu0 %v3846
    %4110 = vmatmul.mubr.f32.gmra.mxu0 %v3748
    %v4111 = vpop.f32.mrf.mxu0
    %v4112 = vadd.f32 %v3831, %v4111
    %v4113 = vpop.f32.mrf.mxu0
    %4114 = vmatprep.mubr.f32.mxu0 %v3849
    %4115 = vmatmul.mubr.f32.gmra.mxu0 %v3749
    %v4116 = vpop.f32.mrf.mxu0
    %v4117 = vadd.f32 %v3831, %v4116
    %v4118 = vpop.f32.mrf.mxu0
    %4119 = vmatprep.mubr.f32.mxu0 %v3852
    %4120 = vmatmul.mubr.f32.gmra.mxu0 %v3750
    %v4121 = vpop.f32.mrf.mxu0
    %v4122 = vadd.f32 %v3831, %v4121
    %v4123 = vpop.f32.mrf.mxu0
    %4124 = vmatprep.mubr.f32.mxu0 %v3855
    %4125 = vmatmul.mubr.f32.gmra.mxu0 %v3751
    %v4126 = vpop.f32.mrf.mxu0
    %v4127 = vadd.f32 %v3831, %v4126
    %v4128 = vpop.f32.mrf.mxu0
    %4129 = vmatprep.mubr.f32.mxu0 %v3858
    %4130 = vmatmul.mubr.f32.gmra.mxu0 %v3752
    %v4131 = vpop.f32.mrf.mxu0
    %v4132 = vadd.f32 %v3831, %v4131
    %v4133 = vpop.f32.mrf.mxu0
    %4134 = vmatprep.mubr.f32.mxu0 %v3861
    %4135 = vmatmul.mubr.f32.gmra.mxu0 %v3753
    %v4136 = vpop.f32.mrf.mxu0
    %v4137 = vadd.f32 %v3831, %v4136
    %v4138 = vpop.f32.mrf.mxu0
    %4139 = vmatprep.mubr.f32.mxu0 %v3864
    %4140 = vmatmul.mubr.f32.gmra.mxu0 %v3754
    %v4141 = vpop.f32.mrf.mxu0
    %v4142 = vadd.f32 %v3831, %v4141
    %v4143 = vpop.f32.mrf.mxu0
    %4144 = vmatprep.mubr.f32.mxu0 %v3867
    %4145 = vmatmul.mubr.f32.gmra.mxu0 %v3755
    %v4146 = vpop.f32.mrf.mxu0
    %v4147 = vadd.f32 %v3831, %v4146
    %v4148 = vpop.f32.mrf.mxu0
    %4149 = vmatprep.mubr.f32.mxu0 %v3870
    %4150 = vmatmul.mubr.f32.gmra.mxu0 %v3756
    %v4151 = vpop.f32.mrf.mxu0
    %v4152 = vadd.f32 %v3831, %v4151
    %v4153 = vpop.f32.mrf.mxu0
    %4154 = vmatprep.mubr.f32.mxu0 %v3873
    %4155 = vmatmul.mubr.f32.gmra.mxu0 %v3757
    %v4156 = vpop.f32.mrf.mxu0
    %v4157 = vadd.f32 %v3831, %v4156
    %v4158 = vpop.f32.mrf.mxu0
    %4159 = vmatprep.mubr.f32.mxu0 %v3876
    %4160 = vmatmul.mubr.f32.gmra.mxu0 %v3758
    %v4161 = vpop.f32.mrf.mxu0
    %v4162 = vadd.f32 %v3831, %v4161
    %v4163 = vpop.f32.mrf.mxu0
    %4164 = vmatprep.mubr.f32.mxu0 %v3879
    %4165 = vmatmul.mubr.f32.gmra.mxu0 %v3759
    %v4166 = vpop.f32.mrf.mxu0
    %v4167 = vadd.f32 %v3831, %v4166
    %v4168 = vpop.f32.mrf.mxu0
    %4169 = vmatprep.mubr.f32.mxu0 %v3882
    %4170 = vmatmul.mubr.f32.gmra.mxu0 %v3760
    %v4171 = vpop.f32.mrf.mxu0
    %v4172 = vadd.f32 %v3831, %v4171
    %v4173 = vpop.f32.mrf.mxu0
    %4174 = vmatprep.mubr.f32.mxu0 %v3885
    %4175 = vmatmul.mubr.f32.gmra.mxu0 %v3761
    %v4176 = vpop.f32.mrf.mxu0
    %v4177 = vadd.f32 %v3831, %v4176
    %v4178 = vpop.f32.mrf.mxu0
    %4179 = vmatprep.mubr.f32.mxu0 %v3888
    %4180 = vmatmul.mubr.f32.gmra.mxu0 %v3762
    %v4181 = vpop.f32.mrf.mxu0
    %v4182 = vadd.f32 %v3831, %v4181
    %v4183 = vpop.f32.mrf.mxu0
    %4184 = vmatprep.mubr.f32.mxu0 %v3891
    %4185 = vmatmul.mubr.f32.gmra.mxu0 %v3763
    %v4186 = vpop.f32.mrf.mxu0
    %v4187 = vadd.f32 %v3831, %v4186
    %v4188 = vpop.f32.mrf.mxu0
    %4189 = vmatprep.mubr.f32.mxu0 %v3894
    %4190 = vmatmul.mubr.f32.gmra.mxu0 %v3764
    %v4191 = vpop.f32.mrf.mxu0
    %v4192 = vadd.f32 %v3831, %v4191
    %v4193 = vpop.f32.mrf.mxu0
    %4194 = vmatprep.mubr.f32.mxu0 %v3897
    %4195 = vmatmul.mubr.f32.gmra.mxu0 %v3765
    %v4196 = vpop.f32.mrf.mxu0
    %v4197 = vadd.f32 %v3831, %v4196
    %v4198 = vpop.f32.mrf.mxu0
    %4199 = vmatprep.mubr.f32.mxu0 %v3900
    %4200 = vmatmul.mubr.f32.gmra.mxu0 %v3766
    %v4201 = vpop.f32.mrf.mxu0
    %v4202 = vadd.f32 %v3831, %v4201
    %v4203 = vpop.f32.mrf.mxu0
    %4204 = vmatprep.mubr.f32.mxu0 %v3903
    %4205 = vmatmul.mubr.f32.gmra.mxu0 %v3767
    %v4206 = vpop.f32.mrf.mxu0
    %v4207 = vadd.f32 %v3831, %v4206
    %v4208 = vpop.f32.mrf.mxu0
    %4209 = vmatprep.mubr.f32.mxu0 %v3906
    %4210 = vmatmul.mubr.f32.gmra.mxu0 %v3768
    %v4211 = vpop.f32.mrf.mxu0
    %v4212 = vadd.f32 %v3831, %v4211
    %v4213 = vpop.f32.mrf.mxu0
    %4214 = vmatprep.mubr.f32.mxu0 %v3909
    %4215 = vmatmul.mubr.f32.gmra.mxu0 %v3769
    %v4216 = vpop.f32.mrf.mxu0
    %v4217 = vadd.f32 %v3831, %v4216
    %v4218 = vpop.f32.mrf.mxu0
    %4219 = vmatprep.mubr.f32.mxu0 %v3912
    %4220 = vmatmul.mubr.f32.gmra.mxu0 %v3770
    %v4221 = vpop.f32.mrf.mxu0
    %v4222 = vadd.f32 %v3831, %v4221
    %v4223 = vpop.f32.mrf.mxu0
    %4224 = vmatprep.mubr.f32.mxu0 %v3915
    %4225 = vmatmul.mubr.f32.gmra.mxu0 %v3771
    %v4226 = vpop.f32.mrf.mxu0
    %v4227 = vadd.f32 %v3831, %v4226
    %v4228 = vpop.f32.mrf.mxu0
    %4229 = vmatprep.mubr.f32.mxu0 %v3918
    %4230 = vmatmul.mubr.f32.gmra.mxu0 %v3772
    %v4231 = vpop.f32.mrf.mxu0
    %v4232 = vadd.f32 %v3831, %v4231
    %v4233 = vpop.f32.mrf.mxu0
    %4234 = vmatprep.mubr.f32.mxu0 %v3921
    %4235 = vmatmul.mubr.f32.gmra.mxu0 %v3773
    %v4236 = vpop.f32.mrf.mxu0
    %v4237 = vadd.f32 %v3831, %v4236
    %v4238 = vpop.f32.mrf.mxu0
    %4239 = vmatprep.mubr.f32.mxu0 %v3924
    %4240 = vmatmul.mubr.f32.gmra.mxu0 %v3774
    %v4241 = vpop.f32.mrf.mxu0
    %v4242 = vadd.f32 %v3831, %v4241
    %v4243 = vpop.f32.mrf.mxu0
    %4244 = vmatprep.mubr.f32.mxu0 %v3927
    %4245 = vmatmul.mubr.f32.gmra.mxu0 %v3775
    %v4246 = vpop.f32.mrf.mxu0
    %v4247 = vadd.f32 %v3831, %v4246
    %v4248 = vpop.f32.mrf.mxu0
    %4249 = vmatprep.mubr.f32.mxu0 %v3930
    %4250 = vmatmul.mubr.f32.gmra.mxu0 %v3776
    %v4251 = vpop.f32.mrf.mxu0
    %v4252 = vadd.f32 %v3831, %v4251
    %v4253 = vpop.f32.mrf.mxu0
    %4254 = vmatprep.mubr.f32.mxu0 %v3933
    %4255 = vmatmul.mubr.f32.gmra.mxu0 %v3777
    %v4256 = vpop.f32.mrf.mxu0
    %v4257 = vadd.f32 %v3831, %v4256
    %v4258 = vpop.f32.mrf.mxu0
    %4259 = vmatprep.mubr.f32.mxu0 %v3936
    %4260 = vmatmul.mubr.f32.gmra.mxu0 %v3778
    %v4261 = vpop.f32.mrf.mxu0
    %v4262 = vadd.f32 %v3831, %v4261
    %v4263 = vpop.f32.mrf.mxu0
    %4264 = vmatprep.mubr.f32.mxu0 %v3939
    %4265 = vmatmul.mubr.f32.gmra.mxu0 %v3779
    %v4266 = vpop.f32.mrf.mxu0
    %v4267 = vadd.f32 %v3831, %v4266
    %v4268 = vpop.f32.mrf.mxu0
    %4269 = vmatprep.mubr.f32.mxu0 %v3942
    %4270 = vmatmul.mubr.f32.gmra.mxu0 %v3780
    %v4271 = vpop.f32.mrf.mxu0
    %v4272 = vadd.f32 %v3831, %v4271
    %v4273 = vpop.f32.mrf.mxu0
    %4274 = vmatprep.mubr.f32.mxu0 %v3945
    %4275 = vmatmul.mubr.f32.gmra.mxu0 %v3781
    %v4276 = vpop.f32.mrf.mxu0
    %v4277 = vadd.f32 %v3831, %v4276
    %v4278 = vpop.f32.mrf.mxu0
    %4279 = vmatprep.mubr.f32.mxu0 %v3948
    %4280 = vmatmul.mubr.f32.gmra.mxu0 %v3782
    %v4281 = vpop.f32.mrf.mxu0
    %v4282 = vadd.f32 %v3831, %v4281
    %v4283 = vpop.f32.mrf.mxu0
    %4284 = vmatprep.mubr.f32.mxu0 %v3951
    %4285 = vmatmul.mubr.f32.gmra.mxu0 %v3783
    %v4286 = vpop.f32.mrf.mxu0
    %v4287 = vadd.f32 %v3831, %v4286
    %v4288 = vpop.f32.mrf.mxu0
    %4289 = vmatprep.mubr.f32.mxu0 %v3954
    %4290 = vmatmul.mubr.f32.gmra.mxu0 %v3784
    %v4291 = vpop.f32.mrf.mxu0
    %v4292 = vadd.f32 %v3831, %v4291
    %v4293 = vpop.f32.mrf.mxu0
    %4294 = vmatprep.mubr.f32.mxu0 %v3957
    %4295 = vmatmul.mubr.f32.gmra.mxu0 %v3785
    %v4296 = vpop.f32.mrf.mxu0
    %v4297 = vadd.f32 %v3831, %v4296
    %v4298 = vpop.f32.mrf.mxu0
    %4299 = vmatprep.mubr.f32.mxu0 %v3960
    %4300 = vmatmul.mubr.f32.gmra.mxu0 %v3786
    %v4301 = vpop.f32.mrf.mxu0
    %v4302 = vadd.f32 %v3831, %v4301
    %v4303 = vpop.f32.mrf.mxu0
    %4304 = vmatprep.mubr.f32.mxu0 %v3963
    %4305 = vmatmul.mubr.f32.gmra.mxu0 %v3787
    %v4306 = vpop.f32.mrf.mxu0
    %v4307 = vadd.f32 %v3831, %v4306
    %v4308 = vpop.f32.mrf.mxu0
    %4309 = vmatprep.mubr.f32.mxu0 %v3966
    %4310 = vmatmul.mubr.f32.gmra.mxu0 %v3788
    %v4311 = vpop.f32.mrf.mxu0
    %v4312 = vadd.f32 %v3831, %v4311
    %v4313 = vpop.f32.mrf.mxu0
    %4314 = vmatprep.mubr.f32.mxu0 %v3969
    %4315 = vmatmul.mubr.f32.gmra.mxu0 %v3789
    %v4316 = vpop.f32.mrf.mxu0
    %v4317 = vadd.f32 %v3831, %v4316
    %v4318 = vpop.f32.mrf.mxu0
    %4319 = vmatprep.mubr.f32.mxu0 %v3972
    %4320 = vmatmul.mubr.f32.gmra.mxu0 %v3790
    %v4321 = vpop.f32.mrf.mxu0
    %v4322 = vadd.f32 %v3831, %v4321
    %v4323 = vpop.f32.mrf.mxu0
    %4324 = vmatprep.mubr.f32.mxu0 %v3975
    %4325 = vmatmul.mubr.f32.gmra.mxu0 %v3791
    %v4326 = vpop.f32.mrf.mxu0
    %v4327 = vadd.f32 %v3831, %v4326
    %v4328 = vpop.f32.mrf.mxu0
    %4329 = vmatprep.mubr.f32.mxu0 %v3978
    %4330 = vmatmul.mubr.f32.gmra.mxu0 %v3792
    %v4331 = vpop.f32.mrf.mxu0
    %v4332 = vadd.f32 %v3831, %v4331
    %v4333 = vpop.f32.mrf.mxu0
    %4334 = vmatprep.mubr.f32.mxu0 %v3981
    %4335 = vmatmul.mubr.f32.gmra.mxu0 %v3793
    %v4336 = vpop.f32.mrf.mxu0
    %v4337 = vadd.f32 %v3831, %v4336
    %v4338 = vpop.f32.mrf.mxu0
    %4339 = vmatprep.mubr.f32.mxu0 %v3984
    %4340 = vmatmul.mubr.f32.gmra.mxu0 %v3794
    %v4341 = vpop.f32.mrf.mxu0
    %v4342 = vadd.f32 %v3831, %v4341
    %v4343 = vpop.f32.mrf.mxu0
    %4344 = vmatprep.mubr.f32.mxu0 %v3987
    %4345 = vmatmul.mubr.f32.gmra.mxu0 %v3795
    %v4346 = vpop.f32.mrf.mxu0
    %v4347 = vadd.f32 %v3831, %v4346
    %v4348 = vpop.f32.mrf.mxu0
    %4349 = vmatprep.mubr.f32.mxu0 %v3990
    %4350 = vmatmul.mubr.f32.gmra.mxu0 %v3796
    %v4351 = vpop.f32.mrf.mxu0
    %v4352 = vadd.f32 %v3831, %v4351
    %v4353 = vpop.f32.mrf.mxu0
    %4354 = vmatprep.mubr.f32.mxu0 %v3993
    %4355 = vmatmul.mubr.f32.gmra.mxu0 %v3797
    %v4356 = vpop.f32.mrf.mxu0
    %v4357 = vadd.f32 %v3831, %v4356
    %v4358 = vpop.f32.mrf.mxu0
    %4359 = vmatprep.mubr.f32.mxu0 %v3996
    %4360 = vmatmul.mubr.f32.gmra.mxu0 %v3798
    %v4361 = vpop.f32.mrf.mxu0
    %v4362 = vadd.f32 %v3831, %v4361
    %v4363 = vpop.f32.mrf.mxu0
    %4364 = vmatprep.mubr.f32.mxu0 %v3999
    %4365 = vmatmul.mubr.f32.gmra.mxu0 %v3799
    %v4366 = vpop.f32.mrf.mxu0
    %v4367 = vadd.f32 %v3831, %v4366
    %v4368 = vpop.f32.mrf.mxu0
    %4369 = vmatprep.mubr.f32.mxu0 %v4002
    %4370 = vmatmul.mubr.f32.gmra.mxu0 %v3800
    %v4371 = vpop.f32.mrf.mxu0
    %v4372 = vadd.f32 %v3831, %v4371
    %v4373 = vpop.f32.mrf.mxu0
    %4374 = vmatprep.mubr.f32.mxu0 %v4005
    %4375 = vmatmul.mubr.f32.gmra.mxu0 %v3801
    %v4376 = vpop.f32.mrf.mxu0
    %v4377 = vadd.f32 %v3831, %v4376
    %v4378 = vpop.f32.mrf.mxu0
    %4379 = vmatprep.mubr.f32.mxu0 %v4008
    %4380 = vmatmul.mubr.f32.gmra.mxu0 %v3802
    %v4381 = vpop.f32.mrf.mxu0
    %v4382 = vadd.f32 %v3831, %v4381
    %v4383 = vpop.f32.mrf.mxu0
    %4384 = vmatprep.mubr.f32.mxu0 %v4011
    %4385 = vmatmul.mubr.f32.gmra.mxu0 %v3803
    %v4386 = vpop.f32.mrf.mxu0
    %v4387 = vadd.f32 %v3831, %v4386
    %v4388 = vpop.f32.mrf.mxu0
    %4389 = vmatprep.mubr.f32.mxu0 %v4014
    %4390 = vmatmul.mubr.f32.gmra.mxu0 %v3804
    %v4391 = vpop.f32.mrf.mxu0
    %v4392 = vadd.f32 %v3831, %v4391
    %v4393 = vpop.f32.mrf.mxu0
    %4394 = vmatprep.mubr.f32.mxu0 %v4017
    %4395 = vmatmul.mubr.f32.gmra.mxu0 %v3805
    %v4396 = vpop.f32.mrf.mxu0
    %v4397 = vadd.f32 %v3831, %v4396
    %v4398 = vpop.f32.mrf.mxu0
    %4399 = vmatprep.mubr.f32.mxu0 %v4020
    %4400 = vmatmul.mubr.f32.gmra.mxu0 %v3806
    %v4401 = vpop.f32.mrf.mxu0
    %v4402 = vadd.f32 %v3831, %v4401
    %v4403 = vpop.f32.mrf.mxu0
    %4404 = vmatprep.mubr.f32.mxu0 %v4023
    %4405 = vmatmul.mubr.f32.gmra.mxu0 %v3807
    %v4406 = vpop.f32.mrf.mxu0
    %v4407 = vadd.f32 %v3831, %v4406
    %v4408 = vpop.f32.mrf.mxu0
    %4409 = vdwg.mxu0
    %v4410 = vmax.f32 %v4092, 0.0
    %v4411 = vmax.f32 %v4097, 0.0
    %v4412 = vmax.f32 %v4102, 0.0
    %v4413 = vmax.f32 %v4107, 0.0
    %v4414 = vmax.f32 %v4112, 0.0
    %v4415 = vmax.f32 %v4117, 0.0
    %v4416 = vmax.f32 %v4122, 0.0
    %v4417 = vmax.f32 %v4127, 0.0
    %v4418 = vmax.f32 %v4132, 0.0
    %v4419 = vmax.f32 %v4137, 0.0
    %v4420 = vmax.f32 %v4142, 0.0
    %v4421 = vmax.f32 %v4147, 0.0
    %v4422 = vmax.f32 %v4152, 0.0
    %v4423 = vmax.f32 %v4157, 0.0
    %v4424 = vmax.f32 %v4162, 0.0
    %v4425 = vmax.f32 %v4167, 0.0
    %v4426 = vmax.f32 %v4172, 0.0
    %v4427 = vmax.f32 %v4177, 0.0
    %v4428 = vmax.f32 %v4182, 0.0
    %v4429 = vmax.f32 %v4187, 0.0
    %v4430 = vmax.f32 %v4192, 0.0
    %v4431 = vmax.f32 %v4197, 0.0
    %v4432 = vmax.f32 %v4202, 0.0
    %v4433 = vmax.f32 %v4207, 0.0
    %v4434 = vmax.f32 %v4212, 0.0
    %v4435 = vmax.f32 %v4217, 0.0
    %v4436 = vmax.f32 %v4222, 0.0
    %v4437 = vmax.f32 %v4227, 0.0
    %v4438 = vmax.f32 %v4232, 0.0
    %v4439 = vmax.f32 %v4237, 0.0
    %v4440 = vmax.f32 %v4242, 0.0
    %v4441 = vmax.f32 %v4247, 0.0
    %v4442 = vmax.f32 %v4252, 0.0
    %v4443 = vmax.f32 %v4257, 0.0
    %v4444 = vmax.f32 %v4262, 0.0
    %v4445 = vmax.f32 %v4267, 0.0
    %v4446 = vmax.f32 %v4272, 0.0
    %v4447 = vmax.f32 %v4277, 0.0
    %v4448 = vmax.f32 %v4282, 0.0
    %v4449 = vmax.f32 %v4287, 0.0
    %v4450 = vmax.f32 %v4292, 0.0
    %v4451 = vmax.f32 %v4297, 0.0
    %v4452 = vmax.f32 %v4302, 0.0
    %v4453 = vmax.f32 %v4307, 0.0
    %v4454 = vmax.f32 %v4312, 0.0
    %v4455 = vmax.f32 %v4317, 0.0
    %v4456 = vmax.f32 %v4322, 0.0
    %v4457 = vmax.f32 %v4327, 0.0
    %v4458 = vmax.f32 %v4332, 0.0
    %v4459 = vmax.f32 %v4337, 0.0
    %v4460 = vmax.f32 %v4342, 0.0
    %v4461 = vmax.f32 %v4347, 0.0
    %v4462 = vmax.f32 %v4352, 0.0
    %v4463 = vmax.f32 %v4357, 0.0
    %v4464 = vmax.f32 %v4362, 0.0
    %v4465 = vmax.f32 %v4367, 0.0
    %v4466 = vmax.f32 %v4372, 0.0
    %v4467 = vmax.f32 %v4377, 0.0
    %v4468 = vmax.f32 %v4382, 0.0
    %v4469 = vmax.f32 %v4387, 0.0
    %v4470 = vmax.f32 %v4392, 0.0
    %v4471 = vmax.f32 %v4397, 0.0
    %v4472 = vmax.f32 %v4402, 0.0
    %v4473 = vmax.f32 %v4407, 0.0
    %4474 = vst.msk [vmem:[%s920 + $0x1] sm:$0xff] %vm810, %v4410
    %4475 = vst.msk [vmem:[%s920 + $0x9] sm:$0xff] %vm810, %v4411
    %4476 = vst.msk [vmem:[%s920 + $0x19] sm:$0xff] %vm810, %v4412
    %4477 = vst.msk [vmem:[%s920 + $0x21] sm:$0xff] %vm810, %v4413
    %4478 = vst.msk [vmem:[%s920 + $0x31] sm:$0xff] %vm810, %v4414
    %4479 = vst.msk [vmem:[%s920 + $0x39] sm:$0xff] %vm810, %v4415
    %4480 = vst.msk [vmem:[%s920 + $0x49] sm:$0xff] %vm810, %v4416
    %4481 = vst.msk [vmem:[%s920 + $0x51] sm:$0xff] %vm810, %v4417
    %4482 = vst.msk [vmem:[%s920 + $0x61] sm:$0xff] %vm810, %v4418
    %4483 = vst.msk [vmem:[%s920 + $0x69] sm:$0xff] %vm810, %v4419
    %4484 = vst.msk [vmem:[%s920 + $0x79] sm:$0xff] %vm810, %v4420
    %4485 = vst.msk [vmem:[%s920 + $0x81] sm:$0xff] %vm810, %v4421
    %4486 = vst.msk [vmem:[%s920 + $0x91] sm:$0xff] %vm810, %v4422
    %4487 = vst.msk [vmem:[%s920 + $0x99] sm:$0xff] %vm810, %v4423
    %4488 = vst.msk [vmem:[%s920 + $0xa9] sm:$0xff] %vm810, %v4424
    %4489 = vst.msk [vmem:[%s920 + $0xb1] sm:$0xff] %vm810, %v4425
    %4490 = vst.msk [vmem:[%s920 + $0xc1] sm:$0xff] %vm810, %v4426
    %4491 = vst.msk [vmem:[%s920 + $0xc9] sm:$0xff] %vm810, %v4427
    %4492 = vst.msk [vmem:[%s920 + $0xd9] sm:$0xff] %vm810, %v4428
    %4493 = vst.msk [vmem:[%s920 + $0xe1] sm:$0xff] %vm810, %v4429
    %4494 = vst.msk [vmem:[%s920 + $0xf1] sm:$0xff] %vm810, %v4430
    %4495 = vst.msk [vmem:[%s920 + $0xf9] sm:$0xff] %vm810, %v4431
    %4496 = vst.msk [vmem:[%s920 + $0x109] sm:$0xff] %vm810, %v4432
    %4497 = vst.msk [vmem:[%s920 + $0x111] sm:$0xff] %vm810, %v4433
    %4498 = vst.msk [vmem:[%s920 + $0x121] sm:$0xff] %vm810, %v4434
    %4499 = vst.msk [vmem:[%s920 + $0x129] sm:$0xff] %vm810, %v4435
    %4500 = vst.msk [vmem:[%s920 + $0x139] sm:$0xff] %vm810, %v4436
    %4501 = vst.msk [vmem:[%s920 + $0x141] sm:$0xff] %vm810, %v4437
    %4502 = vst.msk [vmem:[%s920 + $0x151] sm:$0xff] %vm810, %v4438
    %4503 = vst.msk [vmem:[%s920 + $0x159] sm:$0xff] %vm810, %v4439
    %4504 = vst.msk [vmem:[%s920 + $0x169] sm:$0xff] %vm810, %v4440
    %4505 = vst.msk [vmem:[%s920 + $0x171] sm:$0xff] %vm810, %v4441
    %4506 = vst.msk [vmem:[%s920 + $0x1b1] sm:$0xff] %vm810, %v4442
    %4507 = vst.msk [vmem:[%s920 + $0x1b9] sm:$0xff] %vm810, %v4443
    %4508 = vst.msk [vmem:[%s920 + $0x1c9] sm:$0xff] %vm810, %v4444
    %4509 = vst.msk [vmem:[%s920 + $0x1d1] sm:$0xff] %vm810, %v4445
    %4510 = vst.msk [vmem:[%s920 + $0x1e1] sm:$0xff] %vm810, %v4446
    %4511 = vst.msk [vmem:[%s920 + $0x1e9] sm:$0xff] %vm810, %v4447
    %4512 = vst.msk [vmem:[%s920 + $0x1f9] sm:$0xff] %vm810, %v4448
    %4513 = vst.msk [vmem:[%s920 + $0x201] sm:$0xff] %vm810, %v4449
    %4514 = vst.msk [vmem:[%s920 + $0x211] sm:$0xff] %vm810, %v4450
    %4515 = vst.msk [vmem:[%s920 + $0x219] sm:$0xff] %vm810, %v4451
    %4516 = vst.msk [vmem:[%s920 + $0x229] sm:$0xff] %vm810, %v4452
    %4517 = vst.msk [vmem:[%s920 + $0x231] sm:$0xff] %vm810, %v4453
    %4518 = vst.msk [vmem:[%s920 + $0x241] sm:$0xff] %vm810, %v4454
    %4519 = vst.msk [vmem:[%s920 + $0x249] sm:$0xff] %vm810, %v4455
    %4520 = vst.msk [vmem:[%s920 + $0x259] sm:$0xff] %vm810, %v4456
    %4521 = vst.msk [vmem:[%s920 + $0x261] sm:$0xff] %vm810, %v4457
    %4522 = vst.msk [vmem:[%s920 + $0x271] sm:$0xff] %vm810, %v4458
    %4523 = vst.msk [vmem:[%s920 + $0x279] sm:$0xff] %vm810, %v4459
    %4524 = vst.msk [vmem:[%s920 + $0x289] sm:$0xff] %vm810, %v4460
    %4525 = vst.msk [vmem:[%s920 + $0x291] sm:$0xff] %vm810, %v4461
    %4526 = vst.msk [vmem:[%s920 + $0x2a1] sm:$0xff] %vm810, %v4462
    %4527 = vst.msk [vmem:[%s920 + $0x2a9] sm:$0xff] %vm810, %v4463
    %4528 = vst.msk [vmem:[%s920 + $0x2b9] sm:$0xff] %vm810, %v4464
    %4529 = vst.msk [vmem:[%s920 + $0x2c1] sm:$0xff] %vm810, %v4465
    %4530 = vst.msk [vmem:[%s920 + $0x2d1] sm:$0xff] %vm810, %v4466
    %4531 = vst.msk [vmem:[%s920 + $0x2d9] sm:$0xff] %vm810, %v4467
    %4532 = vst.msk [vmem:[%s920 + $0x2e9] sm:$0xff] %vm810, %v4468
    %4533 = vst.msk [vmem:[%s920 + $0x2f1] sm:$0xff] %vm810, %v4469
    %4534 = vst.msk [vmem:[%s920 + $0x301] sm:$0xff] %vm810, %v4470
    %4535 = vst.msk [vmem:[%s920 + $0x309] sm:$0xff] %vm810, %v4471
    %4536 = vst.msk [vmem:[%s920 + $0x319] sm:$0xff] %vm810, %v4472
    %4537 = vst.msk [vmem:[%s920 + $0x321] sm:$0xff] %vm810, %v4473
    %v4538 = vld [vmem:[#allocation2] sm:$0xff]
    %v4539 = vld [vmem:[#allocation2 + $0x8] sm:$0xff]
    %v4540 = vld [vmem:[#allocation2 + $0x18] sm:$0xff]
    %v4541 = vld [vmem:[#allocation2 + $0x20] sm:$0xff]
    %v4542 = vld [vmem:[#allocation2 + $0x30] sm:$0xff]
    %v4543 = vld [vmem:[#allocation2 + $0x38] sm:$0xff]
    %v4544 = vld [vmem:[#allocation2 + $0x48] sm:$0xff]
    %v4545 = vld [vmem:[#allocation2 + $0x50] sm:$0xff]
    %v4546 = vld [vmem:[#allocation2 + $0x60] sm:$0xff]
    %v4547 = vld [vmem:[#allocation2 + $0x68] sm:$0xff]
    %v4548 = vld [vmem:[#allocation2 + $0x78] sm:$0xff]
    %v4549 = vld [vmem:[#allocation2 + $0x80] sm:$0xff]
    %v4550 = vld [vmem:[#allocation2 + $0x90] sm:$0xff]
    %v4551 = vld [vmem:[#allocation2 + $0x98] sm:$0xff]
    %v4552 = vld [vmem:[#allocation2 + $0xa8] sm:$0xff]
    %v4553 = vld [vmem:[#allocation2 + $0xb0] sm:$0xff]
    %v4554 = vld [vmem:[#allocation2 + $0xc0] sm:$0xff]
    %v4555 = vld [vmem:[#allocation2 + $0xc8] sm:$0xff]
    %v4556 = vld [vmem:[#allocation2 + $0xd8] sm:$0xff]
    %v4557 = vld [vmem:[#allocation2 + $0xe0] sm:$0xff]
    %v4558 = vld [vmem:[#allocation2 + $0xf0] sm:$0xff]
    %v4559 = vld [vmem:[#allocation2 + $0xf8] sm:$0xff]
    %v4560 = vld [vmem:[#allocation2 + $0x108] sm:$0xff]
    %v4561 = vld [vmem:[#allocation2 + $0x110] sm:$0xff]
    %v4562 = vld [vmem:[#allocation2 + $0x120] sm:$0xff]
    %v4563 = vld [vmem:[#allocation2 + $0x128] sm:$0xff]
    %v4564 = vld [vmem:[#allocation2 + $0x138] sm:$0xff]
    %v4565 = vld [vmem:[#allocation2 + $0x140] sm:$0xff]
    %v4566 = vld [vmem:[#allocation2 + $0x150] sm:$0xff]
    %v4567 = vld [vmem:[#allocation2 + $0x158] sm:$0xff]
    %v4568 = vld [vmem:[#allocation2 + $0x168] sm:$0xff]
    %v4569 = vld [vmem:[#allocation2 + $0x170] sm:$0xff]
    %v4570 = vld [vmem:[#allocation2 + $0x1b0] sm:$0xff]
    %v4571 = vld [vmem:[#allocation2 + $0x1b8] sm:$0xff]
    %v4572 = vld [vmem:[#allocation2 + $0x1c8] sm:$0xff]
    %v4573 = vld [vmem:[#allocation2 + $0x1d0] sm:$0xff]
    %v4574 = vld [vmem:[#allocation2 + $0x1e0] sm:$0xff]
    %v4575 = vld [vmem:[#allocation2 + $0x1e8] sm:$0xff]
    %v4576 = vld [vmem:[#allocation2 + $0x1f8] sm:$0xff]
    %v4577 = vld [vmem:[#allocation2 + $0x200] sm:$0xff]
    %v4578 = vld [vmem:[#allocation2 + $0x210] sm:$0xff]
    %v4579 = vld [vmem:[#allocation2 + $0x218] sm:$0xff]
    %v4580 = vld [vmem:[#allocation2 + $0x228] sm:$0xff]
    %v4581 = vld [vmem:[#allocation2 + $0x230] sm:$0xff]
    %v4582 = vld [vmem:[#allocation2 + $0x240] sm:$0xff]
    %v4583 = vld [vmem:[#allocation2 + $0x248] sm:$0xff]
    %v4584 = vld [vmem:[#allocation2 + $0x258] sm:$0xff]
    %v4585 = vld [vmem:[#allocation2 + $0x260] sm:$0xff]
    %v4586 = vld [vmem:[#allocation2 + $0x270] sm:$0xff]
    %v4587 = vld [vmem:[#allocation2 + $0x278] sm:$0xff]
    %v4588 = vld [vmem:[#allocation2 + $0x288] sm:$0xff]
    %v4589 = vld [vmem:[#allocation2 + $0x290] sm:$0xff]
    %v4590 = vld [vmem:[#allocation2 + $0x2a0] sm:$0xff]
    %v4591 = vld [vmem:[#allocation2 + $0x2a8] sm:$0xff]
    %v4592 = vld [vmem:[#allocation2 + $0x2b8] sm:$0xff]
    %v4593 = vld [vmem:[#allocation2 + $0x2c0] sm:$0xff]
    %v4594 = vld [vmem:[#allocation2 + $0x2d0] sm:$0xff]
    %v4595 = vld [vmem:[#allocation2 + $0x2d8] sm:$0xff]
    %v4596 = vld [vmem:[#allocation2 + $0x2e8] sm:$0xff]
    %v4597 = vld [vmem:[#allocation2 + $0x2f0] sm:$0xff]
    %v4598 = vld [vmem:[#allocation2 + $0x300] sm:$0xff]
    %v4599 = vld [vmem:[#allocation2 + $0x308] sm:$0xff]
    %v4600 = vld [vmem:[#allocation2 + $0x318] sm:$0xff]
    %v4601 = vld [vmem:[#allocation2 + $0x320] sm:$0xff]
    %v4602 = vld [vmem:[#allocation2 + $0x1] sm:$0xff]
    %v4603 = vld [vmem:[#allocation2 + $0x9] sm:$0xff]
    %v4604 = vld [vmem:[#allocation2 + $0x19] sm:$0xff]
    %v4605 = vld [vmem:[#allocation2 + $0x21] sm:$0xff]
    %v4606 = vld [vmem:[#allocation2 + $0x31] sm:$0xff]
    %v4607 = vld [vmem:[#allocation2 + $0x39] sm:$0xff]
    %v4608 = vld [vmem:[#allocation2 + $0x49] sm:$0xff]
    %v4609 = vld [vmem:[#allocation2 + $0x51] sm:$0xff]
    %v4610 = vld [vmem:[#allocation2 + $0x61] sm:$0xff]
    %v4611 = vld [vmem:[#allocation2 + $0x69] sm:$0xff]
    %v4612 = vld [vmem:[#allocation2 + $0x79] sm:$0xff]
    %v4613 = vld [vmem:[#allocation2 + $0x81] sm:$0xff]
    %v4614 = vld [vmem:[#allocation2 + $0x91] sm:$0xff]
    %v4615 = vld [vmem:[#allocation2 + $0x99] sm:$0xff]
    %v4616 = vld [vmem:[#allocation2 + $0xa9] sm:$0xff]
    %v4617 = vld [vmem:[#allocation2 + $0xb1] sm:$0xff]
    %v4618 = vld [vmem:[#allocation2 + $0xc1] sm:$0xff]
    %v4619 = vld [vmem:[#allocation2 + $0xc9] sm:$0xff]
    %v4620 = vld [vmem:[#allocation2 + $0xd9] sm:$0xff]
    %v4621 = vld [vmem:[#allocation2 + $0xe1] sm:$0xff]
    %v4622 = vld [vmem:[#allocation2 + $0xf1] sm:$0xff]
    %v4623 = vld [vmem:[#allocation2 + $0xf9] sm:$0xff]
    %v4624 = vld [vmem:[#allocation2 + $0x109] sm:$0xff]
    %v4625 = vld [vmem:[#allocation2 + $0x111] sm:$0xff]
    %v4626 = vld [vmem:[#allocation2 + $0x121] sm:$0xff]
    %v4627 = vld [vmem:[#allocation2 + $0x129] sm:$0xff]
    %v4628 = vld [vmem:[#allocation2 + $0x139] sm:$0xff]
    %v4629 = vld [vmem:[#allocation2 + $0x141] sm:$0xff]
    %v4630 = vld [vmem:[#allocation2 + $0x151] sm:$0xff]
    %v4631 = vld [vmem:[#allocation2 + $0x159] sm:$0xff]
    %v4632 = vld [vmem:[#allocation2 + $0x169] sm:$0xff]
    %v4633 = vld [vmem:[#allocation2 + $0x171] sm:$0xff]
    %v4634 = vld [vmem:[#allocation2 + $0x1b1] sm:$0xff]
    %v4635 = vld [vmem:[#allocation2 + $0x1b9] sm:$0xff]
    %v4636 = vld [vmem:[#allocation2 + $0x1c9] sm:$0xff]
    %v4637 = vld [vmem:[#allocation2 + $0x1d1] sm:$0xff]
    %v4638 = vld [vmem:[#allocation2 + $0x1e1] sm:$0xff]
    %v4639 = vld [vmem:[#allocation2 + $0x1e9] sm:$0xff]
    %v4640 = vld [vmem:[#allocation2 + $0x1f9] sm:$0xff]
    %v4641 = vld [vmem:[#allocation2 + $0x201] sm:$0xff]
    %v4642 = vld [vmem:[#allocation2 + $0x211] sm:$0xff]
    %v4643 = vld [vmem:[#allocation2 + $0x219] sm:$0xff]
    %v4644 = vld [vmem:[#allocation2 + $0x229] sm:$0xff]
    %v4645 = vld [vmem:[#allocation2 + $0x231] sm:$0xff]
    %v4646 = vld [vmem:[#allocation2 + $0x241] sm:$0xff]
    %v4647 = vld [vmem:[#allocation2 + $0x249] sm:$0xff]
    %v4648 = vld [vmem:[#allocation2 + $0x259] sm:$0xff]
    %v4649 = vld [vmem:[#allocation2 + $0x261] sm:$0xff]
    %v4650 = vld [vmem:[#allocation2 + $0x271] sm:$0xff]
    %v4651 = vld [vmem:[#allocation2 + $0x279] sm:$0xff]
    %v4652 = vld [vmem:[#allocation2 + $0x289] sm:$0xff]
    %v4653 = vld [vmem:[#allocation2 + $0x291] sm:$0xff]
    %v4654 = vld [vmem:[#allocation2 + $0x2a1] sm:$0xff]
    %v4655 = vld [vmem:[#allocation2 + $0x2a9] sm:$0xff]
    %v4656 = vld [vmem:[#allocation2 + $0x2b9] sm:$0xff]
    %v4657 = vld [vmem:[#allocation2 + $0x2c1] sm:$0xff]
    %v4658 = vld [vmem:[#allocation2 + $0x2d1] sm:$0xff]
    %v4659 = vld [vmem:[#allocation2 + $0x2d9] sm:$0xff]
    %v4660 = vld [vmem:[#allocation2 + $0x2e9] sm:$0xff]
    %v4661 = vld [vmem:[#allocation2 + $0x2f1] sm:$0xff]
    %v4662 = vld [vmem:[#allocation2 + $0x301] sm:$0xff]
    %v4663 = vld [vmem:[#allocation2 + $0x309] sm:$0xff]
    %v4664 = vld [vmem:[#allocation2 + $0x319] sm:$0xff]
    %v4665 = vld [vmem:[#allocation2 + $0x321] sm:$0xff]
    %v4666 = vld [vmem:[#allocation2 + $0x2] sm:$0xff]
    %v4667 = vld [vmem:[#allocation2 + $0xa] sm:$0xff]
    %v4668 = vld [vmem:[#allocation2 + $0x1a] sm:$0xff]
    %v4669 = vld [vmem:[#allocation2 + $0x22] sm:$0xff]
    %v4670 = vld [vmem:[#allocation2 + $0x32] sm:$0xff]
    %v4671 = vld [vmem:[#allocation2 + $0x3a] sm:$0xff]
    %v4672 = vld [vmem:[#allocation2 + $0x4a] sm:$0xff]
    %v4673 = vld [vmem:[#allocation2 + $0x52] sm:$0xff]
    %v4674 = vld [vmem:[#allocation2 + $0x62] sm:$0xff]
    %v4675 = vld [vmem:[#allocation2 + $0x6a] sm:$0xff]
    %v4676 = vld [vmem:[#allocation2 + $0x7a] sm:$0xff]
    %v4677 = vld [vmem:[#allocation2 + $0x82] sm:$0xff]
    %v4678 = vld [vmem:[#allocation2 + $0x92] sm:$0xff]
    %v4679 = vld [vmem:[#allocation2 + $0x9a] sm:$0xff]
    %v4680 = vld [vmem:[#allocation2 + $0xaa] sm:$0xff]
    %v4681 = vld [vmem:[#allocation2 + $0xb2] sm:$0xff]
    %v4682 = vld [vmem:[#allocation2 + $0xc2] sm:$0xff]
    %v4683 = vld [vmem:[#allocation2 + $0xca] sm:$0xff]
    %v4684 = vld [vmem:[#allocation2 + $0xda] sm:$0xff]
    %v4685 = vld [vmem:[#allocation2 + $0xe2] sm:$0xff]
    %v4686 = vld [vmem:[#allocation2 + $0xf2] sm:$0xff]
    %v4687 = vld [vmem:[#allocation2 + $0xfa] sm:$0xff]
    %v4688 = vld [vmem:[#allocation2 + $0x10a] sm:$0xff]
    %v4689 = vld [vmem:[#allocation2 + $0x112] sm:$0xff]
    %v4690 = vld [vmem:[#allocation2 + $0x122] sm:$0xff]
    %v4691 = vld [vmem:[#allocation2 + $0x12a] sm:$0xff]
    %v4692 = vld [vmem:[#allocation2 + $0x13a] sm:$0xff]
    %v4693 = vld [vmem:[#allocation2 + $0x142] sm:$0xff]
    %v4694 = vld [vmem:[#allocation2 + $0x152] sm:$0xff]
    %v4695 = vld [vmem:[#allocation2 + $0x15a] sm:$0xff]
    %v4696 = vld [vmem:[#allocation2 + $0x16a] sm:$0xff]
    %v4697 = vld [vmem:[#allocation2 + $0x172] sm:$0xff]
    %v4698 = vld [vmem:[#allocation2 + $0x1b2] sm:$0xff]
    %v4699 = vld [vmem:[#allocation2 + $0x1ba] sm:$0xff]
    %v4700 = vld [vmem:[#allocation2 + $0x1ca] sm:$0xff]
    %v4701 = vld [vmem:[#allocation2 + $0x1d2] sm:$0xff]
    %v4702 = vld [vmem:[#allocation2 + $0x1e2] sm:$0xff]
    %v4703 = vld [vmem:[#allocation2 + $0x1ea] sm:$0xff]
    %v4704 = vld [vmem:[#allocation2 + $0x1fa] sm:$0xff]
    %v4705 = vld [vmem:[#allocation2 + $0x202] sm:$0xff]
    %v4706 = vld [vmem:[#allocation2 + $0x212] sm:$0xff]
    %v4707 = vld [vmem:[#allocation2 + $0x21a] sm:$0xff]
    %v4708 = vld [vmem:[#allocation2 + $0x22a] sm:$0xff]
    %v4709 = vld [vmem:[#allocation2 + $0x232] sm:$0xff]
    %v4710 = vld [vmem:[#allocation2 + $0x242] sm:$0xff]
    %v4711 = vld [vmem:[#allocation2 + $0x24a] sm:$0xff]
    %v4712 = vld [vmem:[#allocation2 + $0x25a] sm:$0xff]
    %v4713 = vld [vmem:[#allocation2 + $0x262] sm:$0xff]
    %v4714 = vld [vmem:[#allocation2 + $0x272] sm:$0xff]
    %v4715 = vld [vmem:[#allocation2 + $0x27a] sm:$0xff]
    %v4716 = vld [vmem:[#allocation2 + $0x28a] sm:$0xff]
    %v4717 = vld [vmem:[#allocation2 + $0x292] sm:$0xff]
    %v4718 = vld [vmem:[#allocation2 + $0x2a2] sm:$0xff]
    %v4719 = vld [vmem:[#allocation2 + $0x2aa] sm:$0xff]
    %v4720 = vld [vmem:[#allocation2 + $0x2ba] sm:$0xff]
    %v4721 = vld [vmem:[#allocation2 + $0x2c2] sm:$0xff]
    %v4722 = vld [vmem:[#allocation2 + $0x2d2] sm:$0xff]
    %v4723 = vld [vmem:[#allocation2 + $0x2da] sm:$0xff]
    %v4724 = vld [vmem:[#allocation2 + $0x2ea] sm:$0xff]
    %v4725 = vld [vmem:[#allocation2 + $0x2f2] sm:$0xff]
    %v4726 = vld [vmem:[#allocation2 + $0x302] sm:$0xff]
    %v4727 = vld [vmem:[#allocation2 + $0x30a] sm:$0xff]
    %v4728 = vld [vmem:[#allocation2 + $0x31a] sm:$0xff]
    %v4729 = vld [vmem:[#allocation2 + $0x322] sm:$0xff]
    %v4730 = vld [vmem:[%s920] sm:$0xff]
    %v4731 = vld [vmem:[%s920 + $0x8] sm:$0xff]
    %v4732 = vld [vmem:[%s920 + $0x18] sm:$0xff]
    %v4733 = vld [vmem:[%s920 + $0x20] sm:$0xff]
    %v4734 = vld [vmem:[%s920 + $0x30] sm:$0xff]
    %v4735 = vld [vmem:[%s920 + $0x38] sm:$0xff]
    %v4736 = vld [vmem:[%s920 + $0x48] sm:$0xff]
    %v4737 = vld [vmem:[%s920 + $0x50] sm:$0xff]
    %v4738 = vld [vmem:[%s920 + $0x60] sm:$0xff]
    %v4739 = vld [vmem:[%s920 + $0x68] sm:$0xff]
    %v4740 = vld [vmem:[%s920 + $0x78] sm:$0xff]
    %v4741 = vld [vmem:[%s920 + $0x80] sm:$0xff]
    %v4742 = vld [vmem:[%s920 + $0x90] sm:$0xff]
    %v4743 = vld [vmem:[%s920 + $0x98] sm:$0xff]
    %v4744 = vld [vmem:[%s920 + $0xa8] sm:$0xff]
    %v4745 = vld [vmem:[%s920 + $0xb0] sm:$0xff]
    %v4746 = vld [vmem:[%s920 + $0xc0] sm:$0xff]
    %v4747 = vld [vmem:[%s920 + $0xc8] sm:$0xff]
    %v4748 = vld [vmem:[%s920 + $0xd8] sm:$0xff]
    %v4749 = vld [vmem:[%s920 + $0xe0] sm:$0xff]
    %v4750 = vld [vmem:[%s920 + $0xf0] sm:$0xff]
    %v4751 = vld [vmem:[%s920 + $0xf8] sm:$0xff]
    %v4752 = vld [vmem:[%s920 + $0x108] sm:$0xff]
    %v4753 = vld [vmem:[%s920 + $0x110] sm:$0xff]
    %v4754 = vld [vmem:[%s920 + $0x120] sm:$0xff]
    %v4755 = vld [vmem:[%s920 + $0x128] sm:$0xff]
    %v4756 = vld [vmem:[%s920 + $0x138] sm:$0xff]
    %v4757 = vld [vmem:[%s920 + $0x140] sm:$0xff]
    %v4758 = vld [vmem:[%s920 + $0x150] sm:$0xff]
    %v4759 = vld [vmem:[%s920 + $0x158] sm:$0xff]
    %v4760 = vld [vmem:[%s920 + $0x168] sm:$0xff]
    %v4761 = vld [vmem:[%s920 + $0x170] sm:$0xff]
    %v4762 = vld [vmem:[%s920 + $0x1b0] sm:$0xff]
    %v4763 = vld [vmem:[%s920 + $0x1b8] sm:$0xff]
    %v4764 = vld [vmem:[%s920 + $0x1c8] sm:$0xff]
    %v4765 = vld [vmem:[%s920 + $0x1d0] sm:$0xff]
    %v4766 = vld [vmem:[%s920 + $0x1e0] sm:$0xff]
    %v4767 = vld [vmem:[%s920 + $0x1e8] sm:$0xff]
    %v4768 = vld [vmem:[%s920 + $0x1f8] sm:$0xff]
    %v4769 = vld [vmem:[%s920 + $0x200] sm:$0xff]
    %v4770 = vld [vmem:[%s920 + $0x210] sm:$0xff]
    %v4771 = vld [vmem:[%s920 + $0x218] sm:$0xff]
    %v4772 = vld [vmem:[%s920 + $0x228] sm:$0xff]
    %v4773 = vld [vmem:[%s920 + $0x230] sm:$0xff]
    %v4774 = vld [vmem:[%s920 + $0x240] sm:$0xff]
    %v4775 = vld [vmem:[%s920 + $0x248] sm:$0xff]
    %v4776 = vld [vmem:[%s920 + $0x258] sm:$0xff]
    %v4777 = vld [vmem:[%s920 + $0x260] sm:$0xff]
    %v4778 = vld [vmem:[%s920 + $0x270] sm:$0xff]
    %v4779 = vld [vmem:[%s920 + $0x278] sm:$0xff]
    %v4780 = vld [vmem:[%s920 + $0x288] sm:$0xff]
    %v4781 = vld [vmem:[%s920 + $0x290] sm:$0xff]
    %v4782 = vld [vmem:[%s920 + $0x2a0] sm:$0xff]
    %v4783 = vld [vmem:[%s920 + $0x2a8] sm:$0xff]
    %v4784 = vld [vmem:[%s920 + $0x2b8] sm:$0xff]
    %v4785 = vld [vmem:[%s920 + $0x2c0] sm:$0xff]
    %v4786 = vld [vmem:[%s920 + $0x2d0] sm:$0xff]
    %v4787 = vld [vmem:[%s920 + $0x2d8] sm:$0xff]
    %v4788 = vld [vmem:[%s920 + $0x2e8] sm:$0xff]
    %v4789 = vld [vmem:[%s920 + $0x2f0] sm:$0xff]
    %v4790 = vld [vmem:[%s920 + $0x300] sm:$0xff]
    %v4791 = vld [vmem:[%s920 + $0x308] sm:$0xff]
    %v4792 = vld [vmem:[%s920 + $0x318] sm:$0xff]
    %v4793 = vld [vmem:[%s920 + $0x320] sm:$0xff]
    %v4794 = vld [vmem:[%s920 + $0x1] sm:$0xff]
    %v4795 = vld [vmem:[%s920 + $0x9] sm:$0xff]
    %v4796 = vld [vmem:[%s920 + $0x19] sm:$0xff]
    %v4797 = vld [vmem:[%s920 + $0x21] sm:$0xff]
    %v4798 = vld [vmem:[%s920 + $0x31] sm:$0xff]
    %v4799 = vld [vmem:[%s920 + $0x39] sm:$0xff]
    %v4800 = vld [vmem:[%s920 + $0x49] sm:$0xff]
    %v4801 = vld [vmem:[%s920 + $0x51] sm:$0xff]
    %v4802 = vld [vmem:[%s920 + $0x61] sm:$0xff]
    %v4803 = vld [vmem:[%s920 + $0x69] sm:$0xff]
    %v4804 = vld [vmem:[%s920 + $0x79] sm:$0xff]
    %v4805 = vld [vmem:[%s920 + $0x81] sm:$0xff]
    %v4806 = vld [vmem:[%s920 + $0x91] sm:$0xff]
    %v4807 = vld [vmem:[%s920 + $0x99] sm:$0xff]
    %v4808 = vld [vmem:[%s920 + $0xa9] sm:$0xff]
    %v4809 = vld [vmem:[%s920 + $0xb1] sm:$0xff]
    %v4810 = vld [vmem:[%s920 + $0xc1] sm:$0xff]
    %v4811 = vld [vmem:[%s920 + $0xc9] sm:$0xff]
    %v4812 = vld [vmem:[%s920 + $0xd9] sm:$0xff]
    %v4813 = vld [vmem:[%s920 + $0xe1] sm:$0xff]
    %v4814 = vld [vmem:[%s920 + $0xf1] sm:$0xff]
    %v4815 = vld [vmem:[%s920 + $0xf9] sm:$0xff]
    %v4816 = vld [vmem:[%s920 + $0x109] sm:$0xff]
    %v4817 = vld [vmem:[%s920 + $0x111] sm:$0xff]
    %v4818 = vld [vmem:[%s920 + $0x121] sm:$0xff]
    %v4819 = vld [vmem:[%s920 + $0x129] sm:$0xff]
    %v4820 = vld [vmem:[%s920 + $0x139] sm:$0xff]
    %v4821 = vld [vmem:[%s920 + $0x141] sm:$0xff]
    %v4822 = vld [vmem:[%s920 + $0x151] sm:$0xff]
    %v4823 = vld [vmem:[%s920 + $0x159] sm:$0xff]
    %v4824 = vld [vmem:[%s920 + $0x169] sm:$0xff]
    %v4825 = vld [vmem:[%s920 + $0x171] sm:$0xff]
    %v4826 = vld [vmem:[%s920 + $0x1b1] sm:$0xff]
    %v4827 = vld [vmem:[%s920 + $0x1b9] sm:$0xff]
    %v4828 = vld [vmem:[%s920 + $0x1c9] sm:$0xff]
    %v4829 = vld [vmem:[%s920 + $0x1d1] sm:$0xff]
    %v4830 = vld [vmem:[%s920 + $0x1e1] sm:$0xff]
    %v4831 = vld [vmem:[%s920 + $0x1e9] sm:$0xff]
    %v4832 = vld [vmem:[%s920 + $0x1f9] sm:$0xff]
    %v4833 = vld [vmem:[%s920 + $0x201] sm:$0xff]
    %v4834 = vld [vmem:[%s920 + $0x211] sm:$0xff]
    %v4835 = vld [vmem:[%s920 + $0x219] sm:$0xff]
    %v4836 = vld [vmem:[%s920 + $0x229] sm:$0xff]
    %v4837 = vld [vmem:[%s920 + $0x231] sm:$0xff]
    %v4838 = vld [vmem:[%s920 + $0x241] sm:$0xff]
    %v4839 = vld [vmem:[%s920 + $0x249] sm:$0xff]
    %v4840 = vld [vmem:[%s920 + $0x259] sm:$0xff]
    %v4841 = vld [vmem:[%s920 + $0x261] sm:$0xff]
    %v4842 = vld [vmem:[%s920 + $0x271] sm:$0xff]
    %v4843 = vld [vmem:[%s920 + $0x279] sm:$0xff]
    %v4844 = vld [vmem:[%s920 + $0x289] sm:$0xff]
    %v4845 = vld [vmem:[%s920 + $0x291] sm:$0xff]
    %v4846 = vld [vmem:[%s920 + $0x2a1] sm:$0xff]
    %v4847 = vld [vmem:[%s920 + $0x2a9] sm:$0xff]
    %v4848 = vld [vmem:[%s920 + $0x2b9] sm:$0xff]
    %v4849 = vld [vmem:[%s920 + $0x2c1] sm:$0xff]
    %v4850 = vld [vmem:[%s920 + $0x2d1] sm:$0xff]
    %v4851 = vld [vmem:[%s920 + $0x2d9] sm:$0xff]
    %v4852 = vld [vmem:[%s920 + $0x2e9] sm:$0xff]
    %v4853 = vld [vmem:[%s920 + $0x2f1] sm:$0xff]
    %v4854 = vld [vmem:[%s920 + $0x301] sm:$0xff]
    %v4855 = vld [vmem:[%s920 + $0x309] sm:$0xff]
    %v4856 = vld [vmem:[%s920 + $0x319] sm:$0xff]
    %v4857 = vld [vmem:[%s920 + $0x321] sm:$0xff]
    %v4858 = vld [vmem:[%s920 + $0x2] sm:$0xff]
    %v4859 = vld [vmem:[%s920 + $0xa] sm:$0xff]
    %v4860 = vld [vmem:[%s920 + $0x1a] sm:$0xff]
    %v4861 = vld [vmem:[%s920 + $0x22] sm:$0xff]
    %v4862 = vld [vmem:[%s920 + $0x32] sm:$0xff]
    %v4863 = vld [vmem:[%s920 + $0x3a] sm:$0xff]
    %v4864 = vld [vmem:[%s920 + $0x4a] sm:$0xff]
    %v4865 = vld [vmem:[%s920 + $0x52] sm:$0xff]
    %v4866 = vld [vmem:[%s920 + $0x62] sm:$0xff]
    %v4867 = vld [vmem:[%s920 + $0x6a] sm:$0xff]
    %v4868 = vld [vmem:[%s920 + $0x7a] sm:$0xff]
    %v4869 = vld [vmem:[%s920 + $0x82] sm:$0xff]
    %v4870 = vld [vmem:[%s920 + $0x92] sm:$0xff]
    %v4871 = vld [vmem:[%s920 + $0x9a] sm:$0xff]
    %v4872 = vld [vmem:[%s920 + $0xaa] sm:$0xff]
    %v4873 = vld [vmem:[%s920 + $0xb2] sm:$0xff]
    %v4874 = vld [vmem:[%s920 + $0xc2] sm:$0xff]
    %v4875 = vld [vmem:[%s920 + $0xca] sm:$0xff]
    %v4876 = vld [vmem:[%s920 + $0xda] sm:$0xff]
    %v4877 = vld [vmem:[%s920 + $0xe2] sm:$0xff]
    %v4878 = vld [vmem:[%s920 + $0xf2] sm:$0xff]
    %v4879 = vld [vmem:[%s920 + $0xfa] sm:$0xff]
    %v4880 = vld [vmem:[%s920 + $0x10a] sm:$0xff]
    %v4881 = vld [vmem:[%s920 + $0x112] sm:$0xff]
    %v4882 = vld [vmem:[%s920 + $0x122] sm:$0xff]
    %v4883 = vld [vmem:[%s920 + $0x12a] sm:$0xff]
    %v4884 = vld [vmem:[%s920 + $0x13a] sm:$0xff]
    %v4885 = vld [vmem:[%s920 + $0x142] sm:$0xff]
    %v4886 = vld [vmem:[%s920 + $0x152] sm:$0xff]
    %v4887 = vld [vmem:[%s920 + $0x15a] sm:$0xff]
    %v4888 = vld [vmem:[%s920 + $0x16a] sm:$0xff]
    %v4889 = vld [vmem:[%s920 + $0x172] sm:$0xff]
    %v4890 = vld [vmem:[%s920 + $0x1b2] sm:$0xff]
    %v4891 = vld [vmem:[%s920 + $0x1ba] sm:$0xff]
    %v4892 = vld [vmem:[%s920 + $0x1ca] sm:$0xff]
    %v4893 = vld [vmem:[%s920 + $0x1d2] sm:$0xff]
    %v4894 = vld [vmem:[%s920 + $0x1e2] sm:$0xff]
    %v4895 = vld [vmem:[%s920 + $0x1ea] sm:$0xff]
    %v4896 = vld [vmem:[%s920 + $0x1fa] sm:$0xff]
    %v4897 = vld [vmem:[%s920 + $0x202] sm:$0xff]
    %v4898 = vld [vmem:[%s920 + $0x212] sm:$0xff]
    %v4899 = vld [vmem:[%s920 + $0x21a] sm:$0xff]
    %v4900 = vld [vmem:[%s920 + $0x22a] sm:$0xff]
    %v4901 = vld [vmem:[%s920 + $0x232] sm:$0xff]
    %v4902 = vld [vmem:[%s920 + $0x242] sm:$0xff]
    %v4903 = vld [vmem:[%s920 + $0x24a] sm:$0xff]
    %v4904 = vld [vmem:[%s920 + $0x25a] sm:$0xff]
    %v4905 = vld [vmem:[%s920 + $0x262] sm:$0xff]
    %v4906 = vld [vmem:[%s920 + $0x272] sm:$0xff]
    %v4907 = vld [vmem:[%s920 + $0x27a] sm:$0xff]
    %v4908 = vld [vmem:[%s920 + $0x28a] sm:$0xff]
    %v4909 = vld [vmem:[%s920 + $0x292] sm:$0xff]
    %v4910 = vld [vmem:[%s920 + $0x2a2] sm:$0xff]
    %v4911 = vld [vmem:[%s920 + $0x2aa] sm:$0xff]
    %v4912 = vld [vmem:[%s920 + $0x2ba] sm:$0xff]
    %v4913 = vld [vmem:[%s920 + $0x2c2] sm:$0xff]
    %v4914 = vld [vmem:[%s920 + $0x2d2] sm:$0xff]
    %v4915 = vld [vmem:[%s920 + $0x2da] sm:$0xff]
    %v4916 = vld [vmem:[%s920 + $0x2ea] sm:$0xff]
    %v4917 = vld [vmem:[%s920 + $0x2f2] sm:$0xff]
    %v4918 = vld [vmem:[%s920 + $0x302] sm:$0xff]
    %v4919 = vld [vmem:[%s920 + $0x30a] sm:$0xff]
    %v4920 = vld [vmem:[%s920 + $0x31a] sm:$0xff]
    %v4921 = vld [vmem:[%s920 + $0x322] sm:$0xff]
    %v4922 = vld [vmem:[%s1369] sm:$0xff]
    %v4923 = vld [vmem:[%s1369 + $0x8] sm:$0xff]
    %v4924 = vld [vmem:[%s1369 + $0x18] sm:$0xff]
    %v4925 = vld [vmem:[%s1369 + $0x20] sm:$0xff]
    %v4926 = vld [vmem:[%s1369 + $0x30] sm:$0xff]
    %v4927 = vld [vmem:[%s1369 + $0x38] sm:$0xff]
    %v4928 = vld [vmem:[%s1369 + $0x48] sm:$0xff]
    %v4929 = vld [vmem:[%s1369 + $0x50] sm:$0xff]
    %v4930 = vld [vmem:[%s1369 + $0x60] sm:$0xff]
    %v4931 = vld [vmem:[%s1369 + $0x68] sm:$0xff]
    %v4932 = vld [vmem:[%s1369 + $0x78] sm:$0xff]
    %v4933 = vld [vmem:[%s1369 + $0x80] sm:$0xff]
    %v4934 = vld [vmem:[%s1369 + $0x90] sm:$0xff]
    %v4935 = vld [vmem:[%s1369 + $0x98] sm:$0xff]
    %v4936 = vld [vmem:[%s1369 + $0xa8] sm:$0xff]
    %v4937 = vld [vmem:[%s1369 + $0xb0] sm:$0xff]
    %v4938 = vld [vmem:[%s1369 + $0xc0] sm:$0xff]
    %v4939 = vld [vmem:[%s1369 + $0xc8] sm:$0xff]
    %v4940 = vld [vmem:[%s1369 + $0xd8] sm:$0xff]
    %v4941 = vld [vmem:[%s1369 + $0xe0] sm:$0xff]
    %v4942 = vld [vmem:[%s1369 + $0xf0] sm:$0xff]
    %v4943 = vld [vmem:[%s1369 + $0xf8] sm:$0xff]
    %v4944 = vld [vmem:[%s1369 + $0x108] sm:$0xff]
    %v4945 = vld [vmem:[%s1369 + $0x110] sm:$0xff]
    %v4946 = vld [vmem:[%s1369 + $0x120] sm:$0xff]
    %v4947 = vld [vmem:[%s1369 + $0x128] sm:$0xff]
    %v4948 = vld [vmem:[%s1369 + $0x138] sm:$0xff]
    %v4949 = vld [vmem:[%s1369 + $0x140] sm:$0xff]
    %v4950 = vld [vmem:[%s1369 + $0x150] sm:$0xff]
    %v4951 = vld [vmem:[%s1369 + $0x158] sm:$0xff]
    %v4952 = vld [vmem:[%s1369 + $0x168] sm:$0xff]
    %v4953 = vld [vmem:[%s1369 + $0x170] sm:$0xff]
    %v4954 = vld [vmem:[%s1369 + $0x1b0] sm:$0xff]
    %v4955 = vld [vmem:[%s1369 + $0x1b8] sm:$0xff]
    %v4956 = vld [vmem:[%s1369 + $0x1c8] sm:$0xff]
    %v4957 = vld [vmem:[%s1369 + $0x1d0] sm:$0xff]
    %v4958 = vld [vmem:[%s1369 + $0x1e0] sm:$0xff]
    %v4959 = vld [vmem:[%s1369 + $0x1e8] sm:$0xff]
    %v4960 = vld [vmem:[%s1369 + $0x1f8] sm:$0xff]
    %v4961 = vld [vmem:[%s1369 + $0x200] sm:$0xff]
    %v4962 = vld [vmem:[%s1369 + $0x210] sm:$0xff]
    %v4963 = vld [vmem:[%s1369 + $0x218] sm:$0xff]
    %v4964 = vld [vmem:[%s1369 + $0x228] sm:$0xff]
    %v4965 = vld [vmem:[%s1369 + $0x230] sm:$0xff]
    %v4966 = vld [vmem:[%s1369 + $0x240] sm:$0xff]
    %v4967 = vld [vmem:[%s1369 + $0x248] sm:$0xff]
    %v4968 = vld [vmem:[%s1369 + $0x258] sm:$0xff]
    %v4969 = vld [vmem:[%s1369 + $0x260] sm:$0xff]
    %v4970 = vld [vmem:[%s1369 + $0x270] sm:$0xff]
    %v4971 = vld [vmem:[%s1369 + $0x278] sm:$0xff]
    %v4972 = vld [vmem:[%s1369 + $0x288] sm:$0xff]
    %v4973 = vld [vmem:[%s1369 + $0x290] sm:$0xff]
    %v4974 = vld [vmem:[%s1369 + $0x2a0] sm:$0xff]
    %v4975 = vld [vmem:[%s1369 + $0x2a8] sm:$0xff]
    %v4976 = vld [vmem:[%s1369 + $0x2b8] sm:$0xff]
    %v4977 = vld [vmem:[%s1369 + $0x2c0] sm:$0xff]
    %v4978 = vld [vmem:[%s1369 + $0x2d0] sm:$0xff]
    %v4979 = vld [vmem:[%s1369 + $0x2d8] sm:$0xff]
    %v4980 = vld [vmem:[%s1369 + $0x2e8] sm:$0xff]
    %v4981 = vld [vmem:[%s1369 + $0x2f0] sm:$0xff]
    %v4982 = vld [vmem:[%s1369 + $0x300] sm:$0xff]
    %v4983 = vld [vmem:[%s1369 + $0x308] sm:$0xff]
    %v4984 = vld [vmem:[%s1369 + $0x318] sm:$0xff]
    %v4985 = vld [vmem:[%s1369 + $0x320] sm:$0xff]
    %v4986 = vld [vmem:[%s1369 + $0x1] sm:$0xff]
    %v4987 = vld [vmem:[%s1369 + $0x9] sm:$0xff]
    %v4988 = vld [vmem:[%s1369 + $0x19] sm:$0xff]
    %v4989 = vld [vmem:[%s1369 + $0x21] sm:$0xff]
    %v4990 = vld [vmem:[%s1369 + $0x31] sm:$0xff]
    %v4991 = vld [vmem:[%s1369 + $0x39] sm:$0xff]
    %v4992 = vld [vmem:[%s1369 + $0x49] sm:$0xff]
    %v4993 = vld [vmem:[%s1369 + $0x51] sm:$0xff]
    %v4994 = vld [vmem:[%s1369 + $0x61] sm:$0xff]
    %v4995 = vld [vmem:[%s1369 + $0x69] sm:$0xff]
    %v4996 = vld [vmem:[%s1369 + $0x79] sm:$0xff]
    %v4997 = vld [vmem:[%s1369 + $0x81] sm:$0xff]
    %v4998 = vld [vmem:[%s1369 + $0x91] sm:$0xff]
    %v4999 = vld [vmem:[%s1369 + $0x99] sm:$0xff]
    %v5000 = vld [vmem:[%s1369 + $0xa9] sm:$0xff]
    %v5001 = vld [vmem:[%s1369 + $0xb1] sm:$0xff]
    %v5002 = vld [vmem:[%s1369 + $0xc1] sm:$0xff]
    %v5003 = vld [vmem:[%s1369 + $0xc9] sm:$0xff]
    %v5004 = vld [vmem:[%s1369 + $0xd9] sm:$0xff]
    %v5005 = vld [vmem:[%s1369 + $0xe1] sm:$0xff]
    %v5006 = vld [vmem:[%s1369 + $0xf1] sm:$0xff]
    %v5007 = vld [vmem:[%s1369 + $0xf9] sm:$0xff]
    %v5008 = vld [vmem:[%s1369 + $0x109] sm:$0xff]
    %v5009 = vld [vmem:[%s1369 + $0x111] sm:$0xff]
    %v5010 = vld [vmem:[%s1369 + $0x121] sm:$0xff]
    %v5011 = vld [vmem:[%s1369 + $0x129] sm:$0xff]
    %v5012 = vld [vmem:[%s1369 + $0x139] sm:$0xff]
    %v5013 = vld [vmem:[%s1369 + $0x141] sm:$0xff]
    %v5014 = vld [vmem:[%s1369 + $0x151] sm:$0xff]
    %v5015 = vld [vmem:[%s1369 + $0x159] sm:$0xff]
    %v5016 = vld [vmem:[%s1369 + $0x169] sm:$0xff]
    %v5017 = vld [vmem:[%s1369 + $0x171] sm:$0xff]
    %v5018 = vld [vmem:[%s1369 + $0x1b1] sm:$0xff]
    %v5019 = vld [vmem:[%s1369 + $0x1b9] sm:$0xff]
    %v5020 = vld [vmem:[%s1369 + $0x1c9] sm:$0xff]
    %v5021 = vld [vmem:[%s1369 + $0x1d1] sm:$0xff]
    %v5022 = vld [vmem:[%s1369 + $0x1e1] sm:$0xff]
    %v5023 = vld [vmem:[%s1369 + $0x1e9] sm:$0xff]
    %v5024 = vld [vmem:[%s1369 + $0x1f9] sm:$0xff]
    %v5025 = vld [vmem:[%s1369 + $0x201] sm:$0xff]
    %v5026 = vld [vmem:[%s1369 + $0x211] sm:$0xff]
    %v5027 = vld [vmem:[%s1369 + $0x219] sm:$0xff]
    %v5028 = vld [vmem:[%s1369 + $0x229] sm:$0xff]
    %v5029 = vld [vmem:[%s1369 + $0x231] sm:$0xff]
    %v5030 = vld [vmem:[%s1369 + $0x241] sm:$0xff]
    %v5031 = vld [vmem:[%s1369 + $0x249] sm:$0xff]
    %v5032 = vld [vmem:[%s1369 + $0x259] sm:$0xff]
    %v5033 = vld [vmem:[%s1369 + $0x261] sm:$0xff]
    %v5034 = vld [vmem:[%s1369 + $0x271] sm:$0xff]
    %v5035 = vld [vmem:[%s1369 + $0x279] sm:$0xff]
    %v5036 = vld [vmem:[%s1369 + $0x289] sm:$0xff]
    %v5037 = vld [vmem:[%s1369 + $0x291] sm:$0xff]
    %v5038 = vld [vmem:[%s1369 + $0x2a1] sm:$0xff]
    %v5039 = vld [vmem:[%s1369 + $0x2a9] sm:$0xff]
    %v5040 = vld [vmem:[%s1369 + $0x2b9] sm:$0xff]
    %v5041 = vld [vmem:[%s1369 + $0x2c1] sm:$0xff]
    %v5042 = vld [vmem:[%s1369 + $0x2d1] sm:$0xff]
    %v5043 = vld [vmem:[%s1369 + $0x2d9] sm:$0xff]
    %v5044 = vld [vmem:[%s1369 + $0x2e9] sm:$0xff]
    %v5045 = vld [vmem:[%s1369 + $0x2f1] sm:$0xff]
    %v5046 = vld [vmem:[%s1369 + $0x301] sm:$0xff]
    %v5047 = vld [vmem:[%s1369 + $0x309] sm:$0xff]
    %v5048 = vld [vmem:[%s1369 + $0x319] sm:$0xff]
    %v5049 = vld [vmem:[%s1369 + $0x321] sm:$0xff]
    %v5050 = vld [vmem:[%s1369 + $0x2] sm:$0xff]
    %v5051 = vld [vmem:[%s1369 + $0xa] sm:$0xff]
    %v5052 = vld [vmem:[%s1369 + $0x1a] sm:$0xff]
    %v5053 = vld [vmem:[%s1369 + $0x22] sm:$0xff]
    %v5054 = vld [vmem:[%s1369 + $0x32] sm:$0xff]
    %v5055 = vld [vmem:[%s1369 + $0x3a] sm:$0xff]
    %v5056 = vld [vmem:[%s1369 + $0x4a] sm:$0xff]
    %v5057 = vld [vmem:[%s1369 + $0x52] sm:$0xff]
    %v5058 = vld [vmem:[%s1369 + $0x62] sm:$0xff]
    %v5059 = vld [vmem:[%s1369 + $0x6a] sm:$0xff]
    %v5060 = vld [vmem:[%s1369 + $0x7a] sm:$0xff]
    %v5061 = vld [vmem:[%s1369 + $0x82] sm:$0xff]
    %v5062 = vld [vmem:[%s1369 + $0x92] sm:$0xff]
    %v5063 = vld [vmem:[%s1369 + $0x9a] sm:$0xff]
    %v5064 = vld [vmem:[%s1369 + $0xaa] sm:$0xff]
    %v5065 = vld [vmem:[%s1369 + $0xb2] sm:$0xff]
    %v5066 = vld [vmem:[%s1369 + $0xc2] sm:$0xff]
    %v5067 = vld [vmem:[%s1369 + $0xca] sm:$0xff]
    %v5068 = vld [vmem:[%s1369 + $0xda] sm:$0xff]
    %v5069 = vld [vmem:[%s1369 + $0xe2] sm:$0xff]
    %v5070 = vld [vmem:[%s1369 + $0xf2] sm:$0xff]
    %v5071 = vld [vmem:[%s1369 + $0xfa] sm:$0xff]
    %v5072 = vld [vmem:[%s1369 + $0x10a] sm:$0xff]
    %v5073 = vld [vmem:[%s1369 + $0x112] sm:$0xff]
    %v5074 = vld [vmem:[%s1369 + $0x122] sm:$0xff]
    %v5075 = vld [vmem:[%s1369 + $0x12a] sm:$0xff]
    %v5076 = vld [vmem:[%s1369 + $0x13a] sm:$0xff]
    %v5077 = vld [vmem:[%s1369 + $0x142] sm:$0xff]
    %v5078 = vld [vmem:[%s1369 + $0x152] sm:$0xff]
    %v5079 = vld [vmem:[%s1369 + $0x15a] sm:$0xff]
    %v5080 = vld [vmem:[%s1369 + $0x16a] sm:$0xff]
    %v5081 = vld [vmem:[%s1369 + $0x172] sm:$0xff]
    %v5082 = vld [vmem:[%s1369 + $0x1b2] sm:$0xff]
    %v5083 = vld [vmem:[%s1369 + $0x1ba] sm:$0xff]
    %v5084 = vld [vmem:[%s1369 + $0x1ca] sm:$0xff]
    %v5085 = vld [vmem:[%s1369 + $0x1d2] sm:$0xff]
    %v5086 = vld [vmem:[%s1369 + $0x1e2] sm:$0xff]
    %v5087 = vld [vmem:[%s1369 + $0x1ea] sm:$0xff]
    %v5088 = vld [vmem:[%s1369 + $0x1fa] sm:$0xff]
    %v5089 = vld [vmem:[%s1369 + $0x202] sm:$0xff]
    %v5090 = vld [vmem:[%s1369 + $0x212] sm:$0xff]
    %v5091 = vld [vmem:[%s1369 + $0x21a] sm:$0xff]
    %v5092 = vld [vmem:[%s1369 + $0x22a] sm:$0xff]
    %v5093 = vld [vmem:[%s1369 + $0x232] sm:$0xff]
    %v5094 = vld [vmem:[%s1369 + $0x242] sm:$0xff]
    %v5095 = vld [vmem:[%s1369 + $0x24a] sm:$0xff]
    %v5096 = vld [vmem:[%s1369 + $0x25a] sm:$0xff]
    %v5097 = vld [vmem:[%s1369 + $0x262] sm:$0xff]
    %v5098 = vld [vmem:[%s1369 + $0x272] sm:$0xff]
    %v5099 = vld [vmem:[%s1369 + $0x27a] sm:$0xff]
    %v5100 = vld [vmem:[%s1369 + $0x28a] sm:$0xff]
    %v5101 = vld [vmem:[%s1369 + $0x292] sm:$0xff]
    %v5102 = vld [vmem:[%s1369 + $0x2a2] sm:$0xff]
    %v5103 = vld [vmem:[%s1369 + $0x2aa] sm:$0xff]
    %v5104 = vld [vmem:[%s1369 + $0x2ba] sm:$0xff]
    %v5105 = vld [vmem:[%s1369 + $0x2c2] sm:$0xff]
    %v5106 = vld [vmem:[%s1369 + $0x2d2] sm:$0xff]
    %v5107 = vld [vmem:[%s1369 + $0x2da] sm:$0xff]
    %v5108 = vld [vmem:[%s1369 + $0x2ea] sm:$0xff]
    %v5109 = vld [vmem:[%s1369 + $0x2f2] sm:$0xff]
    %v5110 = vld [vmem:[%s1369 + $0x302] sm:$0xff]
    %v5111 = vld [vmem:[%s1369 + $0x30a] sm:$0xff]
    %v5112 = vld [vmem:[%s1369 + $0x31a] sm:$0xff]
    %v5113 = vld [vmem:[%s1369 + $0x322] sm:$0xff]
    %5178 = vrot.lane.b32.xlu0 %v4602, 16
    %v5179 = vpop.permute.xlu0 %5178
    %5180 = vrot.lane.b32.xlu0 %v4603, 16
    %v5181 = vpop.permute.xlu0 %5180
    %5182 = vrot.lane.b32.xlu0 %v4604, 16
    %v5183 = vpop.permute.xlu0 %5182
    %5184 = vrot.lane.b32.xlu0 %v4605, 16
    %v5185 = vpop.permute.xlu0 %5184
    %5186 = vrot.lane.b32.xlu0 %v4606, 16
    %v5187 = vpop.permute.xlu0 %5186
    %5188 = vrot.lane.b32.xlu0 %v4607, 16
    %v5189 = vpop.permute.xlu0 %5188
    %5190 = vrot.lane.b32.xlu0 %v4608, 16
    %v5191 = vpop.permute.xlu0 %5190
    %5192 = vrot.lane.b32.xlu0 %v4609, 16
    %v5193 = vpop.permute.xlu0 %5192
    %5194 = vrot.lane.b32.xlu0 %v4610, 16
    %v5195 = vpop.permute.xlu0 %5194
    %5196 = vrot.lane.b32.xlu0 %v4611, 16
    %v5197 = vpop.permute.xlu0 %5196
    %5198 = vrot.lane.b32.xlu0 %v4612, 16
    %v5199 = vpop.permute.xlu0 %5198
    %5200 = vrot.lane.b32.xlu0 %v4613, 16
    %v5201 = vpop.permute.xlu0 %5200
    %5202 = vrot.lane.b32.xlu0 %v4614, 16
    %v5203 = vpop.permute.xlu0 %5202
    %5204 = vrot.lane.b32.xlu0 %v4615, 16
    %v5205 = vpop.permute.xlu0 %5204
    %5206 = vrot.lane.b32.xlu0 %v4616, 16
    %v5207 = vpop.permute.xlu0 %5206
    %5208 = vrot.lane.b32.xlu0 %v4617, 16
    %v5209 = vpop.permute.xlu0 %5208
    %5210 = vrot.lane.b32.xlu0 %v4618, 16
    %v5211 = vpop.permute.xlu0 %5210
    %5212 = vrot.lane.b32.xlu0 %v4619, 16
    %v5213 = vpop.permute.xlu0 %5212
    %5214 = vrot.lane.b32.xlu0 %v4620, 16
    %v5215 = vpop.permute.xlu0 %5214
    %5216 = vrot.lane.b32.xlu0 %v4621, 16
    %v5217 = vpop.permute.xlu0 %5216
    %5218 = vrot.lane.b32.xlu0 %v4622, 16
    %v5219 = vpop.permute.xlu0 %5218
    %5220 = vrot.lane.b32.xlu0 %v4623, 16
    %v5221 = vpop.permute.xlu0 %5220
    %5222 = vrot.lane.b32.xlu0 %v4624, 16
    %v5223 = vpop.permute.xlu0 %5222
    %5224 = vrot.lane.b32.xlu0 %v4625, 16
    %v5225 = vpop.permute.xlu0 %5224
    %5226 = vrot.lane.b32.xlu0 %v4626, 16
    %v5227 = vpop.permute.xlu0 %5226
    %5228 = vrot.lane.b32.xlu0 %v4627, 16
    %v5229 = vpop.permute.xlu0 %5228
    %5230 = vrot.lane.b32.xlu0 %v4628, 16
    %v5231 = vpop.permute.xlu0 %5230
    %5232 = vrot.lane.b32.xlu0 %v4629, 16
    %v5233 = vpop.permute.xlu0 %5232
    %5234 = vrot.lane.b32.xlu0 %v4630, 16
    %v5235 = vpop.permute.xlu0 %5234
    %5236 = vrot.lane.b32.xlu0 %v4631, 16
    %v5237 = vpop.permute.xlu0 %5236
    %5238 = vrot.lane.b32.xlu0 %v4632, 16
    %v5239 = vpop.permute.xlu0 %5238
    %5240 = vrot.lane.b32.xlu0 %v4633, 16
    %v5241 = vpop.permute.xlu0 %5240
    %5242 = vrot.lane.b32.xlu0 %v4634, 16
    %v5243 = vpop.permute.xlu0 %5242
    %5244 = vrot.lane.b32.xlu0 %v4635, 16
    %v5245 = vpop.permute.xlu0 %5244
    %5246 = vrot.lane.b32.xlu0 %v4636, 16
    %v5247 = vpop.permute.xlu0 %5246
    %5248 = vrot.lane.b32.xlu0 %v4637, 16
    %v5249 = vpop.permute.xlu0 %5248
    %5250 = vrot.lane.b32.xlu0 %v4638, 16
    %v5251 = vpop.permute.xlu0 %5250
    %5252 = vrot.lane.b32.xlu0 %v4639, 16
    %v5253 = vpop.permute.xlu0 %5252
    %5254 = vrot.lane.b32.xlu0 %v4640, 16
    %v5255 = vpop.permute.xlu0 %5254
    %5256 = vrot.lane.b32.xlu0 %v4641, 16
    %v5257 = vpop.permute.xlu0 %5256
    %5258 = vrot.lane.b32.xlu0 %v4642, 16
    %v5259 = vpop.permute.xlu0 %5258
    %5260 = vrot.lane.b32.xlu0 %v4643, 16
    %v5261 = vpop.permute.xlu0 %5260
    %5262 = vrot.lane.b32.xlu0 %v4644, 16
    %v5263 = vpop.permute.xlu0 %5262
    %5264 = vrot.lane.b32.xlu0 %v4645, 16
    %v5265 = vpop.permute.xlu0 %5264
    %5266 = vrot.lane.b32.xlu0 %v4646, 16
    %v5267 = vpop.permute.xlu0 %5266
    %5268 = vrot.lane.b32.xlu0 %v4647, 16
    %v5269 = vpop.permute.xlu0 %5268
    %5270 = vrot.lane.b32.xlu0 %v4648, 16
    %v5271 = vpop.permute.xlu0 %5270
    %5272 = vrot.lane.b32.xlu0 %v4649, 16
    %v5273 = vpop.permute.xlu0 %5272
    %5274 = vrot.lane.b32.xlu0 %v4650, 16
    %v5275 = vpop.permute.xlu0 %5274
    %5276 = vrot.lane.b32.xlu0 %v4651, 16
    %v5277 = vpop.permute.xlu0 %5276
    %5278 = vrot.lane.b32.xlu0 %v4652, 16
    %v5279 = vpop.permute.xlu0 %5278
    %5280 = vrot.lane.b32.xlu0 %v4653, 16
    %v5281 = vpop.permute.xlu0 %5280
    %5282 = vrot.lane.b32.xlu0 %v4654, 16
    %v5283 = vpop.permute.xlu0 %5282
    %5284 = vrot.lane.b32.xlu0 %v4655, 16
    %v5285 = vpop.permute.xlu0 %5284
    %5286 = vrot.lane.b32.xlu0 %v4656, 16
    %v5287 = vpop.permute.xlu0 %5286
    %5288 = vrot.lane.b32.xlu0 %v4657, 16
    %v5289 = vpop.permute.xlu0 %5288
    %5290 = vrot.lane.b32.xlu0 %v4658, 16
    %v5291 = vpop.permute.xlu0 %5290
    %5292 = vrot.lane.b32.xlu0 %v4659, 16
    %v5293 = vpop.permute.xlu0 %5292
    %5294 = vrot.lane.b32.xlu0 %v4660, 16
    %v5295 = vpop.permute.xlu0 %5294
    %5296 = vrot.lane.b32.xlu0 %v4661, 16
    %v5297 = vpop.permute.xlu0 %5296
    %5298 = vrot.lane.b32.xlu0 %v4662, 16
    %v5299 = vpop.permute.xlu0 %5298
    %5300 = vrot.lane.b32.xlu0 %v4663, 16
    %v5301 = vpop.permute.xlu0 %5300
    %5302 = vrot.lane.b32.xlu0 %v4664, 16
    %v5303 = vpop.permute.xlu0 %5302
    %5304 = vrot.lane.b32.xlu0 %v4665, 16
    %v5305 = vpop.permute.xlu0 %5304
    %5434 = vrot.lane.b32.xlu0 %v4666, 32
    %v5435 = vpop.permute.xlu0 %5434
    %5436 = vrot.lane.b32.xlu0 %v4667, 32
    %v5437 = vpop.permute.xlu0 %5436
    %5438 = vrot.lane.b32.xlu0 %v4668, 32
    %v5439 = vpop.permute.xlu0 %5438
    %5440 = vrot.lane.b32.xlu0 %v4669, 32
    %v5441 = vpop.permute.xlu0 %5440
    %5442 = vrot.lane.b32.xlu0 %v4670, 32
    %v5443 = vpop.permute.xlu0 %5442
    %5444 = vrot.lane.b32.xlu0 %v4671, 32
    %v5445 = vpop.permute.xlu0 %5444
    %5446 = vrot.lane.b32.xlu0 %v4672, 32
    %v5447 = vpop.permute.xlu0 %5446
    %5448 = vrot.lane.b32.xlu0 %v4673, 32
    %v5449 = vpop.permute.xlu0 %5448
    %5450 = vrot.lane.b32.xlu0 %v4674, 32
    %v5451 = vpop.permute.xlu0 %5450
    %5452 = vrot.lane.b32.xlu0 %v4675, 32
    %v5453 = vpop.permute.xlu0 %5452
    %5454 = vrot.lane.b32.xlu0 %v4676, 32
    %v5455 = vpop.permute.xlu0 %5454
    %5456 = vrot.lane.b32.xlu0 %v4677, 32
    %v5457 = vpop.permute.xlu0 %5456
    %5458 = vrot.lane.b32.xlu0 %v4678, 32
    %v5459 = vpop.permute.xlu0 %5458
    %5460 = vrot.lane.b32.xlu0 %v4679, 32
    %v5461 = vpop.permute.xlu0 %5460
    %5462 = vrot.lane.b32.xlu0 %v4680, 32
    %v5463 = vpop.permute.xlu0 %5462
    %5464 = vrot.lane.b32.xlu0 %v4681, 32
    %v5465 = vpop.permute.xlu0 %5464
    %5466 = vrot.lane.b32.xlu0 %v4682, 32
    %v5467 = vpop.permute.xlu0 %5466
    %5468 = vrot.lane.b32.xlu0 %v4683, 32
    %v5469 = vpop.permute.xlu0 %5468
    %5470 = vrot.lane.b32.xlu0 %v4684, 32
    %v5471 = vpop.permute.xlu0 %5470
    %5472 = vrot.lane.b32.xlu0 %v4685, 32
    %v5473 = vpop.permute.xlu0 %5472
    %5474 = vrot.lane.b32.xlu0 %v4686, 32
    %v5475 = vpop.permute.xlu0 %5474
    %5476 = vrot.lane.b32.xlu0 %v4687, 32
    %v5477 = vpop.permute.xlu0 %5476
    %5478 = vrot.lane.b32.xlu0 %v4688, 32
    %v5479 = vpop.permute.xlu0 %5478
    %5480 = vrot.lane.b32.xlu0 %v4689, 32
    %v5481 = vpop.permute.xlu0 %5480
    %5482 = vrot.lane.b32.xlu0 %v4690, 32
    %v5483 = vpop.permute.xlu0 %5482
    %5484 = vrot.lane.b32.xlu0 %v4691, 32
    %v5485 = vpop.permute.xlu0 %5484
    %5486 = vrot.lane.b32.xlu0 %v4692, 32
    %v5487 = vpop.permute.xlu0 %5486
    %5488 = vrot.lane.b32.xlu0 %v4693, 32
    %v5489 = vpop.permute.xlu0 %5488
    %5490 = vrot.lane.b32.xlu0 %v4694, 32
    %v5491 = vpop.permute.xlu0 %5490
    %5492 = vrot.lane.b32.xlu0 %v4695, 32
    %v5493 = vpop.permute.xlu0 %5492
    %5494 = vrot.lane.b32.xlu0 %v4696, 32
    %v5495 = vpop.permute.xlu0 %5494
    %5496 = vrot.lane.b32.xlu0 %v4697, 32
    %v5497 = vpop.permute.xlu0 %5496
    %5498 = vrot.lane.b32.xlu0 %v4698, 32
    %v5499 = vpop.permute.xlu0 %5498
    %5500 = vrot.lane.b32.xlu0 %v4699, 32
    %v5501 = vpop.permute.xlu0 %5500
    %5502 = vrot.lane.b32.xlu0 %v4700, 32
    %v5503 = vpop.permute.xlu0 %5502
    %5504 = vrot.lane.b32.xlu0 %v4701, 32
    %v5505 = vpop.permute.xlu0 %5504
    %5506 = vrot.lane.b32.xlu0 %v4702, 32
    %v5507 = vpop.permute.xlu0 %5506
    %5508 = vrot.lane.b32.xlu0 %v4703, 32
    %v5509 = vpop.permute.xlu0 %5508
    %5510 = vrot.lane.b32.xlu0 %v4704, 32
    %v5511 = vpop.permute.xlu0 %5510
    %5512 = vrot.lane.b32.xlu0 %v4705, 32
    %v5513 = vpop.permute.xlu0 %5512
    %5514 = vrot.lane.b32.xlu0 %v4706, 32
    %v5515 = vpop.permute.xlu0 %5514
    %5516 = vrot.lane.b32.xlu0 %v4707, 32
    %v5517 = vpop.permute.xlu0 %5516
    %5518 = vrot.lane.b32.xlu0 %v4708, 32
    %v5519 = vpop.permute.xlu0 %5518
    %5520 = vrot.lane.b32.xlu0 %v4709, 32
    %v5521 = vpop.permute.xlu0 %5520
    %5522 = vrot.lane.b32.xlu0 %v4710, 32
    %v5523 = vpop.permute.xlu0 %5522
    %5524 = vrot.lane.b32.xlu0 %v4711, 32
    %v5525 = vpop.permute.xlu0 %5524
    %5526 = vrot.lane.b32.xlu0 %v4712, 32
    %v5527 = vpop.permute.xlu0 %5526
    %5528 = vrot.lane.b32.xlu0 %v4713, 32
    %v5529 = vpop.permute.xlu0 %5528
    %5530 = vrot.lane.b32.xlu0 %v4714, 32
    %v5531 = vpop.permute.xlu0 %5530
    %5532 = vrot.lane.b32.xlu0 %v4715, 32
    %v5533 = vpop.permute.xlu0 %5532
    %5534 = vrot.lane.b32.xlu0 %v4716, 32
    %v5535 = vpop.permute.xlu0 %5534
    %5536 = vrot.lane.b32.xlu0 %v4717, 32
    %v5537 = vpop.permute.xlu0 %5536
    %5538 = vrot.lane.b32.xlu0 %v4718, 32
    %v5539 = vpop.permute.xlu0 %5538
    %5540 = vrot.lane.b32.xlu0 %v4719, 32
    %v5541 = vpop.permute.xlu0 %5540
    %5542 = vrot.lane.b32.xlu0 %v4720, 32
    %v5543 = vpop.permute.xlu0 %5542
    %5544 = vrot.lane.b32.xlu0 %v4721, 32
    %v5545 = vpop.permute.xlu0 %5544
    %5546 = vrot.lane.b32.xlu0 %v4722, 32
    %v5547 = vpop.permute.xlu0 %5546
    %5548 = vrot.lane.b32.xlu0 %v4723, 32
    %v5549 = vpop.permute.xlu0 %5548
    %5550 = vrot.lane.b32.xlu0 %v4724, 32
    %v5551 = vpop.permute.xlu0 %5550
    %5552 = vrot.lane.b32.xlu0 %v4725, 32
    %v5553 = vpop.permute.xlu0 %5552
    %5554 = vrot.lane.b32.xlu0 %v4726, 32
    %v5555 = vpop.permute.xlu0 %5554
    %5556 = vrot.lane.b32.xlu0 %v4727, 32
    %v5557 = vpop.permute.xlu0 %5556
    %5558 = vrot.lane.b32.xlu0 %v4728, 32
    %v5559 = vpop.permute.xlu0 %5558
    %5560 = vrot.lane.b32.xlu0 %v4729, 32
    %v5561 = vpop.permute.xlu0 %5560
    %5690 = vrot.lane.b32.xlu0 %v4730, 48
    %v5691 = vpop.permute.xlu0 %5690
    %5692 = vrot.lane.b32.xlu0 %v4731, 48
    %v5693 = vpop.permute.xlu0 %5692
    %5694 = vrot.lane.b32.xlu0 %v4732, 48
    %v5695 = vpop.permute.xlu0 %5694
    %5696 = vrot.lane.b32.xlu0 %v4733, 48
    %v5697 = vpop.permute.xlu0 %5696
    %5698 = vrot.lane.b32.xlu0 %v4734, 48
    %v5699 = vpop.permute.xlu0 %5698
    %5700 = vrot.lane.b32.xlu0 %v4735, 48
    %v5701 = vpop.permute.xlu0 %5700
    %5702 = vrot.lane.b32.xlu0 %v4736, 48
    %v5703 = vpop.permute.xlu0 %5702
    %5704 = vrot.lane.b32.xlu0 %v4737, 48
    %v5705 = vpop.permute.xlu0 %5704
    %5706 = vrot.lane.b32.xlu0 %v4738, 48
    %v5707 = vpop.permute.xlu0 %5706
    %5708 = vrot.lane.b32.xlu0 %v4739, 48
    %v5709 = vpop.permute.xlu0 %5708
    %5710 = vrot.lane.b32.xlu0 %v4740, 48
    %v5711 = vpop.permute.xlu0 %5710
    %5712 = vrot.lane.b32.xlu0 %v4741, 48
    %v5713 = vpop.permute.xlu0 %5712
    %5714 = vrot.lane.b32.xlu0 %v4742, 48
    %v5715 = vpop.permute.xlu0 %5714
    %5716 = vrot.lane.b32.xlu0 %v4743, 48
    %v5717 = vpop.permute.xlu0 %5716
    %5718 = vrot.lane.b32.xlu0 %v4744, 48
    %v5719 = vpop.permute.xlu0 %5718
    %5720 = vrot.lane.b32.xlu0 %v4745, 48
    %v5721 = vpop.permute.xlu0 %5720
    %5722 = vrot.lane.b32.xlu0 %v4746, 48
    %v5723 = vpop.permute.xlu0 %5722
    %5724 = vrot.lane.b32.xlu0 %v4747, 48
    %v5725 = vpop.permute.xlu0 %5724
    %5726 = vrot.lane.b32.xlu0 %v4748, 48
    %v5727 = vpop.permute.xlu0 %5726
    %5728 = vrot.lane.b32.xlu0 %v4749, 48
    %v5729 = vpop.permute.xlu0 %5728
    %5730 = vrot.lane.b32.xlu0 %v4750, 48
    %v5731 = vpop.permute.xlu0 %5730
    %5732 = vrot.lane.b32.xlu0 %v4751, 48
    %v5733 = vpop.permute.xlu0 %5732
    %5734 = vrot.lane.b32.xlu0 %v4752, 48
    %v5735 = vpop.permute.xlu0 %5734
    %5736 = vrot.lane.b32.xlu0 %v4753, 48
    %v5737 = vpop.permute.xlu0 %5736
    %5738 = vrot.lane.b32.xlu0 %v4754, 48
    %v5739 = vpop.permute.xlu0 %5738
    %5740 = vrot.lane.b32.xlu0 %v4755, 48
    %v5741 = vpop.permute.xlu0 %5740
    %5742 = vrot.lane.b32.xlu0 %v4756, 48
    %v5743 = vpop.permute.xlu0 %5742
    %5744 = vrot.lane.b32.xlu0 %v4757, 48
    %v5745 = vpop.permute.xlu0 %5744
    %5746 = vrot.lane.b32.xlu0 %v4758, 48
    %v5747 = vpop.permute.xlu0 %5746
    %5748 = vrot.lane.b32.xlu0 %v4759, 48
    %v5749 = vpop.permute.xlu0 %5748
    %5750 = vrot.lane.b32.xlu0 %v4760, 48
    %v5751 = vpop.permute.xlu0 %5750
    %5752 = vrot.lane.b32.xlu0 %v4761, 48
    %v5753 = vpop.permute.xlu0 %5752
    %5754 = vrot.lane.b32.xlu0 %v4762, 48
    %v5755 = vpop.permute.xlu0 %5754
    %5756 = vrot.lane.b32.xlu0 %v4763, 48
    %v5757 = vpop.permute.xlu0 %5756
    %5758 = vrot.lane.b32.xlu0 %v4764, 48
    %v5759 = vpop.permute.xlu0 %5758
    %5760 = vrot.lane.b32.xlu0 %v4765, 48
    %v5761 = vpop.permute.xlu0 %5760
    %5762 = vrot.lane.b32.xlu0 %v4766, 48
    %v5763 = vpop.permute.xlu0 %5762
    %5764 = vrot.lane.b32.xlu0 %v4767, 48
    %v5765 = vpop.permute.xlu0 %5764
    %5766 = vrot.lane.b32.xlu0 %v4768, 48
    %v5767 = vpop.permute.xlu0 %5766
    %5768 = vrot.lane.b32.xlu0 %v4769, 48
    %v5769 = vpop.permute.xlu0 %5768
    %5770 = vrot.lane.b32.xlu0 %v4770, 48
    %v5771 = vpop.permute.xlu0 %5770
    %5772 = vrot.lane.b32.xlu0 %v4771, 48
    %v5773 = vpop.permute.xlu0 %5772
    %5774 = vrot.lane.b32.xlu0 %v4772, 48
    %v5775 = vpop.permute.xlu0 %5774
    %5776 = vrot.lane.b32.xlu0 %v4773, 48
    %v5777 = vpop.permute.xlu0 %5776
    %5778 = vrot.lane.b32.xlu0 %v4774, 48
    %v5779 = vpop.permute.xlu0 %5778
    %5780 = vrot.lane.b32.xlu0 %v4775, 48
    %v5781 = vpop.permute.xlu0 %5780
    %5782 = vrot.lane.b32.xlu0 %v4776, 48
    %v5783 = vpop.permute.xlu0 %5782
    %5784 = vrot.lane.b32.xlu0 %v4777, 48
    %v5785 = vpop.permute.xlu0 %5784
    %5786 = vrot.lane.b32.xlu0 %v4778, 48
    %v5787 = vpop.permute.xlu0 %5786
    %5788 = vrot.lane.b32.xlu0 %v4779, 48
    %v5789 = vpop.permute.xlu0 %5788
    %5790 = vrot.lane.b32.xlu0 %v4780, 48
    %v5791 = vpop.permute.xlu0 %5790
    %5792 = vrot.lane.b32.xlu0 %v4781, 48
    %v5793 = vpop.permute.xlu0 %5792
    %5794 = vrot.lane.b32.xlu0 %v4782, 48
    %v5795 = vpop.permute.xlu0 %5794
    %5796 = vrot.lane.b32.xlu0 %v4783, 48
    %v5797 = vpop.permute.xlu0 %5796
    %5798 = vrot.lane.b32.xlu0 %v4784, 48
    %v5799 = vpop.permute.xlu0 %5798
    %5800 = vrot.lane.b32.xlu0 %v4785, 48
    %v5801 = vpop.permute.xlu0 %5800
    %5802 = vrot.lane.b32.xlu0 %v4786, 48
    %v5803 = vpop.permute.xlu0 %5802
    %5804 = vrot.lane.b32.xlu0 %v4787, 48
    %v5805 = vpop.permute.xlu0 %5804
    %5806 = vrot.lane.b32.xlu0 %v4788, 48
    %v5807 = vpop.permute.xlu0 %5806
    %5808 = vrot.lane.b32.xlu0 %v4789, 48
    %v5809 = vpop.permute.xlu0 %5808
    %5810 = vrot.lane.b32.xlu0 %v4790, 48
    %v5811 = vpop.permute.xlu0 %5810
    %5812 = vrot.lane.b32.xlu0 %v4791, 48
    %v5813 = vpop.permute.xlu0 %5812
    %5814 = vrot.lane.b32.xlu0 %v4792, 48
    %v5815 = vpop.permute.xlu0 %5814
    %5816 = vrot.lane.b32.xlu0 %v4793, 48
    %v5817 = vpop.permute.xlu0 %5816
    %5946 = vrot.lane.b32.xlu0 %v4794, 64
    %v5947 = vpop.permute.xlu0 %5946
    %5948 = vrot.lane.b32.xlu0 %v4795, 64
    %v5949 = vpop.permute.xlu0 %5948
    %5950 = vrot.lane.b32.xlu0 %v4796, 64
    %v5951 = vpop.permute.xlu0 %5950
    %5952 = vrot.lane.b32.xlu0 %v4797, 64
    %v5953 = vpop.permute.xlu0 %5952
    %5954 = vrot.lane.b32.xlu0 %v4798, 64
    %v5955 = vpop.permute.xlu0 %5954
    %5956 = vrot.lane.b32.xlu0 %v4799, 64
    %v5957 = vpop.permute.xlu0 %5956
    %5958 = vrot.lane.b32.xlu0 %v4800, 64
    %v5959 = vpop.permute.xlu0 %5958
    %5960 = vrot.lane.b32.xlu0 %v4801, 64
    %v5961 = vpop.permute.xlu0 %5960
    %5962 = vrot.lane.b32.xlu0 %v4802, 64
    %v5963 = vpop.permute.xlu0 %5962
    %5964 = vrot.lane.b32.xlu0 %v4803, 64
    %v5965 = vpop.permute.xlu0 %5964
    %5966 = vrot.lane.b32.xlu0 %v4804, 64
    %v5967 = vpop.permute.xlu0 %5966
    %5968 = vrot.lane.b32.xlu0 %v4805, 64
    %v5969 = vpop.permute.xlu0 %5968
    %5970 = vrot.lane.b32.xlu0 %v4806, 64
    %v5971 = vpop.permute.xlu0 %5970
    %5972 = vrot.lane.b32.xlu0 %v4807, 64
    %v5973 = vpop.permute.xlu0 %5972
    %5974 = vrot.lane.b32.xlu0 %v4808, 64
    %v5975 = vpop.permute.xlu0 %5974
    %5976 = vrot.lane.b32.xlu0 %v4809, 64
    %v5977 = vpop.permute.xlu0 %5976
    %5978 = vrot.lane.b32.xlu0 %v4810, 64
    %v5979 = vpop.permute.xlu0 %5978
    %5980 = vrot.lane.b32.xlu0 %v4811, 64
    %v5981 = vpop.permute.xlu0 %5980
    %5982 = vrot.lane.b32.xlu0 %v4812, 64
    %v5983 = vpop.permute.xlu0 %5982
    %5984 = vrot.lane.b32.xlu0 %v4813, 64
    %v5985 = vpop.permute.xlu0 %5984
    %5986 = vrot.lane.b32.xlu0 %v4814, 64
    %v5987 = vpop.permute.xlu0 %5986
    %5988 = vrot.lane.b32.xlu0 %v4815, 64
    %v5989 = vpop.permute.xlu0 %5988
    %5990 = vrot.lane.b32.xlu0 %v4816, 64
    %v5991 = vpop.permute.xlu0 %5990
    %5992 = vrot.lane.b32.xlu0 %v4817, 64
    %v5993 = vpop.permute.xlu0 %5992
    %5994 = vrot.lane.b32.xlu0 %v4818, 64
    %v5995 = vpop.permute.xlu0 %5994
    %5996 = vrot.lane.b32.xlu0 %v4819, 64
    %v5997 = vpop.permute.xlu0 %5996
    %5998 = vrot.lane.b32.xlu0 %v4820, 64
    %v5999 = vpop.permute.xlu0 %5998
    %6000 = vrot.lane.b32.xlu0 %v4821, 64
    %v6001 = vpop.permute.xlu0 %6000
    %6002 = vrot.lane.b32.xlu0 %v4822, 64
    %v6003 = vpop.permute.xlu0 %6002
    %6004 = vrot.lane.b32.xlu0 %v4823, 64
    %v6005 = vpop.permute.xlu0 %6004
    %6006 = vrot.lane.b32.xlu0 %v4824, 64
    %v6007 = vpop.permute.xlu0 %6006
    %6008 = vrot.lane.b32.xlu0 %v4825, 64
    %v6009 = vpop.permute.xlu0 %6008
    %6010 = vrot.lane.b32.xlu0 %v4826, 64
    %v6011 = vpop.permute.xlu0 %6010
    %6012 = vrot.lane.b32.xlu0 %v4827, 64
    %v6013 = vpop.permute.xlu0 %6012
    %6014 = vrot.lane.b32.xlu0 %v4828, 64
    %v6015 = vpop.permute.xlu0 %6014
    %6016 = vrot.lane.b32.xlu0 %v4829, 64
    %v6017 = vpop.permute.xlu0 %6016
    %6018 = vrot.lane.b32.xlu0 %v4830, 64
    %v6019 = vpop.permute.xlu0 %6018
    %6020 = vrot.lane.b32.xlu0 %v4831, 64
    %v6021 = vpop.permute.xlu0 %6020
    %6022 = vrot.lane.b32.xlu0 %v4832, 64
    %v6023 = vpop.permute.xlu0 %6022
    %6024 = vrot.lane.b32.xlu0 %v4833, 64
    %v6025 = vpop.permute.xlu0 %6024
    %6026 = vrot.lane.b32.xlu0 %v4834, 64
    %v6027 = vpop.permute.xlu0 %6026
    %6028 = vrot.lane.b32.xlu0 %v4835, 64
    %v6029 = vpop.permute.xlu0 %6028
    %6030 = vrot.lane.b32.xlu0 %v4836, 64
    %v6031 = vpop.permute.xlu0 %6030
    %6032 = vrot.lane.b32.xlu0 %v4837, 64
    %v6033 = vpop.permute.xlu0 %6032
    %6034 = vrot.lane.b32.xlu0 %v4838, 64
    %v6035 = vpop.permute.xlu0 %6034
    %6036 = vrot.lane.b32.xlu0 %v4839, 64
    %v6037 = vpop.permute.xlu0 %6036
    %6038 = vrot.lane.b32.xlu0 %v4840, 64
    %v6039 = vpop.permute.xlu0 %6038
    %6040 = vrot.lane.b32.xlu0 %v4841, 64
    %v6041 = vpop.permute.xlu0 %6040
    %6042 = vrot.lane.b32.xlu0 %v4842, 64
    %v6043 = vpop.permute.xlu0 %6042
    %6044 = vrot.lane.b32.xlu0 %v4843, 64
    %v6045 = vpop.permute.xlu0 %6044
    %6046 = vrot.lane.b32.xlu0 %v4844, 64
    %v6047 = vpop.permute.xlu0 %6046
    %6048 = vrot.lane.b32.xlu0 %v4845, 64
    %v6049 = vpop.permute.xlu0 %6048
    %6050 = vrot.lane.b32.xlu0 %v4846, 64
    %v6051 = vpop.permute.xlu0 %6050
    %6052 = vrot.lane.b32.xlu0 %v4847, 64
    %v6053 = vpop.permute.xlu0 %6052
    %6054 = vrot.lane.b32.xlu0 %v4848, 64
    %v6055 = vpop.permute.xlu0 %6054
    %6056 = vrot.lane.b32.xlu0 %v4849, 64
    %v6057 = vpop.permute.xlu0 %6056
    %6058 = vrot.lane.b32.xlu0 %v4850, 64
    %v6059 = vpop.permute.xlu0 %6058
    %6060 = vrot.lane.b32.xlu0 %v4851, 64
    %v6061 = vpop.permute.xlu0 %6060
    %6062 = vrot.lane.b32.xlu0 %v4852, 64
    %v6063 = vpop.permute.xlu0 %6062
    %6064 = vrot.lane.b32.xlu0 %v4853, 64
    %v6065 = vpop.permute.xlu0 %6064
    %6066 = vrot.lane.b32.xlu0 %v4854, 64
    %v6067 = vpop.permute.xlu0 %6066
    %6068 = vrot.lane.b32.xlu0 %v4855, 64
    %v6069 = vpop.permute.xlu0 %6068
    %6070 = vrot.lane.b32.xlu0 %v4856, 64
    %v6071 = vpop.permute.xlu0 %6070
    %6072 = vrot.lane.b32.xlu0 %v4857, 64
    %v6073 = vpop.permute.xlu0 %6072
    %6202 = vrot.lane.b32.xlu0 %v4858, 80
    %v6203 = vpop.permute.xlu0 %6202
    %6204 = vrot.lane.b32.xlu0 %v4859, 80
    %v6205 = vpop.permute.xlu0 %6204
    %6206 = vrot.lane.b32.xlu0 %v4860, 80
    %v6207 = vpop.permute.xlu0 %6206
    %6208 = vrot.lane.b32.xlu0 %v4861, 80
    %v6209 = vpop.permute.xlu0 %6208
    %6210 = vrot.lane.b32.xlu0 %v4862, 80
    %v6211 = vpop.permute.xlu0 %6210
    %6212 = vrot.lane.b32.xlu0 %v4863, 80
    %v6213 = vpop.permute.xlu0 %6212
    %6214 = vrot.lane.b32.xlu0 %v4864, 80
    %v6215 = vpop.permute.xlu0 %6214
    %6216 = vrot.lane.b32.xlu0 %v4865, 80
    %v6217 = vpop.permute.xlu0 %6216
    %6218 = vrot.lane.b32.xlu0 %v4866, 80
    %v6219 = vpop.permute.xlu0 %6218
    %6220 = vrot.lane.b32.xlu0 %v4867, 80
    %v6221 = vpop.permute.xlu0 %6220
    %6222 = vrot.lane.b32.xlu0 %v4868, 80
    %v6223 = vpop.permute.xlu0 %6222
    %6224 = vrot.lane.b32.xlu0 %v4869, 80
    %v6225 = vpop.permute.xlu0 %6224
    %6226 = vrot.lane.b32.xlu0 %v4870, 80
    %v6227 = vpop.permute.xlu0 %6226
    %6228 = vrot.lane.b32.xlu0 %v4871, 80
    %v6229 = vpop.permute.xlu0 %6228
    %6230 = vrot.lane.b32.xlu0 %v4872, 80
    %v6231 = vpop.permute.xlu0 %6230
    %6232 = vrot.lane.b32.xlu0 %v4873, 80
    %v6233 = vpop.permute.xlu0 %6232
    %6234 = vrot.lane.b32.xlu0 %v4874, 80
    %v6235 = vpop.permute.xlu0 %6234
    %6236 = vrot.lane.b32.xlu0 %v4875, 80
    %v6237 = vpop.permute.xlu0 %6236
    %6238 = vrot.lane.b32.xlu0 %v4876, 80
    %v6239 = vpop.permute.xlu0 %6238
    %6240 = vrot.lane.b32.xlu0 %v4877, 80
    %v6241 = vpop.permute.xlu0 %6240
    %6242 = vrot.lane.b32.xlu0 %v4878, 80
    %v6243 = vpop.permute.xlu0 %6242
    %6244 = vrot.lane.b32.xlu0 %v4879, 80
    %v6245 = vpop.permute.xlu0 %6244
    %6246 = vrot.lane.b32.xlu0 %v4880, 80
    %v6247 = vpop.permute.xlu0 %6246
    %6248 = vrot.lane.b32.xlu0 %v4881, 80
    %v6249 = vpop.permute.xlu0 %6248
    %6250 = vrot.lane.b32.xlu0 %v4882, 80
    %v6251 = vpop.permute.xlu0 %6250
    %6252 = vrot.lane.b32.xlu0 %v4883, 80
    %v6253 = vpop.permute.xlu0 %6252
    %6254 = vrot.lane.b32.xlu0 %v4884, 80
    %v6255 = vpop.permute.xlu0 %6254
    %6256 = vrot.lane.b32.xlu0 %v4885, 80
    %v6257 = vpop.permute.xlu0 %6256
    %6258 = vrot.lane.b32.xlu0 %v4886, 80
    %v6259 = vpop.permute.xlu0 %6258
    %6260 = vrot.lane.b32.xlu0 %v4887, 80
    %v6261 = vpop.permute.xlu0 %6260
    %6262 = vrot.lane.b32.xlu0 %v4888, 80
    %v6263 = vpop.permute.xlu0 %6262
    %6264 = vrot.lane.b32.xlu0 %v4889, 80
    %v6265 = vpop.permute.xlu0 %6264
    %6266 = vrot.lane.b32.xlu0 %v4890, 80
    %v6267 = vpop.permute.xlu0 %6266
    %6268 = vrot.lane.b32.xlu0 %v4891, 80
    %v6269 = vpop.permute.xlu0 %6268
    %6270 = vrot.lane.b32.xlu0 %v4892, 80
    %v6271 = vpop.permute.xlu0 %6270
    %6272 = vrot.lane.b32.xlu0 %v4893, 80
    %v6273 = vpop.permute.xlu0 %6272
    %6274 = vrot.lane.b32.xlu0 %v4894, 80
    %v6275 = vpop.permute.xlu0 %6274
    %6276 = vrot.lane.b32.xlu0 %v4895, 80
    %v6277 = vpop.permute.xlu0 %6276
    %6278 = vrot.lane.b32.xlu0 %v4896, 80
    %v6279 = vpop.permute.xlu0 %6278
    %6280 = vrot.lane.b32.xlu0 %v4897, 80
    %v6281 = vpop.permute.xlu0 %6280
    %6282 = vrot.lane.b32.xlu0 %v4898, 80
    %v6283 = vpop.permute.xlu0 %6282
    %6284 = vrot.lane.b32.xlu0 %v4899, 80
    %v6285 = vpop.permute.xlu0 %6284
    %6286 = vrot.lane.b32.xlu0 %v4900, 80
    %v6287 = vpop.permute.xlu0 %6286
    %6288 = vrot.lane.b32.xlu0 %v4901, 80
    %v6289 = vpop.permute.xlu0 %6288
    %6290 = vrot.lane.b32.xlu0 %v4902, 80
    %v6291 = vpop.permute.xlu0 %6290
    %6292 = vrot.lane.b32.xlu0 %v4903, 80
    %v6293 = vpop.permute.xlu0 %6292
    %6294 = vrot.lane.b32.xlu0 %v4904, 80
    %v6295 = vpop.permute.xlu0 %6294
    %6296 = vrot.lane.b32.xlu0 %v4905, 80
    %v6297 = vpop.permute.xlu0 %6296
    %6298 = vrot.lane.b32.xlu0 %v4906, 80
    %v6299 = vpop.permute.xlu0 %6298
    %6300 = vrot.lane.b32.xlu0 %v4907, 80
    %v6301 = vpop.permute.xlu0 %6300
    %6302 = vrot.lane.b32.xlu0 %v4908, 80
    %v6303 = vpop.permute.xlu0 %6302
    %6304 = vrot.lane.b32.xlu0 %v4909, 80
    %v6305 = vpop.permute.xlu0 %6304
    %6306 = vrot.lane.b32.xlu0 %v4910, 80
    %v6307 = vpop.permute.xlu0 %6306
    %6308 = vrot.lane.b32.xlu0 %v4911, 80
    %v6309 = vpop.permute.xlu0 %6308
    %6310 = vrot.lane.b32.xlu0 %v4912, 80
    %v6311 = vpop.permute.xlu0 %6310
    %6312 = vrot.lane.b32.xlu0 %v4913, 80
    %v6313 = vpop.permute.xlu0 %6312
    %6314 = vrot.lane.b32.xlu0 %v4914, 80
    %v6315 = vpop.permute.xlu0 %6314
    %6316 = vrot.lane.b32.xlu0 %v4915, 80
    %v6317 = vpop.permute.xlu0 %6316
    %6318 = vrot.lane.b32.xlu0 %v4916, 80
    %v6319 = vpop.permute.xlu0 %6318
    %6320 = vrot.lane.b32.xlu0 %v4917, 80
    %v6321 = vpop.permute.xlu0 %6320
    %6322 = vrot.lane.b32.xlu0 %v4918, 80
    %v6323 = vpop.permute.xlu0 %6322
    %6324 = vrot.lane.b32.xlu0 %v4919, 80
    %v6325 = vpop.permute.xlu0 %6324
    %6326 = vrot.lane.b32.xlu0 %v4920, 80
    %v6327 = vpop.permute.xlu0 %6326
    %6328 = vrot.lane.b32.xlu0 %v4921, 80
    %v6329 = vpop.permute.xlu0 %6328
    %6458 = vrot.lane.b32.xlu0 %v4922, 96
    %v6459 = vpop.permute.xlu0 %6458
    %6460 = vrot.lane.b32.xlu0 %v4923, 96
    %v6461 = vpop.permute.xlu0 %6460
    %6462 = vrot.lane.b32.xlu0 %v4924, 96
    %v6463 = vpop.permute.xlu0 %6462
    %6464 = vrot.lane.b32.xlu0 %v4925, 96
    %v6465 = vpop.permute.xlu0 %6464
    %6466 = vrot.lane.b32.xlu0 %v4926, 96
    %v6467 = vpop.permute.xlu0 %6466
    %6468 = vrot.lane.b32.xlu0 %v4927, 96
    %v6469 = vpop.permute.xlu0 %6468
    %6470 = vrot.lane.b32.xlu0 %v4928, 96
    %v6471 = vpop.permute.xlu0 %6470
    %6472 = vrot.lane.b32.xlu0 %v4929, 96
    %v6473 = vpop.permute.xlu0 %6472
    %6474 = vrot.lane.b32.xlu0 %v4930, 96
    %v6475 = vpop.permute.xlu0 %6474
    %6476 = vrot.lane.b32.xlu0 %v4931, 96
    %v6477 = vpop.permute.xlu0 %6476
    %6478 = vrot.lane.b32.xlu0 %v4932, 96
    %v6479 = vpop.permute.xlu0 %6478
    %6480 = vrot.lane.b32.xlu0 %v4933, 96
    %v6481 = vpop.permute.xlu0 %6480
    %6482 = vrot.lane.b32.xlu0 %v4934, 96
    %v6483 = vpop.permute.xlu0 %6482
    %6484 = vrot.lane.b32.xlu0 %v4935, 96
    %v6485 = vpop.permute.xlu0 %6484
    %6486 = vrot.lane.b32.xlu0 %v4936, 96
    %v6487 = vpop.permute.xlu0 %6486
    %6488 = vrot.lane.b32.xlu0 %v4937, 96
    %v6489 = vpop.permute.xlu0 %6488
    %6490 = vrot.lane.b32.xlu0 %v4938, 96
    %v6491 = vpop.permute.xlu0 %6490
    %6492 = vrot.lane.b32.xlu0 %v4939, 96
    %v6493 = vpop.permute.xlu0 %6492
    %6494 = vrot.lane.b32.xlu0 %v4940, 96
    %v6495 = vpop.permute.xlu0 %6494
    %6496 = vrot.lane.b32.xlu0 %v4941, 96
    %v6497 = vpop.permute.xlu0 %6496
    %6498 = vrot.lane.b32.xlu0 %v4942, 96
    %v6499 = vpop.permute.xlu0 %6498
    %6500 = vrot.lane.b32.xlu0 %v4943, 96
    %v6501 = vpop.permute.xlu0 %6500
    %6502 = vrot.lane.b32.xlu0 %v4944, 96
    %v6503 = vpop.permute.xlu0 %6502
    %6504 = vrot.lane.b32.xlu0 %v4945, 96
    %v6505 = vpop.permute.xlu0 %6504
    %6506 = vrot.lane.b32.xlu0 %v4946, 96
    %v6507 = vpop.permute.xlu0 %6506
    %6508 = vrot.lane.b32.xlu0 %v4947, 96
    %v6509 = vpop.permute.xlu0 %6508
    %6510 = vrot.lane.b32.xlu0 %v4948, 96
    %v6511 = vpop.permute.xlu0 %6510
    %6512 = vrot.lane.b32.xlu0 %v4949, 96
    %v6513 = vpop.permute.xlu0 %6512
    %6514 = vrot.lane.b32.xlu0 %v4950, 96
    %v6515 = vpop.permute.xlu0 %6514
    %6516 = vrot.lane.b32.xlu0 %v4951, 96
    %v6517 = vpop.permute.xlu0 %6516
    %6518 = vrot.lane.b32.xlu0 %v4952, 96
    %v6519 = vpop.permute.xlu0 %6518
    %6520 = vrot.lane.b32.xlu0 %v4953, 96
    %v6521 = vpop.permute.xlu0 %6520
    %6522 = vrot.lane.b32.xlu0 %v4954, 96
    %v6523 = vpop.permute.xlu0 %6522
    %6524 = vrot.lane.b32.xlu0 %v4955, 96
    %v6525 = vpop.permute.xlu0 %6524
    %6526 = vrot.lane.b32.xlu0 %v4956, 96
    %v6527 = vpop.permute.xlu0 %6526
    %6528 = vrot.lane.b32.xlu0 %v4957, 96
    %v6529 = vpop.permute.xlu0 %6528
    %6530 = vrot.lane.b32.xlu0 %v4958, 96
    %v6531 = vpop.permute.xlu0 %6530
    %6532 = vrot.lane.b32.xlu0 %v4959, 96
    %v6533 = vpop.permute.xlu0 %6532
    %6534 = vrot.lane.b32.xlu0 %v4960, 96
    %v6535 = vpop.permute.xlu0 %6534
    %6536 = vrot.lane.b32.xlu0 %v4961, 96
    %v6537 = vpop.permute.xlu0 %6536
    %6538 = vrot.lane.b32.xlu0 %v4962, 96
    %v6539 = vpop.permute.xlu0 %6538
    %6540 = vrot.lane.b32.xlu0 %v4963, 96
    %v6541 = vpop.permute.xlu0 %6540
    %6542 = vrot.lane.b32.xlu0 %v4964, 96
    %v6543 = vpop.permute.xlu0 %6542
    %6544 = vrot.lane.b32.xlu0 %v4965, 96
    %v6545 = vpop.permute.xlu0 %6544
    %6546 = vrot.lane.b32.xlu0 %v4966, 96
    %v6547 = vpop.permute.xlu0 %6546
    %6548 = vrot.lane.b32.xlu0 %v4967, 96
    %v6549 = vpop.permute.xlu0 %6548
    %6550 = vrot.lane.b32.xlu0 %v4968, 96
    %v6551 = vpop.permute.xlu0 %6550
    %6552 = vrot.lane.b32.xlu0 %v4969, 96
    %v6553 = vpop.permute.xlu0 %6552
    %6554 = vrot.lane.b32.xlu0 %v4970, 96
    %v6555 = vpop.permute.xlu0 %6554
    %6556 = vrot.lane.b32.xlu0 %v4971, 96
    %v6557 = vpop.permute.xlu0 %6556
    %6558 = vrot.lane.b32.xlu0 %v4972, 96
    %v6559 = vpop.permute.xlu0 %6558
    %6560 = vrot.lane.b32.xlu0 %v4973, 96
    %v6561 = vpop.permute.xlu0 %6560
    %6562 = vrot.lane.b32.xlu0 %v4974, 96
    %v6563 = vpop.permute.xlu0 %6562
    %6564 = vrot.lane.b32.xlu0 %v4975, 96
    %v6565 = vpop.permute.xlu0 %6564
    %6566 = vrot.lane.b32.xlu0 %v4976, 96
    %v6567 = vpop.permute.xlu0 %6566
    %6568 = vrot.lane.b32.xlu0 %v4977, 96
    %v6569 = vpop.permute.xlu0 %6568
    %6570 = vrot.lane.b32.xlu0 %v4978, 96
    %v6571 = vpop.permute.xlu0 %6570
    %6572 = vrot.lane.b32.xlu0 %v4979, 96
    %v6573 = vpop.permute.xlu0 %6572
    %6574 = vrot.lane.b32.xlu0 %v4980, 96
    %v6575 = vpop.permute.xlu0 %6574
    %6576 = vrot.lane.b32.xlu0 %v4981, 96
    %v6577 = vpop.permute.xlu0 %6576
    %6578 = vrot.lane.b32.xlu0 %v4982, 96
    %v6579 = vpop.permute.xlu0 %6578
    %6580 = vrot.lane.b32.xlu0 %v4983, 96
    %v6581 = vpop.permute.xlu0 %6580
    %6582 = vrot.lane.b32.xlu0 %v4984, 96
    %v6583 = vpop.permute.xlu0 %6582
    %6584 = vrot.lane.b32.xlu0 %v4985, 96
    %v6585 = vpop.permute.xlu0 %6584
    %6714 = vrot.lane.b32.xlu0 %v4986, 112
    %v6715 = vpop.permute.xlu0 %6714
    %6716 = vrot.lane.b32.xlu0 %v4987, 112
    %v6717 = vpop.permute.xlu0 %6716
    %6718 = vrot.lane.b32.xlu0 %v4988, 112
    %v6719 = vpop.permute.xlu0 %6718
    %6720 = vrot.lane.b32.xlu0 %v4989, 112
    %v6721 = vpop.permute.xlu0 %6720
    %6722 = vrot.lane.b32.xlu0 %v4990, 112
    %v6723 = vpop.permute.xlu0 %6722
    %6724 = vrot.lane.b32.xlu0 %v4991, 112
    %v6725 = vpop.permute.xlu0 %6724
    %6726 = vrot.lane.b32.xlu0 %v4992, 112
    %v6727 = vpop.permute.xlu0 %6726
    %6728 = vrot.lane.b32.xlu0 %v4993, 112
    %v6729 = vpop.permute.xlu0 %6728
    %6730 = vrot.lane.b32.xlu0 %v4994, 112
    %v6731 = vpop.permute.xlu0 %6730
    %6732 = vrot.lane.b32.xlu0 %v4995, 112
    %v6733 = vpop.permute.xlu0 %6732
    %6734 = vrot.lane.b32.xlu0 %v4996, 112
    %v6735 = vpop.permute.xlu0 %6734
    %6736 = vrot.lane.b32.xlu0 %v4997, 112
    %v6737 = vpop.permute.xlu0 %6736
    %6738 = vrot.lane.b32.xlu0 %v4998, 112
    %v6739 = vpop.permute.xlu0 %6738
    %6740 = vrot.lane.b32.xlu0 %v4999, 112
    %v6741 = vpop.permute.xlu0 %6740
    %6742 = vrot.lane.b32.xlu0 %v5000, 112
    %v6743 = vpop.permute.xlu0 %6742
    %6744 = vrot.lane.b32.xlu0 %v5001, 112
    %v6745 = vpop.permute.xlu0 %6744
    %6746 = vrot.lane.b32.xlu0 %v5002, 112
    %v6747 = vpop.permute.xlu0 %6746
    %6748 = vrot.lane.b32.xlu0 %v5003, 112
    %v6749 = vpop.permute.xlu0 %6748
    %6750 = vrot.lane.b32.xlu0 %v5004, 112
    %v6751 = vpop.permute.xlu0 %6750
    %6752 = vrot.lane.b32.xlu0 %v5005, 112
    %v6753 = vpop.permute.xlu0 %6752
    %6754 = vrot.lane.b32.xlu0 %v5006, 112
    %v6755 = vpop.permute.xlu0 %6754
    %6756 = vrot.lane.b32.xlu0 %v5007, 112
    %v6757 = vpop.permute.xlu0 %6756
    %6758 = vrot.lane.b32.xlu0 %v5008, 112
    %v6759 = vpop.permute.xlu0 %6758
    %6760 = vrot.lane.b32.xlu0 %v5009, 112
    %v6761 = vpop.permute.xlu0 %6760
    %6762 = vrot.lane.b32.xlu0 %v5010, 112
    %v6763 = vpop.permute.xlu0 %6762
    %6764 = vrot.lane.b32.xlu0 %v5011, 112
    %v6765 = vpop.permute.xlu0 %6764
    %6766 = vrot.lane.b32.xlu0 %v5012, 112
    %v6767 = vpop.permute.xlu0 %6766
    %6768 = vrot.lane.b32.xlu0 %v5013, 112
    %v6769 = vpop.permute.xlu0 %6768
    %6770 = vrot.lane.b32.xlu0 %v5014, 112
    %v6771 = vpop.permute.xlu0 %6770
    %6772 = vrot.lane.b32.xlu0 %v5015, 112
    %v6773 = vpop.permute.xlu0 %6772
    %6774 = vrot.lane.b32.xlu0 %v5016, 112
    %v6775 = vpop.permute.xlu0 %6774
    %6776 = vrot.lane.b32.xlu0 %v5017, 112
    %v6777 = vpop.permute.xlu0 %6776
    %6778 = vrot.lane.b32.xlu0 %v5018, 112
    %v6779 = vpop.permute.xlu0 %6778
    %6780 = vrot.lane.b32.xlu0 %v5019, 112
    %v6781 = vpop.permute.xlu0 %6780
    %6782 = vrot.lane.b32.xlu0 %v5020, 112
    %v6783 = vpop.permute.xlu0 %6782
    %6784 = vrot.lane.b32.xlu0 %v5021, 112
    %v6785 = vpop.permute.xlu0 %6784
    %6786 = vrot.lane.b32.xlu0 %v5022, 112
    %v6787 = vpop.permute.xlu0 %6786
    %6788 = vrot.lane.b32.xlu0 %v5023, 112
    %v6789 = vpop.permute.xlu0 %6788
    %6790 = vrot.lane.b32.xlu0 %v5024, 112
    %v6791 = vpop.permute.xlu0 %6790
    %6792 = vrot.lane.b32.xlu0 %v5025, 112
    %v6793 = vpop.permute.xlu0 %6792
    %6794 = vrot.lane.b32.xlu0 %v5026, 112
    %v6795 = vpop.permute.xlu0 %6794
    %6796 = vrot.lane.b32.xlu0 %v5027, 112
    %v6797 = vpop.permute.xlu0 %6796
    %6798 = vrot.lane.b32.xlu0 %v5028, 112
    %v6799 = vpop.permute.xlu0 %6798
    %6800 = vrot.lane.b32.xlu0 %v5029, 112
    %v6801 = vpop.permute.xlu0 %6800
    %6802 = vrot.lane.b32.xlu0 %v5030, 112
    %v6803 = vpop.permute.xlu0 %6802
    %6804 = vrot.lane.b32.xlu0 %v5031, 112
    %v6805 = vpop.permute.xlu0 %6804
    %6806 = vrot.lane.b32.xlu0 %v5032, 112
    %v6807 = vpop.permute.xlu0 %6806
    %6808 = vrot.lane.b32.xlu0 %v5033, 112
    %v6809 = vpop.permute.xlu0 %6808
    %6810 = vrot.lane.b32.xlu0 %v5034, 112
    %v6811 = vpop.permute.xlu0 %6810
    %6812 = vrot.lane.b32.xlu0 %v5035, 112
    %v6813 = vpop.permute.xlu0 %6812
    %6814 = vrot.lane.b32.xlu0 %v5036, 112
    %v6815 = vpop.permute.xlu0 %6814
    %6816 = vrot.lane.b32.xlu0 %v5037, 112
    %v6817 = vpop.permute.xlu0 %6816
    %6818 = vrot.lane.b32.xlu0 %v5038, 112
    %v6819 = vpop.permute.xlu0 %6818
    %6820 = vrot.lane.b32.xlu0 %v5039, 112
    %v6821 = vpop.permute.xlu0 %6820
    %6822 = vrot.lane.b32.xlu0 %v5040, 112
    %v6823 = vpop.permute.xlu0 %6822
    %6824 = vrot.lane.b32.xlu0 %v5041, 112
    %v6825 = vpop.permute.xlu0 %6824
    %6826 = vrot.lane.b32.xlu0 %v5042, 112
    %v6827 = vpop.permute.xlu0 %6826
    %6828 = vrot.lane.b32.xlu0 %v5043, 112
    %v6829 = vpop.permute.xlu0 %6828
    %6830 = vrot.lane.b32.xlu0 %v5044, 112
    %v6831 = vpop.permute.xlu0 %6830
    %6832 = vrot.lane.b32.xlu0 %v5045, 112
    %v6833 = vpop.permute.xlu0 %6832
    %6834 = vrot.lane.b32.xlu0 %v5046, 112
    %v6835 = vpop.permute.xlu0 %6834
    %6836 = vrot.lane.b32.xlu0 %v5047, 112
    %v6837 = vpop.permute.xlu0 %6836
    %6838 = vrot.lane.b32.xlu0 %v5048, 112
    %v6839 = vpop.permute.xlu0 %6838
    %6840 = vrot.lane.b32.xlu0 %v5049, 112
    %v6841 = vpop.permute.xlu0 %6840
    %v6906 = vsel %vm810, %v4538, %v5179
    %v6907 = vsel %vm810, %v4539, %v5181
    %v6908 = vsel %vm810, %v4540, %v5183
    %v6909 = vsel %vm810, %v4541, %v5185
    %v6910 = vsel %vm810, %v4542, %v5187
    %v6911 = vsel %vm810, %v4543, %v5189
    %v6912 = vsel %vm810, %v4544, %v5191
    %v6913 = vsel %vm810, %v4545, %v5193
    %v6914 = vsel %vm810, %v4546, %v5195
    %v6915 = vsel %vm810, %v4547, %v5197
    %v6916 = vsel %vm810, %v4548, %v5199
    %v6917 = vsel %vm810, %v4549, %v5201
    %v6918 = vsel %vm810, %v4550, %v5203
    %v6919 = vsel %vm810, %v4551, %v5205
    %v6920 = vsel %vm810, %v4552, %v5207
    %v6921 = vsel %vm810, %v4553, %v5209
    %v6922 = vsel %vm810, %v4554, %v5211
    %v6923 = vsel %vm810, %v4555, %v5213
    %v6924 = vsel %vm810, %v4556, %v5215
    %v6925 = vsel %vm810, %v4557, %v5217
    %v6926 = vsel %vm810, %v4558, %v5219
    %v6927 = vsel %vm810, %v4559, %v5221
    %v6928 = vsel %vm810, %v4560, %v5223
    %v6929 = vsel %vm810, %v4561, %v5225
    %v6930 = vsel %vm810, %v4562, %v5227
    %v6931 = vsel %vm810, %v4563, %v5229
    %v6932 = vsel %vm810, %v4564, %v5231
    %v6933 = vsel %vm810, %v4565, %v5233
    %v6934 = vsel %vm810, %v4566, %v5235
    %v6935 = vsel %vm810, %v4567, %v5237
    %v6936 = vsel %vm810, %v4568, %v5239
    %v6937 = vsel %vm810, %v4569, %v5241
    %v6938 = vsel %vm810, %v4570, %v5243
    %v6939 = vsel %vm810, %v4571, %v5245
    %v6940 = vsel %vm810, %v4572, %v5247
    %v6941 = vsel %vm810, %v4573, %v5249
    %v6942 = vsel %vm810, %v4574, %v5251
    %v6943 = vsel %vm810, %v4575, %v5253
    %v6944 = vsel %vm810, %v4576, %v5255
    %v6945 = vsel %vm810, %v4577, %v5257
    %v6946 = vsel %vm810, %v4578, %v5259
    %v6947 = vsel %vm810, %v4579, %v5261
    %v6948 = vsel %vm810, %v4580, %v5263
    %v6949 = vsel %vm810, %v4581, %v5265
    %v6950 = vsel %vm810, %v4582, %v5267
    %v6951 = vsel %vm810, %v4583, %v5269
    %v6952 = vsel %vm810, %v4584, %v5271
    %v6953 = vsel %vm810, %v4585, %v5273
    %v6954 = vsel %vm810, %v4586, %v5275
    %v6955 = vsel %vm810, %v4587, %v5277
    %v6956 = vsel %vm810, %v4588, %v5279
    %v6957 = vsel %vm810, %v4589, %v5281
    %v6958 = vsel %vm810, %v4590, %v5283
    %v6959 = vsel %vm810, %v4591, %v5285
    %v6960 = vsel %vm810, %v4592, %v5287
    %v6961 = vsel %vm810, %v4593, %v5289
    %v6962 = vsel %vm810, %v4594, %v5291
    %v6963 = vsel %vm810, %v4595, %v5293
    %v6964 = vsel %vm810, %v4596, %v5295
    %v6965 = vsel %vm810, %v4597, %v5297
    %v6966 = vsel %vm810, %v4598, %v5299
    %v6967 = vsel %vm810, %v4599, %v5301
    %v6968 = vsel %vm810, %v4600, %v5303
    %v6969 = vsel %vm810, %v4601, %v5305
    %v6970 = vsel %vm3418, %v6906, %v5435
    %v6971 = vsel %vm3418, %v6907, %v5437
    %v6972 = vsel %vm3418, %v6908, %v5439
    %v6973 = vsel %vm3418, %v6909, %v5441
    %v6974 = vsel %vm3418, %v6910, %v5443
    %v6975 = vsel %vm3418, %v6911, %v5445
    %v6976 = vsel %vm3418, %v6912, %v5447
    %v6977 = vsel %vm3418, %v6913, %v5449
    %v6978 = vsel %vm3418, %v6914, %v5451
    %v6979 = vsel %vm3418, %v6915, %v5453
    %v6980 = vsel %vm3418, %v6916, %v5455
    %v6981 = vsel %vm3418, %v6917, %v5457
    %v6982 = vsel %vm3418, %v6918, %v5459
    %v6983 = vsel %vm3418, %v6919, %v5461
    %v6984 = vsel %vm3418, %v6920, %v5463
    %v6985 = vsel %vm3418, %v6921, %v5465
    %v6986 = vsel %vm3418, %v6922, %v5467
    %v6987 = vsel %vm3418, %v6923, %v5469
    %v6988 = vsel %vm3418, %v6924, %v5471
    %v6989 = vsel %vm3418, %v6925, %v5473
    %v6990 = vsel %vm3418, %v6926, %v5475
    %v6991 = vsel %vm3418, %v6927, %v5477
    %v6992 = vsel %vm3418, %v6928, %v5479
    %v6993 = vsel %vm3418, %v6929, %v5481
    %v6994 = vsel %vm3418, %v6930, %v5483
    %v6995 = vsel %vm3418, %v6931, %v5485
    %v6996 = vsel %vm3418, %v6932, %v5487
    %v6997 = vsel %vm3418, %v6933, %v5489
    %v6998 = vsel %vm3418, %v6934, %v5491
    %v6999 = vsel %vm3418, %v6935, %v5493
    %v7000 = vsel %vm3418, %v6936, %v5495
    %v7001 = vsel %vm3418, %v6937, %v5497
    %v7002 = vsel %vm3418, %v6938, %v5499
    %v7003 = vsel %vm3418, %v6939, %v5501
    %v7004 = vsel %vm3418, %v6940, %v5503
    %v7005 = vsel %vm3418, %v6941, %v5505
    %v7006 = vsel %vm3418, %v6942, %v5507
    %v7007 = vsel %vm3418, %v6943, %v5509
    %v7008 = vsel %vm3418, %v6944, %v5511
    %v7009 = vsel %vm3418, %v6945, %v5513
    %v7010 = vsel %vm3418, %v6946, %v5515
    %v7011 = vsel %vm3418, %v6947, %v5517
    %v7012 = vsel %vm3418, %v6948, %v5519
    %v7013 = vsel %vm3418, %v6949, %v5521
    %v7014 = vsel %vm3418, %v6950, %v5523
    %v7015 = vsel %vm3418, %v6951, %v5525
    %v7016 = vsel %vm3418, %v6952, %v5527
    %v7017 = vsel %vm3418, %v6953, %v5529
    %v7018 = vsel %vm3418, %v6954, %v5531
    %v7019 = vsel %vm3418, %v6955, %v5533
    %v7020 = vsel %vm3418, %v6956, %v5535
    %v7021 = vsel %vm3418, %v6957, %v5537
    %v7022 = vsel %vm3418, %v6958, %v5539
    %v7023 = vsel %vm3418, %v6959, %v5541
    %v7024 = vsel %vm3418, %v6960, %v5543
    %v7025 = vsel %vm3418, %v6961, %v5545
    %v7026 = vsel %vm3418, %v6962, %v5547
    %v7027 = vsel %vm3418, %v6963, %v5549
    %v7028 = vsel %vm3418, %v6964, %v5551
    %v7029 = vsel %vm3418, %v6965, %v5553
    %v7030 = vsel %vm3418, %v6966, %v5555
    %v7031 = vsel %vm3418, %v6967, %v5557
    %v7032 = vsel %vm3418, %v6968, %v5559
    %v7033 = vsel %vm3418, %v6969, %v5561
    %v7034 = vsel %vm3483, %v6970, %v5691
    %v7035 = vsel %vm3483, %v6971, %v5693
    %v7036 = vsel %vm3483, %v6972, %v5695
    %v7037 = vsel %vm3483, %v6973, %v5697
    %v7038 = vsel %vm3483, %v6974, %v5699
    %v7039 = vsel %vm3483, %v6975, %v5701
    %v7040 = vsel %vm3483, %v6976, %v5703
    %v7041 = vsel %vm3483, %v6977, %v5705
    %v7042 = vsel %vm3483, %v6978, %v5707
    %v7043 = vsel %vm3483, %v6979, %v5709
    %v7044 = vsel %vm3483, %v6980, %v5711
    %v7045 = vsel %vm3483, %v6981, %v5713
    %v7046 = vsel %vm3483, %v6982, %v5715
    %v7047 = vsel %vm3483, %v6983, %v5717
    %v7048 = vsel %vm3483, %v6984, %v5719
    %v7049 = vsel %vm3483, %v6985, %v5721
    %v7050 = vsel %vm3483, %v6986, %v5723
    %v7051 = vsel %vm3483, %v6987, %v5725
    %v7052 = vsel %vm3483, %v6988, %v5727
    %v7053 = vsel %vm3483, %v6989, %v5729
    %v7054 = vsel %vm3483, %v6990, %v5731
    %v7055 = vsel %vm3483, %v6991, %v5733
    %v7056 = vsel %vm3483, %v6992, %v5735
    %v7057 = vsel %vm3483, %v6993, %v5737
    %v7058 = vsel %vm3483, %v6994, %v5739
    %v7059 = vsel %vm3483, %v6995, %v5741
    %v7060 = vsel %vm3483, %v6996, %v5743
    %v7061 = vsel %vm3483, %v6997, %v5745
    %v7062 = vsel %vm3483, %v6998, %v5747
    %v7063 = vsel %vm3483, %v6999, %v5749
    %v7064 = vsel %vm3483, %v7000, %v5751
    %v7065 = vsel %vm3483, %v7001, %v5753
    %v7066 = vsel %vm3483, %v7002, %v5755
    %v7067 = vsel %vm3483, %v7003, %v5757
    %v7068 = vsel %vm3483, %v7004, %v5759
    %v7069 = vsel %vm3483, %v7005, %v5761
    %v7070 = vsel %vm3483, %v7006, %v5763
    %v7071 = vsel %vm3483, %v7007, %v5765
    %v7072 = vsel %vm3483, %v7008, %v5767
    %v7073 = vsel %vm3483, %v7009, %v5769
    %v7074 = vsel %vm3483, %v7010, %v5771
    %v7075 = vsel %vm3483, %v7011, %v5773
    %v7076 = vsel %vm3483, %v7012, %v5775
    %v7077 = vsel %vm3483, %v7013, %v5777
    %v7078 = vsel %vm3483, %v7014, %v5779
    %v7079 = vsel %vm3483, %v7015, %v5781
    %v7080 = vsel %vm3483, %v7016, %v5783
    %v7081 = vsel %vm3483, %v7017, %v5785
    %v7082 = vsel %vm3483, %v7018, %v5787
    %v7083 = vsel %vm3483, %v7019, %v5789
    %v7084 = vsel %vm3483, %v7020, %v5791
    %v7085 = vsel %vm3483, %v7021, %v5793
    %v7086 = vsel %vm3483, %v7022, %v5795
    %v7087 = vsel %vm3483, %v7023, %v5797
    %v7088 = vsel %vm3483, %v7024, %v5799
    %v7089 = vsel %vm3483, %v7025, %v5801
    %v7090 = vsel %vm3483, %v7026, %v5803
    %v7091 = vsel %vm3483, %v7027, %v5805
    %v7092 = vsel %vm3483, %v7028, %v5807
    %v7093 = vsel %vm3483, %v7029, %v5809
    %v7094 = vsel %vm3483, %v7030, %v5811
    %v7095 = vsel %vm3483, %v7031, %v5813
    %v7096 = vsel %vm3483, %v7032, %v5815
    %v7097 = vsel %vm3483, %v7033, %v5817
    %v7098 = vsel %vm3548, %v7034, %v5947
    %v7099 = vsel %vm3548, %v7035, %v5949
    %v7100 = vsel %vm3548, %v7036, %v5951
    %v7101 = vsel %vm3548, %v7037, %v5953
    %v7102 = vsel %vm3548, %v7038, %v5955
    %v7103 = vsel %vm3548, %v7039, %v5957
    %v7104 = vsel %vm3548, %v7040, %v5959
    %v7105 = vsel %vm3548, %v7041, %v5961
    %v7106 = vsel %vm3548, %v7042, %v5963
    %v7107 = vsel %vm3548, %v7043, %v5965
    %v7108 = vsel %vm3548, %v7044, %v5967
    %v7109 = vsel %vm3548, %v7045, %v5969
    %v7110 = vsel %vm3548, %v7046, %v5971
    %v7111 = vsel %vm3548, %v7047, %v5973
    %v7112 = vsel %vm3548, %v7048, %v5975
    %v7113 = vsel %vm3548, %v7049, %v5977
    %v7114 = vsel %vm3548, %v7050, %v5979
    %v7115 = vsel %vm3548, %v7051, %v5981
    %v7116 = vsel %vm3548, %v7052, %v5983
    %v7117 = vsel %vm3548, %v7053, %v5985
    %v7118 = vsel %vm3548, %v7054, %v5987
    %v7119 = vsel %vm3548, %v7055, %v5989
    %v7120 = vsel %vm3548, %v7056, %v5991
    %v7121 = vsel %vm3548, %v7057, %v5993
    %v7122 = vsel %vm3548, %v7058, %v5995
    %v7123 = vsel %vm3548, %v7059, %v5997
    %v7124 = vsel %vm3548, %v7060, %v5999
    %v7125 = vsel %vm3548, %v7061, %v6001
    %v7126 = vsel %vm3548, %v7062, %v6003
    %v7127 = vsel %vm3548, %v7063, %v6005
    %v7128 = vsel %vm3548, %v7064, %v6007
    %v7129 = vsel %vm3548, %v7065, %v6009
    %v7130 = vsel %vm3548, %v7066, %v6011
    %v7131 = vsel %vm3548, %v7067, %v6013
    %v7132 = vsel %vm3548, %v7068, %v6015
    %v7133 = vsel %vm3548, %v7069, %v6017
    %v7134 = vsel %vm3548, %v7070, %v6019
    %v7135 = vsel %vm3548, %v7071, %v6021
    %v7136 = vsel %vm3548, %v7072, %v6023
    %v7137 = vsel %vm3548, %v7073, %v6025
    %v7138 = vsel %vm3548, %v7074, %v6027
    %v7139 = vsel %vm3548, %v7075, %v6029
    %v7140 = vsel %vm3548, %v7076, %v6031
    %v7141 = vsel %vm3548, %v7077, %v6033
    %v7142 = vsel %vm3548, %v7078, %v6035
    %v7143 = vsel %vm3548, %v7079, %v6037
    %v7144 = vsel %vm3548, %v7080, %v6039
    %v7145 = vsel %vm3548, %v7081, %v6041
    %v7146 = vsel %vm3548, %v7082, %v6043
    %v7147 = vsel %vm3548, %v7083, %v6045
    %v7148 = vsel %vm3548, %v7084, %v6047
    %v7149 = vsel %vm3548, %v7085, %v6049
    %v7150 = vsel %vm3548, %v7086, %v6051
    %v7151 = vsel %vm3548, %v7087, %v6053
    %v7152 = vsel %vm3548, %v7088, %v6055
    %v7153 = vsel %vm3548, %v7089, %v6057
    %v7154 = vsel %vm3548, %v7090, %v6059
    %v7155 = vsel %vm3548, %v7091, %v6061
    %v7156 = vsel %vm3548, %v7092, %v6063
    %v7157 = vsel %vm3548, %v7093, %v6065
    %v7158 = vsel %vm3548, %v7094, %v6067
    %v7159 = vsel %vm3548, %v7095, %v6069
    %v7160 = vsel %vm3548, %v7096, %v6071
    %v7161 = vsel %vm3548, %v7097, %v6073
    %v7162 = vsel %vm3613, %v7098, %v6203
    %v7163 = vsel %vm3613, %v7099, %v6205
    %v7164 = vsel %vm3613, %v7100, %v6207
    %v7165 = vsel %vm3613, %v7101, %v6209
    %v7166 = vsel %vm3613, %v7102, %v6211
    %v7167 = vsel %vm3613, %v7103, %v6213
    %v7168 = vsel %vm3613, %v7104, %v6215
    %v7169 = vsel %vm3613, %v7105, %v6217
    %v7170 = vsel %vm3613, %v7106, %v6219
    %v7171 = vsel %vm3613, %v7107, %v6221
    %v7172 = vsel %vm3613, %v7108, %v6223
    %v7173 = vsel %vm3613, %v7109, %v6225
    %v7174 = vsel %vm3613, %v7110, %v6227
    %v7175 = vsel %vm3613, %v7111, %v6229
    %v7176 = vsel %vm3613, %v7112, %v6231
    %v7177 = vsel %vm3613, %v7113, %v6233
    %v7178 = vsel %vm3613, %v7114, %v6235
    %v7179 = vsel %vm3613, %v7115, %v6237
    %v7180 = vsel %vm3613, %v7116, %v6239
    %v7181 = vsel %vm3613, %v7117, %v6241
    %v7182 = vsel %vm3613, %v7118, %v6243
    %v7183 = vsel %vm3613, %v7119, %v6245
    %v7184 = vsel %vm3613, %v7120, %v6247
    %v7185 = vsel %vm3613, %v7121, %v6249
    %v7186 = vsel %vm3613, %v7122, %v6251
    %v7187 = vsel %vm3613, %v7123, %v6253
    %v7188 = vsel %vm3613, %v7124, %v6255
    %v7189 = vsel %vm3613, %v7125, %v6257
    %v7190 = vsel %vm3613, %v7126, %v6259
    %v7191 = vsel %vm3613, %v7127, %v6261
    %v7192 = vsel %vm3613, %v7128, %v6263
    %v7193 = vsel %vm3613, %v7129, %v6265
    %v7194 = vsel %vm3613, %v7130, %v6267
    %v7195 = vsel %vm3613, %v7131, %v6269
    %v7196 = vsel %vm3613, %v7132, %v6271
    %v7197 = vsel %vm3613, %v7133, %v6273
    %v7198 = vsel %vm3613, %v7134, %v6275
    %v7199 = vsel %vm3613, %v7135, %v6277
    %v7200 = vsel %vm3613, %v7136, %v6279
    %v7201 = vsel %vm3613, %v7137, %v6281
    %v7202 = vsel %vm3613, %v7138, %v6283
    %v7203 = vsel %vm3613, %v7139, %v6285
    %v7204 = vsel %vm3613, %v7140, %v6287
    %v7205 = vsel %vm3613, %v7141, %v6289
    %v7206 = vsel %vm3613, %v7142, %v6291
    %v7207 = vsel %vm3613, %v7143, %v6293
    %v7208 = vsel %vm3613, %v7144, %v6295
    %v7209 = vsel %vm3613, %v7145, %v6297
    %v7210 = vsel %vm3613, %v7146, %v6299
    %v7211 = vsel %vm3613, %v7147, %v6301
    %v7212 = vsel %vm3613, %v7148, %v6303
    %v7213 = vsel %vm3613, %v7149, %v6305
    %v7214 = vsel %vm3613, %v7150, %v6307
    %v7215 = vsel %vm3613, %v7151, %v6309
    %v7216 = vsel %vm3613, %v7152, %v6311
    %v7217 = vsel %vm3613, %v7153, %v6313
    %v7218 = vsel %vm3613, %v7154, %v6315
    %v7219 = vsel %vm3613, %v7155, %v6317
    %v7220 = vsel %vm3613, %v7156, %v6319
    %v7221 = vsel %vm3613, %v7157, %v6321
    %v7222 = vsel %vm3613, %v7158, %v6323
    %v7223 = vsel %vm3613, %v7159, %v6325
    %v7224 = vsel %vm3613, %v7160, %v6327
    %v7225 = vsel %vm3613, %v7161, %v6329
    %v7226 = vsel %vm3678, %v7162, %v6459
    %v7227 = vsel %vm3678, %v7163, %v6461
    %v7228 = vsel %vm3678, %v7164, %v6463
    %v7229 = vsel %vm3678, %v7165, %v6465
    %v7230 = vsel %vm3678, %v7166, %v6467
    %v7231 = vsel %vm3678, %v7167, %v6469
    %v7232 = vsel %vm3678, %v7168, %v6471
    %v7233 = vsel %vm3678, %v7169, %v6473
    %v7234 = vsel %vm3678, %v7170, %v6475
    %v7235 = vsel %vm3678, %v7171, %v6477
    %v7236 = vsel %vm3678, %v7172, %v6479
    %v7237 = vsel %vm3678, %v7173, %v6481
    %v7238 = vsel %vm3678, %v7174, %v6483
    %v7239 = vsel %vm3678, %v7175, %v6485
    %v7240 = vsel %vm3678, %v7176, %v6487
    %v7241 = vsel %vm3678, %v7177, %v6489
    %v7242 = vsel %vm3678, %v7178, %v6491
    %v7243 = vsel %vm3678, %v7179, %v6493
    %v7244 = vsel %vm3678, %v7180, %v6495
    %v7245 = vsel %vm3678, %v7181, %v6497
    %v7246 = vsel %vm3678, %v7182, %v6499
    %v7247 = vsel %vm3678, %v7183, %v6501
    %v7248 = vsel %vm3678, %v7184, %v6503
    %v7249 = vsel %vm3678, %v7185, %v6505
    %v7250 = vsel %vm3678, %v7186, %v6507
    %v7251 = vsel %vm3678, %v7187, %v6509
    %v7252 = vsel %vm3678, %v7188, %v6511
    %v7253 = vsel %vm3678, %v7189, %v6513
    %v7254 = vsel %vm3678, %v7190, %v6515
    %v7255 = vsel %vm3678, %v7191, %v6517
    %v7256 = vsel %vm3678, %v7192, %v6519
    %v7257 = vsel %vm3678, %v7193, %v6521
    %v7258 = vsel %vm3678, %v7194, %v6523
    %v7259 = vsel %vm3678, %v7195, %v6525
    %v7260 = vsel %vm3678, %v7196, %v6527
    %v7261 = vsel %vm3678, %v7197, %v6529
    %v7262 = vsel %vm3678, %v7198, %v6531
    %v7263 = vsel %vm3678, %v7199, %v6533
    %v7264 = vsel %vm3678, %v7200, %v6535
    %v7265 = vsel %vm3678, %v7201, %v6537
    %v7266 = vsel %vm3678, %v7202, %v6539
    %v7267 = vsel %vm3678, %v7203, %v6541
    %v7268 = vsel %vm3678, %v7204, %v6543
    %v7269 = vsel %vm3678, %v7205, %v6545
    %v7270 = vsel %vm3678, %v7206, %v6547
    %v7271 = vsel %vm3678, %v7207, %v6549
    %v7272 = vsel %vm3678, %v7208, %v6551
    %v7273 = vsel %vm3678, %v7209, %v6553
    %v7274 = vsel %vm3678, %v7210, %v6555
    %v7275 = vsel %vm3678, %v7211, %v6557
    %v7276 = vsel %vm3678, %v7212, %v6559
    %v7277 = vsel %vm3678, %v7213, %v6561
    %v7278 = vsel %vm3678, %v7214, %v6563
    %v7279 = vsel %vm3678, %v7215, %v6565
    %v7280 = vsel %vm3678, %v7216, %v6567
    %v7281 = vsel %vm3678, %v7217, %v6569
    %v7282 = vsel %vm3678, %v7218, %v6571
    %v7283 = vsel %vm3678, %v7219, %v6573
    %v7284 = vsel %vm3678, %v7220, %v6575
    %v7285 = vsel %vm3678, %v7221, %v6577
    %v7286 = vsel %vm3678, %v7222, %v6579
    %v7287 = vsel %vm3678, %v7223, %v6581
    %v7288 = vsel %vm3678, %v7224, %v6583
    %v7289 = vsel %vm3678, %v7225, %v6585
    %v7290 = vsel %vm3743, %v7226, %v6715
    %v7291 = vsel %vm3743, %v7227, %v6717
    %v7292 = vsel %vm3743, %v7228, %v6719
    %v7293 = vsel %vm3743, %v7229, %v6721
    %v7294 = vsel %vm3743, %v7230, %v6723
    %v7295 = vsel %vm3743, %v7231, %v6725
    %v7296 = vsel %vm3743, %v7232, %v6727
    %v7297 = vsel %vm3743, %v7233, %v6729
    %v7298 = vsel %vm3743, %v7234, %v6731
    %v7299 = vsel %vm3743, %v7235, %v6733
    %v7300 = vsel %vm3743, %v7236, %v6735
    %v7301 = vsel %vm3743, %v7237, %v6737
    %v7302 = vsel %vm3743, %v7238, %v6739
    %v7303 = vsel %vm3743, %v7239, %v6741
    %v7304 = vsel %vm3743, %v7240, %v6743
    %v7305 = vsel %vm3743, %v7241, %v6745
    %v7306 = vsel %vm3743, %v7242, %v6747
    %v7307 = vsel %vm3743, %v7243, %v6749
    %v7308 = vsel %vm3743, %v7244, %v6751
    %v7309 = vsel %vm3743, %v7245, %v6753
    %v7310 = vsel %vm3743, %v7246, %v6755
    %v7311 = vsel %vm3743, %v7247, %v6757
    %v7312 = vsel %vm3743, %v7248, %v6759
    %v7313 = vsel %vm3743, %v7249, %v6761
    %v7314 = vsel %vm3743, %v7250, %v6763
    %v7315 = vsel %vm3743, %v7251, %v6765
    %v7316 = vsel %vm3743, %v7252, %v6767
    %v7317 = vsel %vm3743, %v7253, %v6769
    %v7318 = vsel %vm3743, %v7254, %v6771
    %v7319 = vsel %vm3743, %v7255, %v6773
    %v7320 = vsel %vm3743, %v7256, %v6775
    %v7321 = vsel %vm3743, %v7257, %v6777
    %v7322 = vsel %vm3743, %v7258, %v6779
    %v7323 = vsel %vm3743, %v7259, %v6781
    %v7324 = vsel %vm3743, %v7260, %v6783
    %v7325 = vsel %vm3743, %v7261, %v6785
    %v7326 = vsel %vm3743, %v7262, %v6787
    %v7327 = vsel %vm3743, %v7263, %v6789
    %v7328 = vsel %vm3743, %v7264, %v6791
    %v7329 = vsel %vm3743, %v7265, %v6793
    %v7330 = vsel %vm3743, %v7266, %v6795
    %v7331 = vsel %vm3743, %v7267, %v6797
    %v7332 = vsel %vm3743, %v7268, %v6799
    %v7333 = vsel %vm3743, %v7269, %v6801
    %v7334 = vsel %vm3743, %v7270, %v6803
    %v7335 = vsel %vm3743, %v7271, %v6805
    %v7336 = vsel %vm3743, %v7272, %v6807
    %v7337 = vsel %vm3743, %v7273, %v6809
    %v7338 = vsel %vm3743, %v7274, %v6811
    %v7339 = vsel %vm3743, %v7275, %v6813
    %v7340 = vsel %vm3743, %v7276, %v6815
    %v7341 = vsel %vm3743, %v7277, %v6817
    %v7342 = vsel %vm3743, %v7278, %v6819
    %v7343 = vsel %vm3743, %v7279, %v6821
    %v7344 = vsel %vm3743, %v7280, %v6823
    %v7345 = vsel %vm3743, %v7281, %v6825
    %v7346 = vsel %vm3743, %v7282, %v6827
    %v7347 = vsel %vm3743, %v7283, %v6829
    %v7348 = vsel %vm3743, %v7284, %v6831
    %v7349 = vsel %vm3743, %v7285, %v6833
    %v7350 = vsel %vm3743, %v7286, %v6835
    %v7351 = vsel %vm3743, %v7287, %v6837
    %v7352 = vsel %vm3743, %v7288, %v6839
    %v7353 = vsel %vm3743, %v7289, %v6841
    %v7354 = vld [vmem:[%s6] sm:$0xff]
    %v7355 = vld [vmem:[%s6 + $0x8] sm:$0xff]
    %v7356 = vld [vmem:[%s6 + $0x10] sm:$0xff]
    %v7357 = vld [vmem:[%s6 + $0x18] sm:$0xff]
    %v7358 = vld [vmem:[%s6 + $0x20] sm:$0xff]
    %v7359 = vld [vmem:[%s6 + $0x28] sm:$0xff]
    %v7360 = vld [vmem:[%s6 + $0x30] sm:$0xff]
    %v7361 = vld [vmem:[%s6 + $0x38] sm:$0xff]
    %v7362 = vld [vmem:[%s6 + $0x40] sm:$0xff]
    %v7363 = vld [vmem:[%s6 + $0x48] sm:$0xff]
    %v7364 = vld [vmem:[%s6 + $0x50] sm:$0xff]
    %v7365 = vld [vmem:[%s6 + $0x58] sm:$0xff]
    %v7366 = vld [vmem:[%s6 + $0x60] sm:$0xff]
    %v7367 = vld [vmem:[%s6 + $0x68] sm:$0xff]
    %v7368 = vld [vmem:[%s6 + $0x70] sm:$0xff]
    %v7369 = vld [vmem:[%s6 + $0x78] sm:$0xff]
    %v7370 = vld [vmem:[%s6 + $0x80] sm:$0xff]
    %v7371 = vld [vmem:[%s6 + $0x88] sm:$0xff]
    %v7372 = vld [vmem:[%s7] sm:$0x1]
    %v7374 = vlaneseq
    %v7375 = vshrl.u32 %v7374, 7
    %v7376 = vsub.s32 0, %v7375
    %v7377 = vrot.slane %v7372, %v7376
    %v7380 = vsel %vm810, %v5050, 0
    %v7383 = vsel %vm810, %v5051, 0
    %v7386 = vsel %vm810, %v5052, 0
    %v7389 = vsel %vm810, %v5053, 0
    %v7392 = vsel %vm810, %v5054, 0
    %v7395 = vsel %vm810, %v5055, 0
    %v7398 = vsel %vm810, %v5056, 0
    %v7401 = vsel %vm810, %v5057, 0
    %v7404 = vsel %vm810, %v5058, 0
    %v7407 = vsel %vm810, %v5059, 0
    %v7410 = vsel %vm810, %v5060, 0
    %v7413 = vsel %vm810, %v5061, 0
    %v7416 = vsel %vm810, %v5062, 0
    %v7419 = vsel %vm810, %v5063, 0
    %v7422 = vsel %vm810, %v5064, 0
    %v7425 = vsel %vm810, %v5065, 0
    %v7428 = vsel %vm810, %v5066, 0
    %v7431 = vsel %vm810, %v5067, 0
    %v7434 = vsel %vm810, %v5068, 0
    %v7437 = vsel %vm810, %v5069, 0
    %v7440 = vsel %vm810, %v5070, 0
    %v7443 = vsel %vm810, %v5071, 0
    %v7446 = vsel %vm810, %v5072, 0
    %v7449 = vsel %vm810, %v5073, 0
    %v7452 = vsel %vm810, %v5074, 0
    %v7455 = vsel %vm810, %v5075, 0
    %v7458 = vsel %vm810, %v5076, 0
    %v7461 = vsel %vm810, %v5077, 0
    %v7464 = vsel %vm810, %v5078, 0
    %v7467 = vsel %vm810, %v5079, 0
    %v7470 = vsel %vm810, %v5080, 0
    %v7473 = vsel %vm810, %v5081, 0
    %v7476 = vsel %vm810, %v5082, 0
    %v7479 = vsel %vm810, %v5083, 0
    %v7482 = vsel %vm810, %v5084, 0
    %v7485 = vsel %vm810, %v5085, 0
    %v7488 = vsel %vm810, %v5086, 0
    %v7491 = vsel %vm810, %v5087, 0
    %v7494 = vsel %vm810, %v5088, 0
    %v7497 = vsel %vm810, %v5089, 0
    %v7500 = vsel %vm810, %v5090, 0
    %v7503 = vsel %vm810, %v5091, 0
    %v7506 = vsel %vm810, %v5092, 0
    %v7509 = vsel %vm810, %v5093, 0
    %v7512 = vsel %vm810, %v5094, 0
    %v7515 = vsel %vm810, %v5095, 0
    %v7518 = vsel %vm810, %v5096, 0
    %v7521 = vsel %vm810, %v5097, 0
    %v7524 = vsel %vm810, %v5098, 0
    %v7527 = vsel %vm810, %v5099, 0
    %v7530 = vsel %vm810, %v5100, 0
    %v7533 = vsel %vm810, %v5101, 0
    %v7536 = vsel %vm810, %v5102, 0
    %v7539 = vsel %vm810, %v5103, 0
    %v7542 = vsel %vm810, %v5104, 0
    %v7545 = vsel %vm810, %v5105, 0
    %v7548 = vsel %vm810, %v5106, 0
    %v7551 = vsel %vm810, %v5107, 0
    %v7554 = vsel %vm810, %v5108, 0
    %v7557 = vsel %vm810, %v5109, 0
    %v7560 = vsel %vm810, %v5110, 0
    %v7563 = vsel %vm810, %v5111, 0
    %v7566 = vsel %vm810, %v5112, 0
    %v7569 = vsel %vm810, %v5113, 0
    %7571 = vmatprep.subr.mxu0 0.0
    %7572 = vmatpush1.msra.mxu0 %v7369
    %7573 = vmatprep.subr.mxu0 0.0
    %7574 = vmatpush1.msra.mxu0 %v7368
    %7575 = vmatprep.subr.mxu0 0.0
    %7576 = vmatpush1.msra.mxu0 %v7367
    %7577 = vmatprep.subr.mxu0 0.0
    %7578 = vmatpush1.msra.mxu0 %v7366
    %7579 = vmatprep.subr.mxu0 0.0
    %7580 = vmatpush1.msra.mxu0 %v7365
    %7581 = vmatprep.subr.mxu0 0.0
    %7582 = vmatpush1.msra.mxu0 %v7364
    %7583 = vmatprep.subr.mxu0 0.0
    %7584 = vmatpush1.msra.mxu0 %v7363
    %7585 = vmatprep.subr.mxu0 0.0
    %7586 = vmatpush1.msra.mxu0 %v7362
    %7587 = vmatprep.subr.mxu0 0.0
    %7588 = vmatpush1.msra.mxu0 %v7361
    %7589 = vmatprep.subr.mxu0 0.0
    %7590 = vmatpush1.msra.mxu0 %v7360
    %7591 = vmatprep.subr.mxu0 0.0
    %7592 = vmatpush1.msra.mxu0 %v7359
    %7593 = vmatprep.subr.mxu0 0.0
    %7594 = vmatpush1.msra.mxu0 %v7358
    %7595 = vmatprep.subr.mxu0 0.0
    %7596 = vmatpush1.msra.mxu0 %v7357
    %7597 = vmatprep.subr.mxu0 0.0
    %7598 = vmatpush1.msra.mxu0 %v7356
    %7599 = vmatprep.subr.mxu0 0.0
    %7600 = vmatpush1.msra.mxu0 %v7355
    %7601 = vmatprep.subr.mxu0 0.0
    %7602 = vmatpush1.msra.mxu0 %v7354
    %7603 = vmatprep.subr.mxu0 0.0
    %7604 = vmatpush2.msra.mxu0 0.0
    %7605 = vmatprep.subr.mxu0 0.0
    %7606 = vmatpush2.msra.mxu0 0.0
    %7607 = vmatprep.subr.mxu0 0.0
    %7608 = vmatpush2.msra.mxu0 0.0
    %7609 = vmatprep.subr.mxu0 0.0
    %7610 = vmatpush2.msra.mxu0 0.0
    %7611 = vmatprep.subr.mxu0 0.0
    %7612 = vmatpush2.msra.mxu0 0.0
    %7613 = vmatprep.subr.mxu0 0.0
    %7614 = vmatpush2.msra.mxu0 0.0
    %7615 = vmatprep.subr.mxu0 0.0
    %7616 = vmatpush2.msra.mxu0 0.0
    %7617 = vmatprep.subr.mxu0 0.0
    %7618 = vmatpush2.msra.mxu0 0.0
    %7619 = vmatprep.subr.mxu0 0.0
    %7620 = vmatpush2.msra.mxu0 0.0
    %7621 = vmatprep.subr.mxu0 0.0
    %7622 = vmatpush2.msra.mxu0 0.0
    %7623 = vmatprep.subr.mxu0 0.0
    %7624 = vmatpush2.msra.mxu0 0.0
    %7625 = vmatprep.subr.mxu0 0.0
    %7626 = vmatpush2.msra.mxu0 0.0
    %7627 = vmatprep.subr.mxu0 0.0
    %7628 = vmatpush2.msra.mxu0 0.0
    %7629 = vmatprep.subr.mxu0 0.0
    %7630 = vmatpush2.msra.mxu0 0.0
    %7631 = vmatprep.subr.mxu0 0.0
    %7632 = vmatpush2.msra.mxu0 %v7371
    %7633 = vmatprep.subr.mxu0 0.0
    %7634 = vmatpush2.msra.mxu0 %v7370
    %7635 = vmatprep.mubr.f32.mxu0 %v7380
    %7636 = vmatmul.mubr.f32.gmra.mxu0 %v7290
    %v7637 = vpop.f32.mrf.mxu0
    %v7638 = vadd.f32 %v7377, %v7637
    %v7639 = vpop.f32.mrf.mxu0
    %7640 = vmatprep.mubr.f32.mxu0 %v7383
    %7641 = vmatmul.mubr.f32.gmra.mxu0 %v7291
    %v7642 = vpop.f32.mrf.mxu0
    %v7643 = vadd.f32 %v7377, %v7642
    %v7644 = vpop.f32.mrf.mxu0
    %7645 = vmatprep.mubr.f32.mxu0 %v7386
    %7646 = vmatmul.mubr.f32.gmra.mxu0 %v7292
    %v7647 = vpop.f32.mrf.mxu0
    %v7648 = vadd.f32 %v7377, %v7647
    %v7649 = vpop.f32.mrf.mxu0
    %7650 = vmatprep.mubr.f32.mxu0 %v7389
    %7651 = vmatmul.mubr.f32.gmra.mxu0 %v7293
    %v7652 = vpop.f32.mrf.mxu0
    %v7653 = vadd.f32 %v7377, %v7652
    %v7654 = vpop.f32.mrf.mxu0
    %7655 = vmatprep.mubr.f32.mxu0 %v7392
    %7656 = vmatmul.mubr.f32.gmra.mxu0 %v7294
    %v7657 = vpop.f32.mrf.mxu0
    %v7658 = vadd.f32 %v7377, %v7657
    %v7659 = vpop.f32.mrf.mxu0
    %7660 = vmatprep.mubr.f32.mxu0 %v7395
    %7661 = vmatmul.mubr.f32.gmra.mxu0 %v7295
    %v7662 = vpop.f32.mrf.mxu0
    %v7663 = vadd.f32 %v7377, %v7662
    %v7664 = vpop.f32.mrf.mxu0
    %7665 = vmatprep.mubr.f32.mxu0 %v7398
    %7666 = vmatmul.mubr.f32.gmra.mxu0 %v7296
    %v7667 = vpop.f32.mrf.mxu0
    %v7668 = vadd.f32 %v7377, %v7667
    %v7669 = vpop.f32.mrf.mxu0
    %7670 = vmatprep.mubr.f32.mxu0 %v7401
    %7671 = vmatmul.mubr.f32.gmra.mxu0 %v7297
    %v7672 = vpop.f32.mrf.mxu0
    %v7673 = vadd.f32 %v7377, %v7672
    %v7674 = vpop.f32.mrf.mxu0
    %7675 = vmatprep.mubr.f32.mxu0 %v7404
    %7676 = vmatmul.mubr.f32.gmra.mxu0 %v7298
    %v7677 = vpop.f32.mrf.mxu0
    %v7678 = vadd.f32 %v7377, %v7677
    %v7679 = vpop.f32.mrf.mxu0
    %7680 = vmatprep.mubr.f32.mxu0 %v7407
    %7681 = vmatmul.mubr.f32.gmra.mxu0 %v7299
    %v7682 = vpop.f32.mrf.mxu0
    %v7683 = vadd.f32 %v7377, %v7682
    %v7684 = vpop.f32.mrf.mxu0
    %7685 = vmatprep.mubr.f32.mxu0 %v7410
    %7686 = vmatmul.mubr.f32.gmra.mxu0 %v7300
    %v7687 = vpop.f32.mrf.mxu0
    %v7688 = vadd.f32 %v7377, %v7687
    %v7689 = vpop.f32.mrf.mxu0
    %7690 = vmatprep.mubr.f32.mxu0 %v7413
    %7691 = vmatmul.mubr.f32.gmra.mxu0 %v7301
    %v7692 = vpop.f32.mrf.mxu0
    %v7693 = vadd.f32 %v7377, %v7692
    %v7694 = vpop.f32.mrf.mxu0
    %7695 = vmatprep.mubr.f32.mxu0 %v7416
    %7696 = vmatmul.mubr.f32.gmra.mxu0 %v7302
    %v7697 = vpop.f32.mrf.mxu0
    %v7698 = vadd.f32 %v7377, %v7697
    %v7699 = vpop.f32.mrf.mxu0
    %7700 = vmatprep.mubr.f32.mxu0 %v7419
    %7701 = vmatmul.mubr.f32.gmra.mxu0 %v7303
    %v7702 = vpop.f32.mrf.mxu0
    %v7703 = vadd.f32 %v7377, %v7702
    %v7704 = vpop.f32.mrf.mxu0
    %7705 = vmatprep.mubr.f32.mxu0 %v7422
    %7706 = vmatmul.mubr.f32.gmra.mxu0 %v7304
    %v7707 = vpop.f32.mrf.mxu0
    %v7708 = vadd.f32 %v7377, %v7707
    %v7709 = vpop.f32.mrf.mxu0
    %7710 = vmatprep.mubr.f32.mxu0 %v7425
    %7711 = vmatmul.mubr.f32.gmra.mxu0 %v7305
    %v7712 = vpop.f32.mrf.mxu0
    %v7713 = vadd.f32 %v7377, %v7712
    %v7714 = vpop.f32.mrf.mxu0
    %7715 = vmatprep.mubr.f32.mxu0 %v7428
    %7716 = vmatmul.mubr.f32.gmra.mxu0 %v7306
    %v7717 = vpop.f32.mrf.mxu0
    %v7718 = vadd.f32 %v7377, %v7717
    %v7719 = vpop.f32.mrf.mxu0
    %7720 = vmatprep.mubr.f32.mxu0 %v7431
    %7721 = vmatmul.mubr.f32.gmra.mxu0 %v7307
    %v7722 = vpop.f32.mrf.mxu0
    %v7723 = vadd.f32 %v7377, %v7722
    %v7724 = vpop.f32.mrf.mxu0
    %7725 = vmatprep.mubr.f32.mxu0 %v7434
    %7726 = vmatmul.mubr.f32.gmra.mxu0 %v7308
    %v7727 = vpop.f32.mrf.mxu0
    %v7728 = vadd.f32 %v7377, %v7727
    %v7729 = vpop.f32.mrf.mxu0
    %7730 = vmatprep.mubr.f32.mxu0 %v7437
    %7731 = vmatmul.mubr.f32.gmra.mxu0 %v7309
    %v7732 = vpop.f32.mrf.mxu0
    %v7733 = vadd.f32 %v7377, %v7732
    %v7734 = vpop.f32.mrf.mxu0
    %7735 = vmatprep.mubr.f32.mxu0 %v7440
    %7736 = vmatmul.mubr.f32.gmra.mxu0 %v7310
    %v7737 = vpop.f32.mrf.mxu0
    %v7738 = vadd.f32 %v7377, %v7737
    %v7739 = vpop.f32.mrf.mxu0
    %7740 = vmatprep.mubr.f32.mxu0 %v7443
    %7741 = vmatmul.mubr.f32.gmra.mxu0 %v7311
    %v7742 = vpop.f32.mrf.mxu0
    %v7743 = vadd.f32 %v7377, %v7742
    %v7744 = vpop.f32.mrf.mxu0
    %7745 = vmatprep.mubr.f32.mxu0 %v7446
    %7746 = vmatmul.mubr.f32.gmra.mxu0 %v7312
    %v7747 = vpop.f32.mrf.mxu0
    %v7748 = vadd.f32 %v7377, %v7747
    %v7749 = vpop.f32.mrf.mxu0
    %7750 = vmatprep.mubr.f32.mxu0 %v7449
    %7751 = vmatmul.mubr.f32.gmra.mxu0 %v7313
    %v7752 = vpop.f32.mrf.mxu0
    %v7753 = vadd.f32 %v7377, %v7752
    %v7754 = vpop.f32.mrf.mxu0
    %7755 = vmatprep.mubr.f32.mxu0 %v7452
    %7756 = vmatmul.mubr.f32.gmra.mxu0 %v7314
    %v7757 = vpop.f32.mrf.mxu0
    %v7758 = vadd.f32 %v7377, %v7757
    %v7759 = vpop.f32.mrf.mxu0
    %7760 = vmatprep.mubr.f32.mxu0 %v7455
    %7761 = vmatmul.mubr.f32.gmra.mxu0 %v7315
    %v7762 = vpop.f32.mrf.mxu0
    %v7763 = vadd.f32 %v7377, %v7762
    %v7764 = vpop.f32.mrf.mxu0
    %7765 = vmatprep.mubr.f32.mxu0 %v7458
    %7766 = vmatmul.mubr.f32.gmra.mxu0 %v7316
    %v7767 = vpop.f32.mrf.mxu0
    %v7768 = vadd.f32 %v7377, %v7767
    %v7769 = vpop.f32.mrf.mxu0
    %7770 = vmatprep.mubr.f32.mxu0 %v7461
    %7771 = vmatmul.mubr.f32.gmra.mxu0 %v7317
    %v7772 = vpop.f32.mrf.mxu0
    %v7773 = vadd.f32 %v7377, %v7772
    %v7774 = vpop.f32.mrf.mxu0
    %7775 = vmatprep.mubr.f32.mxu0 %v7464
    %7776 = vmatmul.mubr.f32.gmra.mxu0 %v7318
    %v7777 = vpop.f32.mrf.mxu0
    %v7778 = vadd.f32 %v7377, %v7777
    %v7779 = vpop.f32.mrf.mxu0
    %7780 = vmatprep.mubr.f32.mxu0 %v7467
    %7781 = vmatmul.mubr.f32.gmra.mxu0 %v7319
    %v7782 = vpop.f32.mrf.mxu0
    %v7783 = vadd.f32 %v7377, %v7782
    %v7784 = vpop.f32.mrf.mxu0
    %7785 = vmatprep.mubr.f32.mxu0 %v7470
    %7786 = vmatmul.mubr.f32.gmra.mxu0 %v7320
    %v7787 = vpop.f32.mrf.mxu0
    %v7788 = vadd.f32 %v7377, %v7787
    %v7789 = vpop.f32.mrf.mxu0
    %7790 = vmatprep.mubr.f32.mxu0 %v7473
    %7791 = vmatmul.mubr.f32.gmra.mxu0 %v7321
    %v7792 = vpop.f32.mrf.mxu0
    %v7793 = vadd.f32 %v7377, %v7792
    %v7794 = vpop.f32.mrf.mxu0
    %7795 = vmatprep.mubr.f32.mxu0 %v7476
    %7796 = vmatmul.mubr.f32.gmra.mxu0 %v7322
    %v7797 = vpop.f32.mrf.mxu0
    %v7798 = vadd.f32 %v7377, %v7797
    %v7799 = vpop.f32.mrf.mxu0
    %7800 = vmatprep.mubr.f32.mxu0 %v7479
    %7801 = vmatmul.mubr.f32.gmra.mxu0 %v7323
    %v7802 = vpop.f32.mrf.mxu0
    %v7803 = vadd.f32 %v7377, %v7802
    %v7804 = vpop.f32.mrf.mxu0
    %7805 = vmatprep.mubr.f32.mxu0 %v7482
    %7806 = vmatmul.mubr.f32.gmra.mxu0 %v7324
    %v7807 = vpop.f32.mrf.mxu0
    %v7808 = vadd.f32 %v7377, %v7807
    %v7809 = vpop.f32.mrf.mxu0
    %7810 = vmatprep.mubr.f32.mxu0 %v7485
    %7811 = vmatmul.mubr.f32.gmra.mxu0 %v7325
    %v7812 = vpop.f32.mrf.mxu0
    %v7813 = vadd.f32 %v7377, %v7812
    %v7814 = vpop.f32.mrf.mxu0
    %7815 = vmatprep.mubr.f32.mxu0 %v7488
    %7816 = vmatmul.mubr.f32.gmra.mxu0 %v7326
    %v7817 = vpop.f32.mrf.mxu0
    %v7818 = vadd.f32 %v7377, %v7817
    %v7819 = vpop.f32.mrf.mxu0
    %7820 = vmatprep.mubr.f32.mxu0 %v7491
    %7821 = vmatmul.mubr.f32.gmra.mxu0 %v7327
    %v7822 = vpop.f32.mrf.mxu0
    %v7823 = vadd.f32 %v7377, %v7822
    %v7824 = vpop.f32.mrf.mxu0
    %7825 = vmatprep.mubr.f32.mxu0 %v7494
    %7826 = vmatmul.mubr.f32.gmra.mxu0 %v7328
    %v7827 = vpop.f32.mrf.mxu0
    %v7828 = vadd.f32 %v7377, %v7827
    %v7829 = vpop.f32.mrf.mxu0
    %7830 = vmatprep.mubr.f32.mxu0 %v7497
    %7831 = vmatmul.mubr.f32.gmra.mxu0 %v7329
    %v7832 = vpop.f32.mrf.mxu0
    %v7833 = vadd.f32 %v7377, %v7832
    %v7834 = vpop.f32.mrf.mxu0
    %7835 = vmatprep.mubr.f32.mxu0 %v7500
    %7836 = vmatmul.mubr.f32.gmra.mxu0 %v7330
    %v7837 = vpop.f32.mrf.mxu0
    %v7838 = vadd.f32 %v7377, %v7837
    %v7839 = vpop.f32.mrf.mxu0
    %7840 = vmatprep.mubr.f32.mxu0 %v7503
    %7841 = vmatmul.mubr.f32.gmra.mxu0 %v7331
    %v7842 = vpop.f32.mrf.mxu0
    %v7843 = vadd.f32 %v7377, %v7842
    %v7844 = vpop.f32.mrf.mxu0
    %7845 = vmatprep.mubr.f32.mxu0 %v7506
    %7846 = vmatmul.mubr.f32.gmra.mxu0 %v7332
    %v7847 = vpop.f32.mrf.mxu0
    %v7848 = vadd.f32 %v7377, %v7847
    %v7849 = vpop.f32.mrf.mxu0
    %7850 = vmatprep.mubr.f32.mxu0 %v7509
    %7851 = vmatmul.mubr.f32.gmra.mxu0 %v7333
    %v7852 = vpop.f32.mrf.mxu0
    %v7853 = vadd.f32 %v7377, %v7852
    %v7854 = vpop.f32.mrf.mxu0
    %7855 = vmatprep.mubr.f32.mxu0 %v7512
    %7856 = vmatmul.mubr.f32.gmra.mxu0 %v7334
    %v7857 = vpop.f32.mrf.mxu0
    %v7858 = vadd.f32 %v7377, %v7857
    %v7859 = vpop.f32.mrf.mxu0
    %7860 = vmatprep.mubr.f32.mxu0 %v7515
    %7861 = vmatmul.mubr.f32.gmra.mxu0 %v7335
    %v7862 = vpop.f32.mrf.mxu0
    %v7863 = vadd.f32 %v7377, %v7862
    %v7864 = vpop.f32.mrf.mxu0
    %7865 = vmatprep.mubr.f32.mxu0 %v7518
    %7866 = vmatmul.mubr.f32.gmra.mxu0 %v7336
    %v7867 = vpop.f32.mrf.mxu0
    %v7868 = vadd.f32 %v7377, %v7867
    %v7869 = vpop.f32.mrf.mxu0
    %7870 = vmatprep.mubr.f32.mxu0 %v7521
    %7871 = vmatmul.mubr.f32.gmra.mxu0 %v7337
    %v7872 = vpop.f32.mrf.mxu0
    %v7873 = vadd.f32 %v7377, %v7872
    %v7874 = vpop.f32.mrf.mxu0
    %7875 = vmatprep.mubr.f32.mxu0 %v7524
    %7876 = vmatmul.mubr.f32.gmra.mxu0 %v7338
    %v7877 = vpop.f32.mrf.mxu0
    %v7878 = vadd.f32 %v7377, %v7877
    %v7879 = vpop.f32.mrf.mxu0
    %7880 = vmatprep.mubr.f32.mxu0 %v7527
    %7881 = vmatmul.mubr.f32.gmra.mxu0 %v7339
    %v7882 = vpop.f32.mrf.mxu0
    %v7883 = vadd.f32 %v7377, %v7882
    %v7884 = vpop.f32.mrf.mxu0
    %7885 = vmatprep.mubr.f32.mxu0 %v7530
    %7886 = vmatmul.mubr.f32.gmra.mxu0 %v7340
    %v7887 = vpop.f32.mrf.mxu0
    %v7888 = vadd.f32 %v7377, %v7887
    %v7889 = vpop.f32.mrf.mxu0
    %7890 = vmatprep.mubr.f32.mxu0 %v7533
    %7891 = vmatmul.mubr.f32.gmra.mxu0 %v7341
    %v7892 = vpop.f32.mrf.mxu0
    %v7893 = vadd.f32 %v7377, %v7892
    %v7894 = vpop.f32.mrf.mxu0
    %7895 = vmatprep.mubr.f32.mxu0 %v7536
    %7896 = vmatmul.mubr.f32.gmra.mxu0 %v7342
    %v7897 = vpop.f32.mrf.mxu0
    %v7898 = vadd.f32 %v7377, %v7897
    %v7899 = vpop.f32.mrf.mxu0
    %7900 = vmatprep.mubr.f32.mxu0 %v7539
    %7901 = vmatmul.mubr.f32.gmra.mxu0 %v7343
    %v7902 = vpop.f32.mrf.mxu0
    %v7903 = vadd.f32 %v7377, %v7902
    %v7904 = vpop.f32.mrf.mxu0
    %7905 = vmatprep.mubr.f32.mxu0 %v7542
    %7906 = vmatmul.mubr.f32.gmra.mxu0 %v7344
    %v7907 = vpop.f32.mrf.mxu0
    %v7908 = vadd.f32 %v7377, %v7907
    %v7909 = vpop.f32.mrf.mxu0
    %7910 = vmatprep.mubr.f32.mxu0 %v7545
    %7911 = vmatmul.mubr.f32.gmra.mxu0 %v7345
    %v7912 = vpop.f32.mrf.mxu0
    %v7913 = vadd.f32 %v7377, %v7912
    %v7914 = vpop.f32.mrf.mxu0
    %7915 = vmatprep.mubr.f32.mxu0 %v7548
    %7916 = vmatmul.mubr.f32.gmra.mxu0 %v7346
    %v7917 = vpop.f32.mrf.mxu0
    %v7918 = vadd.f32 %v7377, %v7917
    %v7919 = vpop.f32.mrf.mxu0
    %7920 = vmatprep.mubr.f32.mxu0 %v7551
    %7921 = vmatmul.mubr.f32.gmra.mxu0 %v7347
    %v7922 = vpop.f32.mrf.mxu0
    %v7923 = vadd.f32 %v7377, %v7922
    %v7924 = vpop.f32.mrf.mxu0
    %7925 = vmatprep.mubr.f32.mxu0 %v7554
    %7926 = vmatmul.mubr.f32.gmra.mxu0 %v7348
    %v7927 = vpop.f32.mrf.mxu0
    %v7928 = vadd.f32 %v7377, %v7927
    %v7929 = vpop.f32.mrf.mxu0
    %7930 = vmatprep.mubr.f32.mxu0 %v7557
    %7931 = vmatmul.mubr.f32.gmra.mxu0 %v7349
    %v7932 = vpop.f32.mrf.mxu0
    %v7933 = vadd.f32 %v7377, %v7932
    %v7934 = vpop.f32.mrf.mxu0
    %7935 = vmatprep.mubr.f32.mxu0 %v7560
    %7936 = vmatmul.mubr.f32.gmra.mxu0 %v7350
    %v7937 = vpop.f32.mrf.mxu0
    %v7938 = vadd.f32 %v7377, %v7937
    %v7939 = vpop.f32.mrf.mxu0
    %7940 = vmatprep.mubr.f32.mxu0 %v7563
    %7941 = vmatmul.mubr.f32.gmra.mxu0 %v7351
    %v7942 = vpop.f32.mrf.mxu0
    %v7943 = vadd.f32 %v7377, %v7942
    %v7944 = vpop.f32.mrf.mxu0
    %7945 = vmatprep.mubr.f32.mxu0 %v7566
    %7946 = vmatmul.mubr.f32.gmra.mxu0 %v7352
    %v7947 = vpop.f32.mrf.mxu0
    %v7948 = vadd.f32 %v7377, %v7947
    %v7949 = vpop.f32.mrf.mxu0
    %7950 = vmatprep.mubr.f32.mxu0 %v7569
    %7951 = vmatmul.mubr.f32.gmra.mxu0 %v7353
    %v7952 = vpop.f32.mrf.mxu0
    %v7953 = vadd.f32 %v7377, %v7952
    %v7954 = vpop.f32.mrf.mxu0
    %7955 = vdwg.mxu0
    %v7956 = vadd.f32 %v7638, %v746
    %v7957 = vadd.f32 %v7643, %v747
    %v7958 = vadd.f32 %v7648, %v748
    %v7959 = vadd.f32 %v7653, %v749
    %v7960 = vadd.f32 %v7658, %v750
    %v7961 = vadd.f32 %v7663, %v751
    %v7962 = vadd.f32 %v7668, %v752
    %v7963 = vadd.f32 %v7673, %v753
    %v7964 = vadd.f32 %v7678, %v754
    %v7965 = vadd.f32 %v7683, %v755
    %v7966 = vadd.f32 %v7688, %v756
    %v7967 = vadd.f32 %v7693, %v757
    %v7968 = vadd.f32 %v7698, %v758
    %v7969 = vadd.f32 %v7703, %v759
    %v7970 = vadd.f32 %v7708, %v760
    %v7971 = vadd.f32 %v7713, %v761
    %v7972 = vadd.f32 %v7718, %v762
    %v7973 = vadd.f32 %v7723, %v763
    %v7974 = vadd.f32 %v7728, %v764
    %v7975 = vadd.f32 %v7733, %v765
    %v7976 = vadd.f32 %v7738, %v766
    %v7977 = vadd.f32 %v7743, %v767
    %v7978 = vadd.f32 %v7748, %v768
    %v7979 = vadd.f32 %v7753, %v769
    %v7980 = vadd.f32 %v7758, %v770
    %v7981 = vadd.f32 %v7763, %v771
    %v7982 = vadd.f32 %v7768, %v772
    %v7983 = vadd.f32 %v7773, %v773
    %v7984 = vadd.f32 %v7778, %v774
    %v7985 = vadd.f32 %v7783, %v775
    %v7986 = vadd.f32 %v7788, %v776
    %v7987 = vadd.f32 %v7793, %v777
    %v7988 = vadd.f32 %v7798, %v778
    %v7989 = vadd.f32 %v7803, %v779
    %v7990 = vadd.f32 %v7808, %v780
    %v7991 = vadd.f32 %v7813, %v781
    %v7992 = vadd.f32 %v7818, %v782
    %v7993 = vadd.f32 %v7823, %v783
    %v7994 = vadd.f32 %v7828, %v784
    %v7995 = vadd.f32 %v7833, %v785
    %v7996 = vadd.f32 %v7838, %v786
    %v7997 = vadd.f32 %v7843, %v787
    %v7998 = vadd.f32 %v7848, %v788
    %v7999 = vadd.f32 %v7853, %v789
    %v8000 = vadd.f32 %v7858, %v790
    %v8001 = vadd.f32 %v7863, %v791
    %v8002 = vadd.f32 %v7868, %v792
    %v8003 = vadd.f32 %v7873, %v793
    %v8004 = vadd.f32 %v7878, %v794
    %v8005 = vadd.f32 %v7883, %v795
    %v8006 = vadd.f32 %v7888, %v796
    %v8007 = vadd.f32 %v7893, %v797
    %v8008 = vadd.f32 %v7898, %v798
    %v8009 = vadd.f32 %v7903, %v799
    %v8010 = vadd.f32 %v7908, %v800
    %v8011 = vadd.f32 %v7913, %v801
    %v8012 = vadd.f32 %v7918, %v802
    %v8013 = vadd.f32 %v7923, %v803
    %v8014 = vadd.f32 %v7928, %v804
    %v8015 = vadd.f32 %v7933, %v805
    %v8016 = vadd.f32 %v7938, %v806
    %v8017 = vadd.f32 %v7943, %v807
    %v8018 = vadd.f32 %v7948, %v808
    %v8019 = vadd.f32 %v7953, %v809
    %v8020 = vmax.f32 %v7956, 0.0
    %v8021 = vmax.f32 %v7957, 0.0
    %v8022 = vmax.f32 %v7958, 0.0
    %v8023 = vmax.f32 %v7959, 0.0
    %v8024 = vmax.f32 %v7960, 0.0
    %v8025 = vmax.f32 %v7961, 0.0
    %v8026 = vmax.f32 %v7962, 0.0
    %v8027 = vmax.f32 %v7963, 0.0
    %v8028 = vmax.f32 %v7964, 0.0
    %v8029 = vmax.f32 %v7965, 0.0
    %v8030 = vmax.f32 %v7966, 0.0
    %v8031 = vmax.f32 %v7967, 0.0
    %v8032 = vmax.f32 %v7968, 0.0
    %v8033 = vmax.f32 %v7969, 0.0
    %v8034 = vmax.f32 %v7970, 0.0
    %v8035 = vmax.f32 %v7971, 0.0
    %v8036 = vmax.f32 %v7972, 0.0
    %v8037 = vmax.f32 %v7973, 0.0
    %v8038 = vmax.f32 %v7974, 0.0
    %v8039 = vmax.f32 %v7975, 0.0
    %v8040 = vmax.f32 %v7976, 0.0
    %v8041 = vmax.f32 %v7977, 0.0
    %v8042 = vmax.f32 %v7978, 0.0
    %v8043 = vmax.f32 %v7979, 0.0
    %v8044 = vmax.f32 %v7980, 0.0
    %v8045 = vmax.f32 %v7981, 0.0
    %v8046 = vmax.f32 %v7982, 0.0
    %v8047 = vmax.f32 %v7983, 0.0
    %v8048 = vmax.f32 %v7984, 0.0
    %v8049 = vmax.f32 %v7985, 0.0
    %v8050 = vmax.f32 %v7986, 0.0
    %v8051 = vmax.f32 %v7987, 0.0
    %v8052 = vmax.f32 %v7988, 0.0
    %v8053 = vmax.f32 %v7989, 0.0
    %v8054 = vmax.f32 %v7990, 0.0
    %v8055 = vmax.f32 %v7991, 0.0
    %v8056 = vmax.f32 %v7992, 0.0
    %v8057 = vmax.f32 %v7993, 0.0
    %v8058 = vmax.f32 %v7994, 0.0
    %v8059 = vmax.f32 %v7995, 0.0
    %v8060 = vmax.f32 %v7996, 0.0
    %v8061 = vmax.f32 %v7997, 0.0
    %v8062 = vmax.f32 %v7998, 0.0
    %v8063 = vmax.f32 %v7999, 0.0
    %v8064 = vmax.f32 %v8000, 0.0
    %v8065 = vmax.f32 %v8001, 0.0
    %v8066 = vmax.f32 %v8002, 0.0
    %v8067 = vmax.f32 %v8003, 0.0
    %v8068 = vmax.f32 %v8004, 0.0
    %v8069 = vmax.f32 %v8005, 0.0
    %v8070 = vmax.f32 %v8006, 0.0
    %v8071 = vmax.f32 %v8007, 0.0
    %v8072 = vmax.f32 %v8008, 0.0
    %v8073 = vmax.f32 %v8009, 0.0
    %v8074 = vmax.f32 %v8010, 0.0
    %v8075 = vmax.f32 %v8011, 0.0
    %v8076 = vmax.f32 %v8012, 0.0
    %v8077 = vmax.f32 %v8013, 0.0
    %v8078 = vmax.f32 %v8014, 0.0
    %v8079 = vmax.f32 %v8015, 0.0
    %v8080 = vmax.f32 %v8016, 0.0
    %v8081 = vmax.f32 %v8017, 0.0
    %v8082 = vmax.f32 %v8018, 0.0
    %v8083 = vmax.f32 %v8019, 0.0
    %v8084 = vld [vmem:[%s1] sm:$0xff]
    %v8086 = vcombine.high %v8084, %v8084
    %v8088 = vunpack.c.l.s4 1983009808
    %v8089 = vunpack.c.0.s8 %v8088
    %v8090 = vlaneseq
    %v8091 = vshrl.u32 %v8090, 7
    %v8092 = vsub.s32 %v8089, %v8091
    %v8093 = vrot.slane %v8084, %v8092
    %v8095 = vunpack.c.l.s4 1983009808
    %v8096 = vunpack.c.0.s8 %v8095
    %v8097 = vlaneseq
    %v8098 = vshrl.u32 %v8097, 7
    %v8099 = vsub.s32 %v8096, %v8098
    %v8100 = vrot.slane %v8086, %v8099
    %v8101 = vcombine.high %v8093, %v8093
    %v8102 = vcombine.high %v8100, %v8100
    %8107 = vmatprep.subr.mxu0 0.0
    %8108 = vmatpush1.msra.mxu0 %v8035
    %8109 = vmatprep.subr.mxu0 0.0
    %8110 = vmatpush1.msra.mxu0 %v8034
    %8111 = vmatprep.subr.mxu0 0.0
    %8112 = vmatpush1.msra.mxu0 %v8033
    %8113 = vmatprep.subr.mxu0 0.0
    %8114 = vmatpush1.msra.mxu0 %v8032
    %8115 = vmatprep.subr.mxu0 0.0
    %8116 = vmatpush1.msra.mxu0 %v8031
    %8117 = vmatprep.subr.mxu0 0.0
    %8118 = vmatpush1.msra.mxu0 %v8030
    %8119 = vmatprep.subr.mxu0 0.0
    %8120 = vmatpush1.msra.mxu0 %v8029
    %8121 = vmatprep.subr.mxu0 0.0
    %8122 = vmatpush1.msra.mxu0 %v8028
    %8123 = vmatprep.subr.mxu0 0.0
    %8124 = vmatpush1.msra.mxu0 %v8027
    %8125 = vmatprep.subr.mxu0 0.0
    %8126 = vmatpush1.msra.mxu0 %v8026
    %8127 = vmatprep.subr.mxu0 0.0
    %8128 = vmatpush1.msra.mxu0 %v8025
    %8129 = vmatprep.subr.mxu0 0.0
    %8130 = vmatpush1.msra.mxu0 %v8024
    %8131 = vmatprep.subr.mxu0 0.0
    %8132 = vmatpush1.msra.mxu0 %v8023
    %8133 = vmatprep.subr.mxu0 0.0
    %8134 = vmatpush1.msra.mxu0 %v8022
    %8135 = vmatprep.subr.mxu0 0.0
    %8136 = vmatpush1.msra.mxu0 %v8021
    %8137 = vmatprep.subr.mxu0 0.0
    %8138 = vmatpush1.msra.mxu0 %v8020
    %8139 = vmatprep.subr.mxu0 0.0
    %8140 = vmatpush2.msra.mxu0 %v8051
    %8141 = vmatprep.subr.mxu0 0.0
    %8142 = vmatpush2.msra.mxu0 %v8050
    %8143 = vmatprep.subr.mxu0 0.0
    %8144 = vmatpush2.msra.mxu0 %v8049
    %8145 = vmatprep.subr.mxu0 0.0
    %8146 = vmatpush2.msra.mxu0 %v8048
    %8147 = vmatprep.subr.mxu0 0.0
    %8148 = vmatpush2.msra.mxu0 %v8047
    %8149 = vmatprep.subr.mxu0 0.0
    %8150 = vmatpush2.msra.mxu0 %v8046
    %8151 = vmatprep.subr.mxu0 0.0
    %8152 = vmatpush2.msra.mxu0 %v8045
    %8153 = vmatprep.subr.mxu0 0.0
    %8154 = vmatpush2.msra.mxu0 %v8044
    %8155 = vmatprep.subr.mxu0 0.0
    %8156 = vmatpush2.msra.mxu0 %v8043
    %8157 = vmatprep.subr.mxu0 0.0
    %8158 = vmatpush2.msra.mxu0 %v8042
    %8159 = vmatprep.subr.mxu0 0.0
    %8160 = vmatpush2.msra.mxu0 %v8041
    %8161 = vmatprep.subr.mxu0 0.0
    %8162 = vmatpush2.msra.mxu0 %v8040
    %8163 = vmatprep.subr.mxu0 0.0
    %8164 = vmatpush2.msra.mxu0 %v8039
    %8165 = vmatprep.subr.mxu0 0.0
    %8166 = vmatpush2.msra.mxu0 %v8038
    %8167 = vmatprep.subr.mxu0 0.0
    %8168 = vmatpush2.msra.mxu0 %v8037
    %8169 = vmatprep.subr.mxu0 0.0
    %8170 = vmatpush2.msra.mxu0 %v8036
    %8171 = vmatprep.mubr.f32.mxu0 %v8101
    %8172 = vmatmul.mubr.f32.gmra.mxu0 %v8093
    %v8173 = vpop.f32.mrf.mxu0
    %v8174 = vadd.f32 0.0, %v8173
    %v8175 = vpop.f32.mrf.mxu0
    %8176 = vdwg.mxu0
    %8177 = vmatprep.subr.mxu0 0.0
    %8178 = vmatpush1.msra.mxu0 %v8067
    %8179 = vmatprep.subr.mxu0 0.0
    %8180 = vmatpush1.msra.mxu0 %v8066
    %8181 = vmatprep.subr.mxu0 0.0
    %8182 = vmatpush1.msra.mxu0 %v8065
    %8183 = vmatprep.subr.mxu0 0.0
    %8184 = vmatpush1.msra.mxu0 %v8064
    %8185 = vmatprep.subr.mxu0 0.0
    %8186 = vmatpush1.msra.mxu0 %v8063
    %8187 = vmatprep.subr.mxu0 0.0
    %8188 = vmatpush1.msra.mxu0 %v8062
    %8189 = vmatprep.subr.mxu0 0.0
    %8190 = vmatpush1.msra.mxu0 %v8061
    %8191 = vmatprep.subr.mxu0 0.0
    %8192 = vmatpush1.msra.mxu0 %v8060
    %8193 = vmatprep.subr.mxu0 0.0
    %8194 = vmatpush1.msra.mxu0 %v8059
    %8195 = vmatprep.subr.mxu0 0.0
    %8196 = vmatpush1.msra.mxu0 %v8058
    %8197 = vmatprep.subr.mxu0 0.0
    %8198 = vmatpush1.msra.mxu0 %v8057
    %8199 = vmatprep.subr.mxu0 0.0
    %8200 = vmatpush1.msra.mxu0 %v8056
    %8201 = vmatprep.subr.mxu0 0.0
    %8202 = vmatpush1.msra.mxu0 %v8055
    %8203 = vmatprep.subr.mxu0 0.0
    %8204 = vmatpush1.msra.mxu0 %v8054
    %8205 = vmatprep.subr.mxu0 0.0
    %8206 = vmatpush1.msra.mxu0 %v8053
    %8207 = vmatprep.subr.mxu0 0.0
    %8208 = vmatpush1.msra.mxu0 %v8052
    %8209 = vmatprep.subr.mxu0 0.0
    %8210 = vmatpush2.msra.mxu0 %v8083
    %8211 = vmatprep.subr.mxu0 0.0
    %8212 = vmatpush2.msra.mxu0 %v8082
    %8213 = vmatprep.subr.mxu0 0.0
    %8214 = vmatpush2.msra.mxu0 %v8081
    %8215 = vmatprep.subr.mxu0 0.0
    %8216 = vmatpush2.msra.mxu0 %v8080
    %8217 = vmatprep.subr.mxu0 0.0
    %8218 = vmatpush2.msra.mxu0 %v8079
    %8219 = vmatprep.subr.mxu0 0.0
    %8220 = vmatpush2.msra.mxu0 %v8078
    %8221 = vmatprep.subr.mxu0 0.0
    %8222 = vmatpush2.msra.mxu0 %v8077
    %8223 = vmatprep.subr.mxu0 0.0
    %8224 = vmatpush2.msra.mxu0 %v8076
    %8225 = vmatprep.subr.mxu0 0.0
    %8226 = vmatpush2.msra.mxu0 %v8075
    %8227 = vmatprep.subr.mxu0 0.0
    %8228 = vmatpush2.msra.mxu0 %v8074
    %8229 = vmatprep.subr.mxu0 0.0
    %8230 = vmatpush2.msra.mxu0 %v8073
    %8231 = vmatprep.subr.mxu0 0.0
    %8232 = vmatpush2.msra.mxu0 %v8072
    %8233 = vmatprep.subr.mxu0 0.0
    %8234 = vmatpush2.msra.mxu0 %v8071
    %8235 = vmatprep.subr.mxu0 0.0
    %8236 = vmatpush2.msra.mxu0 %v8070
    %8237 = vmatprep.subr.mxu0 0.0
    %8238 = vmatpush2.msra.mxu0 %v8069
    %8239 = vmatprep.subr.mxu0 0.0
    %8240 = vmatpush2.msra.mxu0 %v8068
    %8241 = vmatprep.mubr.f32.mxu0 %v8102
    %8242 = vmatmul.mubr.f32.gmra.mxu0 %v8100
    %v8243 = vpop.f32.mrf.mxu0
    %v8244 = vadd.f32 %v8174, %v8243
    %v8245 = vpop.f32.mrf.mxu0
    %8246 = vdwg.mxu0
    %v8247 = vld [vmem:[%s8] sm:$0xff]
    %v8248 = vld [vmem:[%s8 + $0x8] sm:$0xff]
    %v8249 = vld [vmem:[%s8 + $0x10] sm:$0xff]
    %v8250 = vld [vmem:[%s8 + $0x18] sm:$0xff]
    %v8251 = vld [vmem:[%s8 + $0x20] sm:$0xff]
    %v8252 = vld [vmem:[%s8 + $0x28] sm:$0xff]
    %v8253 = vld [vmem:[%s8 + $0x30] sm:$0xff]
    %v8254 = vld [vmem:[%s8 + $0x38] sm:$0xff]
    %v8255 = vld [vmem:[%s8 + $0x40] sm:$0xff]
    %v8256 = vld [vmem:[%s8 + $0x48] sm:$0xff]
    %v8257 = vld [vmem:[%s8 + $0x50] sm:$0xff]
    %v8258 = vld [vmem:[%s8 + $0x58] sm:$0xff]
    %v8259 = vld [vmem:[%s8 + $0x60] sm:$0xff]
    %v8260 = vld [vmem:[%s8 + $0x68] sm:$0xff]
    %v8261 = vld [vmem:[%s8 + $0x70] sm:$0xff]
    %v8262 = vld [vmem:[%s8 + $0x78] sm:$0xff]
    %v8263 = vld [vmem:[%s9] sm:$0xff]
    %v8265 = vlaneseq
    %v8266 = vshrl.u32 %v8265, 7
    %v8267 = vsub.s32 0, %v8266
    %v8268 = vrot.slane %v8263, %v8267
    %v8269 = vlaneseq
    %v8270 = vshrl.u32 %v8269, 7
    %v8271 = vsub.s32 1, %v8270
    %v8272 = vrot.slane %v8263, %v8271
    %v8273 = vlaneseq
    %v8274 = vshrl.u32 %v8273, 7
    %v8275 = vsub.s32 2, %v8274
    %v8276 = vrot.slane %v8263, %v8275
    %v8277 = vlaneseq
    %v8278 = vshrl.u32 %v8277, 7
    %v8279 = vsub.s32 3, %v8278
    %v8280 = vrot.slane %v8263, %v8279
    %v8281 = vlaneseq
    %v8282 = vshrl.u32 %v8281, 7
    %v8283 = vsub.s32 4, %v8282
    %v8284 = vrot.slane %v8263, %v8283
    %v8285 = vlaneseq
    %v8286 = vshrl.u32 %v8285, 7
    %v8287 = vsub.s32 5, %v8286
    %v8288 = vrot.slane %v8263, %v8287
    %v8289 = vlaneseq
    %v8290 = vshrl.u32 %v8289, 7
    %v8291 = vsub.s32 6, %v8290
    %v8292 = vrot.slane %v8263, %v8291
    %v8293 = vlaneseq
    %v8294 = vshrl.u32 %v8293, 7
    %v8295 = vsub.s32 7, %v8294
    %v8296 = vrot.slane %v8263, %v8295
    %v8306 = vsel %vm810, %v8244, 0
    %8308 = vmatprep.subr.mxu0 0.0
    %8309 = vmatpush1.msra.mxu0 0.0
    %8310 = vmatprep.subr.mxu0 0.0
    %8311 = vmatpush1.msra.mxu0 0.0
    %8312 = vmatprep.subr.mxu0 0.0
    %8313 = vmatpush1.msra.mxu0 0.0
    %8314 = vmatprep.subr.mxu0 0.0
    %8315 = vmatpush1.msra.mxu0 0.0
    %8316 = vmatprep.subr.mxu0 0.0
    %8317 = vmatpush1.msra.mxu0 0.0
    %8318 = vmatprep.subr.mxu0 0.0
    %8319 = vmatpush1.msra.mxu0 0.0
    %8320 = vmatprep.subr.mxu0 0.0
    %8321 = vmatpush1.msra.mxu0 0.0
    %8322 = vmatprep.subr.mxu0 0.0
    %8323 = vmatpush1.msra.mxu0 0.0
    %8324 = vmatprep.subr.mxu0 0.0
    %8325 = vmatpush1.msra.mxu0 0.0
    %8326 = vmatprep.subr.mxu0 0.0
    %8327 = vmatpush1.msra.mxu0 0.0
    %8328 = vmatprep.subr.mxu0 0.0
    %8329 = vmatpush1.msra.mxu0 0.0
    %8330 = vmatprep.subr.mxu0 0.0
    %8331 = vmatpush1.msra.mxu0 0.0
    %8332 = vmatprep.subr.mxu0 0.0
    %8333 = vmatpush1.msra.mxu0 0.0
    %8334 = vmatprep.subr.mxu0 0.0
    %8335 = vmatpush1.msra.mxu0 0.0
    %8336 = vmatprep.subr.mxu0 %v8256
    %8337 = vmatpush1.msra.mxu0 %v8255
    %8338 = vmatprep.subr.mxu0 %v8248
    %8339 = vmatpush1.msra.mxu0 %v8247
    %8340 = vmatprep.subr.mxu0 0.0
    %8341 = vmatpush2.msra.mxu0 0.0
    %8342 = vmatprep.subr.mxu0 0.0
    %8343 = vmatpush2.msra.mxu0 0.0
    %8344 = vmatprep.subr.mxu0 0.0
    %8345 = vmatpush2.msra.mxu0 0.0
    %8346 = vmatprep.subr.mxu0 0.0
    %8347 = vmatpush2.msra.mxu0 0.0
    %8348 = vmatprep.subr.mxu0 0.0
    %8349 = vmatpush2.msra.mxu0 0.0
    %8350 = vmatprep.subr.mxu0 0.0
    %8351 = vmatpush2.msra.mxu0 0.0
    %8352 = vmatprep.subr.mxu0 0.0
    %8353 = vmatpush2.msra.mxu0 0.0
    %8354 = vmatprep.subr.mxu0 0.0
    %8355 = vmatpush2.msra.mxu0 0.0
    %8356 = vmatprep.subr.mxu0 0.0
    %8357 = vmatpush2.msra.mxu0 0.0
    %8358 = vmatprep.subr.mxu0 0.0
    %8359 = vmatpush2.msra.mxu0 0.0
    %8360 = vmatprep.subr.mxu0 0.0
    %8361 = vmatpush2.msra.mxu0 0.0
    %8362 = vmatprep.subr.mxu0 0.0
    %8363 = vmatpush2.msra.mxu0 0.0
    %8364 = vmatprep.subr.mxu0 0.0
    %8365 = vmatpush2.msra.mxu0 0.0
    %8366 = vmatprep.subr.mxu0 0.0
    %8367 = vmatpush2.msra.mxu0 0.0
    %8368 = vmatprep.subr.mxu0 0.0
    %8369 = vmatpush2.msra.mxu0 0.0
    %8370 = vmatprep.subr.mxu0 0.0
    %8371 = vmatpush2.msra.mxu0 0.0
    %8372 = vmatprep.mubr.f32.mxu0 0.0
    %8373 = vmatmul.mubr.f32.gmra.mxu0 %v8306
    %v8374 = vpop.f32.mrf.mxu0
    %v8375 = vadd.f32 %v8268, %v8374
    %v8376 = vpop.f32.mrf.mxu0
    %v8377 = vadd.f32 %v8272, %v8376
    %8378 = vdwg.mxu0
    %8379 = vmatprep.subr.mxu0 0.0
    %8380 = vmatpush1.msra.mxu0 0.0
    %8381 = vmatprep.subr.mxu0 0.0
    %8382 = vmatpush1.msra.mxu0 0.0
    %8383 = vmatprep.subr.mxu0 0.0
    %8384 = vmatpush1.msra.mxu0 0.0
    %8385 = vmatprep.subr.mxu0 0.0
    %8386 = vmatpush1.msra.mxu0 0.0
    %8387 = vmatprep.subr.mxu0 0.0
    %8388 = vmatpush1.msra.mxu0 0.0
    %8389 = vmatprep.subr.mxu0 0.0
    %8390 = vmatpush1.msra.mxu0 0.0
    %8391 = vmatprep.subr.mxu0 0.0
    %8392 = vmatpush1.msra.mxu0 0.0
    %8393 = vmatprep.subr.mxu0 0.0
    %8394 = vmatpush1.msra.mxu0 0.0
    %8395 = vmatprep.subr.mxu0 0.0
    %8396 = vmatpush1.msra.mxu0 0.0
    %8397 = vmatprep.subr.mxu0 0.0
    %8398 = vmatpush1.msra.mxu0 0.0
    %8399 = vmatprep.subr.mxu0 0.0
    %8400 = vmatpush1.msra.mxu0 0.0
    %8401 = vmatprep.subr.mxu0 0.0
    %8402 = vmatpush1.msra.mxu0 0.0
    %8403 = vmatprep.subr.mxu0 0.0
    %8404 = vmatpush1.msra.mxu0 0.0
    %8405 = vmatprep.subr.mxu0 0.0
    %8406 = vmatpush1.msra.mxu0 0.0
    %8407 = vmatprep.subr.mxu0 %v8258
    %8408 = vmatpush1.msra.mxu0 %v8257
    %8409 = vmatprep.subr.mxu0 %v8250
    %8410 = vmatpush1.msra.mxu0 %v8249
    %8411 = vmatprep.subr.mxu0 0.0
    %8412 = vmatpush2.msra.mxu0 0.0
    %8413 = vmatprep.subr.mxu0 0.0
    %8414 = vmatpush2.msra.mxu0 0.0
    %8415 = vmatprep.subr.mxu0 0.0
    %8416 = vmatpush2.msra.mxu0 0.0
    %8417 = vmatprep.subr.mxu0 0.0
    %8418 = vmatpush2.msra.mxu0 0.0
    %8419 = vmatprep.subr.mxu0 0.0
    %8420 = vmatpush2.msra.mxu0 0.0
    %8421 = vmatprep.subr.mxu0 0.0
    %8422 = vmatpush2.msra.mxu0 0.0
    %8423 = vmatprep.subr.mxu0 0.0
    %8424 = vmatpush2.msra.mxu0 0.0
    %8425 = vmatprep.subr.mxu0 0.0
    %8426 = vmatpush2.msra.mxu0 0.0
    %8427 = vmatprep.subr.mxu0 0.0
    %8428 = vmatpush2.msra.mxu0 0.0
    %8429 = vmatprep.subr.mxu0 0.0
    %8430 = vmatpush2.msra.mxu0 0.0
    %8431 = vmatprep.subr.mxu0 0.0
    %8432 = vmatpush2.msra.mxu0 0.0
    %8433 = vmatprep.subr.mxu0 0.0
    %8434 = vmatpush2.msra.mxu0 0.0
    %8435 = vmatprep.subr.mxu0 0.0
    %8436 = vmatpush2.msra.mxu0 0.0
    %8437 = vmatprep.subr.mxu0 0.0
    %8438 = vmatpush2.msra.mxu0 0.0
    %8439 = vmatprep.subr.mxu0 0.0
    %8440 = vmatpush2.msra.mxu0 0.0
    %8441 = vmatprep.subr.mxu0 0.0
    %8442 = vmatpush2.msra.mxu0 0.0
    %8443 = vmatprep.mubr.f32.mxu0 0.0
    %8444 = vmatmul.mubr.f32.gmra.mxu0 %v8306
    %v8445 = vpop.f32.mrf.mxu0
    %v8446 = vadd.f32 %v8276, %v8445
    %v8447 = vpop.f32.mrf.mxu0
    %v8448 = vadd.f32 %v8280, %v8447
    %8449 = vdwg.mxu0
    %8450 = vmatprep.subr.mxu0 0.0
    %8451 = vmatpush1.msra.mxu0 0.0
    %8452 = vmatprep.subr.mxu0 0.0
    %8453 = vmatpush1.msra.mxu0 0.0
    %8454 = vmatprep.subr.mxu0 0.0
    %8455 = vmatpush1.msra.mxu0 0.0
    %8456 = vmatprep.subr.mxu0 0.0
    %8457 = vmatpush1.msra.mxu0 0.0
    %8458 = vmatprep.subr.mxu0 0.0
    %8459 = vmatpush1.msra.mxu0 0.0
    %8460 = vmatprep.subr.mxu0 0.0
    %8461 = vmatpush1.msra.mxu0 0.0
    %8462 = vmatprep.subr.mxu0 0.0
    %8463 = vmatpush1.msra.mxu0 0.0
    %8464 = vmatprep.subr.mxu0 0.0
    %8465 = vmatpush1.msra.mxu0 0.0
    %8466 = vmatprep.subr.mxu0 0.0
    %8467 = vmatpush1.msra.mxu0 0.0
    %8468 = vmatprep.subr.mxu0 0.0
    %8469 = vmatpush1.msra.mxu0 0.0
    %8470 = vmatprep.subr.mxu0 0.0
    %8471 = vmatpush1.msra.mxu0 0.0
    %8472 = vmatprep.subr.mxu0 0.0
    %8473 = vmatpush1.msra.mxu0 0.0
    %8474 = vmatprep.subr.mxu0 0.0
    %8475 = vmatpush1.msra.mxu0 0.0
    %8476 = vmatprep.subr.mxu0 0.0
    %8477 = vmatpush1.msra.mxu0 0.0
    %8478 = vmatprep.subr.mxu0 %v8260
    %8479 = vmatpush1.msra.mxu0 %v8259
    %8480 = vmatprep.subr.mxu0 %v8252
    %8481 = vmatpush1.msra.mxu0 %v8251
    %8482 = vmatprep.subr.mxu0 0.0
    %8483 = vmatpush2.msra.mxu0 0.0
    %8484 = vmatprep.subr.mxu0 0.0
    %8485 = vmatpush2.msra.mxu0 0.0
    %8486 = vmatprep.subr.mxu0 0.0
    %8487 = vmatpush2.msra.mxu0 0.0
    %8488 = vmatprep.subr.mxu0 0.0
    %8489 = vmatpush2.msra.mxu0 0.0
    %8490 = vmatprep.subr.mxu0 0.0
    %8491 = vmatpush2.msra.mxu0 0.0
    %8492 = vmatprep.subr.mxu0 0.0
    %8493 = vmatpush2.msra.mxu0 0.0
    %8494 = vmatprep.subr.mxu0 0.0
    %8495 = vmatpush2.msra.mxu0 0.0
    %8496 = vmatprep.subr.mxu0 0.0
    %8497 = vmatpush2.msra.mxu0 0.0
    %8498 = vmatprep.subr.mxu0 0.0
    %8499 = vmatpush2.msra.mxu0 0.0
    %8500 = vmatprep.subr.mxu0 0.0
    %8501 = vmatpush2.msra.mxu0 0.0
    %8502 = vmatprep.subr.mxu0 0.0
    %8503 = vmatpush2.msra.mxu0 0.0
    %8504 = vmatprep.subr.mxu0 0.0
    %8505 = vmatpush2.msra.mxu0 0.0
    %8506 = vmatprep.subr.mxu0 0.0
    %8507 = vmatpush2.msra.mxu0 0.0
    %8508 = vmatprep.subr.mxu0 0.0
    %8509 = vmatpush2.msra.mxu0 0.0
    %8510 = vmatprep.subr.mxu0 0.0
    %8511 = vmatpush2.msra.mxu0 0.0
    %8512 = vmatprep.subr.mxu0 0.0
    %8513 = vmatpush2.msra.mxu0 0.0
    %8514 = vmatprep.mubr.f32.mxu0 0.0
    %8515 = vmatmul.mubr.f32.gmra.mxu0 %v8306
    %v8516 = vpop.f32.mrf.mxu0
    %v8517 = vadd.f32 %v8284, %v8516
    %v8518 = vpop.f32.mrf.mxu0
    %v8519 = vadd.f32 %v8288, %v8518
    %8520 = vdwg.mxu0
    %8521 = vmatprep.subr.mxu0 0.0
    %8522 = vmatpush1.msra.mxu0 0.0
    %8523 = vmatprep.subr.mxu0 0.0
    %8524 = vmatpush1.msra.mxu0 0.0
    %8525 = vmatprep.subr.mxu0 0.0
    %8526 = vmatpush1.msra.mxu0 0.0
    %8527 = vmatprep.subr.mxu0 0.0
    %8528 = vmatpush1.msra.mxu0 0.0
    %8529 = vmatprep.subr.mxu0 0.0
    %8530 = vmatpush1.msra.mxu0 0.0
    %8531 = vmatprep.subr.mxu0 0.0
    %8532 = vmatpush1.msra.mxu0 0.0
    %8533 = vmatprep.subr.mxu0 0.0
    %8534 = vmatpush1.msra.mxu0 0.0
    %8535 = vmatprep.subr.mxu0 0.0
    %8536 = vmatpush1.msra.mxu0 0.0
    %8537 = vmatprep.subr.mxu0 0.0
    %8538 = vmatpush1.msra.mxu0 0.0
    %8539 = vmatprep.subr.mxu0 0.0
    %8540 = vmatpush1.msra.mxu0 0.0
    %8541 = vmatprep.subr.mxu0 0.0
    %8542 = vmatpush1.msra.mxu0 0.0
    %8543 = vmatprep.subr.mxu0 0.0
    %8544 = vmatpush1.msra.mxu0 0.0
    %8545 = vmatprep.subr.mxu0 0.0
    %8546 = vmatpush1.msra.mxu0 0.0
    %8547 = vmatprep.subr.mxu0 0.0
    %8548 = vmatpush1.msra.mxu0 0.0
    %8549 = vmatprep.subr.mxu0 %v8262
    %8550 = vmatpush1.msra.mxu0 %v8261
    %8551 = vmatprep.subr.mxu0 %v8254
    %8552 = vmatpush1.msra.mxu0 %v8253
    %8553 = vmatprep.subr.mxu0 0.0
    %8554 = vmatpush2.msra.mxu0 0.0
    %8555 = vmatprep.subr.mxu0 0.0
    %8556 = vmatpush2.msra.mxu0 0.0
    %8557 = vmatprep.subr.mxu0 0.0
    %8558 = vmatpush2.msra.mxu0 0.0
    %8559 = vmatprep.subr.mxu0 0.0
    %8560 = vmatpush2.msra.mxu0 0.0
    %8561 = vmatprep.subr.mxu0 0.0
    %8562 = vmatpush2.msra.mxu0 0.0
    %8563 = vmatprep.subr.mxu0 0.0
    %8564 = vmatpush2.msra.mxu0 0.0
    %8565 = vmatprep.subr.mxu0 0.0
    %8566 = vmatpush2.msra.mxu0 0.0
    %8567 = vmatprep.subr.mxu0 0.0
    %8568 = vmatpush2.msra.mxu0 0.0
    %8569 = vmatprep.subr.mxu0 0.0
    %8570 = vmatpush2.msra.mxu0 0.0
    %8571 = vmatprep.subr.mxu0 0.0
    %8572 = vmatpush2.msra.mxu0 0.0
    %8573 = vmatprep.subr.mxu0 0.0
    %8574 = vmatpush2.msra.mxu0 0.0
    %8575 = vmatprep.subr.mxu0 0.0
    %8576 = vmatpush2.msra.mxu0 0.0
    %8577 = vmatprep.subr.mxu0 0.0
    %8578 = vmatpush2.msra.mxu0 0.0
    %8579 = vmatprep.subr.mxu0 0.0
    %8580 = vmatpush2.msra.mxu0 0.0
    %8581 = vmatprep.subr.mxu0 0.0
    %8582 = vmatpush2.msra.mxu0 0.0
    %8583 = vmatprep.subr.mxu0 0.0
    %8584 = vmatpush2.msra.mxu0 0.0
    %8585 = vmatprep.mubr.f32.mxu0 0.0
    %8586 = vmatmul.mubr.f32.gmra.mxu0 %v8306
    %v8587 = vpop.f32.mrf.mxu0
    %v8588 = vadd.f32 %v8292, %v8587
    %v8589 = vpop.f32.mrf.mxu0
    %v8590 = vadd.f32 %v8296, %v8589
    %8591 = vdwg.mxu0
    %v8600 = vcombine.low %v8375, %v8377
    %v8601 = vcombine.low %v8446, %v8448
    %v8603 = vunpack.c.l.s4 1983009808
    %v8604 = vunpack.c.0.s8 %v8603
    %v8605 = vlaneseq
    %v8606 = vshrl.u32 %v8605, 7
    %v8607 = vsub.s32 %v8604, %v8606
    %v8608 = vrot.slane %v8600, %v8607
    %v8610 = vunpack.c.l.s4 1983009808
    %v8611 = vunpack.c.0.s8 %v8610
    %v8612 = vlaneseq
    %v8613 = vshrl.u32 %v8612, 7
    %v8614 = vsub.s32 %v8611, %v8613
    %v8615 = vrot.slane %v8601, %v8614
    %v8616 = vcombine.low %v8608, %v8615
    %v8617 = vcombine.low %v8517, %v8519
    %v8618 = vcombine.low %v8588, %v8590
    %v8620 = vunpack.c.l.s4 1983009808
    %v8621 = vunpack.c.0.s8 %v8620
    %v8622 = vlaneseq
    %v8623 = vshrl.u32 %v8622, 7
    %v8624 = vsub.s32 %v8621, %v8623
    %v8625 = vrot.slane %v8617, %v8624
    %v8627 = vunpack.c.l.s4 1983009808
    %v8628 = vunpack.c.0.s8 %v8627
    %v8629 = vlaneseq
    %v8630 = vshrl.u32 %v8629, 7
    %v8631 = vsub.s32 %v8628, %v8630
    %v8632 = vrot.slane %v8618, %v8631
    %v8633 = vcombine.low %v8625, %v8632
    %8636 = vst [vmem:[#allocation4] sm:$0xff] %v8616
    %8637 = vst [vmem:[#allocation4 + $0x8] sm:$0xff] %v8633
    %v8638 = vpack.c.bf16 %v8375, %v8375
    %v8639 = vpack.c.bf16 %v8377, %v8377
    %v8640 = vpack.c.bf16 %v8446, %v8446
    %v8641 = vpack.c.bf16 %v8448, %v8448
    %v8642 = vpack.c.bf16 %v8517, %v8517
    %v8643 = vpack.c.bf16 %v8519, %v8519
    %v8644 = vpack.c.bf16 %v8588, %v8588
    %v8645 = vpack.c.bf16 %v8590, %v8590
    %v8646 = vld [vmem:[%s10] sm:$0xff]
    %v8647 = vld [vmem:[%s10 + $0x8] sm:$0xff]
    %v8648 = vld [vmem:[%s10 + $0x10] sm:$0xff]
    %v8649 = vld [vmem:[%s10 + $0x18] sm:$0xff]
    %v8650 = vld [vmem:[%s10 + $0x20] sm:$0xff]
    %v8651 = vld [vmem:[%s10 + $0x28] sm:$0xff]
    %v8652 = vld [vmem:[%s10 + $0x30] sm:$0xff]
    %v8653 = vld [vmem:[%s10 + $0x38] sm:$0xff]
    %v8654 = vld [vmem:[%s10 + $0x40] sm:$0xff]
    %v8655 = vld [vmem:[%s10 + $0x48] sm:$0xff]
    %v8656 = vld [vmem:[%s10 + $0x50] sm:$0xff]
    %v8657 = vld [vmem:[%s10 + $0x58] sm:$0xff]
    %v8658 = vld [vmem:[%s10 + $0x60] sm:$0xff]
    %v8659 = vld [vmem:[%s10 + $0x68] sm:$0xff]
    %v8660 = vld [vmem:[%s10 + $0x70] sm:$0xff]
    %v8661 = vld [vmem:[%s10 + $0x78] sm:$0xff]
    %v8662 = vld [vmem:[%s10 + $0x80] sm:$0xff]
    %v8663 = vld [vmem:[%s10 + $0x88] sm:$0xff]
    %v8664 = vld [vmem:[%s10 + $0x90] sm:$0xff]
    %v8665 = vld [vmem:[%s10 + $0x98] sm:$0xff]
    %v8666 = vld [vmem:[%s10 + $0xa0] sm:$0xff]
    %v8667 = vld [vmem:[%s10 + $0xa8] sm:$0xff]
    %v8668 = vld [vmem:[%s10 + $0xb0] sm:$0xff]
    %v8669 = vld [vmem:[%s10 + $0xb8] sm:$0xff]
    %v8670 = vld [vmem:[%s10 + $0xc0] sm:$0xff]
    %v8671 = vld [vmem:[%s10 + $0xc8] sm:$0xff]
    %v8672 = vld [vmem:[%s10 + $0xd0] sm:$0xff]
    %v8673 = vld [vmem:[%s10 + $0xd8] sm:$0xff]
    %v8674 = vld [vmem:[%s10 + $0xe0] sm:$0xff]
    %v8675 = vld [vmem:[%s10 + $0xe8] sm:$0xff]
    %v8676 = vld [vmem:[%s10 + $0xf0] sm:$0xff]
    %v8677 = vld [vmem:[%s10 + $0xf8] sm:$0xff]
    %v8678 = vld [vmem:[%s10 + $0x100] sm:$0xff]
    %v8679 = vld [vmem:[%s10 + $0x108] sm:$0xff]
    %v8680 = vld [vmem:[%s10 + $0x110] sm:$0xff]
    %v8681 = vld [vmem:[%s10 + $0x118] sm:$0xff]
    %v8682 = vld [vmem:[%s10 + $0x120] sm:$0xff]
    %v8683 = vld [vmem:[%s10 + $0x128] sm:$0xff]
    %v8684 = vld [vmem:[%s10 + $0x130] sm:$0xff]
    %v8685 = vld [vmem:[%s10 + $0x138] sm:$0xff]
    %v8686 = vld [vmem:[%s10 + $0x140] sm:$0xff]
    %v8687 = vld [vmem:[%s10 + $0x148] sm:$0xff]
    %v8688 = vld [vmem:[%s10 + $0x150] sm:$0xff]
    %v8689 = vld [vmem:[%s10 + $0x158] sm:$0xff]
    %v8690 = vld [vmem:[%s10 + $0x160] sm:$0xff]
    %v8691 = vld [vmem:[%s10 + $0x168] sm:$0xff]
    %v8692 = vld [vmem:[%s10 + $0x170] sm:$0xff]
    %v8693 = vld [vmem:[%s10 + $0x178] sm:$0xff]
    %v8694 = vld [vmem:[%s10 + $0x180] sm:$0xff]
    %v8695 = vld [vmem:[%s10 + $0x188] sm:$0xff]
    %v8696 = vld [vmem:[%s10 + $0x190] sm:$0xff]
    %v8697 = vld [vmem:[%s10 + $0x198] sm:$0xff]
    %v8698 = vld [vmem:[%s10 + $0x1a0] sm:$0xff]
    %v8699 = vld [vmem:[%s10 + $0x1a8] sm:$0xff]
    %v8700 = vld [vmem:[%s10 + $0x1b0] sm:$0xff]
    %v8701 = vld [vmem:[%s10 + $0x1b8] sm:$0xff]
    %v8702 = vld [vmem:[%s10 + $0x1c0] sm:$0xff]
    %v8703 = vld [vmem:[%s10 + $0x1c8] sm:$0xff]
    %v8704 = vld [vmem:[%s10 + $0x1d0] sm:$0xff]
    %v8705 = vld [vmem:[%s10 + $0x1d8] sm:$0xff]
    %v8706 = vld [vmem:[%s10 + $0x1e0] sm:$0xff]
    %v8707 = vld [vmem:[%s10 + $0x1e8] sm:$0xff]
    %v8708 = vld [vmem:[%s10 + $0x1f0] sm:$0xff]
    %v8709 = vld [vmem:[%s10 + $0x1f8] sm:$0xff]
    %v8710 = vld [vmem:[%s10 + $0x200] sm:$0xff]
    %v8711 = vld [vmem:[%s10 + $0x208] sm:$0xff]
    %v8712 = vld [vmem:[%s10 + $0x210] sm:$0xff]
    %v8713 = vld [vmem:[%s10 + $0x218] sm:$0xff]
    %v8714 = vld [vmem:[%s10 + $0x220] sm:$0xff]
    %v8715 = vld [vmem:[%s10 + $0x228] sm:$0xff]
    %v8716 = vld [vmem:[%s10 + $0x230] sm:$0xff]
    %v8717 = vld [vmem:[%s10 + $0x238] sm:$0xff]
    %v8718 = vld [vmem:[%s10 + $0x240] sm:$0xff]
    %v8719 = vld [vmem:[%s10 + $0x248] sm:$0xff]
    %v8720 = vld [vmem:[%s10 + $0x250] sm:$0xff]
    %v8721 = vld [vmem:[%s10 + $0x258] sm:$0xff]
    %v8722 = vld [vmem:[%s10 + $0x260] sm:$0xff]
    %v8723 = vld [vmem:[%s10 + $0x268] sm:$0xff]
    %v8724 = vld [vmem:[%s10 + $0x270] sm:$0xff]
    %v8725 = vld [vmem:[%s10 + $0x278] sm:$0xff]
    %v8726 = vld [vmem:[%s10 + $0x280] sm:$0xff]
    %v8727 = vld [vmem:[%s10 + $0x288] sm:$0xff]
    %v8728 = vld [vmem:[%s10 + $0x290] sm:$0xff]
    %v8729 = vld [vmem:[%s10 + $0x298] sm:$0xff]
    %v8730 = vld [vmem:[%s10 + $0x2a0] sm:$0xff]
    %v8731 = vld [vmem:[%s10 + $0x2a8] sm:$0xff]
    %v8732 = vld [vmem:[%s10 + $0x2b0] sm:$0xff]
    %v8733 = vld [vmem:[%s10 + $0x2b8] sm:$0xff]
    %v8734 = vld [vmem:[%s10 + $0x2c0] sm:$0xff]
    %v8735 = vld [vmem:[%s10 + $0x2c8] sm:$0xff]
    %v8736 = vld [vmem:[%s10 + $0x2d0] sm:$0xff]
    %v8737 = vld [vmem:[%s10 + $0x2d8] sm:$0xff]
    %v8738 = vld [vmem:[%s10 + $0x2e0] sm:$0xff]
    %v8739 = vld [vmem:[%s10 + $0x2e8] sm:$0xff]
    %v8740 = vld [vmem:[%s10 + $0x2f0] sm:$0xff]
    %v8741 = vld [vmem:[%s10 + $0x2f8] sm:$0xff]
    %v8742 = vld [vmem:[%s10 + $0x300] sm:$0xff]
    %v8743 = vld [vmem:[%s10 + $0x308] sm:$0xff]
    %v8744 = vld [vmem:[%s10 + $0x310] sm:$0xff]
    %v8745 = vld [vmem:[%s10 + $0x318] sm:$0xff]
    %v8746 = vld [vmem:[%s10 + $0x320] sm:$0xff]
    %v8747 = vld [vmem:[%s10 + $0x328] sm:$0xff]
    %v8748 = vld [vmem:[%s10 + $0x330] sm:$0xff]
    %v8749 = vld [vmem:[%s10 + $0x338] sm:$0xff]
    %v8750 = vld [vmem:[%s10 + $0x340] sm:$0xff]
    %v8751 = vld [vmem:[%s10 + $0x348] sm:$0xff]
    %v8752 = vld [vmem:[%s10 + $0x350] sm:$0xff]
    %v8753 = vld [vmem:[%s10 + $0x358] sm:$0xff]
    %v8754 = vld [vmem:[%s10 + $0x360] sm:$0xff]
    %v8755 = vld [vmem:[%s10 + $0x368] sm:$0xff]
    %v8756 = vld [vmem:[%s10 + $0x370] sm:$0xff]
    %v8757 = vld [vmem:[%s10 + $0x378] sm:$0xff]
    %v8758 = vld [vmem:[%s10 + $0x380] sm:$0xff]
    %v8759 = vld [vmem:[%s10 + $0x388] sm:$0xff]
    %v8760 = vld [vmem:[%s10 + $0x390] sm:$0xff]
    %v8761 = vld [vmem:[%s10 + $0x398] sm:$0xff]
    %v8762 = vld [vmem:[%s10 + $0x3a0] sm:$0xff]
    %v8763 = vld [vmem:[%s10 + $0x3a8] sm:$0xff]
    %v8764 = vld [vmem:[%s10 + $0x3b0] sm:$0xff]
    %v8765 = vld [vmem:[%s10 + $0x3b8] sm:$0xff]
    %v8766 = vld [vmem:[%s10 + $0x3c0] sm:$0xff]
    %v8767 = vld [vmem:[%s10 + $0x3c8] sm:$0xff]
    %v8768 = vld [vmem:[%s10 + $0x3d0] sm:$0xff]
    %v8769 = vld [vmem:[%s10 + $0x3d8] sm:$0xff]
    %v8770 = vld [vmem:[%s10 + $0x3e0] sm:$0xff]
    %v8771 = vld [vmem:[%s10 + $0x3e8] sm:$0xff]
    %v8772 = vld [vmem:[%s10 + $0x3f0] sm:$0xff]
    %v8773 = vld [vmem:[%s10 + $0x3f8] sm:$0xff]
    %v8774 = vld [vmem:[%s10 + $0x400] sm:$0xff]
    %v8775 = vld [vmem:[%s10 + $0x408] sm:$0xff]
    %v8776 = vld [vmem:[%s10 + $0x410] sm:$0xff]
    %v8777 = vld [vmem:[%s10 + $0x418] sm:$0xff]
    %v8778 = vld [vmem:[%s10 + $0x420] sm:$0xff]
    %v8779 = vld [vmem:[%s10 + $0x428] sm:$0xff]
    %v8780 = vld [vmem:[%s10 + $0x430] sm:$0xff]
    %v8781 = vld [vmem:[%s10 + $0x438] sm:$0xff]
    %v8782 = vld [vmem:[%s10 + $0x440] sm:$0xff]
    %v8783 = vld [vmem:[%s10 + $0x448] sm:$0xff]
    %v8784 = vld [vmem:[%s10 + $0x450] sm:$0xff]
    %v8785 = vld [vmem:[%s10 + $0x458] sm:$0xff]
    %v8786 = vld [vmem:[%s10 + $0x460] sm:$0xff]
    %v8787 = vld [vmem:[%s10 + $0x468] sm:$0xff]
    %v8788 = vld [vmem:[%s10 + $0x470] sm:$0xff]
    %v8789 = vld [vmem:[%s10 + $0x478] sm:$0xff]
    %v8790 = vld [vmem:[%s10 + $0x480] sm:$0xff]
    %v8791 = vld [vmem:[%s10 + $0x488] sm:$0xff]
    %v8792 = vld [vmem:[%s10 + $0x490] sm:$0xff]
    %v8793 = vld [vmem:[%s10 + $0x498] sm:$0xff]
    %v8794 = vld [vmem:[%s10 + $0x4a0] sm:$0xff]
    %v8795 = vld [vmem:[%s10 + $0x4a8] sm:$0xff]
    %v8796 = vld [vmem:[%s10 + $0x4b0] sm:$0xff]
    %v8797 = vld [vmem:[%s10 + $0x4b8] sm:$0xff]
    %v8798 = vld [vmem:[%s10 + $0x4c0] sm:$0xff]
    %v8799 = vld [vmem:[%s10 + $0x4c8] sm:$0xff]
    %v8800 = vld [vmem:[%s10 + $0x4d0] sm:$0xff]
    %v8801 = vld [vmem:[%s10 + $0x4d8] sm:$0xff]
    %v8802 = vld [vmem:[%s10 + $0x4e0] sm:$0xff]
    %v8803 = vld [vmem:[%s10 + $0x4e8] sm:$0xff]
    %v8804 = vld [vmem:[%s10 + $0x4f0] sm:$0xff]
    %v8805 = vld [vmem:[%s10 + $0x4f8] sm:$0xff]
    %v8806 = vld [vmem:[%s10 + $0x500] sm:$0xff]
    %v8807 = vld [vmem:[%s10 + $0x508] sm:$0xff]
    %v8808 = vld [vmem:[%s10 + $0x510] sm:$0xff]
    %v8809 = vld [vmem:[%s10 + $0x518] sm:$0xff]
    %v8810 = vld [vmem:[%s10 + $0x520] sm:$0xff]
    %v8811 = vld [vmem:[%s10 + $0x528] sm:$0xff]
    %v8812 = vld [vmem:[%s10 + $0x530] sm:$0xff]
    %v8813 = vld [vmem:[%s10 + $0x538] sm:$0xff]
    %v8814 = vld [vmem:[%s10 + $0x540] sm:$0xff]
    %v8815 = vld [vmem:[%s10 + $0x548] sm:$0xff]
    %v8816 = vld [vmem:[%s10 + $0x550] sm:$0xff]
    %v8817 = vld [vmem:[%s10 + $0x558] sm:$0xff]
    %v8818 = vld [vmem:[%s10 + $0x560] sm:$0xff]
    %v8819 = vld [vmem:[%s10 + $0x568] sm:$0xff]
    %v8820 = vld [vmem:[%s10 + $0x570] sm:$0xff]
    %v8821 = vld [vmem:[%s10 + $0x578] sm:$0xff]
    %v8822 = vld [vmem:[%s10 + $0x580] sm:$0xff]
    %v8823 = vld [vmem:[%s10 + $0x588] sm:$0xff]
    %v8824 = vld [vmem:[%s10 + $0x590] sm:$0xff]
    %v8825 = vld [vmem:[%s10 + $0x598] sm:$0xff]
    %v8826 = vld [vmem:[%s10 + $0x5a0] sm:$0xff]
    %v8827 = vld [vmem:[%s10 + $0x5a8] sm:$0xff]
    %v8828 = vld [vmem:[%s10 + $0x5b0] sm:$0xff]
    %v8829 = vld [vmem:[%s10 + $0x5b8] sm:$0xff]
    %v8830 = vld [vmem:[%s10 + $0x5c0] sm:$0xff]
    %v8831 = vld [vmem:[%s10 + $0x5c8] sm:$0xff]
    %v8832 = vld [vmem:[%s10 + $0x5d0] sm:$0xff]
    %v8833 = vld [vmem:[%s10 + $0x5d8] sm:$0xff]
    %v8834 = vld [vmem:[%s10 + $0x5e0] sm:$0xff]
    %v8835 = vld [vmem:[%s10 + $0x5e8] sm:$0xff]
    %v8836 = vld [vmem:[%s10 + $0x5f0] sm:$0xff]
    %v8837 = vld [vmem:[%s10 + $0x5f8] sm:$0xff]
    %v8838 = vld [vmem:[%s10 + $0x600] sm:$0xff]
    %v8839 = vld [vmem:[%s10 + $0x608] sm:$0xff]
    %v8840 = vld [vmem:[%s10 + $0x610] sm:$0xff]
    %v8841 = vld [vmem:[%s10 + $0x618] sm:$0xff]
    %v8842 = vld [vmem:[%s10 + $0x620] sm:$0xff]
    %v8843 = vld [vmem:[%s10 + $0x628] sm:$0xff]
    %v8844 = vld [vmem:[%s10 + $0x630] sm:$0xff]
    %v8845 = vld [vmem:[%s10 + $0x638] sm:$0xff]
    %v8846 = vld [vmem:[%s10 + $0x640] sm:$0xff]
    %v8847 = vld [vmem:[%s10 + $0x648] sm:$0xff]
    %v8848 = vld [vmem:[%s10 + $0x650] sm:$0xff]
    %v8849 = vld [vmem:[%s10 + $0x658] sm:$0xff]
    %v8850 = vld [vmem:[%s10 + $0x660] sm:$0xff]
    %v8851 = vld [vmem:[%s10 + $0x668] sm:$0xff]
    %v8852 = vld [vmem:[%s10 + $0x670] sm:$0xff]
    %v8853 = vld [vmem:[%s10 + $0x678] sm:$0xff]
    %v8854 = vld [vmem:[%s10 + $0x680] sm:$0xff]
    %v8855 = vld [vmem:[%s10 + $0x688] sm:$0xff]
    %v8856 = vld [vmem:[%s10 + $0x690] sm:$0xff]
    %v8857 = vld [vmem:[%s10 + $0x698] sm:$0xff]
    %v8858 = vld [vmem:[%s10 + $0x6a0] sm:$0xff]
    %v8859 = vld [vmem:[%s10 + $0x6a8] sm:$0xff]
    %v8860 = vld [vmem:[%s10 + $0x6b0] sm:$0xff]
    %v8861 = vld [vmem:[%s10 + $0x6b8] sm:$0xff]
    %v8862 = vld [vmem:[%s10 + $0x6c0] sm:$0xff]
    %v8863 = vld [vmem:[%s10 + $0x6c8] sm:$0xff]
    %v8864 = vld [vmem:[%s10 + $0x6d0] sm:$0xff]
    %v8865 = vld [vmem:[%s10 + $0x6d8] sm:$0xff]
    %v8866 = vld [vmem:[%s10 + $0x6e0] sm:$0xff]
    %v8867 = vld [vmem:[%s10 + $0x6e8] sm:$0xff]
    %v8868 = vld [vmem:[%s10 + $0x6f0] sm:$0xff]
    %v8869 = vld [vmem:[%s10 + $0x6f8] sm:$0xff]
    %v8870 = vld [vmem:[%s10 + $0x700] sm:$0xff]
    %v8871 = vld [vmem:[%s10 + $0x708] sm:$0xff]
    %v8872 = vld [vmem:[%s10 + $0x710] sm:$0xff]
    %v8873 = vld [vmem:[%s10 + $0x718] sm:$0xff]
    %v8874 = vld [vmem:[%s10 + $0x720] sm:$0xff]
    %v8875 = vld [vmem:[%s10 + $0x728] sm:$0xff]
    %v8876 = vld [vmem:[%s10 + $0x730] sm:$0xff]
    %v8877 = vld [vmem:[%s10 + $0x738] sm:$0xff]
    %v8878 = vld [vmem:[%s10 + $0x740] sm:$0xff]
    %v8879 = vld [vmem:[%s10 + $0x748] sm:$0xff]
    %v8880 = vld [vmem:[%s10 + $0x750] sm:$0xff]
    %v8881 = vld [vmem:[%s10 + $0x758] sm:$0xff]
    %v8882 = vld [vmem:[%s10 + $0x760] sm:$0xff]
    %v8883 = vld [vmem:[%s10 + $0x768] sm:$0xff]
    %v8884 = vld [vmem:[%s10 + $0x770] sm:$0xff]
    %v8885 = vld [vmem:[%s10 + $0x778] sm:$0xff]
    %v8886 = vld [vmem:[%s10 + $0x780] sm:$0xff]
    %v8887 = vld [vmem:[%s10 + $0x788] sm:$0xff]
    %v8888 = vld [vmem:[%s10 + $0x790] sm:$0xff]
    %v8889 = vld [vmem:[%s10 + $0x798] sm:$0xff]
    %v8890 = vld [vmem:[%s10 + $0x7a0] sm:$0xff]
    %v8891 = vld [vmem:[%s10 + $0x7a8] sm:$0xff]
    %v8892 = vld [vmem:[%s10 + $0x7b0] sm:$0xff]
    %v8893 = vld [vmem:[%s10 + $0x7b8] sm:$0xff]
    %v8894 = vld [vmem:[%s10 + $0x7c0] sm:$0xff]
    %v8895 = vld [vmem:[%s10 + $0x7c8] sm:$0xff]
    %v8896 = vld [vmem:[%s10 + $0x7d0] sm:$0xff]
    %v8897 = vld [vmem:[%s10 + $0x7d8] sm:$0xff]
    %v8898 = vld [vmem:[%s10 + $0x7e0] sm:$0xff]
    %v8899 = vld [vmem:[%s10 + $0x7e8] sm:$0xff]
    %v8900 = vld [vmem:[%s10 + $0x7f0] sm:$0xff]
    %v8901 = vld [vmem:[%s10 + $0x7f8] sm:$0xff]
    %v8902 = vld [vmem:[%s10 + $0x800] sm:$0xff]
    %v8903 = vld [vmem:[%s10 + $0x808] sm:$0xff]
    %v8904 = vld [vmem:[%s10 + $0x810] sm:$0xff]
    %v8905 = vld [vmem:[%s10 + $0x818] sm:$0xff]
    %v8906 = vld [vmem:[%s10 + $0x820] sm:$0xff]
    %v8907 = vld [vmem:[%s10 + $0x828] sm:$0xff]
    %v8908 = vld [vmem:[%s10 + $0x830] sm:$0xff]
    %v8909 = vld [vmem:[%s10 + $0x838] sm:$0xff]
    %v8910 = vld [vmem:[%s10 + $0x840] sm:$0xff]
    %v8911 = vld [vmem:[%s10 + $0x848] sm:$0xff]
    %v8912 = vld [vmem:[%s10 + $0x850] sm:$0xff]
    %v8913 = vld [vmem:[%s10 + $0x858] sm:$0xff]
    %v8914 = vld [vmem:[%s10 + $0x860] sm:$0xff]
    %v8915 = vld [vmem:[%s10 + $0x868] sm:$0xff]
    %v8916 = vld [vmem:[%s10 + $0x870] sm:$0xff]
    %v8917 = vld [vmem:[%s10 + $0x878] sm:$0xff]
    %v8918 = vld [vmem:[%s10 + $0x880] sm:$0xff]
    %v8919 = vld [vmem:[%s10 + $0x888] sm:$0xff]
    %v8920 = vld [vmem:[%s10 + $0x890] sm:$0xff]
    %v8921 = vld [vmem:[%s10 + $0x898] sm:$0xff]
    %v8922 = vld [vmem:[%s10 + $0x8a0] sm:$0xff]
    %v8923 = vld [vmem:[%s10 + $0x8a8] sm:$0xff]
    %v8924 = vld [vmem:[%s10 + $0x8b0] sm:$0xff]
    %v8925 = vld [vmem:[%s10 + $0x8b8] sm:$0xff]
    %v8926 = vld [vmem:[%s10 + $0x8c0] sm:$0xff]
    %v8927 = vld [vmem:[%s10 + $0x8c8] sm:$0xff]
    %v8928 = vld [vmem:[%s10 + $0x8d0] sm:$0xff]
    %v8929 = vld [vmem:[%s10 + $0x8d8] sm:$0xff]
    %v8930 = vld [vmem:[%s10 + $0x8e0] sm:$0xff]
    %v8931 = vld [vmem:[%s10 + $0x8e8] sm:$0xff]
    %v8932 = vld [vmem:[%s10 + $0x8f0] sm:$0xff]
    %v8933 = vld [vmem:[%s10 + $0x8f8] sm:$0xff]
    %v8934 = vld [vmem:[%s10 + $0x900] sm:$0xff]
    %v8935 = vld [vmem:[%s10 + $0x908] sm:$0xff]
    %v8936 = vld [vmem:[%s10 + $0x910] sm:$0xff]
    %v8937 = vld [vmem:[%s10 + $0x918] sm:$0xff]
    %v8938 = vld [vmem:[%s10 + $0x920] sm:$0xff]
    %v8939 = vld [vmem:[%s10 + $0x928] sm:$0xff]
    %v8940 = vld [vmem:[%s10 + $0x930] sm:$0xff]
    %v8941 = vld [vmem:[%s10 + $0x938] sm:$0xff]
    %v8942 = vld [vmem:[%s10 + $0x940] sm:$0xff]
    %v8943 = vld [vmem:[%s10 + $0x948] sm:$0xff]
    %v8944 = vld [vmem:[%s10 + $0x950] sm:$0xff]
    %v8945 = vld [vmem:[%s10 + $0x958] sm:$0xff]
    %v8946 = vld [vmem:[%s10 + $0x960] sm:$0xff]
    %v8947 = vld [vmem:[%s10 + $0x968] sm:$0xff]
    %v8948 = vld [vmem:[%s10 + $0x970] sm:$0xff]
    %v8949 = vld [vmem:[%s10 + $0x978] sm:$0xff]
    %v8950 = vld [vmem:[%s10 + $0x980] sm:$0xff]
    %v8951 = vld [vmem:[%s10 + $0x988] sm:$0xff]
    %v8952 = vld [vmem:[%s10 + $0x990] sm:$0xff]
    %v8953 = vld [vmem:[%s10 + $0x998] sm:$0xff]
    %v8954 = vld [vmem:[%s10 + $0x9a0] sm:$0xff]
    %v8955 = vld [vmem:[%s10 + $0x9a8] sm:$0xff]
    %v8956 = vld [vmem:[%s10 + $0x9b0] sm:$0xff]
    %v8957 = vld [vmem:[%s10 + $0x9b8] sm:$0xff]
    %v8958 = vld [vmem:[%s10 + $0x9c0] sm:$0xff]
    %v8959 = vld [vmem:[%s10 + $0x9c8] sm:$0xff]
    %v8960 = vld [vmem:[%s10 + $0x9d0] sm:$0xff]
    %v8961 = vld [vmem:[%s10 + $0x9d8] sm:$0xff]
    %v8962 = vld [vmem:[%s10 + $0x9e0] sm:$0xff]
    %v8963 = vld [vmem:[%s10 + $0x9e8] sm:$0xff]
    %v8964 = vld [vmem:[%s10 + $0x9f0] sm:$0xff]
    %v8965 = vld [vmem:[%s10 + $0x9f8] sm:$0xff]
    %v8966 = vld [vmem:[%s10 + $0xa00] sm:$0xff]
    %v8967 = vld [vmem:[%s10 + $0xa08] sm:$0xff]
    %v8968 = vld [vmem:[%s10 + $0xa10] sm:$0xff]
    %v8969 = vld [vmem:[%s10 + $0xa18] sm:$0xff]
    %v8970 = vld [vmem:[%s10 + $0xa20] sm:$0xff]
    %v8971 = vld [vmem:[%s10 + $0xa28] sm:$0xff]
    %v8972 = vld [vmem:[%s10 + $0xa30] sm:$0xff]
    %v8973 = vld [vmem:[%s10 + $0xa38] sm:$0xff]
    %v8974 = vld [vmem:[%s10 + $0xa40] sm:$0xff]
    %v8975 = vld [vmem:[%s10 + $0xa48] sm:$0xff]
    %v8976 = vld [vmem:[%s10 + $0xa50] sm:$0xff]
    %v8977 = vld [vmem:[%s10 + $0xa58] sm:$0xff]
    %v8978 = vld [vmem:[%s10 + $0xa60] sm:$0xff]
    %v8979 = vld [vmem:[%s10 + $0xa68] sm:$0xff]
    %v8980 = vld [vmem:[%s10 + $0xa70] sm:$0xff]
    %v8981 = vld [vmem:[%s10 + $0xa78] sm:$0xff]
    %v8982 = vld [vmem:[%s10 + $0xa80] sm:$0xff]
    %v8983 = vld [vmem:[%s10 + $0xa88] sm:$0xff]
    %v8984 = vld [vmem:[%s10 + $0xa90] sm:$0xff]
    %v8985 = vld [vmem:[%s10 + $0xa98] sm:$0xff]
    %v8986 = vld [vmem:[%s10 + $0xaa0] sm:$0xff]
    %v8987 = vld [vmem:[%s10 + $0xaa8] sm:$0xff]
    %v8988 = vld [vmem:[%s10 + $0xab0] sm:$0xff]
    %v8989 = vld [vmem:[%s10 + $0xab8] sm:$0xff]
    %v8990 = vld [vmem:[%s10 + $0xac0] sm:$0xff]
    %v8991 = vld [vmem:[%s10 + $0xac8] sm:$0xff]
    %v8992 = vld [vmem:[%s10 + $0xad0] sm:$0xff]
    %v8993 = vld [vmem:[%s10 + $0xad8] sm:$0xff]
    %v8994 = vld [vmem:[%s10 + $0xae0] sm:$0xff]
    %v8995 = vld [vmem:[%s10 + $0xae8] sm:$0xff]
    %v8996 = vld [vmem:[%s10 + $0xaf0] sm:$0xff]
    %v8997 = vld [vmem:[%s10 + $0xaf8] sm:$0xff]
    %v8998 = vld [vmem:[%s10 + $0xb00] sm:$0xff]
    %v8999 = vld [vmem:[%s10 + $0xb08] sm:$0xff]
    %v9000 = vld [vmem:[%s10 + $0xb10] sm:$0xff]
    %v9001 = vld [vmem:[%s10 + $0xb18] sm:$0xff]
    %v9002 = vld [vmem:[%s10 + $0xb20] sm:$0xff]
    %v9003 = vld [vmem:[%s10 + $0xb28] sm:$0xff]
    %v9004 = vld [vmem:[%s10 + $0xb30] sm:$0xff]
    %v9005 = vld [vmem:[%s10 + $0xb38] sm:$0xff]
    %v9006 = vld [vmem:[%s10 + $0xb40] sm:$0xff]
    %v9007 = vld [vmem:[%s10 + $0xb48] sm:$0xff]
    %v9008 = vld [vmem:[%s10 + $0xb50] sm:$0xff]
    %v9009 = vld [vmem:[%s10 + $0xb58] sm:$0xff]
    %v9010 = vld [vmem:[%s10 + $0xb60] sm:$0xff]
    %v9011 = vld [vmem:[%s10 + $0xb68] sm:$0xff]
    %v9012 = vld [vmem:[%s10 + $0xb70] sm:$0xff]
    %v9013 = vld [vmem:[%s10 + $0xb78] sm:$0xff]
    %v9014 = vld [vmem:[%s10 + $0xb80] sm:$0xff]
    %v9015 = vld [vmem:[%s10 + $0xb88] sm:$0xff]
    %v9016 = vld [vmem:[%s10 + $0xb90] sm:$0xff]
    %v9017 = vld [vmem:[%s10 + $0xb98] sm:$0xff]
    %v9018 = vld [vmem:[%s10 + $0xba0] sm:$0xff]
    %v9019 = vld [vmem:[%s10 + $0xba8] sm:$0xff]
    %v9020 = vld [vmem:[%s10 + $0xbb0] sm:$0xff]
    %v9021 = vld [vmem:[%s10 + $0xbb8] sm:$0xff]
    %v9022 = vld [vmem:[%s10 + $0xbc0] sm:$0xff]
    %v9023 = vld [vmem:[%s10 + $0xbc8] sm:$0xff]
    %v9024 = vld [vmem:[%s10 + $0xbd0] sm:$0xff]
    %v9025 = vld [vmem:[%s10 + $0xbd8] sm:$0xff]
    %v9026 = vld [vmem:[%s10 + $0xbe0] sm:$0xff]
    %v9027 = vld [vmem:[%s10 + $0xbe8] sm:$0xff]
    %v9028 = vld [vmem:[%s10 + $0xbf0] sm:$0xff]
    %v9029 = vld [vmem:[%s10 + $0xbf8] sm:$0xff]
    %v9030 = vld [vmem:[%s10 + $0xc00] sm:$0xff]
    %v9031 = vld [vmem:[%s10 + $0xc08] sm:$0xff]
    %v9032 = vld [vmem:[%s10 + $0xc10] sm:$0xff]
    %v9033 = vld [vmem:[%s10 + $0xc18] sm:$0xff]
    %v9034 = vld [vmem:[%s10 + $0xc20] sm:$0xff]
    %v9035 = vld [vmem:[%s10 + $0xc28] sm:$0xff]
    %v9036 = vld [vmem:[%s10 + $0xc30] sm:$0xff]
    %v9037 = vld [vmem:[%s10 + $0xc38] sm:$0xff]
    %v9038 = vld [vmem:[%s10 + $0xc40] sm:$0xff]
    %v9039 = vld [vmem:[%s10 + $0xc48] sm:$0xff]
    %v9040 = vld [vmem:[%s10 + $0xc50] sm:$0xff]
    %v9041 = vld [vmem:[%s10 + $0xc58] sm:$0xff]
    %v9042 = vld [vmem:[%s10 + $0xc60] sm:$0xff]
    %v9043 = vld [vmem:[%s10 + $0xc68] sm:$0xff]
    %v9044 = vld [vmem:[%s10 + $0xc70] sm:$0xff]
    %v9045 = vld [vmem:[%s10 + $0xc78] sm:$0xff]
    %v9046 = vld [vmem:[%s10 + $0xc80] sm:$0xff]
    %v9047 = vld [vmem:[%s10 + $0xc88] sm:$0xff]
    %v9048 = vld [vmem:[%s10 + $0xc90] sm:$0xff]
    %v9049 = vld [vmem:[%s10 + $0xc98] sm:$0xff]
    %v9050 = vld [vmem:[%s10 + $0xca0] sm:$0xff]
    %v9051 = vld [vmem:[%s10 + $0xca8] sm:$0xff]
    %v9052 = vld [vmem:[%s10 + $0xcb0] sm:$0xff]
    %v9053 = vld [vmem:[%s10 + $0xcb8] sm:$0xff]
    %v9054 = vld [vmem:[%s10 + $0xcc0] sm:$0xff]
    %v9055 = vld [vmem:[%s10 + $0xcc8] sm:$0xff]
    %v9056 = vld [vmem:[%s10 + $0xcd0] sm:$0xff]
    %v9057 = vld [vmem:[%s10 + $0xcd8] sm:$0xff]
    %v9058 = vld [vmem:[%s10 + $0xce0] sm:$0xff]
    %v9059 = vld [vmem:[%s10 + $0xce8] sm:$0xff]
    %v9060 = vld [vmem:[%s10 + $0xcf0] sm:$0xff]
    %v9061 = vld [vmem:[%s10 + $0xcf8] sm:$0xff]
    %v9062 = vld [vmem:[%s10 + $0xd00] sm:$0xff]
    %v9063 = vld [vmem:[%s10 + $0xd08] sm:$0xff]
    %v9064 = vld [vmem:[%s10 + $0xd10] sm:$0xff]
    %v9065 = vld [vmem:[%s10 + $0xd18] sm:$0xff]
    %v9066 = vld [vmem:[%s10 + $0xd20] sm:$0xff]
    %v9067 = vld [vmem:[%s10 + $0xd28] sm:$0xff]
    %v9068 = vld [vmem:[%s10 + $0xd30] sm:$0xff]
    %v9069 = vld [vmem:[%s10 + $0xd38] sm:$0xff]
    %v9070 = vld [vmem:[%s10 + $0xd40] sm:$0xff]
    %v9071 = vld [vmem:[%s10 + $0xd48] sm:$0xff]
    %v9072 = vld [vmem:[%s10 + $0xd50] sm:$0xff]
    %v9073 = vld [vmem:[%s10 + $0xd58] sm:$0xff]
    %v9074 = vld [vmem:[%s10 + $0xd60] sm:$0xff]
    %v9075 = vld [vmem:[%s10 + $0xd68] sm:$0xff]
    %v9076 = vld [vmem:[%s10 + $0xd70] sm:$0xff]
    %v9077 = vld [vmem:[%s10 + $0xd78] sm:$0xff]
    %v9078 = vld [vmem:[%s10 + $0xd80] sm:$0xff]
    %v9079 = vld [vmem:[%s10 + $0xd88] sm:$0xff]
    %v9080 = vld [vmem:[%s10 + $0xd90] sm:$0xff]
    %v9081 = vld [vmem:[%s10 + $0xd98] sm:$0xff]
    %v9082 = vld [vmem:[%s10 + $0xda0] sm:$0xff]
    %v9083 = vld [vmem:[%s10 + $0xda8] sm:$0xff]
    %v9084 = vld [vmem:[%s10 + $0xdb0] sm:$0xff]
    %v9085 = vld [vmem:[%s10 + $0xdb8] sm:$0xff]
    %v9086 = vld [vmem:[%s10 + $0xdc0] sm:$0xff]
    %v9087 = vld [vmem:[%s10 + $0xdc8] sm:$0xff]
    %v9088 = vld [vmem:[%s10 + $0xdd0] sm:$0xff]
    %v9089 = vld [vmem:[%s10 + $0xdd8] sm:$0xff]
    %v9090 = vld [vmem:[%s10 + $0xde0] sm:$0xff]
    %v9091 = vld [vmem:[%s10 + $0xde8] sm:$0xff]
    %v9092 = vld [vmem:[%s10 + $0xdf0] sm:$0xff]
    %v9093 = vld [vmem:[%s10 + $0xdf8] sm:$0xff]
    %v9094 = vld [vmem:[%s10 + $0xe00] sm:$0xff]
    %v9095 = vld [vmem:[%s10 + $0xe08] sm:$0xff]
    %v9096 = vld [vmem:[%s10 + $0xe10] sm:$0xff]
    %v9097 = vld [vmem:[%s10 + $0xe18] sm:$0xff]
    %v9098 = vld [vmem:[%s10 + $0xe20] sm:$0xff]
    %v9099 = vld [vmem:[%s10 + $0xe28] sm:$0xff]
    %v9100 = vld [vmem:[%s10 + $0xe30] sm:$0xff]
    %v9101 = vld [vmem:[%s10 + $0xe38] sm:$0xff]
    %v9102 = vld [vmem:[%s10 + $0xe40] sm:$0xff]
    %v9103 = vld [vmem:[%s10 + $0xe48] sm:$0xff]
    %v9104 = vld [vmem:[%s10 + $0xe50] sm:$0xff]
    %v9105 = vld [vmem:[%s10 + $0xe58] sm:$0xff]
    %v9106 = vld [vmem:[%s10 + $0xe60] sm:$0xff]
    %v9107 = vld [vmem:[%s10 + $0xe68] sm:$0xff]
    %v9108 = vld [vmem:[%s10 + $0xe70] sm:$0xff]
    %v9109 = vld [vmem:[%s10 + $0xe78] sm:$0xff]
    %v9110 = vld [vmem:[%s10 + $0xe80] sm:$0xff]
    %v9111 = vld [vmem:[%s10 + $0xe88] sm:$0xff]
    %v9112 = vld [vmem:[%s10 + $0xe90] sm:$0xff]
    %v9113 = vld [vmem:[%s10 + $0xe98] sm:$0xff]
    %v9114 = vld [vmem:[%s10 + $0xea0] sm:$0xff]
    %v9115 = vld [vmem:[%s10 + $0xea8] sm:$0xff]
    %v9116 = vld [vmem:[%s10 + $0xeb0] sm:$0xff]
    %v9117 = vld [vmem:[%s10 + $0xeb8] sm:$0xff]
    %v9118 = vld [vmem:[%s10 + $0xec0] sm:$0xff]
    %v9119 = vld [vmem:[%s10 + $0xec8] sm:$0xff]
    %v9120 = vld [vmem:[%s10 + $0xed0] sm:$0xff]
    %v9121 = vld [vmem:[%s10 + $0xed8] sm:$0xff]
    %v9122 = vld [vmem:[%s10 + $0xee0] sm:$0xff]
    %v9123 = vld [vmem:[%s10 + $0xee8] sm:$0xff]
    %v9124 = vld [vmem:[%s10 + $0xef0] sm:$0xff]
    %v9125 = vld [vmem:[%s10 + $0xef8] sm:$0xff]
    %v9126 = vld [vmem:[%s10 + $0xf00] sm:$0xff]
    %v9127 = vld [vmem:[%s10 + $0xf08] sm:$0xff]
    %v9128 = vld [vmem:[%s10 + $0xf10] sm:$0xff]
    %v9129 = vld [vmem:[%s10 + $0xf18] sm:$0xff]
    %v9130 = vld [vmem:[%s10 + $0xf20] sm:$0xff]
    %v9131 = vld [vmem:[%s10 + $0xf28] sm:$0xff]
    %v9132 = vld [vmem:[%s10 + $0xf30] sm:$0xff]
    %v9133 = vld [vmem:[%s10 + $0xf38] sm:$0xff]
    %v9134 = vld [vmem:[%s10 + $0xf40] sm:$0xff]
    %v9135 = vld [vmem:[%s10 + $0xf48] sm:$0xff]
    %v9136 = vld [vmem:[%s10 + $0xf50] sm:$0xff]
    %v9137 = vld [vmem:[%s10 + $0xf58] sm:$0xff]
    %v9138 = vld [vmem:[%s10 + $0xf60] sm:$0xff]
    %v9139 = vld [vmem:[%s10 + $0xf68] sm:$0xff]
    %v9140 = vld [vmem:[%s10 + $0xf70] sm:$0xff]
    %v9141 = vld [vmem:[%s10 + $0xf78] sm:$0xff]
    %v9142 = vld [vmem:[%s10 + $0xf80] sm:$0xff]
    %v9143 = vld [vmem:[%s10 + $0xf88] sm:$0xff]
    %v9144 = vld [vmem:[%s10 + $0xf90] sm:$0xff]
    %v9145 = vld [vmem:[%s10 + $0xf98] sm:$0xff]
    %v9146 = vld [vmem:[%s10 + $0xfa0] sm:$0xff]
    %v9147 = vld [vmem:[%s10 + $0xfa8] sm:$0xff]
    %v9148 = vld [vmem:[%s10 + $0xfb0] sm:$0xff]
    %v9149 = vld [vmem:[%s10 + $0xfb8] sm:$0xff]
    %v9150 = vld [vmem:[%s10 + $0xfc0] sm:$0xff]
    %v9151 = vld [vmem:[%s10 + $0xfc8] sm:$0xff]
    %v9152 = vld [vmem:[%s10 + $0xfd0] sm:$0xff]
    %v9153 = vld [vmem:[%s10 + $0xfd8] sm:$0xff]
    %v9154 = vld [vmem:[%s10 + $0xfe0] sm:$0xff]
    %v9155 = vld [vmem:[%s10 + $0xfe8] sm:$0xff]
    %v9156 = vld [vmem:[%s10 + $0xff0] sm:$0xff]
    %v9157 = vld [vmem:[%s10 + $0xff8] sm:$0xff]
    %v9158 = vld [vmem:[%s11] sm:$0xff]
    %v9160 = vlaneseq
    %v9161 = vshrl.u32 %v9160, 7
    %v9162 = vsub.s32 0, %v9161
    %v9163 = vrot.slane %v9158, %v9162
    %v9164 = vlaneseq
    %v9165 = vshrl.u32 %v9164, 7
    %v9166 = vsub.s32 1, %v9165
    %v9167 = vrot.slane %v9158, %v9166
    %v9168 = vlaneseq
    %v9169 = vshrl.u32 %v9168, 7
    %v9170 = vsub.s32 2, %v9169
    %v9171 = vrot.slane %v9158, %v9170
    %v9172 = vlaneseq
    %v9173 = vshrl.u32 %v9172, 7
    %v9174 = vsub.s32 3, %v9173
    %v9175 = vrot.slane %v9158, %v9174
    %v9176 = vlaneseq
    %v9177 = vshrl.u32 %v9176, 7
    %v9178 = vsub.s32 4, %v9177
    %v9179 = vrot.slane %v9158, %v9178
    %v9180 = vlaneseq
    %v9181 = vshrl.u32 %v9180, 7
    %v9182 = vsub.s32 5, %v9181
    %v9183 = vrot.slane %v9158, %v9182
    %v9184 = vlaneseq
    %v9185 = vshrl.u32 %v9184, 7
    %v9186 = vsub.s32 6, %v9185
    %v9187 = vrot.slane %v9158, %v9186
    %v9188 = vlaneseq
    %v9189 = vshrl.u32 %v9188, 7
    %v9190 = vsub.s32 7, %v9189
    %v9191 = vrot.slane %v9158, %v9190
    %v9712 = vunpack.c.l.b16 %v8646
    %v9713 = vunpack.c.h.b16 %v8646
    %v9714 = vunpack.c.l.b16 %v8647
    %v9715 = vunpack.c.h.b16 %v8647
    %v9716 = vunpack.c.l.b16 %v8648
    %v9717 = vunpack.c.h.b16 %v8648
    %v9718 = vunpack.c.l.b16 %v8649
    %v9719 = vunpack.c.h.b16 %v8649
    %v9720 = vunpack.c.l.b16 %v8650
    %v9721 = vunpack.c.h.b16 %v8650
    %v9722 = vunpack.c.l.b16 %v8651
    %v9723 = vunpack.c.h.b16 %v8651
    %v9724 = vunpack.c.l.b16 %v8652
    %v9725 = vunpack.c.h.b16 %v8652
    %v9726 = vunpack.c.l.b16 %v8653
    %v9727 = vunpack.c.h.b16 %v8653
    %v9728 = vunpack.c.l.b16 %v8654
    %v9729 = vunpack.c.h.b16 %v8654
    %v9730 = vunpack.c.l.b16 %v8655
    %v9731 = vunpack.c.h.b16 %v8655
    %v9732 = vunpack.c.l.b16 %v8656
    %v9733 = vunpack.c.h.b16 %v8656
    %v9734 = vunpack.c.l.b16 %v8657
    %v9735 = vunpack.c.h.b16 %v8657
    %v9736 = vunpack.c.l.b16 %v8658
    %v9737 = vunpack.c.h.b16 %v8658
    %v9738 = vunpack.c.l.b16 %v8659
    %v9739 = vunpack.c.h.b16 %v8659
    %v9740 = vunpack.c.l.b16 %v8660
    %v9741 = vunpack.c.h.b16 %v8660
    %v9742 = vunpack.c.l.b16 %v8661
    %v9743 = vunpack.c.h.b16 %v8661
    %v9744 = vunpack.c.l.b16 %v8662
    %v9745 = vunpack.c.h.b16 %v8662
    %v9746 = vunpack.c.l.b16 %v8663
    %v9747 = vunpack.c.h.b16 %v8663
    %v9748 = vunpack.c.l.b16 %v8664
    %v9749 = vunpack.c.h.b16 %v8664
    %v9750 = vunpack.c.l.b16 %v8665
    %v9751 = vunpack.c.h.b16 %v8665
    %v9752 = vunpack.c.l.b16 %v8666
    %v9753 = vunpack.c.h.b16 %v8666
    %v9754 = vunpack.c.l.b16 %v8667
    %v9755 = vunpack.c.h.b16 %v8667
    %v9756 = vunpack.c.l.b16 %v8668
    %v9757 = vunpack.c.h.b16 %v8668
    %v9758 = vunpack.c.l.b16 %v8669
    %v9759 = vunpack.c.h.b16 %v8669
    %v9760 = vunpack.c.l.b16 %v8670
    %v9761 = vunpack.c.h.b16 %v8670
    %v9762 = vunpack.c.l.b16 %v8671
    %v9763 = vunpack.c.h.b16 %v8671
    %v9764 = vunpack.c.l.b16 %v8672
    %v9765 = vunpack.c.h.b16 %v8672
    %v9766 = vunpack.c.l.b16 %v8673
    %v9767 = vunpack.c.h.b16 %v8673
    %v9768 = vunpack.c.l.b16 %v8674
    %v9769 = vunpack.c.h.b16 %v8674
    %v9770 = vunpack.c.l.b16 %v8675
    %v9771 = vunpack.c.h.b16 %v8675
    %v9772 = vunpack.c.l.b16 %v8676
    %v9773 = vunpack.c.h.b16 %v8676
    %v9774 = vunpack.c.l.b16 %v8677
    %v9775 = vunpack.c.h.b16 %v8677
    %v9776 = vunpack.c.l.b16 %v8678
    %v9777 = vunpack.c.h.b16 %v8678
    %v9778 = vunpack.c.l.b16 %v8679
    %v9779 = vunpack.c.h.b16 %v8679
    %v9780 = vunpack.c.l.b16 %v8680
    %v9781 = vunpack.c.h.b16 %v8680
    %v9782 = vunpack.c.l.b16 %v8681
    %v9783 = vunpack.c.h.b16 %v8681
    %v9784 = vunpack.c.l.b16 %v8682
    %v9785 = vunpack.c.h.b16 %v8682
    %v9786 = vunpack.c.l.b16 %v8683
    %v9787 = vunpack.c.h.b16 %v8683
    %v9788 = vunpack.c.l.b16 %v8684
    %v9789 = vunpack.c.h.b16 %v8684
    %v9790 = vunpack.c.l.b16 %v8685
    %v9791 = vunpack.c.h.b16 %v8685
    %v9792 = vunpack.c.l.b16 %v8686
    %v9793 = vunpack.c.h.b16 %v8686
    %v9794 = vunpack.c.l.b16 %v8687
    %v9795 = vunpack.c.h.b16 %v8687
    %v9796 = vunpack.c.l.b16 %v8688
    %v9797 = vunpack.c.h.b16 %v8688
    %v9798 = vunpack.c.l.b16 %v8689
    %v9799 = vunpack.c.h.b16 %v8689
    %v9800 = vunpack.c.l.b16 %v8690
    %v9801 = vunpack.c.h.b16 %v8690
    %v9802 = vunpack.c.l.b16 %v8691
    %v9803 = vunpack.c.h.b16 %v8691
    %v9804 = vunpack.c.l.b16 %v8692
    %v9805 = vunpack.c.h.b16 %v8692
    %v9806 = vunpack.c.l.b16 %v8693
    %v9807 = vunpack.c.h.b16 %v8693
    %v9808 = vunpack.c.l.b16 %v8694
    %v9809 = vunpack.c.h.b16 %v8694
    %v9810 = vunpack.c.l.b16 %v8695
    %v9811 = vunpack.c.h.b16 %v8695
    %v9812 = vunpack.c.l.b16 %v8696
    %v9813 = vunpack.c.h.b16 %v8696
    %v9814 = vunpack.c.l.b16 %v8697
    %v9815 = vunpack.c.h.b16 %v8697
    %v9816 = vunpack.c.l.b16 %v8698
    %v9817 = vunpack.c.h.b16 %v8698
    %v9818 = vunpack.c.l.b16 %v8699
    %v9819 = vunpack.c.h.b16 %v8699
    %v9820 = vunpack.c.l.b16 %v8700
    %v9821 = vunpack.c.h.b16 %v8700
    %v9822 = vunpack.c.l.b16 %v8701
    %v9823 = vunpack.c.h.b16 %v8701
    %v9824 = vunpack.c.l.b16 %v8702
    %v9825 = vunpack.c.h.b16 %v8702
    %v9826 = vunpack.c.l.b16 %v8703
    %v9827 = vunpack.c.h.b16 %v8703
    %v9828 = vunpack.c.l.b16 %v8704
    %v9829 = vunpack.c.h.b16 %v8704
    %v9830 = vunpack.c.l.b16 %v8705
    %v9831 = vunpack.c.h.b16 %v8705
    %v9832 = vunpack.c.l.b16 %v8706
    %v9833 = vunpack.c.h.b16 %v8706
    %v9834 = vunpack.c.l.b16 %v8707
    %v9835 = vunpack.c.h.b16 %v8707
    %v9836 = vunpack.c.l.b16 %v8708
    %v9837 = vunpack.c.h.b16 %v8708
    %v9838 = vunpack.c.l.b16 %v8709
    %v9839 = vunpack.c.h.b16 %v8709
    %v9840 = vunpack.c.l.b16 %v8710
    %v9841 = vunpack.c.h.b16 %v8710
    %v9842 = vunpack.c.l.b16 %v8711
    %v9843 = vunpack.c.h.b16 %v8711
    %v9844 = vunpack.c.l.b16 %v8712
    %v9845 = vunpack.c.h.b16 %v8712
    %v9846 = vunpack.c.l.b16 %v8713
    %v9847 = vunpack.c.h.b16 %v8713
    %v9848 = vunpack.c.l.b16 %v8714
    %v9849 = vunpack.c.h.b16 %v8714
    %v9850 = vunpack.c.l.b16 %v8715
    %v9851 = vunpack.c.h.b16 %v8715
    %v9852 = vunpack.c.l.b16 %v8716
    %v9853 = vunpack.c.h.b16 %v8716
    %v9854 = vunpack.c.l.b16 %v8717
    %v9855 = vunpack.c.h.b16 %v8717
    %v9856 = vunpack.c.l.b16 %v8718
    %v9857 = vunpack.c.h.b16 %v8718
    %v9858 = vunpack.c.l.b16 %v8719
    %v9859 = vunpack.c.h.b16 %v8719
    %v9860 = vunpack.c.l.b16 %v8720
    %v9861 = vunpack.c.h.b16 %v8720
    %v9862 = vunpack.c.l.b16 %v8721
    %v9863 = vunpack.c.h.b16 %v8721
    %v9864 = vunpack.c.l.b16 %v8722
    %v9865 = vunpack.c.h.b16 %v8722
    %v9866 = vunpack.c.l.b16 %v8723
    %v9867 = vunpack.c.h.b16 %v8723
    %v9868 = vunpack.c.l.b16 %v8724
    %v9869 = vunpack.c.h.b16 %v8724
    %v9870 = vunpack.c.l.b16 %v8725
    %v9871 = vunpack.c.h.b16 %v8725
    %v9872 = vunpack.c.l.b16 %v8726
    %v9873 = vunpack.c.h.b16 %v8726
    %v9874 = vunpack.c.l.b16 %v8727
    %v9875 = vunpack.c.h.b16 %v8727
    %v9876 = vunpack.c.l.b16 %v8728
    %v9877 = vunpack.c.h.b16 %v8728
    %v9878 = vunpack.c.l.b16 %v8729
    %v9879 = vunpack.c.h.b16 %v8729
    %v9880 = vunpack.c.l.b16 %v8730
    %v9881 = vunpack.c.h.b16 %v8730
    %v9882 = vunpack.c.l.b16 %v8731
    %v9883 = vunpack.c.h.b16 %v8731
    %v9884 = vunpack.c.l.b16 %v8732
    %v9885 = vunpack.c.h.b16 %v8732
    %v9886 = vunpack.c.l.b16 %v8733
    %v9887 = vunpack.c.h.b16 %v8733
    %v9888 = vunpack.c.l.b16 %v8734
    %v9889 = vunpack.c.h.b16 %v8734
    %v9890 = vunpack.c.l.b16 %v8735
    %v9891 = vunpack.c.h.b16 %v8735
    %v9892 = vunpack.c.l.b16 %v8736
    %v9893 = vunpack.c.h.b16 %v8736
    %v9894 = vunpack.c.l.b16 %v8737
    %v9895 = vunpack.c.h.b16 %v8737
    %v9896 = vunpack.c.l.b16 %v8738
    %v9897 = vunpack.c.h.b16 %v8738
    %v9898 = vunpack.c.l.b16 %v8739
    %v9899 = vunpack.c.h.b16 %v8739
    %v9900 = vunpack.c.l.b16 %v8740
    %v9901 = vunpack.c.h.b16 %v8740
    %v9902 = vunpack.c.l.b16 %v8741
    %v9903 = vunpack.c.h.b16 %v8741
    %v9904 = vunpack.c.l.b16 %v8742
    %v9905 = vunpack.c.h.b16 %v8742
    %v9906 = vunpack.c.l.b16 %v8743
    %v9907 = vunpack.c.h.b16 %v8743
    %v9908 = vunpack.c.l.b16 %v8744
    %v9909 = vunpack.c.h.b16 %v8744
    %v9910 = vunpack.c.l.b16 %v8745
    %v9911 = vunpack.c.h.b16 %v8745
    %v9912 = vunpack.c.l.b16 %v8746
    %v9913 = vunpack.c.h.b16 %v8746
    %v9914 = vunpack.c.l.b16 %v8747
    %v9915 = vunpack.c.h.b16 %v8747
    %v9916 = vunpack.c.l.b16 %v8748
    %v9917 = vunpack.c.h.b16 %v8748
    %v9918 = vunpack.c.l.b16 %v8749
    %v9919 = vunpack.c.h.b16 %v8749
    %v9920 = vunpack.c.l.b16 %v8750
    %v9921 = vunpack.c.h.b16 %v8750
    %v9922 = vunpack.c.l.b16 %v8751
    %v9923 = vunpack.c.h.b16 %v8751
    %v9924 = vunpack.c.l.b16 %v8752
    %v9925 = vunpack.c.h.b16 %v8752
    %v9926 = vunpack.c.l.b16 %v8753
    %v9927 = vunpack.c.h.b16 %v8753
    %v9928 = vunpack.c.l.b16 %v8754
    %v9929 = vunpack.c.h.b16 %v8754
    %v9930 = vunpack.c.l.b16 %v8755
    %v9931 = vunpack.c.h.b16 %v8755
    %v9932 = vunpack.c.l.b16 %v8756
    %v9933 = vunpack.c.h.b16 %v8756
    %v9934 = vunpack.c.l.b16 %v8757
    %v9935 = vunpack.c.h.b16 %v8757
    %v9936 = vunpack.c.l.b16 %v8758
    %v9937 = vunpack.c.h.b16 %v8758
    %v9938 = vunpack.c.l.b16 %v8759
    %v9939 = vunpack.c.h.b16 %v8759
    %v9940 = vunpack.c.l.b16 %v8760
    %v9941 = vunpack.c.h.b16 %v8760
    %v9942 = vunpack.c.l.b16 %v8761
    %v9943 = vunpack.c.h.b16 %v8761
    %v9944 = vunpack.c.l.b16 %v8762
    %v9945 = vunpack.c.h.b16 %v8762
    %v9946 = vunpack.c.l.b16 %v8763
    %v9947 = vunpack.c.h.b16 %v8763
    %v9948 = vunpack.c.l.b16 %v8764
    %v9949 = vunpack.c.h.b16 %v8764
    %v9950 = vunpack.c.l.b16 %v8765
    %v9951 = vunpack.c.h.b16 %v8765
    %v9952 = vunpack.c.l.b16 %v8766
    %v9953 = vunpack.c.h.b16 %v8766
    %v9954 = vunpack.c.l.b16 %v8767
    %v9955 = vunpack.c.h.b16 %v8767
    %v9956 = vunpack.c.l.b16 %v8768
    %v9957 = vunpack.c.h.b16 %v8768
    %v9958 = vunpack.c.l.b16 %v8769
    %v9959 = vunpack.c.h.b16 %v8769
    %v9960 = vunpack.c.l.b16 %v8770
    %v9961 = vunpack.c.h.b16 %v8770
    %v9962 = vunpack.c.l.b16 %v8771
    %v9963 = vunpack.c.h.b16 %v8771
    %v9964 = vunpack.c.l.b16 %v8772
    %v9965 = vunpack.c.h.b16 %v8772
    %v9966 = vunpack.c.l.b16 %v8773
    %v9967 = vunpack.c.h.b16 %v8773
    %v9968 = vunpack.c.l.b16 %v8774
    %v9969 = vunpack.c.h.b16 %v8774
    %v9970 = vunpack.c.l.b16 %v8775
    %v9971 = vunpack.c.h.b16 %v8775
    %v9972 = vunpack.c.l.b16 %v8776
    %v9973 = vunpack.c.h.b16 %v8776
    %v9974 = vunpack.c.l.b16 %v8777
    %v9975 = vunpack.c.h.b16 %v8777
    %v9976 = vunpack.c.l.b16 %v8778
    %v9977 = vunpack.c.h.b16 %v8778
    %v9978 = vunpack.c.l.b16 %v8779
    %v9979 = vunpack.c.h.b16 %v8779
    %v9980 = vunpack.c.l.b16 %v8780
    %v9981 = vunpack.c.h.b16 %v8780
    %v9982 = vunpack.c.l.b16 %v8781
    %v9983 = vunpack.c.h.b16 %v8781
    %v9984 = vunpack.c.l.b16 %v8782
    %v9985 = vunpack.c.h.b16 %v8782
    %v9986 = vunpack.c.l.b16 %v8783
    %v9987 = vunpack.c.h.b16 %v8783
    %v9988 = vunpack.c.l.b16 %v8784
    %v9989 = vunpack.c.h.b16 %v8784
    %v9990 = vunpack.c.l.b16 %v8785
    %v9991 = vunpack.c.h.b16 %v8785
    %v9992 = vunpack.c.l.b16 %v8786
    %v9993 = vunpack.c.h.b16 %v8786
    %v9994 = vunpack.c.l.b16 %v8787
    %v9995 = vunpack.c.h.b16 %v8787
    %v9996 = vunpack.c.l.b16 %v8788
    %v9997 = vunpack.c.h.b16 %v8788
    %v9998 = vunpack.c.l.b16 %v8789
    %v9999 = vunpack.c.h.b16 %v8789
    %v10000 = vunpack.c.l.b16 %v8790
    %v10001 = vunpack.c.h.b16 %v8790
    %v10002 = vunpack.c.l.b16 %v8791
    %v10003 = vunpack.c.h.b16 %v8791
    %v10004 = vunpack.c.l.b16 %v8792
    %v10005 = vunpack.c.h.b16 %v8792
    %v10006 = vunpack.c.l.b16 %v8793
    %v10007 = vunpack.c.h.b16 %v8793
    %v10008 = vunpack.c.l.b16 %v8794
    %v10009 = vunpack.c.h.b16 %v8794
    %v10010 = vunpack.c.l.b16 %v8795
    %v10011 = vunpack.c.h.b16 %v8795
    %v10012 = vunpack.c.l.b16 %v8796
    %v10013 = vunpack.c.h.b16 %v8796
    %v10014 = vunpack.c.l.b16 %v8797
    %v10015 = vunpack.c.h.b16 %v8797
    %v10016 = vunpack.c.l.b16 %v8798
    %v10017 = vunpack.c.h.b16 %v8798
    %v10018 = vunpack.c.l.b16 %v8799
    %v10019 = vunpack.c.h.b16 %v8799
    %v10020 = vunpack.c.l.b16 %v8800
    %v10021 = vunpack.c.h.b16 %v8800
    %v10022 = vunpack.c.l.b16 %v8801
    %v10023 = vunpack.c.h.b16 %v8801
    %v10024 = vunpack.c.l.b16 %v8802
    %v10025 = vunpack.c.h.b16 %v8802
    %v10026 = vunpack.c.l.b16 %v8803
    %v10027 = vunpack.c.h.b16 %v8803
    %v10028 = vunpack.c.l.b16 %v8804
    %v10029 = vunpack.c.h.b16 %v8804
    %v10030 = vunpack.c.l.b16 %v8805
    %v10031 = vunpack.c.h.b16 %v8805
    %v10032 = vunpack.c.l.b16 %v8806
    %v10033 = vunpack.c.h.b16 %v8806
    %v10034 = vunpack.c.l.b16 %v8807
    %v10035 = vunpack.c.h.b16 %v8807
    %v10036 = vunpack.c.l.b16 %v8808
    %v10037 = vunpack.c.h.b16 %v8808
    %v10038 = vunpack.c.l.b16 %v8809
    %v10039 = vunpack.c.h.b16 %v8809
    %v10040 = vunpack.c.l.b16 %v8810
    %v10041 = vunpack.c.h.b16 %v8810
    %v10042 = vunpack.c.l.b16 %v8811
    %v10043 = vunpack.c.h.b16 %v8811
    %v10044 = vunpack.c.l.b16 %v8812
    %v10045 = vunpack.c.h.b16 %v8812
    %v10046 = vunpack.c.l.b16 %v8813
    %v10047 = vunpack.c.h.b16 %v8813
    %v10048 = vunpack.c.l.b16 %v8814
    %v10049 = vunpack.c.h.b16 %v8814
    %v10050 = vunpack.c.l.b16 %v8815
    %v10051 = vunpack.c.h.b16 %v8815
    %v10052 = vunpack.c.l.b16 %v8816
    %v10053 = vunpack.c.h.b16 %v8816
    %v10054 = vunpack.c.l.b16 %v8817
    %v10055 = vunpack.c.h.b16 %v8817
    %v10056 = vunpack.c.l.b16 %v8818
    %v10057 = vunpack.c.h.b16 %v8818
    %v10058 = vunpack.c.l.b16 %v8819
    %v10059 = vunpack.c.h.b16 %v8819
    %v10060 = vunpack.c.l.b16 %v8820
    %v10061 = vunpack.c.h.b16 %v8820
    %v10062 = vunpack.c.l.b16 %v8821
    %v10063 = vunpack.c.h.b16 %v8821
    %v10064 = vunpack.c.l.b16 %v8822
    %v10065 = vunpack.c.h.b16 %v8822
    %v10066 = vunpack.c.l.b16 %v8823
    %v10067 = vunpack.c.h.b16 %v8823
    %v10068 = vunpack.c.l.b16 %v8824
    %v10069 = vunpack.c.h.b16 %v8824
    %v10070 = vunpack.c.l.b16 %v8825
    %v10071 = vunpack.c.h.b16 %v8825
    %v10072 = vunpack.c.l.b16 %v8826
    %v10073 = vunpack.c.h.b16 %v8826
    %v10074 = vunpack.c.l.b16 %v8827
    %v10075 = vunpack.c.h.b16 %v8827
    %v10076 = vunpack.c.l.b16 %v8828
    %v10077 = vunpack.c.h.b16 %v8828
    %v10078 = vunpack.c.l.b16 %v8829
    %v10079 = vunpack.c.h.b16 %v8829
    %v10080 = vunpack.c.l.b16 %v8830
    %v10081 = vunpack.c.h.b16 %v8830
    %v10082 = vunpack.c.l.b16 %v8831
    %v10083 = vunpack.c.h.b16 %v8831
    %v10084 = vunpack.c.l.b16 %v8832
    %v10085 = vunpack.c.h.b16 %v8832
    %v10086 = vunpack.c.l.b16 %v8833
    %v10087 = vunpack.c.h.b16 %v8833
    %v10088 = vunpack.c.l.b16 %v8834
    %v10089 = vunpack.c.h.b16 %v8834
    %v10090 = vunpack.c.l.b16 %v8835
    %v10091 = vunpack.c.h.b16 %v8835
    %v10092 = vunpack.c.l.b16 %v8836
    %v10093 = vunpack.c.h.b16 %v8836
    %v10094 = vunpack.c.l.b16 %v8837
    %v10095 = vunpack.c.h.b16 %v8837
    %v10096 = vunpack.c.l.b16 %v8838
    %v10097 = vunpack.c.h.b16 %v8838
    %v10098 = vunpack.c.l.b16 %v8839
    %v10099 = vunpack.c.h.b16 %v8839
    %v10100 = vunpack.c.l.b16 %v8840
    %v10101 = vunpack.c.h.b16 %v8840
    %v10102 = vunpack.c.l.b16 %v8841
    %v10103 = vunpack.c.h.b16 %v8841
    %v10104 = vunpack.c.l.b16 %v8842
    %v10105 = vunpack.c.h.b16 %v8842
    %v10106 = vunpack.c.l.b16 %v8843
    %v10107 = vunpack.c.h.b16 %v8843
    %v10108 = vunpack.c.l.b16 %v8844
    %v10109 = vunpack.c.h.b16 %v8844
    %v10110 = vunpack.c.l.b16 %v8845
    %v10111 = vunpack.c.h.b16 %v8845
    %v10112 = vunpack.c.l.b16 %v8846
    %v10113 = vunpack.c.h.b16 %v8846
    %v10114 = vunpack.c.l.b16 %v8847
    %v10115 = vunpack.c.h.b16 %v8847
    %v10116 = vunpack.c.l.b16 %v8848
    %v10117 = vunpack.c.h.b16 %v8848
    %v10118 = vunpack.c.l.b16 %v8849
    %v10119 = vunpack.c.h.b16 %v8849
    %v10120 = vunpack.c.l.b16 %v8850
    %v10121 = vunpack.c.h.b16 %v8850
    %v10122 = vunpack.c.l.b16 %v8851
    %v10123 = vunpack.c.h.b16 %v8851
    %v10124 = vunpack.c.l.b16 %v8852
    %v10125 = vunpack.c.h.b16 %v8852
    %v10126 = vunpack.c.l.b16 %v8853
    %v10127 = vunpack.c.h.b16 %v8853
    %v10128 = vunpack.c.l.b16 %v8854
    %v10129 = vunpack.c.h.b16 %v8854
    %v10130 = vunpack.c.l.b16 %v8855
    %v10131 = vunpack.c.h.b16 %v8855
    %v10132 = vunpack.c.l.b16 %v8856
    %v10133 = vunpack.c.h.b16 %v8856
    %v10134 = vunpack.c.l.b16 %v8857
    %v10135 = vunpack.c.h.b16 %v8857
    %v10136 = vunpack.c.l.b16 %v8858
    %v10137 = vunpack.c.h.b16 %v8858
    %v10138 = vunpack.c.l.b16 %v8859
    %v10139 = vunpack.c.h.b16 %v8859
    %v10140 = vunpack.c.l.b16 %v8860
    %v10141 = vunpack.c.h.b16 %v8860
    %v10142 = vunpack.c.l.b16 %v8861
    %v10143 = vunpack.c.h.b16 %v8861
    %v10144 = vunpack.c.l.b16 %v8862
    %v10145 = vunpack.c.h.b16 %v8862
    %v10146 = vunpack.c.l.b16 %v8863
    %v10147 = vunpack.c.h.b16 %v8863
    %v10148 = vunpack.c.l.b16 %v8864
    %v10149 = vunpack.c.h.b16 %v8864
    %v10150 = vunpack.c.l.b16 %v8865
    %v10151 = vunpack.c.h.b16 %v8865
    %v10152 = vunpack.c.l.b16 %v8866
    %v10153 = vunpack.c.h.b16 %v8866
    %v10154 = vunpack.c.l.b16 %v8867
    %v10155 = vunpack.c.h.b16 %v8867
    %v10156 = vunpack.c.l.b16 %v8868
    %v10157 = vunpack.c.h.b16 %v8868
    %v10158 = vunpack.c.l.b16 %v8869
    %v10159 = vunpack.c.h.b16 %v8869
    %v10160 = vunpack.c.l.b16 %v8870
    %v10161 = vunpack.c.h.b16 %v8870
    %v10162 = vunpack.c.l.b16 %v8871
    %v10163 = vunpack.c.h.b16 %v8871
    %v10164 = vunpack.c.l.b16 %v8872
    %v10165 = vunpack.c.h.b16 %v8872
    %v10166 = vunpack.c.l.b16 %v8873
    %v10167 = vunpack.c.h.b16 %v8873
    %v10168 = vunpack.c.l.b16 %v8874
    %v10169 = vunpack.c.h.b16 %v8874
    %v10170 = vunpack.c.l.b16 %v8875
    %v10171 = vunpack.c.h.b16 %v8875
    %v10172 = vunpack.c.l.b16 %v8876
    %v10173 = vunpack.c.h.b16 %v8876
    %v10174 = vunpack.c.l.b16 %v8877
    %v10175 = vunpack.c.h.b16 %v8877
    %v10176 = vunpack.c.l.b16 %v8878
    %v10177 = vunpack.c.h.b16 %v8878
    %v10178 = vunpack.c.l.b16 %v8879
    %v10179 = vunpack.c.h.b16 %v8879
    %v10180 = vunpack.c.l.b16 %v8880
    %v10181 = vunpack.c.h.b16 %v8880
    %v10182 = vunpack.c.l.b16 %v8881
    %v10183 = vunpack.c.h.b16 %v8881
    %v10184 = vunpack.c.l.b16 %v8882
    %v10185 = vunpack.c.h.b16 %v8882
    %v10186 = vunpack.c.l.b16 %v8883
    %v10187 = vunpack.c.h.b16 %v8883
    %v10188 = vunpack.c.l.b16 %v8884
    %v10189 = vunpack.c.h.b16 %v8884
    %v10190 = vunpack.c.l.b16 %v8885
    %v10191 = vunpack.c.h.b16 %v8885
    %v10192 = vunpack.c.l.b16 %v8886
    %v10193 = vunpack.c.h.b16 %v8886
    %v10194 = vunpack.c.l.b16 %v8887
    %v10195 = vunpack.c.h.b16 %v8887
    %v10196 = vunpack.c.l.b16 %v8888
    %v10197 = vunpack.c.h.b16 %v8888
    %v10198 = vunpack.c.l.b16 %v8889
    %v10199 = vunpack.c.h.b16 %v8889
    %v10200 = vunpack.c.l.b16 %v8890
    %v10201 = vunpack.c.h.b16 %v8890
    %v10202 = vunpack.c.l.b16 %v8891
    %v10203 = vunpack.c.h.b16 %v8891
    %v10204 = vunpack.c.l.b16 %v8892
    %v10205 = vunpack.c.h.b16 %v8892
    %v10206 = vunpack.c.l.b16 %v8893
    %v10207 = vunpack.c.h.b16 %v8893
    %v10208 = vunpack.c.l.b16 %v8894
    %v10209 = vunpack.c.h.b16 %v8894
    %v10210 = vunpack.c.l.b16 %v8895
    %v10211 = vunpack.c.h.b16 %v8895
    %v10212 = vunpack.c.l.b16 %v8896
    %v10213 = vunpack.c.h.b16 %v8896
    %v10214 = vunpack.c.l.b16 %v8897
    %v10215 = vunpack.c.h.b16 %v8897
    %v10216 = vunpack.c.l.b16 %v8898
    %v10217 = vunpack.c.h.b16 %v8898
    %v10218 = vunpack.c.l.b16 %v8899
    %v10219 = vunpack.c.h.b16 %v8899
    %v10220 = vunpack.c.l.b16 %v8900
    %v10221 = vunpack.c.h.b16 %v8900
    %v10222 = vunpack.c.l.b16 %v8901
    %v10223 = vunpack.c.h.b16 %v8901
    %v10224 = vunpack.c.l.b16 %v8902
    %v10225 = vunpack.c.h.b16 %v8902
    %v10226 = vunpack.c.l.b16 %v8903
    %v10227 = vunpack.c.h.b16 %v8903
    %v10228 = vunpack.c.l.b16 %v8904
    %v10229 = vunpack.c.h.b16 %v8904
    %v10230 = vunpack.c.l.b16 %v8905
    %v10231 = vunpack.c.h.b16 %v8905
    %v10232 = vunpack.c.l.b16 %v8906
    %v10233 = vunpack.c.h.b16 %v8906
    %v10234 = vunpack.c.l.b16 %v8907
    %v10235 = vunpack.c.h.b16 %v8907
    %v10236 = vunpack.c.l.b16 %v8908
    %v10237 = vunpack.c.h.b16 %v8908
    %v10238 = vunpack.c.l.b16 %v8909
    %v10239 = vunpack.c.h.b16 %v8909
    %v10240 = vunpack.c.l.b16 %v8910
    %v10241 = vunpack.c.h.b16 %v8910
    %v10242 = vunpack.c.l.b16 %v8911
    %v10243 = vunpack.c.h.b16 %v8911
    %v10244 = vunpack.c.l.b16 %v8912
    %v10245 = vunpack.c.h.b16 %v8912
    %v10246 = vunpack.c.l.b16 %v8913
    %v10247 = vunpack.c.h.b16 %v8913
    %v10248 = vunpack.c.l.b16 %v8914
    %v10249 = vunpack.c.h.b16 %v8914
    %v10250 = vunpack.c.l.b16 %v8915
    %v10251 = vunpack.c.h.b16 %v8915
    %v10252 = vunpack.c.l.b16 %v8916
    %v10253 = vunpack.c.h.b16 %v8916
    %v10254 = vunpack.c.l.b16 %v8917
    %v10255 = vunpack.c.h.b16 %v8917
    %v10256 = vunpack.c.l.b16 %v8918
    %v10257 = vunpack.c.h.b16 %v8918
    %v10258 = vunpack.c.l.b16 %v8919
    %v10259 = vunpack.c.h.b16 %v8919
    %v10260 = vunpack.c.l.b16 %v8920
    %v10261 = vunpack.c.h.b16 %v8920
    %v10262 = vunpack.c.l.b16 %v8921
    %v10263 = vunpack.c.h.b16 %v8921
    %v10264 = vunpack.c.l.b16 %v8922
    %v10265 = vunpack.c.h.b16 %v8922
    %v10266 = vunpack.c.l.b16 %v8923
    %v10267 = vunpack.c.h.b16 %v8923
    %v10268 = vunpack.c.l.b16 %v8924
    %v10269 = vunpack.c.h.b16 %v8924
    %v10270 = vunpack.c.l.b16 %v8925
    %v10271 = vunpack.c.h.b16 %v8925
    %v10272 = vunpack.c.l.b16 %v8926
    %v10273 = vunpack.c.h.b16 %v8926
    %v10274 = vunpack.c.l.b16 %v8927
    %v10275 = vunpack.c.h.b16 %v8927
    %v10276 = vunpack.c.l.b16 %v8928
    %v10277 = vunpack.c.h.b16 %v8928
    %v10278 = vunpack.c.l.b16 %v8929
    %v10279 = vunpack.c.h.b16 %v8929
    %v10280 = vunpack.c.l.b16 %v8930
    %v10281 = vunpack.c.h.b16 %v8930
    %v10282 = vunpack.c.l.b16 %v8931
    %v10283 = vunpack.c.h.b16 %v8931
    %v10284 = vunpack.c.l.b16 %v8932
    %v10285 = vunpack.c.h.b16 %v8932
    %v10286 = vunpack.c.l.b16 %v8933
    %v10287 = vunpack.c.h.b16 %v8933
    %v10288 = vunpack.c.l.b16 %v8934
    %v10289 = vunpack.c.h.b16 %v8934
    %v10290 = vunpack.c.l.b16 %v8935
    %v10291 = vunpack.c.h.b16 %v8935
    %v10292 = vunpack.c.l.b16 %v8936
    %v10293 = vunpack.c.h.b16 %v8936
    %v10294 = vunpack.c.l.b16 %v8937
    %v10295 = vunpack.c.h.b16 %v8937
    %v10296 = vunpack.c.l.b16 %v8938
    %v10297 = vunpack.c.h.b16 %v8938
    %v10298 = vunpack.c.l.b16 %v8939
    %v10299 = vunpack.c.h.b16 %v8939
    %v10300 = vunpack.c.l.b16 %v8940
    %v10301 = vunpack.c.h.b16 %v8940
    %v10302 = vunpack.c.l.b16 %v8941
    %v10303 = vunpack.c.h.b16 %v8941
    %v10304 = vunpack.c.l.b16 %v8942
    %v10305 = vunpack.c.h.b16 %v8942
    %v10306 = vunpack.c.l.b16 %v8943
    %v10307 = vunpack.c.h.b16 %v8943
    %v10308 = vunpack.c.l.b16 %v8944
    %v10309 = vunpack.c.h.b16 %v8944
    %v10310 = vunpack.c.l.b16 %v8945
    %v10311 = vunpack.c.h.b16 %v8945
    %v10312 = vunpack.c.l.b16 %v8946
    %v10313 = vunpack.c.h.b16 %v8946
    %v10314 = vunpack.c.l.b16 %v8947
    %v10315 = vunpack.c.h.b16 %v8947
    %v10316 = vunpack.c.l.b16 %v8948
    %v10317 = vunpack.c.h.b16 %v8948
    %v10318 = vunpack.c.l.b16 %v8949
    %v10319 = vunpack.c.h.b16 %v8949
    %v10320 = vunpack.c.l.b16 %v8950
    %v10321 = vunpack.c.h.b16 %v8950
    %v10322 = vunpack.c.l.b16 %v8951
    %v10323 = vunpack.c.h.b16 %v8951
    %v10324 = vunpack.c.l.b16 %v8952
    %v10325 = vunpack.c.h.b16 %v8952
    %v10326 = vunpack.c.l.b16 %v8953
    %v10327 = vunpack.c.h.b16 %v8953
    %v10328 = vunpack.c.l.b16 %v8954
    %v10329 = vunpack.c.h.b16 %v8954
    %v10330 = vunpack.c.l.b16 %v8955
    %v10331 = vunpack.c.h.b16 %v8955
    %v10332 = vunpack.c.l.b16 %v8956
    %v10333 = vunpack.c.h.b16 %v8956
    %v10334 = vunpack.c.l.b16 %v8957
    %v10335 = vunpack.c.h.b16 %v8957
    %v10336 = vunpack.c.l.b16 %v8958
    %v10337 = vunpack.c.h.b16 %v8958
    %v10338 = vunpack.c.l.b16 %v8959
    %v10339 = vunpack.c.h.b16 %v8959
    %v10340 = vunpack.c.l.b16 %v8960
    %v10341 = vunpack.c.h.b16 %v8960
    %v10342 = vunpack.c.l.b16 %v8961
    %v10343 = vunpack.c.h.b16 %v8961
    %v10344 = vunpack.c.l.b16 %v8962
    %v10345 = vunpack.c.h.b16 %v8962
    %v10346 = vunpack.c.l.b16 %v8963
    %v10347 = vunpack.c.h.b16 %v8963
    %v10348 = vunpack.c.l.b16 %v8964
    %v10349 = vunpack.c.h.b16 %v8964
    %v10350 = vunpack.c.l.b16 %v8965
    %v10351 = vunpack.c.h.b16 %v8965
    %v10352 = vunpack.c.l.b16 %v8966
    %v10353 = vunpack.c.h.b16 %v8966
    %v10354 = vunpack.c.l.b16 %v8967
    %v10355 = vunpack.c.h.b16 %v8967
    %v10356 = vunpack.c.l.b16 %v8968
    %v10357 = vunpack.c.h.b16 %v8968
    %v10358 = vunpack.c.l.b16 %v8969
    %v10359 = vunpack.c.h.b16 %v8969
    %v10360 = vunpack.c.l.b16 %v8970
    %v10361 = vunpack.c.h.b16 %v8970
    %v10362 = vunpack.c.l.b16 %v8971
    %v10363 = vunpack.c.h.b16 %v8971
    %v10364 = vunpack.c.l.b16 %v8972
    %v10365 = vunpack.c.h.b16 %v8972
    %v10366 = vunpack.c.l.b16 %v8973
    %v10367 = vunpack.c.h.b16 %v8973
    %v10368 = vunpack.c.l.b16 %v8974
    %v10369 = vunpack.c.h.b16 %v8974
    %v10370 = vunpack.c.l.b16 %v8975
    %v10371 = vunpack.c.h.b16 %v8975
    %v10372 = vunpack.c.l.b16 %v8976
    %v10373 = vunpack.c.h.b16 %v8976
    %v10374 = vunpack.c.l.b16 %v8977
    %v10375 = vunpack.c.h.b16 %v8977
    %v10376 = vunpack.c.l.b16 %v8978
    %v10377 = vunpack.c.h.b16 %v8978
    %v10378 = vunpack.c.l.b16 %v8979
    %v10379 = vunpack.c.h.b16 %v8979
    %v10380 = vunpack.c.l.b16 %v8980
    %v10381 = vunpack.c.h.b16 %v8980
    %v10382 = vunpack.c.l.b16 %v8981
    %v10383 = vunpack.c.h.b16 %v8981
    %v10384 = vunpack.c.l.b16 %v8982
    %v10385 = vunpack.c.h.b16 %v8982
    %v10386 = vunpack.c.l.b16 %v8983
    %v10387 = vunpack.c.h.b16 %v8983
    %v10388 = vunpack.c.l.b16 %v8984
    %v10389 = vunpack.c.h.b16 %v8984
    %v10390 = vunpack.c.l.b16 %v8985
    %v10391 = vunpack.c.h.b16 %v8985
    %v10392 = vunpack.c.l.b16 %v8986
    %v10393 = vunpack.c.h.b16 %v8986
    %v10394 = vunpack.c.l.b16 %v8987
    %v10395 = vunpack.c.h.b16 %v8987
    %v10396 = vunpack.c.l.b16 %v8988
    %v10397 = vunpack.c.h.b16 %v8988
    %v10398 = vunpack.c.l.b16 %v8989
    %v10399 = vunpack.c.h.b16 %v8989
    %v10400 = vunpack.c.l.b16 %v8990
    %v10401 = vunpack.c.h.b16 %v8990
    %v10402 = vunpack.c.l.b16 %v8991
    %v10403 = vunpack.c.h.b16 %v8991
    %v10404 = vunpack.c.l.b16 %v8992
    %v10405 = vunpack.c.h.b16 %v8992
    %v10406 = vunpack.c.l.b16 %v8993
    %v10407 = vunpack.c.h.b16 %v8993
    %v10408 = vunpack.c.l.b16 %v8994
    %v10409 = vunpack.c.h.b16 %v8994
    %v10410 = vunpack.c.l.b16 %v8995
    %v10411 = vunpack.c.h.b16 %v8995
    %v10412 = vunpack.c.l.b16 %v8996
    %v10413 = vunpack.c.h.b16 %v8996
    %v10414 = vunpack.c.l.b16 %v8997
    %v10415 = vunpack.c.h.b16 %v8997
    %v10416 = vunpack.c.l.b16 %v8998
    %v10417 = vunpack.c.h.b16 %v8998
    %v10418 = vunpack.c.l.b16 %v8999
    %v10419 = vunpack.c.h.b16 %v8999
    %v10420 = vunpack.c.l.b16 %v9000
    %v10421 = vunpack.c.h.b16 %v9000
    %v10422 = vunpack.c.l.b16 %v9001
    %v10423 = vunpack.c.h.b16 %v9001
    %v10424 = vunpack.c.l.b16 %v9002
    %v10425 = vunpack.c.h.b16 %v9002
    %v10426 = vunpack.c.l.b16 %v9003
    %v10427 = vunpack.c.h.b16 %v9003
    %v10428 = vunpack.c.l.b16 %v9004
    %v10429 = vunpack.c.h.b16 %v9004
    %v10430 = vunpack.c.l.b16 %v9005
    %v10431 = vunpack.c.h.b16 %v9005
    %v10432 = vunpack.c.l.b16 %v9006
    %v10433 = vunpack.c.h.b16 %v9006
    %v10434 = vunpack.c.l.b16 %v9007
    %v10435 = vunpack.c.h.b16 %v9007
    %v10436 = vunpack.c.l.b16 %v9008
    %v10437 = vunpack.c.h.b16 %v9008
    %v10438 = vunpack.c.l.b16 %v9009
    %v10439 = vunpack.c.h.b16 %v9009
    %v10440 = vunpack.c.l.b16 %v9010
    %v10441 = vunpack.c.h.b16 %v9010
    %v10442 = vunpack.c.l.b16 %v9011
    %v10443 = vunpack.c.h.b16 %v9011
    %v10444 = vunpack.c.l.b16 %v9012
    %v10445 = vunpack.c.h.b16 %v9012
    %v10446 = vunpack.c.l.b16 %v9013
    %v10447 = vunpack.c.h.b16 %v9013
    %v10448 = vunpack.c.l.b16 %v9014
    %v10449 = vunpack.c.h.b16 %v9014
    %v10450 = vunpack.c.l.b16 %v9015
    %v10451 = vunpack.c.h.b16 %v9015
    %v10452 = vunpack.c.l.b16 %v9016
    %v10453 = vunpack.c.h.b16 %v9016
    %v10454 = vunpack.c.l.b16 %v9017
    %v10455 = vunpack.c.h.b16 %v9017
    %v10456 = vunpack.c.l.b16 %v9018
    %v10457 = vunpack.c.h.b16 %v9018
    %v10458 = vunpack.c.l.b16 %v9019
    %v10459 = vunpack.c.h.b16 %v9019
    %v10460 = vunpack.c.l.b16 %v9020
    %v10461 = vunpack.c.h.b16 %v9020
    %v10462 = vunpack.c.l.b16 %v9021
    %v10463 = vunpack.c.h.b16 %v9021
    %v10464 = vunpack.c.l.b16 %v9022
    %v10465 = vunpack.c.h.b16 %v9022
    %v10466 = vunpack.c.l.b16 %v9023
    %v10467 = vunpack.c.h.b16 %v9023
    %v10468 = vunpack.c.l.b16 %v9024
    %v10469 = vunpack.c.h.b16 %v9024
    %v10470 = vunpack.c.l.b16 %v9025
    %v10471 = vunpack.c.h.b16 %v9025
    %v10472 = vunpack.c.l.b16 %v9026
    %v10473 = vunpack.c.h.b16 %v9026
    %v10474 = vunpack.c.l.b16 %v9027
    %v10475 = vunpack.c.h.b16 %v9027
    %v10476 = vunpack.c.l.b16 %v9028
    %v10477 = vunpack.c.h.b16 %v9028
    %v10478 = vunpack.c.l.b16 %v9029
    %v10479 = vunpack.c.h.b16 %v9029
    %v10480 = vunpack.c.l.b16 %v9030
    %v10481 = vunpack.c.h.b16 %v9030
    %v10482 = vunpack.c.l.b16 %v9031
    %v10483 = vunpack.c.h.b16 %v9031
    %v10484 = vunpack.c.l.b16 %v9032
    %v10485 = vunpack.c.h.b16 %v9032
    %v10486 = vunpack.c.l.b16 %v9033
    %v10487 = vunpack.c.h.b16 %v9033
    %v10488 = vunpack.c.l.b16 %v9034
    %v10489 = vunpack.c.h.b16 %v9034
    %v10490 = vunpack.c.l.b16 %v9035
    %v10491 = vunpack.c.h.b16 %v9035
    %v10492 = vunpack.c.l.b16 %v9036
    %v10493 = vunpack.c.h.b16 %v9036
    %v10494 = vunpack.c.l.b16 %v9037
    %v10495 = vunpack.c.h.b16 %v9037
    %v10496 = vunpack.c.l.b16 %v9038
    %v10497 = vunpack.c.h.b16 %v9038
    %v10498 = vunpack.c.l.b16 %v9039
    %v10499 = vunpack.c.h.b16 %v9039
    %v10500 = vunpack.c.l.b16 %v9040
    %v10501 = vunpack.c.h.b16 %v9040
    %v10502 = vunpack.c.l.b16 %v9041
    %v10503 = vunpack.c.h.b16 %v9041
    %v10504 = vunpack.c.l.b16 %v9042
    %v10505 = vunpack.c.h.b16 %v9042
    %v10506 = vunpack.c.l.b16 %v9043
    %v10507 = vunpack.c.h.b16 %v9043
    %v10508 = vunpack.c.l.b16 %v9044
    %v10509 = vunpack.c.h.b16 %v9044
    %v10510 = vunpack.c.l.b16 %v9045
    %v10511 = vunpack.c.h.b16 %v9045
    %v10512 = vunpack.c.l.b16 %v9046
    %v10513 = vunpack.c.h.b16 %v9046
    %v10514 = vunpack.c.l.b16 %v9047
    %v10515 = vunpack.c.h.b16 %v9047
    %v10516 = vunpack.c.l.b16 %v9048
    %v10517 = vunpack.c.h.b16 %v9048
    %v10518 = vunpack.c.l.b16 %v9049
    %v10519 = vunpack.c.h.b16 %v9049
    %v10520 = vunpack.c.l.b16 %v9050
    %v10521 = vunpack.c.h.b16 %v9050
    %v10522 = vunpack.c.l.b16 %v9051
    %v10523 = vunpack.c.h.b16 %v9051
    %v10524 = vunpack.c.l.b16 %v9052
    %v10525 = vunpack.c.h.b16 %v9052
    %v10526 = vunpack.c.l.b16 %v9053
    %v10527 = vunpack.c.h.b16 %v9053
    %v10528 = vunpack.c.l.b16 %v9054
    %v10529 = vunpack.c.h.b16 %v9054
    %v10530 = vunpack.c.l.b16 %v9055
    %v10531 = vunpack.c.h.b16 %v9055
    %v10532 = vunpack.c.l.b16 %v9056
    %v10533 = vunpack.c.h.b16 %v9056
    %v10534 = vunpack.c.l.b16 %v9057
    %v10535 = vunpack.c.h.b16 %v9057
    %v10536 = vunpack.c.l.b16 %v9058
    %v10537 = vunpack.c.h.b16 %v9058
    %v10538 = vunpack.c.l.b16 %v9059
    %v10539 = vunpack.c.h.b16 %v9059
    %v10540 = vunpack.c.l.b16 %v9060
    %v10541 = vunpack.c.h.b16 %v9060
    %v10542 = vunpack.c.l.b16 %v9061
    %v10543 = vunpack.c.h.b16 %v9061
    %v10544 = vunpack.c.l.b16 %v9062
    %v10545 = vunpack.c.h.b16 %v9062
    %v10546 = vunpack.c.l.b16 %v9063
    %v10547 = vunpack.c.h.b16 %v9063
    %v10548 = vunpack.c.l.b16 %v9064
    %v10549 = vunpack.c.h.b16 %v9064
    %v10550 = vunpack.c.l.b16 %v9065
    %v10551 = vunpack.c.h.b16 %v9065
    %v10552 = vunpack.c.l.b16 %v9066
    %v10553 = vunpack.c.h.b16 %v9066
    %v10554 = vunpack.c.l.b16 %v9067
    %v10555 = vunpack.c.h.b16 %v9067
    %v10556 = vunpack.c.l.b16 %v9068
    %v10557 = vunpack.c.h.b16 %v9068
    %v10558 = vunpack.c.l.b16 %v9069
    %v10559 = vunpack.c.h.b16 %v9069
    %v10560 = vunpack.c.l.b16 %v9070
    %v10561 = vunpack.c.h.b16 %v9070
    %v10562 = vunpack.c.l.b16 %v9071
    %v10563 = vunpack.c.h.b16 %v9071
    %v10564 = vunpack.c.l.b16 %v9072
    %v10565 = vunpack.c.h.b16 %v9072
    %v10566 = vunpack.c.l.b16 %v9073
    %v10567 = vunpack.c.h.b16 %v9073
    %v10568 = vunpack.c.l.b16 %v9074
    %v10569 = vunpack.c.h.b16 %v9074
    %v10570 = vunpack.c.l.b16 %v9075
    %v10571 = vunpack.c.h.b16 %v9075
    %v10572 = vunpack.c.l.b16 %v9076
    %v10573 = vunpack.c.h.b16 %v9076
    %v10574 = vunpack.c.l.b16 %v9077
    %v10575 = vunpack.c.h.b16 %v9077
    %v10576 = vunpack.c.l.b16 %v9078
    %v10577 = vunpack.c.h.b16 %v9078
    %v10578 = vunpack.c.l.b16 %v9079
    %v10579 = vunpack.c.h.b16 %v9079
    %v10580 = vunpack.c.l.b16 %v9080
    %v10581 = vunpack.c.h.b16 %v9080
    %v10582 = vunpack.c.l.b16 %v9081
    %v10583 = vunpack.c.h.b16 %v9081
    %v10584 = vunpack.c.l.b16 %v9082
    %v10585 = vunpack.c.h.b16 %v9082
    %v10586 = vunpack.c.l.b16 %v9083
    %v10587 = vunpack.c.h.b16 %v9083
    %v10588 = vunpack.c.l.b16 %v9084
    %v10589 = vunpack.c.h.b16 %v9084
    %v10590 = vunpack.c.l.b16 %v9085
    %v10591 = vunpack.c.h.b16 %v9085
    %v10592 = vunpack.c.l.b16 %v9086
    %v10593 = vunpack.c.h.b16 %v9086
    %v10594 = vunpack.c.l.b16 %v9087
    %v10595 = vunpack.c.h.b16 %v9087
    %v10596 = vunpack.c.l.b16 %v9088
    %v10597 = vunpack.c.h.b16 %v9088
    %v10598 = vunpack.c.l.b16 %v9089
    %v10599 = vunpack.c.h.b16 %v9089
    %v10600 = vunpack.c.l.b16 %v9090
    %v10601 = vunpack.c.h.b16 %v9090
    %v10602 = vunpack.c.l.b16 %v9091
    %v10603 = vunpack.c.h.b16 %v9091
    %v10604 = vunpack.c.l.b16 %v9092
    %v10605 = vunpack.c.h.b16 %v9092
    %v10606 = vunpack.c.l.b16 %v9093
    %v10607 = vunpack.c.h.b16 %v9093
    %v10608 = vunpack.c.l.b16 %v9094
    %v10609 = vunpack.c.h.b16 %v9094
    %v10610 = vunpack.c.l.b16 %v9095
    %v10611 = vunpack.c.h.b16 %v9095
    %v10612 = vunpack.c.l.b16 %v9096
    %v10613 = vunpack.c.h.b16 %v9096
    %v10614 = vunpack.c.l.b16 %v9097
    %v10615 = vunpack.c.h.b16 %v9097
    %v10616 = vunpack.c.l.b16 %v9098
    %v10617 = vunpack.c.h.b16 %v9098
    %v10618 = vunpack.c.l.b16 %v9099
    %v10619 = vunpack.c.h.b16 %v9099
    %v10620 = vunpack.c.l.b16 %v9100
    %v10621 = vunpack.c.h.b16 %v9100
    %v10622 = vunpack.c.l.b16 %v9101
    %v10623 = vunpack.c.h.b16 %v9101
    %v10624 = vunpack.c.l.b16 %v9102
    %v10625 = vunpack.c.h.b16 %v9102
    %v10626 = vunpack.c.l.b16 %v9103
    %v10627 = vunpack.c.h.b16 %v9103
    %v10628 = vunpack.c.l.b16 %v9104
    %v10629 = vunpack.c.h.b16 %v9104
    %v10630 = vunpack.c.l.b16 %v9105
    %v10631 = vunpack.c.h.b16 %v9105
    %v10632 = vunpack.c.l.b16 %v9106
    %v10633 = vunpack.c.h.b16 %v9106
    %v10634 = vunpack.c.l.b16 %v9107
    %v10635 = vunpack.c.h.b16 %v9107
    %v10636 = vunpack.c.l.b16 %v9108
    %v10637 = vunpack.c.h.b16 %v9108
    %v10638 = vunpack.c.l.b16 %v9109
    %v10639 = vunpack.c.h.b16 %v9109
    %v10640 = vunpack.c.l.b16 %v9110
    %v10641 = vunpack.c.h.b16 %v9110
    %v10642 = vunpack.c.l.b16 %v9111
    %v10643 = vunpack.c.h.b16 %v9111
    %v10644 = vunpack.c.l.b16 %v9112
    %v10645 = vunpack.c.h.b16 %v9112
    %v10646 = vunpack.c.l.b16 %v9113
    %v10647 = vunpack.c.h.b16 %v9113
    %v10648 = vunpack.c.l.b16 %v9114
    %v10649 = vunpack.c.h.b16 %v9114
    %v10650 = vunpack.c.l.b16 %v9115
    %v10651 = vunpack.c.h.b16 %v9115
    %v10652 = vunpack.c.l.b16 %v9116
    %v10653 = vunpack.c.h.b16 %v9116
    %v10654 = vunpack.c.l.b16 %v9117
    %v10655 = vunpack.c.h.b16 %v9117
    %v10656 = vunpack.c.l.b16 %v9118
    %v10657 = vunpack.c.h.b16 %v9118
    %v10658 = vunpack.c.l.b16 %v9119
    %v10659 = vunpack.c.h.b16 %v9119
    %v10660 = vunpack.c.l.b16 %v9120
    %v10661 = vunpack.c.h.b16 %v9120
    %v10662 = vunpack.c.l.b16 %v9121
    %v10663 = vunpack.c.h.b16 %v9121
    %v10664 = vunpack.c.l.b16 %v9122
    %v10665 = vunpack.c.h.b16 %v9122
    %v10666 = vunpack.c.l.b16 %v9123
    %v10667 = vunpack.c.h.b16 %v9123
    %v10668 = vunpack.c.l.b16 %v9124
    %v10669 = vunpack.c.h.b16 %v9124
    %v10670 = vunpack.c.l.b16 %v9125
    %v10671 = vunpack.c.h.b16 %v9125
    %v10672 = vunpack.c.l.b16 %v9126
    %v10673 = vunpack.c.h.b16 %v9126
    %v10674 = vunpack.c.l.b16 %v9127
    %v10675 = vunpack.c.h.b16 %v9127
    %v10676 = vunpack.c.l.b16 %v9128
    %v10677 = vunpack.c.h.b16 %v9128
    %v10678 = vunpack.c.l.b16 %v9129
    %v10679 = vunpack.c.h.b16 %v9129
    %v10680 = vunpack.c.l.b16 %v9130
    %v10681 = vunpack.c.h.b16 %v9130
    %v10682 = vunpack.c.l.b16 %v9131
    %v10683 = vunpack.c.h.b16 %v9131
    %v10684 = vunpack.c.l.b16 %v9132
    %v10685 = vunpack.c.h.b16 %v9132
    %v10686 = vunpack.c.l.b16 %v9133
    %v10687 = vunpack.c.h.b16 %v9133
    %v10688 = vunpack.c.l.b16 %v9134
    %v10689 = vunpack.c.h.b16 %v9134
    %v10690 = vunpack.c.l.b16 %v9135
    %v10691 = vunpack.c.h.b16 %v9135
    %v10692 = vunpack.c.l.b16 %v9136
    %v10693 = vunpack.c.h.b16 %v9136
    %v10694 = vunpack.c.l.b16 %v9137
    %v10695 = vunpack.c.h.b16 %v9137
    %v10696 = vunpack.c.l.b16 %v9138
    %v10697 = vunpack.c.h.b16 %v9138
    %v10698 = vunpack.c.l.b16 %v9139
    %v10699 = vunpack.c.h.b16 %v9139
    %v10700 = vunpack.c.l.b16 %v9140
    %v10701 = vunpack.c.h.b16 %v9140
    %v10702 = vunpack.c.l.b16 %v9141
    %v10703 = vunpack.c.h.b16 %v9141
    %v10704 = vunpack.c.l.b16 %v9142
    %v10705 = vunpack.c.h.b16 %v9142
    %v10706 = vunpack.c.l.b16 %v9143
    %v10707 = vunpack.c.h.b16 %v9143
    %v10708 = vunpack.c.l.b16 %v9144
    %v10709 = vunpack.c.h.b16 %v9144
    %v10710 = vunpack.c.l.b16 %v9145
    %v10711 = vunpack.c.h.b16 %v9145
    %v10712 = vunpack.c.l.b16 %v9146
    %v10713 = vunpack.c.h.b16 %v9146
    %v10714 = vunpack.c.l.b16 %v9147
    %v10715 = vunpack.c.h.b16 %v9147
    %v10716 = vunpack.c.l.b16 %v9148
    %v10717 = vunpack.c.h.b16 %v9148
    %v10718 = vunpack.c.l.b16 %v9149
    %v10719 = vunpack.c.h.b16 %v9149
    %v10720 = vunpack.c.l.b16 %v9150
    %v10721 = vunpack.c.h.b16 %v9150
    %v10722 = vunpack.c.l.b16 %v9151
    %v10723 = vunpack.c.h.b16 %v9151
    %v10724 = vunpack.c.l.b16 %v9152
    %v10725 = vunpack.c.h.b16 %v9152
    %v10726 = vunpack.c.l.b16 %v9153
    %v10727 = vunpack.c.h.b16 %v9153
    %v10728 = vunpack.c.l.b16 %v9154
    %v10729 = vunpack.c.h.b16 %v9154
    %v10730 = vunpack.c.l.b16 %v9155
    %v10731 = vunpack.c.h.b16 %v9155
    %v10732 = vunpack.c.l.b16 %v9156
    %v10733 = vunpack.c.h.b16 %v9156
    %v10734 = vunpack.c.l.b16 %v9157
    %v10735 = vunpack.c.h.b16 %v9157
    %v10736 = vpack.c.b16 %v9720, %v9712
    %v10737 = vpack.c.b16 %v9721, %v9713
    %v10738 = vpack.c.b16 %v9722, %v9714
    %v10739 = vpack.c.b16 %v9723, %v9715
    %v10740 = vpack.c.b16 %v9724, %v9716
    %v10741 = vpack.c.b16 %v9725, %v9717
    %v10742 = vpack.c.b16 %v9726, %v9718
    %v10743 = vpack.c.b16 %v9727, %v9719
    %v10744 = vpack.c.b16 %v9736, %v9728
    %v10745 = vpack.c.b16 %v9737, %v9729
    %v10746 = vpack.c.b16 %v9738, %v9730
    %v10747 = vpack.c.b16 %v9739, %v9731
    %v10748 = vpack.c.b16 %v9740, %v9732
    %v10749 = vpack.c.b16 %v9741, %v9733
    %v10750 = vpack.c.b16 %v9742, %v9734
    %v10751 = vpack.c.b16 %v9743, %v9735
    %v10752 = vpack.c.b16 %v9752, %v9744
    %v10753 = vpack.c.b16 %v9753, %v9745
    %v10754 = vpack.c.b16 %v9754, %v9746
    %v10755 = vpack.c.b16 %v9755, %v9747
    %v10756 = vpack.c.b16 %v9756, %v9748
    %v10757 = vpack.c.b16 %v9757, %v9749
    %v10758 = vpack.c.b16 %v9758, %v9750
    %v10759 = vpack.c.b16 %v9759, %v9751
    %v10760 = vpack.c.b16 %v9768, %v9760
    %v10761 = vpack.c.b16 %v9769, %v9761
    %v10762 = vpack.c.b16 %v9770, %v9762
    %v10763 = vpack.c.b16 %v9771, %v9763
    %v10764 = vpack.c.b16 %v9772, %v9764
    %v10765 = vpack.c.b16 %v9773, %v9765
    %v10766 = vpack.c.b16 %v9774, %v9766
    %v10767 = vpack.c.b16 %v9775, %v9767
    %v10768 = vpack.c.b16 %v9784, %v9776
    %v10769 = vpack.c.b16 %v9785, %v9777
    %v10770 = vpack.c.b16 %v9786, %v9778
    %v10771 = vpack.c.b16 %v9787, %v9779
    %v10772 = vpack.c.b16 %v9788, %v9780
    %v10773 = vpack.c.b16 %v9789, %v9781
    %v10774 = vpack.c.b16 %v9790, %v9782
    %v10775 = vpack.c.b16 %v9791, %v9783
    %v10776 = vpack.c.b16 %v9800, %v9792
    %v10777 = vpack.c.b16 %v9801, %v9793
    %v10778 = vpack.c.b16 %v9802, %v9794
    %v10779 = vpack.c.b16 %v9803, %v9795
    %v10780 = vpack.c.b16 %v9804, %v9796
    %v10781 = vpack.c.b16 %v9805, %v9797
    %v10782 = vpack.c.b16 %v9806, %v9798
    %v10783 = vpack.c.b16 %v9807, %v9799
    %v10784 = vpack.c.b16 %v9816, %v9808
    %v10785 = vpack.c.b16 %v9817, %v9809
    %v10786 = vpack.c.b16 %v9818, %v9810
    %v10787 = vpack.c.b16 %v9819, %v9811
    %v10788 = vpack.c.b16 %v9820, %v9812
    %v10789 = vpack.c.b16 %v9821, %v9813
    %v10790 = vpack.c.b16 %v9822, %v9814
    %v10791 = vpack.c.b16 %v9823, %v9815
    %v10792 = vpack.c.b16 %v9832, %v9824
    %v10793 = vpack.c.b16 %v9833, %v9825
    %v10794 = vpack.c.b16 %v9834, %v9826
    %v10795 = vpack.c.b16 %v9835, %v9827
    %v10796 = vpack.c.b16 %v9836, %v9828
    %v10797 = vpack.c.b16 %v9837, %v9829
    %v10798 = vpack.c.b16 %v9838, %v9830
    %v10799 = vpack.c.b16 %v9839, %v9831
    %v10800 = vpack.c.b16 %v9848, %v9840
    %v10801 = vpack.c.b16 %v9849, %v9841
    %v10802 = vpack.c.b16 %v9850, %v9842
    %v10803 = vpack.c.b16 %v9851, %v9843
    %v10804 = vpack.c.b16 %v9852, %v9844
    %v10805 = vpack.c.b16 %v9853, %v9845
    %v10806 = vpack.c.b16 %v9854, %v9846
    %v10807 = vpack.c.b16 %v9855, %v9847
    %v10808 = vpack.c.b16 %v9864, %v9856
    %v10809 = vpack.c.b16 %v9865, %v9857
    %v10810 = vpack.c.b16 %v9866, %v9858
    %v10811 = vpack.c.b16 %v9867, %v9859
    %v10812 = vpack.c.b16 %v9868, %v9860
    %v10813 = vpack.c.b16 %v9869, %v9861
    %v10814 = vpack.c.b16 %v9870, %v9862
    %v10815 = vpack.c.b16 %v9871, %v9863
    %v10816 = vpack.c.b16 %v9880, %v9872
    %v10817 = vpack.c.b16 %v9881, %v9873
    %v10818 = vpack.c.b16 %v9882, %v9874
    %v10819 = vpack.c.b16 %v9883, %v9875
    %v10820 = vpack.c.b16 %v9884, %v9876
    %v10821 = vpack.c.b16 %v9885, %v9877
    %v10822 = vpack.c.b16 %v9886, %v9878
    %v10823 = vpack.c.b16 %v9887, %v9879
    %v10824 = vpack.c.b16 %v9896, %v9888
    %v10825 = vpack.c.b16 %v9897, %v9889
    %v10826 = vpack.c.b16 %v9898, %v9890
    %v10827 = vpack.c.b16 %v9899, %v9891
    %v10828 = vpack.c.b16 %v9900, %v9892
    %v10829 = vpack.c.b16 %v9901, %v9893
    %v10830 = vpack.c.b16 %v9902, %v9894
    %v10831 = vpack.c.b16 %v9903, %v9895
    %v10832 = vpack.c.b16 %v9912, %v9904
    %v10833 = vpack.c.b16 %v9913, %v9905
    %v10834 = vpack.c.b16 %v9914, %v9906
    %v10835 = vpack.c.b16 %v9915, %v9907
    %v10836 = vpack.c.b16 %v9916, %v9908
    %v10837 = vpack.c.b16 %v9917, %v9909
    %v10838 = vpack.c.b16 %v9918, %v9910
    %v10839 = vpack.c.b16 %v9919, %v9911
    %v10840 = vpack.c.b16 %v9928, %v9920
    %v10841 = vpack.c.b16 %v9929, %v9921
    %v10842 = vpack.c.b16 %v9930, %v9922
    %v10843 = vpack.c.b16 %v9931, %v9923
    %v10844 = vpack.c.b16 %v9932, %v9924
    %v10845 = vpack.c.b16 %v9933, %v9925
    %v10846 = vpack.c.b16 %v9934, %v9926
    %v10847 = vpack.c.b16 %v9935, %v9927
    %v10848 = vpack.c.b16 %v9944, %v9936
    %v10849 = vpack.c.b16 %v9945, %v9937
    %v10850 = vpack.c.b16 %v9946, %v9938
    %v10851 = vpack.c.b16 %v9947, %v9939
    %v10852 = vpack.c.b16 %v9948, %v9940
    %v10853 = vpack.c.b16 %v9949, %v9941
    %v10854 = vpack.c.b16 %v9950, %v9942
    %v10855 = vpack.c.b16 %v9951, %v9943
    %v10856 = vpack.c.b16 %v9960, %v9952
    %v10857 = vpack.c.b16 %v9961, %v9953
    %v10858 = vpack.c.b16 %v9962, %v9954
    %v10859 = vpack.c.b16 %v9963, %v9955
    %v10860 = vpack.c.b16 %v9964, %v9956
    %v10861 = vpack.c.b16 %v9965, %v9957
    %v10862 = vpack.c.b16 %v9966, %v9958
    %v10863 = vpack.c.b16 %v9967, %v9959
    %v10864 = vpack.c.b16 %v9976, %v9968
    %v10865 = vpack.c.b16 %v9977, %v9969
    %v10866 = vpack.c.b16 %v9978, %v9970
    %v10867 = vpack.c.b16 %v9979, %v9971
    %v10868 = vpack.c.b16 %v9980, %v9972
    %v10869 = vpack.c.b16 %v9981, %v9973
    %v10870 = vpack.c.b16 %v9982, %v9974
    %v10871 = vpack.c.b16 %v9983, %v9975
    %v10872 = vpack.c.b16 %v9992, %v9984
    %v10873 = vpack.c.b16 %v9993, %v9985
    %v10874 = vpack.c.b16 %v9994, %v9986
    %v10875 = vpack.c.b16 %v9995, %v9987
    %v10876 = vpack.c.b16 %v9996, %v9988
    %v10877 = vpack.c.b16 %v9997, %v9989
    %v10878 = vpack.c.b16 %v9998, %v9990
    %v10879 = vpack.c.b16 %v9999, %v9991
    %v10880 = vpack.c.b16 %v10008, %v10000
    %v10881 = vpack.c.b16 %v10009, %v10001
    %v10882 = vpack.c.b16 %v10010, %v10002
    %v10883 = vpack.c.b16 %v10011, %v10003
    %v10884 = vpack.c.b16 %v10012, %v10004
    %v10885 = vpack.c.b16 %v10013, %v10005
    %v10886 = vpack.c.b16 %v10014, %v10006
    %v10887 = vpack.c.b16 %v10015, %v10007
    %v10888 = vpack.c.b16 %v10024, %v10016
    %v10889 = vpack.c.b16 %v10025, %v10017
    %v10890 = vpack.c.b16 %v10026, %v10018
    %v10891 = vpack.c.b16 %v10027, %v10019
    %v10892 = vpack.c.b16 %v10028, %v10020
    %v10893 = vpack.c.b16 %v10029, %v10021
    %v10894 = vpack.c.b16 %v10030, %v10022
    %v10895 = vpack.c.b16 %v10031, %v10023
    %v10896 = vpack.c.b16 %v10040, %v10032
    %v10897 = vpack.c.b16 %v10041, %v10033
    %v10898 = vpack.c.b16 %v10042, %v10034
    %v10899 = vpack.c.b16 %v10043, %v10035
    %v10900 = vpack.c.b16 %v10044, %v10036
    %v10901 = vpack.c.b16 %v10045, %v10037
    %v10902 = vpack.c.b16 %v10046, %v10038
    %v10903 = vpack.c.b16 %v10047, %v10039
    %v10904 = vpack.c.b16 %v10056, %v10048
    %v10905 = vpack.c.b16 %v10057, %v10049
    %v10906 = vpack.c.b16 %v10058, %v10050
    %v10907 = vpack.c.b16 %v10059, %v10051
    %v10908 = vpack.c.b16 %v10060, %v10052
    %v10909 = vpack.c.b16 %v10061, %v10053
    %v10910 = vpack.c.b16 %v10062, %v10054
    %v10911 = vpack.c.b16 %v10063, %v10055
    %v10912 = vpack.c.b16 %v10072, %v10064
    %v10913 = vpack.c.b16 %v10073, %v10065
    %v10914 = vpack.c.b16 %v10074, %v10066
    %v10915 = vpack.c.b16 %v10075, %v10067
    %v10916 = vpack.c.b16 %v10076, %v10068
    %v10917 = vpack.c.b16 %v10077, %v10069
    %v10918 = vpack.c.b16 %v10078, %v10070
    %v10919 = vpack.c.b16 %v10079, %v10071
    %v10920 = vpack.c.b16 %v10088, %v10080
    %v10921 = vpack.c.b16 %v10089, %v10081
    %v10922 = vpack.c.b16 %v10090, %v10082
    %v10923 = vpack.c.b16 %v10091, %v10083
    %v10924 = vpack.c.b16 %v10092, %v10084
    %v10925 = vpack.c.b16 %v10093, %v10085
    %v10926 = vpack.c.b16 %v10094, %v10086
    %v10927 = vpack.c.b16 %v10095, %v10087
    %v10928 = vpack.c.b16 %v10104, %v10096
    %v10929 = vpack.c.b16 %v10105, %v10097
    %v10930 = vpack.c.b16 %v10106, %v10098
    %v10931 = vpack.c.b16 %v10107, %v10099
    %v10932 = vpack.c.b16 %v10108, %v10100
    %v10933 = vpack.c.b16 %v10109, %v10101
    %v10934 = vpack.c.b16 %v10110, %v10102
    %v10935 = vpack.c.b16 %v10111, %v10103
    %v10936 = vpack.c.b16 %v10120, %v10112
    %v10937 = vpack.c.b16 %v10121, %v10113
    %v10938 = vpack.c.b16 %v10122, %v10114
    %v10939 = vpack.c.b16 %v10123, %v10115
    %v10940 = vpack.c.b16 %v10124, %v10116
    %v10941 = vpack.c.b16 %v10125, %v10117
    %v10942 = vpack.c.b16 %v10126, %v10118
    %v10943 = vpack.c.b16 %v10127, %v10119
    %v10944 = vpack.c.b16 %v10136, %v10128
    %v10945 = vpack.c.b16 %v10137, %v10129
    %v10946 = vpack.c.b16 %v10138, %v10130
    %v10947 = vpack.c.b16 %v10139, %v10131
    %v10948 = vpack.c.b16 %v10140, %v10132
    %v10949 = vpack.c.b16 %v10141, %v10133
    %v10950 = vpack.c.b16 %v10142, %v10134
    %v10951 = vpack.c.b16 %v10143, %v10135
    %v10952 = vpack.c.b16 %v10152, %v10144
    %v10953 = vpack.c.b16 %v10153, %v10145
    %v10954 = vpack.c.b16 %v10154, %v10146
    %v10955 = vpack.c.b16 %v10155, %v10147
    %v10956 = vpack.c.b16 %v10156, %v10148
    %v10957 = vpack.c.b16 %v10157, %v10149
    %v10958 = vpack.c.b16 %v10158, %v10150
    %v10959 = vpack.c.b16 %v10159, %v10151
    %v10960 = vpack.c.b16 %v10168, %v10160
    %v10961 = vpack.c.b16 %v10169, %v10161
    %v10962 = vpack.c.b16 %v10170, %v10162
    %v10963 = vpack.c.b16 %v10171, %v10163
    %v10964 = vpack.c.b16 %v10172, %v10164
    %v10965 = vpack.c.b16 %v10173, %v10165
    %v10966 = vpack.c.b16 %v10174, %v10166
    %v10967 = vpack.c.b16 %v10175, %v10167
    %v10968 = vpack.c.b16 %v10184, %v10176
    %v10969 = vpack.c.b16 %v10185, %v10177
    %v10970 = vpack.c.b16 %v10186, %v10178
    %v10971 = vpack.c.b16 %v10187, %v10179
    %v10972 = vpack.c.b16 %v10188, %v10180
    %v10973 = vpack.c.b16 %v10189, %v10181
    %v10974 = vpack.c.b16 %v10190, %v10182
    %v10975 = vpack.c.b16 %v10191, %v10183
    %v10976 = vpack.c.b16 %v10200, %v10192
    %v10977 = vpack.c.b16 %v10201, %v10193
    %v10978 = vpack.c.b16 %v10202, %v10194
    %v10979 = vpack.c.b16 %v10203, %v10195
    %v10980 = vpack.c.b16 %v10204, %v10196
    %v10981 = vpack.c.b16 %v10205, %v10197
    %v10982 = vpack.c.b16 %v10206, %v10198
    %v10983 = vpack.c.b16 %v10207, %v10199
    %v10984 = vpack.c.b16 %v10216, %v10208
    %v10985 = vpack.c.b16 %v10217, %v10209
    %v10986 = vpack.c.b16 %v10218, %v10210
    %v10987 = vpack.c.b16 %v10219, %v10211
    %v10988 = vpack.c.b16 %v10220, %v10212
    %v10989 = vpack.c.b16 %v10221, %v10213
    %v10990 = vpack.c.b16 %v10222, %v10214
    %v10991 = vpack.c.b16 %v10223, %v10215
    %v10992 = vpack.c.b16 %v10232, %v10224
    %v10993 = vpack.c.b16 %v10233, %v10225
    %v10994 = vpack.c.b16 %v10234, %v10226
    %v10995 = vpack.c.b16 %v10235, %v10227
    %v10996 = vpack.c.b16 %v10236, %v10228
    %v10997 = vpack.c.b16 %v10237, %v10229
    %v10998 = vpack.c.b16 %v10238, %v10230
    %v10999 = vpack.c.b16 %v10239, %v10231
    %v11000 = vpack.c.b16 %v10248, %v10240
    %v11001 = vpack.c.b16 %v10249, %v10241
    %v11002 = vpack.c.b16 %v10250, %v10242
    %v11003 = vpack.c.b16 %v10251, %v10243
    %v11004 = vpack.c.b16 %v10252, %v10244
    %v11005 = vpack.c.b16 %v10253, %v10245
    %v11006 = vpack.c.b16 %v10254, %v10246
    %v11007 = vpack.c.b16 %v10255, %v10247
    %v11008 = vpack.c.b16 %v10264, %v10256
    %v11009 = vpack.c.b16 %v10265, %v10257
    %v11010 = vpack.c.b16 %v10266, %v10258
    %v11011 = vpack.c.b16 %v10267, %v10259
    %v11012 = vpack.c.b16 %v10268, %v10260
    %v11013 = vpack.c.b16 %v10269, %v10261
    %v11014 = vpack.c.b16 %v10270, %v10262
    %v11015 = vpack.c.b16 %v10271, %v10263
    %v11016 = vpack.c.b16 %v10280, %v10272
    %v11017 = vpack.c.b16 %v10281, %v10273
    %v11018 = vpack.c.b16 %v10282, %v10274
    %v11019 = vpack.c.b16 %v10283, %v10275
    %v11020 = vpack.c.b16 %v10284, %v10276
    %v11021 = vpack.c.b16 %v10285, %v10277
    %v11022 = vpack.c.b16 %v10286, %v10278
    %v11023 = vpack.c.b16 %v10287, %v10279
    %v11024 = vpack.c.b16 %v10296, %v10288
    %v11025 = vpack.c.b16 %v10297, %v10289
    %v11026 = vpack.c.b16 %v10298, %v10290
    %v11027 = vpack.c.b16 %v10299, %v10291
    %v11028 = vpack.c.b16 %v10300, %v10292
    %v11029 = vpack.c.b16 %v10301, %v10293
    %v11030 = vpack.c.b16 %v10302, %v10294
    %v11031 = vpack.c.b16 %v10303, %v10295
    %v11032 = vpack.c.b16 %v10312, %v10304
    %v11033 = vpack.c.b16 %v10313, %v10305
    %v11034 = vpack.c.b16 %v10314, %v10306
    %v11035 = vpack.c.b16 %v10315, %v10307
    %v11036 = vpack.c.b16 %v10316, %v10308
    %v11037 = vpack.c.b16 %v10317, %v10309
    %v11038 = vpack.c.b16 %v10318, %v10310
    %v11039 = vpack.c.b16 %v10319, %v10311
    %v11040 = vpack.c.b16 %v10328, %v10320
    %v11041 = vpack.c.b16 %v10329, %v10321
    %v11042 = vpack.c.b16 %v10330, %v10322
    %v11043 = vpack.c.b16 %v10331, %v10323
    %v11044 = vpack.c.b16 %v10332, %v10324
    %v11045 = vpack.c.b16 %v10333, %v10325
    %v11046 = vpack.c.b16 %v10334, %v10326
    %v11047 = vpack.c.b16 %v10335, %v10327
    %v11048 = vpack.c.b16 %v10344, %v10336
    %v11049 = vpack.c.b16 %v10345, %v10337
    %v11050 = vpack.c.b16 %v10346, %v10338
    %v11051 = vpack.c.b16 %v10347, %v10339
    %v11052 = vpack.c.b16 %v10348, %v10340
    %v11053 = vpack.c.b16 %v10349, %v10341
    %v11054 = vpack.c.b16 %v10350, %v10342
    %v11055 = vpack.c.b16 %v10351, %v10343
    %v11056 = vpack.c.b16 %v10360, %v10352
    %v11057 = vpack.c.b16 %v10361, %v10353
    %v11058 = vpack.c.b16 %v10362, %v10354
    %v11059 = vpack.c.b16 %v10363, %v10355
    %v11060 = vpack.c.b16 %v10364, %v10356
    %v11061 = vpack.c.b16 %v10365, %v10357
    %v11062 = vpack.c.b16 %v10366, %v10358
    %v11063 = vpack.c.b16 %v10367, %v10359
    %v11064 = vpack.c.b16 %v10376, %v10368
    %v11065 = vpack.c.b16 %v10377, %v10369
    %v11066 = vpack.c.b16 %v10378, %v10370
    %v11067 = vpack.c.b16 %v10379, %v10371
    %v11068 = vpack.c.b16 %v10380, %v10372
    %v11069 = vpack.c.b16 %v10381, %v10373
    %v11070 = vpack.c.b16 %v10382, %v10374
    %v11071 = vpack.c.b16 %v10383, %v10375
    %v11072 = vpack.c.b16 %v10392, %v10384
    %v11073 = vpack.c.b16 %v10393, %v10385
    %v11074 = vpack.c.b16 %v10394, %v10386
    %v11075 = vpack.c.b16 %v10395, %v10387
    %v11076 = vpack.c.b16 %v10396, %v10388
    %v11077 = vpack.c.b16 %v10397, %v10389
    %v11078 = vpack.c.b16 %v10398, %v10390
    %v11079 = vpack.c.b16 %v10399, %v10391
    %v11080 = vpack.c.b16 %v10408, %v10400
    %v11081 = vpack.c.b16 %v10409, %v10401
    %v11082 = vpack.c.b16 %v10410, %v10402
    %v11083 = vpack.c.b16 %v10411, %v10403
    %v11084 = vpack.c.b16 %v10412, %v10404
    %v11085 = vpack.c.b16 %v10413, %v10405
    %v11086 = vpack.c.b16 %v10414, %v10406
    %v11087 = vpack.c.b16 %v10415, %v10407
    %v11088 = vpack.c.b16 %v10424, %v10416
    %v11089 = vpack.c.b16 %v10425, %v10417
    %v11090 = vpack.c.b16 %v10426, %v10418
    %v11091 = vpack.c.b16 %v10427, %v10419
    %v11092 = vpack.c.b16 %v10428, %v10420
    %v11093 = vpack.c.b16 %v10429, %v10421
    %v11094 = vpack.c.b16 %v10430, %v10422
    %v11095 = vpack.c.b16 %v10431, %v10423
    %v11096 = vpack.c.b16 %v10440, %v10432
    %v11097 = vpack.c.b16 %v10441, %v10433
    %v11098 = vpack.c.b16 %v10442, %v10434
    %v11099 = vpack.c.b16 %v10443, %v10435
    %v11100 = vpack.c.b16 %v10444, %v10436
    %v11101 = vpack.c.b16 %v10445, %v10437
    %v11102 = vpack.c.b16 %v10446, %v10438
    %v11103 = vpack.c.b16 %v10447, %v10439
    %v11104 = vpack.c.b16 %v10456, %v10448
    %v11105 = vpack.c.b16 %v10457, %v10449
    %v11106 = vpack.c.b16 %v10458, %v10450
    %v11107 = vpack.c.b16 %v10459, %v10451
    %v11108 = vpack.c.b16 %v10460, %v10452
    %v11109 = vpack.c.b16 %v10461, %v10453
    %v11110 = vpack.c.b16 %v10462, %v10454
    %v11111 = vpack.c.b16 %v10463, %v10455
    %v11112 = vpack.c.b16 %v10472, %v10464
    %v11113 = vpack.c.b16 %v10473, %v10465
    %v11114 = vpack.c.b16 %v10474, %v10466
    %v11115 = vpack.c.b16 %v10475, %v10467
    %v11116 = vpack.c.b16 %v10476, %v10468
    %v11117 = vpack.c.b16 %v10477, %v10469
    %v11118 = vpack.c.b16 %v10478, %v10470
    %v11119 = vpack.c.b16 %v10479, %v10471
    %v11120 = vpack.c.b16 %v10488, %v10480
    %v11121 = vpack.c.b16 %v10489, %v10481
    %v11122 = vpack.c.b16 %v10490, %v10482
    %v11123 = vpack.c.b16 %v10491, %v10483
    %v11124 = vpack.c.b16 %v10492, %v10484
    %v11125 = vpack.c.b16 %v10493, %v10485
    %v11126 = vpack.c.b16 %v10494, %v10486
    %v11127 = vpack.c.b16 %v10495, %v10487
    %v11128 = vpack.c.b16 %v10504, %v10496
    %v11129 = vpack.c.b16 %v10505, %v10497
    %v11130 = vpack.c.b16 %v10506, %v10498
    %v11131 = vpack.c.b16 %v10507, %v10499
    %v11132 = vpack.c.b16 %v10508, %v10500
    %v11133 = vpack.c.b16 %v10509, %v10501
    %v11134 = vpack.c.b16 %v10510, %v10502
    %v11135 = vpack.c.b16 %v10511, %v10503
    %v11136 = vpack.c.b16 %v10520, %v10512
    %v11137 = vpack.c.b16 %v10521, %v10513
    %v11138 = vpack.c.b16 %v10522, %v10514
    %v11139 = vpack.c.b16 %v10523, %v10515
    %v11140 = vpack.c.b16 %v10524, %v10516
    %v11141 = vpack.c.b16 %v10525, %v10517
    %v11142 = vpack.c.b16 %v10526, %v10518
    %v11143 = vpack.c.b16 %v10527, %v10519
    %v11144 = vpack.c.b16 %v10536, %v10528
    %v11145 = vpack.c.b16 %v10537, %v10529
    %v11146 = vpack.c.b16 %v10538, %v10530
    %v11147 = vpack.c.b16 %v10539, %v10531
    %v11148 = vpack.c.b16 %v10540, %v10532
    %v11149 = vpack.c.b16 %v10541, %v10533
    %v11150 = vpack.c.b16 %v10542, %v10534
    %v11151 = vpack.c.b16 %v10543, %v10535
    %v11152 = vpack.c.b16 %v10552, %v10544
    %v11153 = vpack.c.b16 %v10553, %v10545
    %v11154 = vpack.c.b16 %v10554, %v10546
    %v11155 = vpack.c.b16 %v10555, %v10547
    %v11156 = vpack.c.b16 %v10556, %v10548
    %v11157 = vpack.c.b16 %v10557, %v10549
    %v11158 = vpack.c.b16 %v10558, %v10550
    %v11159 = vpack.c.b16 %v10559, %v10551
    %v11160 = vpack.c.b16 %v10568, %v10560
    %v11161 = vpack.c.b16 %v10569, %v10561
    %v11162 = vpack.c.b16 %v10570, %v10562
    %v11163 = vpack.c.b16 %v10571, %v10563
    %v11164 = vpack.c.b16 %v10572, %v10564
    %v11165 = vpack.c.b16 %v10573, %v10565
    %v11166 = vpack.c.b16 %v10574, %v10566
    %v11167 = vpack.c.b16 %v10575, %v10567
    %v11168 = vpack.c.b16 %v10584, %v10576
    %v11169 = vpack.c.b16 %v10585, %v10577
    %v11170 = vpack.c.b16 %v10586, %v10578
    %v11171 = vpack.c.b16 %v10587, %v10579
    %v11172 = vpack.c.b16 %v10588, %v10580
    %v11173 = vpack.c.b16 %v10589, %v10581
    %v11174 = vpack.c.b16 %v10590, %v10582
    %v11175 = vpack.c.b16 %v10591, %v10583
    %v11176 = vpack.c.b16 %v10600, %v10592
    %v11177 = vpack.c.b16 %v10601, %v10593
    %v11178 = vpack.c.b16 %v10602, %v10594
    %v11179 = vpack.c.b16 %v10603, %v10595
    %v11180 = vpack.c.b16 %v10604, %v10596
    %v11181 = vpack.c.b16 %v10605, %v10597
    %v11182 = vpack.c.b16 %v10606, %v10598
    %v11183 = vpack.c.b16 %v10607, %v10599
    %v11184 = vpack.c.b16 %v10616, %v10608
    %v11185 = vpack.c.b16 %v10617, %v10609
    %v11186 = vpack.c.b16 %v10618, %v10610
    %v11187 = vpack.c.b16 %v10619, %v10611
    %v11188 = vpack.c.b16 %v10620, %v10612
    %v11189 = vpack.c.b16 %v10621, %v10613
    %v11190 = vpack.c.b16 %v10622, %v10614
    %v11191 = vpack.c.b16 %v10623, %v10615
    %v11192 = vpack.c.b16 %v10632, %v10624
    %v11193 = vpack.c.b16 %v10633, %v10625
    %v11194 = vpack.c.b16 %v10634, %v10626
    %v11195 = vpack.c.b16 %v10635, %v10627
    %v11196 = vpack.c.b16 %v10636, %v10628
    %v11197 = vpack.c.b16 %v10637, %v10629
    %v11198 = vpack.c.b16 %v10638, %v10630
    %v11199 = vpack.c.b16 %v10639, %v10631
    %v11200 = vpack.c.b16 %v10648, %v10640
    %v11201 = vpack.c.b16 %v10649, %v10641
    %v11202 = vpack.c.b16 %v10650, %v10642
    %v11203 = vpack.c.b16 %v10651, %v10643
    %v11204 = vpack.c.b16 %v10652, %v10644
    %v11205 = vpack.c.b16 %v10653, %v10645
    %v11206 = vpack.c.b16 %v10654, %v10646
    %v11207 = vpack.c.b16 %v10655, %v10647
    %v11208 = vpack.c.b16 %v10664, %v10656
    %v11209 = vpack.c.b16 %v10665, %v10657
    %v11210 = vpack.c.b16 %v10666, %v10658
    %v11211 = vpack.c.b16 %v10667, %v10659
    %v11212 = vpack.c.b16 %v10668, %v10660
    %v11213 = vpack.c.b16 %v10669, %v10661
    %v11214 = vpack.c.b16 %v10670, %v10662
    %v11215 = vpack.c.b16 %v10671, %v10663
    %v11216 = vpack.c.b16 %v10680, %v10672
    %v11217 = vpack.c.b16 %v10681, %v10673
    %v11218 = vpack.c.b16 %v10682, %v10674
    %v11219 = vpack.c.b16 %v10683, %v10675
    %v11220 = vpack.c.b16 %v10684, %v10676
    %v11221 = vpack.c.b16 %v10685, %v10677
    %v11222 = vpack.c.b16 %v10686, %v10678
    %v11223 = vpack.c.b16 %v10687, %v10679
    %v11224 = vpack.c.b16 %v10696, %v10688
    %v11225 = vpack.c.b16 %v10697, %v10689
    %v11226 = vpack.c.b16 %v10698, %v10690
    %v11227 = vpack.c.b16 %v10699, %v10691
    %v11228 = vpack.c.b16 %v10700, %v10692
    %v11229 = vpack.c.b16 %v10701, %v10693
    %v11230 = vpack.c.b16 %v10702, %v10694
    %v11231 = vpack.c.b16 %v10703, %v10695
    %v11232 = vpack.c.b16 %v10712, %v10704
    %v11233 = vpack.c.b16 %v10713, %v10705
    %v11234 = vpack.c.b16 %v10714, %v10706
    %v11235 = vpack.c.b16 %v10715, %v10707
    %v11236 = vpack.c.b16 %v10716, %v10708
    %v11237 = vpack.c.b16 %v10717, %v10709
    %v11238 = vpack.c.b16 %v10718, %v10710
    %v11239 = vpack.c.b16 %v10719, %v10711
    %v11240 = vpack.c.b16 %v10728, %v10720
    %v11241 = vpack.c.b16 %v10729, %v10721
    %v11242 = vpack.c.b16 %v10730, %v10722
    %v11243 = vpack.c.b16 %v10731, %v10723
    %v11244 = vpack.c.b16 %v10732, %v10724
    %v11245 = vpack.c.b16 %v10733, %v10725
    %v11246 = vpack.c.b16 %v10734, %v10726
    %v11247 = vpack.c.b16 %v10735, %v10727
    %11760 = vmatprep.subr.bf16.mxu0 %v10793
    %11761 = vmatpush1.bf16.msra.mxu0 %v10792
    %11762 = vmatprep.subr.bf16.mxu0 %v10785
    %11763 = vmatpush1.bf16.msra.mxu0 %v10784
    %11764 = vmatprep.subr.bf16.mxu0 %v10777
    %11765 = vmatpush1.bf16.msra.mxu0 %v10776
    %11766 = vmatprep.subr.bf16.mxu0 %v10769
    %11767 = vmatpush1.bf16.msra.mxu0 %v10768
    %11768 = vmatprep.subr.bf16.mxu0 %v10761
    %11769 = vmatpush1.bf16.msra.mxu0 %v10760
    %11770 = vmatprep.subr.bf16.mxu0 %v10753
    %11771 = vmatpush1.bf16.msra.mxu0 %v10752
    %11772 = vmatprep.subr.bf16.mxu0 %v10745
    %11773 = vmatpush1.bf16.msra.mxu0 %v10744
    %11774 = vmatprep.subr.bf16.mxu0 %v10737
    %11775 = vmatpush1.bf16.msra.mxu0 %v10736
    %11776 = vmatprep.subr.bf16.mxu0 %v10857
    %11777 = vmatpush2.bf16.msra.mxu0 %v10856
    %11778 = vmatprep.subr.bf16.mxu0 %v10849
    %11779 = vmatpush2.bf16.msra.mxu0 %v10848
    %11780 = vmatprep.subr.bf16.mxu0 %v10841
    %11781 = vmatpush2.bf16.msra.mxu0 %v10840
    %11782 = vmatprep.subr.bf16.mxu0 %v10833
    %11783 = vmatpush2.bf16.msra.mxu0 %v10832
    %11784 = vmatprep.subr.bf16.mxu0 %v10825
    %11785 = vmatpush2.bf16.msra.mxu0 %v10824
    %11786 = vmatprep.subr.bf16.mxu0 %v10817
    %11787 = vmatpush2.bf16.msra.mxu0 %v10816
    %11788 = vmatprep.subr.bf16.mxu0 %v10809
    %11789 = vmatpush2.bf16.msra.mxu0 %v10808
    %11790 = vmatprep.subr.bf16.mxu0 %v10801
    %11791 = vmatpush2.bf16.msra.mxu0 %v10800
    %11792 = vmatprep.mubr.bf16.mxu0 %v8639
    %11793 = vmatmul.mubr.bf16.gmra.mxu0 %v8638
    %v11794 = vpop.f32.mrf.mxu0
    %v11795 = vadd.f32 %v9163, %v11794
    %v11796 = vpop.f32.mrf.mxu0
    %v11797 = vadd.f32 %v9167, %v11796
    %v11798 = vpop.f32.mrf.mxu0
    %v11799 = vpop.f32.mrf.mxu0
    %11800 = vdwg.mxu0
    %11801 = vmatprep.subr.bf16.mxu0 %v10921
    %11802 = vmatpush1.bf16.msra.mxu0 %v10920
    %11803 = vmatprep.subr.bf16.mxu0 %v10913
    %11804 = vmatpush1.bf16.msra.mxu0 %v10912
    %11805 = vmatprep.subr.bf16.mxu0 %v10905
    %11806 = vmatpush1.bf16.msra.mxu0 %v10904
    %11807 = vmatprep.subr.bf16.mxu0 %v10897
    %11808 = vmatpush1.bf16.msra.mxu0 %v10896
    %11809 = vmatprep.subr.bf16.mxu0 %v10889
    %11810 = vmatpush1.bf16.msra.mxu0 %v10888
    %11811 = vmatprep.subr.bf16.mxu0 %v10881
    %11812 = vmatpush1.bf16.msra.mxu0 %v10880
    %11813 = vmatprep.subr.bf16.mxu0 %v10873
    %11814 = vmatpush1.bf16.msra.mxu0 %v10872
    %11815 = vmatprep.subr.bf16.mxu0 %v10865
    %11816 = vmatpush1.bf16.msra.mxu0 %v10864
    %11817 = vmatprep.subr.bf16.mxu0 %v10985
    %11818 = vmatpush2.bf16.msra.mxu0 %v10984
    %11819 = vmatprep.subr.bf16.mxu0 %v10977
    %11820 = vmatpush2.bf16.msra.mxu0 %v10976
    %11821 = vmatprep.subr.bf16.mxu0 %v10969
    %11822 = vmatpush2.bf16.msra.mxu0 %v10968
    %11823 = vmatprep.subr.bf16.mxu0 %v10961
    %11824 = vmatpush2.bf16.msra.mxu0 %v10960
    %11825 = vmatprep.subr.bf16.mxu0 %v10953
    %11826 = vmatpush2.bf16.msra.mxu0 %v10952
    %11827 = vmatprep.subr.bf16.mxu0 %v10945
    %11828 = vmatpush2.bf16.msra.mxu0 %v10944
    %11829 = vmatprep.subr.bf16.mxu0 %v10937
    %11830 = vmatpush2.bf16.msra.mxu0 %v10936
    %11831 = vmatprep.subr.bf16.mxu0 %v10929
    %11832 = vmatpush2.bf16.msra.mxu0 %v10928
    %11833 = vmatprep.mubr.bf16.mxu0 %v8641
    %11834 = vmatmul.mubr.bf16.gmra.mxu0 %v8640
    %v11835 = vpop.f32.mrf.mxu0
    %v11836 = vadd.f32 %v11795, %v11835
    %v11837 = vpop.f32.mrf.mxu0
    %v11838 = vadd.f32 %v11797, %v11837
    %v11839 = vpop.f32.mrf.mxu0
    %v11840 = vpop.f32.mrf.mxu0
    %11841 = vdwg.mxu0
    %11842 = vmatprep.subr.bf16.mxu0 %v11049
    %11843 = vmatpush1.bf16.msra.mxu0 %v11048
    %11844 = vmatprep.subr.bf16.mxu0 %v11041
    %11845 = vmatpush1.bf16.msra.mxu0 %v11040
    %11846 = vmatprep.subr.bf16.mxu0 %v11033
    %11847 = vmatpush1.bf16.msra.mxu0 %v11032
    %11848 = vmatprep.subr.bf16.mxu0 %v11025
    %11849 = vmatpush1.bf16.msra.mxu0 %v11024
    %11850 = vmatprep.subr.bf16.mxu0 %v11017
    %11851 = vmatpush1.bf16.msra.mxu0 %v11016
    %11852 = vmatprep.subr.bf16.mxu0 %v11009
    %11853 = vmatpush1.bf16.msra.mxu0 %v11008
    %11854 = vmatprep.subr.bf16.mxu0 %v11001
    %11855 = vmatpush1.bf16.msra.mxu0 %v11000
    %11856 = vmatprep.subr.bf16.mxu0 %v10993
    %11857 = vmatpush1.bf16.msra.mxu0 %v10992
    %11858 = vmatprep.subr.bf16.mxu0 %v11113
    %11859 = vmatpush2.bf16.msra.mxu0 %v11112
    %11860 = vmatprep.subr.bf16.mxu0 %v11105
    %11861 = vmatpush2.bf16.msra.mxu0 %v11104
    %11862 = vmatprep.subr.bf16.mxu0 %v11097
    %11863 = vmatpush2.bf16.msra.mxu0 %v11096
    %11864 = vmatprep.subr.bf16.mxu0 %v11089
    %11865 = vmatpush2.bf16.msra.mxu0 %v11088
    %11866 = vmatprep.subr.bf16.mxu0 %v11081
    %11867 = vmatpush2.bf16.msra.mxu0 %v11080
    %11868 = vmatprep.subr.bf16.mxu0 %v11073
    %11869 = vmatpush2.bf16.msra.mxu0 %v11072
    %11870 = vmatprep.subr.bf16.mxu0 %v11065
    %11871 = vmatpush2.bf16.msra.mxu0 %v11064
    %11872 = vmatprep.subr.bf16.mxu0 %v11057
    %11873 = vmatpush2.bf16.msra.mxu0 %v11056
    %11874 = vmatprep.mubr.bf16.mxu0 %v8643
    %11875 = vmatmul.mubr.bf16.gmra.mxu0 %v8642
    %v11876 = vpop.f32.mrf.mxu0
    %v11877 = vadd.f32 %v11836, %v11876
    %v11878 = vpop.f32.mrf.mxu0
    %v11879 = vadd.f32 %v11838, %v11878
    %v11880 = vpop.f32.mrf.mxu0
    %v11881 = vpop.f32.mrf.mxu0
    %11882 = vdwg.mxu0
    %11883 = vmatprep.subr.bf16.mxu0 %v11177
    %11884 = vmatpush1.bf16.msra.mxu0 %v11176
    %11885 = vmatprep.subr.bf16.mxu0 %v11169
    %11886 = vmatpush1.bf16.msra.mxu0 %v11168
    %11887 = vmatprep.subr.bf16.mxu0 %v11161
    %11888 = vmatpush1.bf16.msra.mxu0 %v11160
    %11889 = vmatprep.subr.bf16.mxu0 %v11153
    %11890 = vmatpush1.bf16.msra.mxu0 %v11152
    %11891 = vmatprep.subr.bf16.mxu0 %v11145
    %11892 = vmatpush1.bf16.msra.mxu0 %v11144
    %11893 = vmatprep.subr.bf16.mxu0 %v11137
    %11894 = vmatpush1.bf16.msra.mxu0 %v11136
    %11895 = vmatprep.subr.bf16.mxu0 %v11129
    %11896 = vmatpush1.bf16.msra.mxu0 %v11128
    %11897 = vmatprep.subr.bf16.mxu0 %v11121
    %11898 = vmatpush1.bf16.msra.mxu0 %v11120
    %11899 = vmatprep.subr.bf16.mxu0 %v11241
    %11900 = vmatpush2.bf16.msra.mxu0 %v11240
    %11901 = vmatprep.subr.bf16.mxu0 %v11233
    %11902 = vmatpush2.bf16.msra.mxu0 %v11232
    %11903 = vmatprep.subr.bf16.mxu0 %v11225
    %11904 = vmatpush2.bf16.msra.mxu0 %v11224
    %11905 = vmatprep.subr.bf16.mxu0 %v11217
    %11906 = vmatpush2.bf16.msra.mxu0 %v11216
    %11907 = vmatprep.subr.bf16.mxu0 %v11209
    %11908 = vmatpush2.bf16.msra.mxu0 %v11208
    %11909 = vmatprep.subr.bf16.mxu0 %v11201
    %11910 = vmatpush2.bf16.msra.mxu0 %v11200
    %11911 = vmatprep.subr.bf16.mxu0 %v11193
    %11912 = vmatpush2.bf16.msra.mxu0 %v11192
    %11913 = vmatprep.subr.bf16.mxu0 %v11185
    %11914 = vmatpush2.bf16.msra.mxu0 %v11184
    %11915 = vmatprep.mubr.bf16.mxu0 %v8645
    %11916 = vmatmul.mubr.bf16.gmra.mxu0 %v8644
    %v11917 = vpop.f32.mrf.mxu0
    %v11918 = vadd.f32 %v11877, %v11917
    %v11919 = vpop.f32.mrf.mxu0
    %v11920 = vadd.f32 %v11879, %v11919
    %v11921 = vpop.f32.mrf.mxu0
    %v11922 = vpop.f32.mrf.mxu0
    %11923 = vdwg.mxu0
    %11924 = vmatprep.subr.bf16.mxu0 %v10795
    %11925 = vmatpush1.bf16.msra.mxu0 %v10794
    %11926 = vmatprep.subr.bf16.mxu0 %v10787
    %11927 = vmatpush1.bf16.msra.mxu0 %v10786
    %11928 = vmatprep.subr.bf16.mxu0 %v10779
    %11929 = vmatpush1.bf16.msra.mxu0 %v10778
    %11930 = vmatprep.subr.bf16.mxu0 %v10771
    %11931 = vmatpush1.bf16.msra.mxu0 %v10770
    %11932 = vmatprep.subr.bf16.mxu0 %v10763
    %11933 = vmatpush1.bf16.msra.mxu0 %v10762
    %11934 = vmatprep.subr.bf16.mxu0 %v10755
    %11935 = vmatpush1.bf16.msra.mxu0 %v10754
    %11936 = vmatprep.subr.bf16.mxu0 %v10747
    %11937 = vmatpush1.bf16.msra.mxu0 %v10746
    %11938 = vmatprep.subr.bf16.mxu0 %v10739
    %11939 = vmatpush1.bf16.msra.mxu0 %v10738
    %11940 = vmatprep.subr.bf16.mxu0 %v10859
    %11941 = vmatpush2.bf16.msra.mxu0 %v10858
    %11942 = vmatprep.subr.bf16.mxu0 %v10851
    %11943 = vmatpush2.bf16.msra.mxu0 %v10850
    %11944 = vmatprep.subr.bf16.mxu0 %v10843
    %11945 = vmatpush2.bf16.msra.mxu0 %v10842
    %11946 = vmatprep.subr.bf16.mxu0 %v10835
    %11947 = vmatpush2.bf16.msra.mxu0 %v10834
    %11948 = vmatprep.subr.bf16.mxu0 %v10827
    %11949 = vmatpush2.bf16.msra.mxu0 %v10826
    %11950 = vmatprep.subr.bf16.mxu0 %v10819
    %11951 = vmatpush2.bf16.msra.mxu0 %v10818
    %11952 = vmatprep.subr.bf16.mxu0 %v10811
    %11953 = vmatpush2.bf16.msra.mxu0 %v10810
    %11954 = vmatprep.subr.bf16.mxu0 %v10803
    %11955 = vmatpush2.bf16.msra.mxu0 %v10802
    %11956 = vmatprep.mubr.bf16.mxu0 %v8639
    %11957 = vmatmul.mubr.bf16.gmra.mxu0 %v8638
    %v11958 = vpop.f32.mrf.mxu0
    %v11959 = vadd.f32 %v9171, %v11958
    %v11960 = vpop.f32.mrf.mxu0
    %v11961 = vadd.f32 %v9175, %v11960
    %v11962 = vpop.f32.mrf.mxu0
    %v11963 = vpop.f32.mrf.mxu0
    %11964 = vdwg.mxu0
    %11965 = vmatprep.subr.bf16.mxu0 %v10923
    %11966 = vmatpush1.bf16.msra.mxu0 %v10922
    %11967 = vmatprep.subr.bf16.mxu0 %v10915
    %11968 = vmatpush1.bf16.msra.mxu0 %v10914
    %11969 = vmatprep.subr.bf16.mxu0 %v10907
    %11970 = vmatpush1.bf16.msra.mxu0 %v10906
    %11971 = vmatprep.subr.bf16.mxu0 %v10899
    %11972 = vmatpush1.bf16.msra.mxu0 %v10898
    %11973 = vmatprep.subr.bf16.mxu0 %v10891
    %11974 = vmatpush1.bf16.msra.mxu0 %v10890
    %11975 = vmatprep.subr.bf16.mxu0 %v10883
    %11976 = vmatpush1.bf16.msra.mxu0 %v10882
    %11977 = vmatprep.subr.bf16.mxu0 %v10875
    %11978 = vmatpush1.bf16.msra.mxu0 %v10874
    %11979 = vmatprep.subr.bf16.mxu0 %v10867
    %11980 = vmatpush1.bf16.msra.mxu0 %v10866
    %11981 = vmatprep.subr.bf16.mxu0 %v10987
    %11982 = vmatpush2.bf16.msra.mxu0 %v10986
    %11983 = vmatprep.subr.bf16.mxu0 %v10979
    %11984 = vmatpush2.bf16.msra.mxu0 %v10978
    %11985 = vmatprep.subr.bf16.mxu0 %v10971
    %11986 = vmatpush2.bf16.msra.mxu0 %v10970
    %11987 = vmatprep.subr.bf16.mxu0 %v10963
    %11988 = vmatpush2.bf16.msra.mxu0 %v10962
    %11989 = vmatprep.subr.bf16.mxu0 %v10955
    %11990 = vmatpush2.bf16.msra.mxu0 %v10954
    %11991 = vmatprep.subr.bf16.mxu0 %v10947
    %11992 = vmatpush2.bf16.msra.mxu0 %v10946
    %11993 = vmatprep.subr.bf16.mxu0 %v10939
    %11994 = vmatpush2.bf16.msra.mxu0 %v10938
    %11995 = vmatprep.subr.bf16.mxu0 %v10931
    %11996 = vmatpush2.bf16.msra.mxu0 %v10930
    %11997 = vmatprep.mubr.bf16.mxu0 %v8641
    %11998 = vmatmul.mubr.bf16.gmra.mxu0 %v8640
    %v11999 = vpop.f32.mrf.mxu0
    %v12000 = vadd.f32 %v11959, %v11999
    %v12001 = vpop.f32.mrf.mxu0
    %v12002 = vadd.f32 %v11961, %v12001
    %v12003 = vpop.f32.mrf.mxu0
    %v12004 = vpop.f32.mrf.mxu0
    %12005 = vdwg.mxu0
    %12006 = vmatprep.subr.bf16.mxu0 %v11051
    %12007 = vmatpush1.bf16.msra.mxu0 %v11050
    %12008 = vmatprep.subr.bf16.mxu0 %v11043
    %12009 = vmatpush1.bf16.msra.mxu0 %v11042
    %12010 = vmatprep.subr.bf16.mxu0 %v11035
    %12011 = vmatpush1.bf16.msra.mxu0 %v11034
    %12012 = vmatprep.subr.bf16.mxu0 %v11027
    %12013 = vmatpush1.bf16.msra.mxu0 %v11026
    %12014 = vmatprep.subr.bf16.mxu0 %v11019
    %12015 = vmatpush1.bf16.msra.mxu0 %v11018
    %12016 = vmatprep.subr.bf16.mxu0 %v11011
    %12017 = vmatpush1.bf16.msra.mxu0 %v11010
    %12018 = vmatprep.subr.bf16.mxu0 %v11003
    %12019 = vmatpush1.bf16.msra.mxu0 %v11002
    %12020 = vmatprep.subr.bf16.mxu0 %v10995
    %12021 = vmatpush1.bf16.msra.mxu0 %v10994
    %12022 = vmatprep.subr.bf16.mxu0 %v11115
    %12023 = vmatpush2.bf16.msra.mxu0 %v11114
    %12024 = vmatprep.subr.bf16.mxu0 %v11107
    %12025 = vmatpush2.bf16.msra.mxu0 %v11106
    %12026 = vmatprep.subr.bf16.mxu0 %v11099
    %12027 = vmatpush2.bf16.msra.mxu0 %v11098
    %12028 = vmatprep.subr.bf16.mxu0 %v11091
    %12029 = vmatpush2.bf16.msra.mxu0 %v11090
    %12030 = vmatprep.subr.bf16.mxu0 %v11083
    %12031 = vmatpush2.bf16.msra.mxu0 %v11082
    %12032 = vmatprep.subr.bf16.mxu0 %v11075
    %12033 = vmatpush2.bf16.msra.mxu0 %v11074
    %12034 = vmatprep.subr.bf16.mxu0 %v11067
    %12035 = vmatpush2.bf16.msra.mxu0 %v11066
    %12036 = vmatprep.subr.bf16.mxu0 %v11059
    %12037 = vmatpush2.bf16.msra.mxu0 %v11058
    %12038 = vmatprep.mubr.bf16.mxu0 %v8643
    %12039 = vmatmul.mubr.bf16.gmra.mxu0 %v8642
    %v12040 = vpop.f32.mrf.mxu0
    %v12041 = vadd.f32 %v12000, %v12040
    %v12042 = vpop.f32.mrf.mxu0
    %v12043 = vadd.f32 %v12002, %v12042
    %v12044 = vpop.f32.mrf.mxu0
    %v12045 = vpop.f32.mrf.mxu0
    %12046 = vdwg.mxu0
    %12047 = vmatprep.subr.bf16.mxu0 %v11179
    %12048 = vmatpush1.bf16.msra.mxu0 %v11178
    %12049 = vmatprep.subr.bf16.mxu0 %v11171
    %12050 = vmatpush1.bf16.msra.mxu0 %v11170
    %12051 = vmatprep.subr.bf16.mxu0 %v11163
    %12052 = vmatpush1.bf16.msra.mxu0 %v11162
    %12053 = vmatprep.subr.bf16.mxu0 %v11155
    %12054 = vmatpush1.bf16.msra.mxu0 %v11154
    %12055 = vmatprep.subr.bf16.mxu0 %v11147
    %12056 = vmatpush1.bf16.msra.mxu0 %v11146
    %12057 = vmatprep.subr.bf16.mxu0 %v11139
    %12058 = vmatpush1.bf16.msra.mxu0 %v11138
    %12059 = vmatprep.subr.bf16.mxu0 %v11131
    %12060 = vmatpush1.bf16.msra.mxu0 %v11130
    %12061 = vmatprep.subr.bf16.mxu0 %v11123
    %12062 = vmatpush1.bf16.msra.mxu0 %v11122
    %12063 = vmatprep.subr.bf16.mxu0 %v11243
    %12064 = vmatpush2.bf16.msra.mxu0 %v11242
    %12065 = vmatprep.subr.bf16.mxu0 %v11235
    %12066 = vmatpush2.bf16.msra.mxu0 %v11234
    %12067 = vmatprep.subr.bf16.mxu0 %v11227
    %12068 = vmatpush2.bf16.msra.mxu0 %v11226
    %12069 = vmatprep.subr.bf16.mxu0 %v11219
    %12070 = vmatpush2.bf16.msra.mxu0 %v11218
    %12071 = vmatprep.subr.bf16.mxu0 %v11211
    %12072 = vmatpush2.bf16.msra.mxu0 %v11210
    %12073 = vmatprep.subr.bf16.mxu0 %v11203
    %12074 = vmatpush2.bf16.msra.mxu0 %v11202
    %12075 = vmatprep.subr.bf16.mxu0 %v11195
    %12076 = vmatpush2.bf16.msra.mxu0 %v11194
    %12077 = vmatprep.subr.bf16.mxu0 %v11187
    %12078 = vmatpush2.bf16.msra.mxu0 %v11186
    %12079 = vmatprep.mubr.bf16.mxu0 %v8645
    %12080 = vmatmul.mubr.bf16.gmra.mxu0 %v8644
    %v12081 = vpop.f32.mrf.mxu0
    %v12082 = vadd.f32 %v12041, %v12081
    %v12083 = vpop.f32.mrf.mxu0
    %v12084 = vadd.f32 %v12043, %v12083
    %v12085 = vpop.f32.mrf.mxu0
    %v12086 = vpop.f32.mrf.mxu0
    %12087 = vdwg.mxu0
    %12088 = vmatprep.subr.bf16.mxu0 %v10797
    %12089 = vmatpush1.bf16.msra.mxu0 %v10796
    %12090 = vmatprep.subr.bf16.mxu0 %v10789
    %12091 = vmatpush1.bf16.msra.mxu0 %v10788
    %12092 = vmatprep.subr.bf16.mxu0 %v10781
    %12093 = vmatpush1.bf16.msra.mxu0 %v10780
    %12094 = vmatprep.subr.bf16.mxu0 %v10773
    %12095 = vmatpush1.bf16.msra.mxu0 %v10772
    %12096 = vmatprep.subr.bf16.mxu0 %v10765
    %12097 = vmatpush1.bf16.msra.mxu0 %v10764
    %12098 = vmatprep.subr.bf16.mxu0 %v10757
    %12099 = vmatpush1.bf16.msra.mxu0 %v10756
    %12100 = vmatprep.subr.bf16.mxu0 %v10749
    %12101 = vmatpush1.bf16.msra.mxu0 %v10748
    %12102 = vmatprep.subr.bf16.mxu0 %v10741
    %12103 = vmatpush1.bf16.msra.mxu0 %v10740
    %12104 = vmatprep.subr.bf16.mxu0 %v10861
    %12105 = vmatpush2.bf16.msra.mxu0 %v10860
    %12106 = vmatprep.subr.bf16.mxu0 %v10853
    %12107 = vmatpush2.bf16.msra.mxu0 %v10852
    %12108 = vmatprep.subr.bf16.mxu0 %v10845
    %12109 = vmatpush2.bf16.msra.mxu0 %v10844
    %12110 = vmatprep.subr.bf16.mxu0 %v10837
    %12111 = vmatpush2.bf16.msra.mxu0 %v10836
    %12112 = vmatprep.subr.bf16.mxu0 %v10829
    %12113 = vmatpush2.bf16.msra.mxu0 %v10828
    %12114 = vmatprep.subr.bf16.mxu0 %v10821
    %12115 = vmatpush2.bf16.msra.mxu0 %v10820
    %12116 = vmatprep.subr.bf16.mxu0 %v10813
    %12117 = vmatpush2.bf16.msra.mxu0 %v10812
    %12118 = vmatprep.subr.bf16.mxu0 %v10805
    %12119 = vmatpush2.bf16.msra.mxu0 %v10804
    %12120 = vmatprep.mubr.bf16.mxu0 %v8639
    %12121 = vmatmul.mubr.bf16.gmra.mxu0 %v8638
    %v12122 = vpop.f32.mrf.mxu0
    %v12123 = vadd.f32 %v9179, %v12122
    %v12124 = vpop.f32.mrf.mxu0
    %v12125 = vadd.f32 %v9183, %v12124
    %v12126 = vpop.f32.mrf.mxu0
    %v12127 = vpop.f32.mrf.mxu0
    %12128 = vdwg.mxu0
    %12129 = vmatprep.subr.bf16.mxu0 %v10925
    %12130 = vmatpush1.bf16.msra.mxu0 %v10924
    %12131 = vmatprep.subr.bf16.mxu0 %v10917
    %12132 = vmatpush1.bf16.msra.mxu0 %v10916
    %12133 = vmatprep.subr.bf16.mxu0 %v10909
    %12134 = vmatpush1.bf16.msra.mxu0 %v10908
    %12135 = vmatprep.subr.bf16.mxu0 %v10901
    %12136 = vmatpush1.bf16.msra.mxu0 %v10900
    %12137 = vmatprep.subr.bf16.mxu0 %v10893
    %12138 = vmatpush1.bf16.msra.mxu0 %v10892
    %12139 = vmatprep.subr.bf16.mxu0 %v10885
    %12140 = vmatpush1.bf16.msra.mxu0 %v10884
    %12141 = vmatprep.subr.bf16.mxu0 %v10877
    %12142 = vmatpush1.bf16.msra.mxu0 %v10876
    %12143 = vmatprep.subr.bf16.mxu0 %v10869
    %12144 = vmatpush1.bf16.msra.mxu0 %v10868
    %12145 = vmatprep.subr.bf16.mxu0 %v10989
    %12146 = vmatpush2.bf16.msra.mxu0 %v10988
    %12147 = vmatprep.subr.bf16.mxu0 %v10981
    %12148 = vmatpush2.bf16.msra.mxu0 %v10980
    %12149 = vmatprep.subr.bf16.mxu0 %v10973
    %12150 = vmatpush2.bf16.msra.mxu0 %v10972
    %12151 = vmatprep.subr.bf16.mxu0 %v10965
    %12152 = vmatpush2.bf16.msra.mxu0 %v10964
    %12153 = vmatprep.subr.bf16.mxu0 %v10957
    %12154 = vmatpush2.bf16.msra.mxu0 %v10956
    %12155 = vmatprep.subr.bf16.mxu0 %v10949
    %12156 = vmatpush2.bf16.msra.mxu0 %v10948
    %12157 = vmatprep.subr.bf16.mxu0 %v10941
    %12158 = vmatpush2.bf16.msra.mxu0 %v10940
    %12159 = vmatprep.subr.bf16.mxu0 %v10933
    %12160 = vmatpush2.bf16.msra.mxu0 %v10932
    %12161 = vmatprep.mubr.bf16.mxu0 %v8641
    %12162 = vmatmul.mubr.bf16.gmra.mxu0 %v8640
    %v12163 = vpop.f32.mrf.mxu0
    %v12164 = vadd.f32 %v12123, %v12163
    %v12165 = vpop.f32.mrf.mxu0
    %v12166 = vadd.f32 %v12125, %v12165
    %v12167 = vpop.f32.mrf.mxu0
    %v12168 = vpop.f32.mrf.mxu0
    %12169 = vdwg.mxu0
    %12170 = vmatprep.subr.bf16.mxu0 %v11053
    %12171 = vmatpush1.bf16.msra.mxu0 %v11052
    %12172 = vmatprep.subr.bf16.mxu0 %v11045
    %12173 = vmatpush1.bf16.msra.mxu0 %v11044
    %12174 = vmatprep.subr.bf16.mxu0 %v11037
    %12175 = vmatpush1.bf16.msra.mxu0 %v11036
    %12176 = vmatprep.subr.bf16.mxu0 %v11029
    %12177 = vmatpush1.bf16.msra.mxu0 %v11028
    %12178 = vmatprep.subr.bf16.mxu0 %v11021
    %12179 = vmatpush1.bf16.msra.mxu0 %v11020
    %12180 = vmatprep.subr.bf16.mxu0 %v11013
    %12181 = vmatpush1.bf16.msra.mxu0 %v11012
    %12182 = vmatprep.subr.bf16.mxu0 %v11005
    %12183 = vmatpush1.bf16.msra.mxu0 %v11004
    %12184 = vmatprep.subr.bf16.mxu0 %v10997
    %12185 = vmatpush1.bf16.msra.mxu0 %v10996
    %12186 = vmatprep.subr.bf16.mxu0 %v11117
    %12187 = vmatpush2.bf16.msra.mxu0 %v11116
    %12188 = vmatprep.subr.bf16.mxu0 %v11109
    %12189 = vmatpush2.bf16.msra.mxu0 %v11108
    %12190 = vmatprep.subr.bf16.mxu0 %v11101
    %12191 = vmatpush2.bf16.msra.mxu0 %v11100
    %12192 = vmatprep.subr.bf16.mxu0 %v11093
    %12193 = vmatpush2.bf16.msra.mxu0 %v11092
    %12194 = vmatprep.subr.bf16.mxu0 %v11085
    %12195 = vmatpush2.bf16.msra.mxu0 %v11084
    %12196 = vmatprep.subr.bf16.mxu0 %v11077
    %12197 = vmatpush2.bf16.msra.mxu0 %v11076
    %12198 = vmatprep.subr.bf16.mxu0 %v11069
    %12199 = vmatpush2.bf16.msra.mxu0 %v11068
    %12200 = vmatprep.subr.bf16.mxu0 %v11061
    %12201 = vmatpush2.bf16.msra.mxu0 %v11060
    %12202 = vmatprep.mubr.bf16.mxu0 %v8643
    %12203 = vmatmul.mubr.bf16.gmra.mxu0 %v8642
    %v12204 = vpop.f32.mrf.mxu0
    %v12205 = vadd.f32 %v12164, %v12204
    %v12206 = vpop.f32.mrf.mxu0
    %v12207 = vadd.f32 %v12166, %v12206
    %v12208 = vpop.f32.mrf.mxu0
    %v12209 = vpop.f32.mrf.mxu0
    %12210 = vdwg.mxu0
    %12211 = vmatprep.subr.bf16.mxu0 %v11181
    %12212 = vmatpush1.bf16.msra.mxu0 %v11180
    %12213 = vmatprep.subr.bf16.mxu0 %v11173
    %12214 = vmatpush1.bf16.msra.mxu0 %v11172
    %12215 = vmatprep.subr.bf16.mxu0 %v11165
    %12216 = vmatpush1.bf16.msra.mxu0 %v11164
    %12217 = vmatprep.subr.bf16.mxu0 %v11157
    %12218 = vmatpush1.bf16.msra.mxu0 %v11156
    %12219 = vmatprep.subr.bf16.mxu0 %v11149
    %12220 = vmatpush1.bf16.msra.mxu0 %v11148
    %12221 = vmatprep.subr.bf16.mxu0 %v11141
    %12222 = vmatpush1.bf16.msra.mxu0 %v11140
    %12223 = vmatprep.subr.bf16.mxu0 %v11133
    %12224 = vmatpush1.bf16.msra.mxu0 %v11132
    %12225 = vmatprep.subr.bf16.mxu0 %v11125
    %12226 = vmatpush1.bf16.msra.mxu0 %v11124
    %12227 = vmatprep.subr.bf16.mxu0 %v11245
    %12228 = vmatpush2.bf16.msra.mxu0 %v11244
    %12229 = vmatprep.subr.bf16.mxu0 %v11237
    %12230 = vmatpush2.bf16.msra.mxu0 %v11236
    %12231 = vmatprep.subr.bf16.mxu0 %v11229
    %12232 = vmatpush2.bf16.msra.mxu0 %v11228
    %12233 = vmatprep.subr.bf16.mxu0 %v11221
    %12234 = vmatpush2.bf16.msra.mxu0 %v11220
    %12235 = vmatprep.subr.bf16.mxu0 %v11213
    %12236 = vmatpush2.bf16.msra.mxu0 %v11212
    %12237 = vmatprep.subr.bf16.mxu0 %v11205
    %12238 = vmatpush2.bf16.msra.mxu0 %v11204
    %12239 = vmatprep.subr.bf16.mxu0 %v11197
    %12240 = vmatpush2.bf16.msra.mxu0 %v11196
    %12241 = vmatprep.subr.bf16.mxu0 %v11189
    %12242 = vmatpush2.bf16.msra.mxu0 %v11188
    %12243 = vmatprep.mubr.bf16.mxu0 %v8645
    %12244 = vmatmul.mubr.bf16.gmra.mxu0 %v8644
    %v12245 = vpop.f32.mrf.mxu0
    %v12246 = vadd.f32 %v12205, %v12245
    %v12247 = vpop.f32.mrf.mxu0
    %v12248 = vadd.f32 %v12207, %v12247
    %v12249 = vpop.f32.mrf.mxu0
    %v12250 = vpop.f32.mrf.mxu0
    %12251 = vdwg.mxu0
    %12252 = vmatprep.subr.bf16.mxu0 %v10799
    %12253 = vmatpush1.bf16.msra.mxu0 %v10798
    %12254 = vmatprep.subr.bf16.mxu0 %v10791
    %12255 = vmatpush1.bf16.msra.mxu0 %v10790
    %12256 = vmatprep.subr.bf16.mxu0 %v10783
    %12257 = vmatpush1.bf16.msra.mxu0 %v10782
    %12258 = vmatprep.subr.bf16.mxu0 %v10775
    %12259 = vmatpush1.bf16.msra.mxu0 %v10774
    %12260 = vmatprep.subr.bf16.mxu0 %v10767
    %12261 = vmatpush1.bf16.msra.mxu0 %v10766
    %12262 = vmatprep.subr.bf16.mxu0 %v10759
    %12263 = vmatpush1.bf16.msra.mxu0 %v10758
    %12264 = vmatprep.subr.bf16.mxu0 %v10751
    %12265 = vmatpush1.bf16.msra.mxu0 %v10750
    %12266 = vmatprep.subr.bf16.mxu0 %v10743
    %12267 = vmatpush1.bf16.msra.mxu0 %v10742
    %12268 = vmatprep.subr.bf16.mxu0 %v10863
    %12269 = vmatpush2.bf16.msra.mxu0 %v10862
    %12270 = vmatprep.subr.bf16.mxu0 %v10855
    %12271 = vmatpush2.bf16.msra.mxu0 %v10854
    %12272 = vmatprep.subr.bf16.mxu0 %v10847
    %12273 = vmatpush2.bf16.msra.mxu0 %v10846
    %12274 = vmatprep.subr.bf16.mxu0 %v10839
    %12275 = vmatpush2.bf16.msra.mxu0 %v10838
    %12276 = vmatprep.subr.bf16.mxu0 %v10831
    %12277 = vmatpush2.bf16.msra.mxu0 %v10830
    %12278 = vmatprep.subr.bf16.mxu0 %v10823
    %12279 = vmatpush2.bf16.msra.mxu0 %v10822
    %12280 = vmatprep.subr.bf16.mxu0 %v10815
    %12281 = vmatpush2.bf16.msra.mxu0 %v10814
    %12282 = vmatprep.subr.bf16.mxu0 %v10807
    %12283 = vmatpush2.bf16.msra.mxu0 %v10806
    %12284 = vmatprep.mubr.bf16.mxu0 %v8639
    %12285 = vmatmul.mubr.bf16.gmra.mxu0 %v8638
    %v12286 = vpop.f32.mrf.mxu0
    %v12287 = vadd.f32 %v9187, %v12286
    %v12288 = vpop.f32.mrf.mxu0
    %v12289 = vadd.f32 %v9191, %v12288
    %v12290 = vpop.f32.mrf.mxu0
    %v12291 = vpop.f32.mrf.mxu0
    %12292 = vdwg.mxu0
    %12293 = vmatprep.subr.bf16.mxu0 %v10927
    %12294 = vmatpush1.bf16.msra.mxu0 %v10926
    %12295 = vmatprep.subr.bf16.mxu0 %v10919
    %12296 = vmatpush1.bf16.msra.mxu0 %v10918
    %12297 = vmatprep.subr.bf16.mxu0 %v10911
    %12298 = vmatpush1.bf16.msra.mxu0 %v10910
    %12299 = vmatprep.subr.bf16.mxu0 %v10903
    %12300 = vmatpush1.bf16.msra.mxu0 %v10902
    %12301 = vmatprep.subr.bf16.mxu0 %v10895
    %12302 = vmatpush1.bf16.msra.mxu0 %v10894
    %12303 = vmatprep.subr.bf16.mxu0 %v10887
    %12304 = vmatpush1.bf16.msra.mxu0 %v10886
    %12305 = vmatprep.subr.bf16.mxu0 %v10879
    %12306 = vmatpush1.bf16.msra.mxu0 %v10878
    %12307 = vmatprep.subr.bf16.mxu0 %v10871
    %12308 = vmatpush1.bf16.msra.mxu0 %v10870
    %12309 = vmatprep.subr.bf16.mxu0 %v10991
    %12310 = vmatpush2.bf16.msra.mxu0 %v10990
    %12311 = vmatprep.subr.bf16.mxu0 %v10983
    %12312 = vmatpush2.bf16.msra.mxu0 %v10982
    %12313 = vmatprep.subr.bf16.mxu0 %v10975
    %12314 = vmatpush2.bf16.msra.mxu0 %v10974
    %12315 = vmatprep.subr.bf16.mxu0 %v10967
    %12316 = vmatpush2.bf16.msra.mxu0 %v10966
    %12317 = vmatprep.subr.bf16.mxu0 %v10959
    %12318 = vmatpush2.bf16.msra.mxu0 %v10958
    %12319 = vmatprep.subr.bf16.mxu0 %v10951
    %12320 = vmatpush2.bf16.msra.mxu0 %v10950
    %12321 = vmatprep.subr.bf16.mxu0 %v10943
    %12322 = vmatpush2.bf16.msra.mxu0 %v10942
    %12323 = vmatprep.subr.bf16.mxu0 %v10935
    %12324 = vmatpush2.bf16.msra.mxu0 %v10934
    %12325 = vmatprep.mubr.bf16.mxu0 %v8641
    %12326 = vmatmul.mubr.bf16.gmra.mxu0 %v8640
    %v12327 = vpop.f32.mrf.mxu0
    %v12328 = vadd.f32 %v12287, %v12327
    %v12329 = vpop.f32.mrf.mxu0
    %v12330 = vadd.f32 %v12289, %v12329
    %v12331 = vpop.f32.mrf.mxu0
    %v12332 = vpop.f32.mrf.mxu0
    %12333 = vdwg.mxu0
    %12334 = vmatprep.subr.bf16.mxu0 %v11055
    %12335 = vmatpush1.bf16.msra.mxu0 %v11054
    %12336 = vmatprep.subr.bf16.mxu0 %v11047
    %12337 = vmatpush1.bf16.msra.mxu0 %v11046
    %12338 = vmatprep.subr.bf16.mxu0 %v11039
    %12339 = vmatpush1.bf16.msra.mxu0 %v11038
    %12340 = vmatprep.subr.bf16.mxu0 %v11031
    %12341 = vmatpush1.bf16.msra.mxu0 %v11030
    %12342 = vmatprep.subr.bf16.mxu0 %v11023
    %12343 = vmatpush1.bf16.msra.mxu0 %v11022
    %12344 = vmatprep.subr.bf16.mxu0 %v11015
    %12345 = vmatpush1.bf16.msra.mxu0 %v11014
    %12346 = vmatprep.subr.bf16.mxu0 %v11007
    %12347 = vmatpush1.bf16.msra.mxu0 %v11006
    %12348 = vmatprep.subr.bf16.mxu0 %v10999
    %12349 = vmatpush1.bf16.msra.mxu0 %v10998
    %12350 = vmatprep.subr.bf16.mxu0 %v11119
    %12351 = vmatpush2.bf16.msra.mxu0 %v11118
    %12352 = vmatprep.subr.bf16.mxu0 %v11111
    %12353 = vmatpush2.bf16.msra.mxu0 %v11110
    %12354 = vmatprep.subr.bf16.mxu0 %v11103
    %12355 = vmatpush2.bf16.msra.mxu0 %v11102
    %12356 = vmatprep.subr.bf16.mxu0 %v11095
    %12357 = vmatpush2.bf16.msra.mxu0 %v11094
    %12358 = vmatprep.subr.bf16.mxu0 %v11087
    %12359 = vmatpush2.bf16.msra.mxu0 %v11086
    %12360 = vmatprep.subr.bf16.mxu0 %v11079
    %12361 = vmatpush2.bf16.msra.mxu0 %v11078
    %12362 = vmatprep.subr.bf16.mxu0 %v11071
    %12363 = vmatpush2.bf16.msra.mxu0 %v11070
    %12364 = vmatprep.subr.bf16.mxu0 %v11063
    %12365 = vmatpush2.bf16.msra.mxu0 %v11062
    %12366 = vmatprep.mubr.bf16.mxu0 %v8643
    %12367 = vmatmul.mubr.bf16.gmra.mxu0 %v8642
    %v12368 = vpop.f32.mrf.mxu0
    %v12369 = vadd.f32 %v12328, %v12368
    %v12370 = vpop.f32.mrf.mxu0
    %v12371 = vadd.f32 %v12330, %v12370
    %v12372 = vpop.f32.mrf.mxu0
    %v12373 = vpop.f32.mrf.mxu0
    %12374 = vdwg.mxu0
    %12375 = vmatprep.subr.bf16.mxu0 %v11183
    %12376 = vmatpush1.bf16.msra.mxu0 %v11182
    %12377 = vmatprep.subr.bf16.mxu0 %v11175
    %12378 = vmatpush1.bf16.msra.mxu0 %v11174
    %12379 = vmatprep.subr.bf16.mxu0 %v11167
    %12380 = vmatpush1.bf16.msra.mxu0 %v11166
    %12381 = vmatprep.subr.bf16.mxu0 %v11159
    %12382 = vmatpush1.bf16.msra.mxu0 %v11158
    %12383 = vmatprep.subr.bf16.mxu0 %v11151
    %12384 = vmatpush1.bf16.msra.mxu0 %v11150
    %12385 = vmatprep.subr.bf16.mxu0 %v11143
    %12386 = vmatpush1.bf16.msra.mxu0 %v11142
    %12387 = vmatprep.subr.bf16.mxu0 %v11135
    %12388 = vmatpush1.bf16.msra.mxu0 %v11134
    %12389 = vmatprep.subr.bf16.mxu0 %v11127
    %12390 = vmatpush1.bf16.msra.mxu0 %v11126
    %12391 = vmatprep.subr.bf16.mxu0 %v11247
    %12392 = vmatpush2.bf16.msra.mxu0 %v11246
    %12393 = vmatprep.subr.bf16.mxu0 %v11239
    %12394 = vmatpush2.bf16.msra.mxu0 %v11238
    %12395 = vmatprep.subr.bf16.mxu0 %v11231
    %12396 = vmatpush2.bf16.msra.mxu0 %v11230
    %12397 = vmatprep.subr.bf16.mxu0 %v11223
    %12398 = vmatpush2.bf16.msra.mxu0 %v11222
    %12399 = vmatprep.subr.bf16.mxu0 %v11215
    %12400 = vmatpush2.bf16.msra.mxu0 %v11214
    %12401 = vmatprep.subr.bf16.mxu0 %v11207
    %12402 = vmatpush2.bf16.msra.mxu0 %v11206
    %12403 = vmatprep.subr.bf16.mxu0 %v11199
    %12404 = vmatpush2.bf16.msra.mxu0 %v11198
    %12405 = vmatprep.subr.bf16.mxu0 %v11191
    %12406 = vmatpush2.bf16.msra.mxu0 %v11190
    %12407 = vmatprep.mubr.bf16.mxu0 %v8645
    %12408 = vmatmul.mubr.bf16.gmra.mxu0 %v8644
    %v12409 = vpop.f32.mrf.mxu0
    %v12410 = vadd.f32 %v12369, %v12409
    %v12411 = vpop.f32.mrf.mxu0
    %v12412 = vadd.f32 %v12371, %v12411
    %v12413 = vpop.f32.mrf.mxu0
    %v12414 = vpop.f32.mrf.mxu0
    %12415 = vdwg.mxu0
    %v12416 = vmax.f32 %v11918, 0.0
    %v12417 = vmax.f32 %v11920, 0.0
    %v12418 = vmax.f32 %v12082, 0.0
    %v12419 = vmax.f32 %v12084, 0.0
    %v12420 = vmax.f32 %v12246, 0.0
    %v12421 = vmax.f32 %v12248, 0.0
    %v12422 = vmax.f32 %v12410, 0.0
    %v12423 = vmax.f32 %v12412, 0.0
    %v12424 = vpack.c.bf16 %v12416, %v12416
    %v12425 = vpack.c.bf16 %v12417, %v12417
    %v12426 = vpack.c.bf16 %v12418, %v12418
    %v12427 = vpack.c.bf16 %v12419, %v12419
    %v12428 = vld [vmem:[%s12] sm:$0xff]
    %v12429 = vld [vmem:[%s12 + $0x8] sm:$0xff]
    %v12430 = vld [vmem:[%s12 + $0x10] sm:$0xff]
    %v12431 = vld [vmem:[%s12 + $0x18] sm:$0xff]
    %v12432 = vld [vmem:[%s12 + $0x20] sm:$0xff]
    %v12433 = vld [vmem:[%s12 + $0x28] sm:$0xff]
    %v12434 = vld [vmem:[%s12 + $0x30] sm:$0xff]
    %v12435 = vld [vmem:[%s12 + $0x38] sm:$0xff]
    %v12436 = vld [vmem:[%s12 + $0x40] sm:$0xff]
    %v12437 = vld [vmem:[%s12 + $0x48] sm:$0xff]
    %v12438 = vld [vmem:[%s12 + $0x50] sm:$0xff]
    %v12439 = vld [vmem:[%s12 + $0x58] sm:$0xff]
    %v12440 = vld [vmem:[%s12 + $0x60] sm:$0xff]
    %v12441 = vld [vmem:[%s12 + $0x68] sm:$0xff]
    %v12442 = vld [vmem:[%s12 + $0x70] sm:$0xff]
    %v12443 = vld [vmem:[%s12 + $0x78] sm:$0xff]
    %v12444 = vld [vmem:[%s12 + $0x80] sm:$0xff]
    %v12445 = vld [vmem:[%s12 + $0x88] sm:$0xff]
    %v12446 = vld [vmem:[%s12 + $0x90] sm:$0xff]
    %v12447 = vld [vmem:[%s12 + $0x98] sm:$0xff]
    %v12448 = vld [vmem:[%s12 + $0xa0] sm:$0xff]
    %v12449 = vld [vmem:[%s12 + $0xa8] sm:$0xff]
    %v12450 = vld [vmem:[%s12 + $0xb0] sm:$0xff]
    %v12451 = vld [vmem:[%s12 + $0xb8] sm:$0xff]
    %v12452 = vld [vmem:[%s12 + $0xc0] sm:$0xff]
    %v12453 = vld [vmem:[%s12 + $0xc8] sm:$0xff]
    %v12454 = vld [vmem:[%s12 + $0xd0] sm:$0xff]
    %v12455 = vld [vmem:[%s12 + $0xd8] sm:$0xff]
    %v12456 = vld [vmem:[%s12 + $0xe0] sm:$0xff]
    %v12457 = vld [vmem:[%s12 + $0xe8] sm:$0xff]
    %v12458 = vld [vmem:[%s12 + $0xf0] sm:$0xff]
    %v12459 = vld [vmem:[%s12 + $0xf8] sm:$0xff]
    %v12460 = vld [vmem:[%s12 + $0x100] sm:$0xff]
    %v12461 = vld [vmem:[%s12 + $0x108] sm:$0xff]
    %v12462 = vld [vmem:[%s12 + $0x110] sm:$0xff]
    %v12463 = vld [vmem:[%s12 + $0x118] sm:$0xff]
    %v12464 = vld [vmem:[%s12 + $0x120] sm:$0xff]
    %v12465 = vld [vmem:[%s12 + $0x128] sm:$0xff]
    %v12466 = vld [vmem:[%s12 + $0x130] sm:$0xff]
    %v12467 = vld [vmem:[%s12 + $0x138] sm:$0xff]
    %v12468 = vld [vmem:[%s12 + $0x140] sm:$0xff]
    %v12469 = vld [vmem:[%s12 + $0x148] sm:$0xff]
    %v12470 = vld [vmem:[%s12 + $0x150] sm:$0xff]
    %v12471 = vld [vmem:[%s12 + $0x158] sm:$0xff]
    %v12472 = vld [vmem:[%s12 + $0x160] sm:$0xff]
    %v12473 = vld [vmem:[%s12 + $0x168] sm:$0xff]
    %v12474 = vld [vmem:[%s12 + $0x170] sm:$0xff]
    %v12475 = vld [vmem:[%s12 + $0x178] sm:$0xff]
    %v12476 = vld [vmem:[%s12 + $0x180] sm:$0xff]
    %v12477 = vld [vmem:[%s12 + $0x188] sm:$0xff]
    %v12478 = vld [vmem:[%s12 + $0x190] sm:$0xff]
    %v12479 = vld [vmem:[%s12 + $0x198] sm:$0xff]
    %v12480 = vld [vmem:[%s12 + $0x1a0] sm:$0xff]
    %v12481 = vld [vmem:[%s12 + $0x1a8] sm:$0xff]
    %v12482 = vld [vmem:[%s12 + $0x1b0] sm:$0xff]
    %v12483 = vld [vmem:[%s12 + $0x1b8] sm:$0xff]
    %v12484 = vld [vmem:[%s12 + $0x1c0] sm:$0xff]
    %v12485 = vld [vmem:[%s12 + $0x1c8] sm:$0xff]
    %v12486 = vld [vmem:[%s12 + $0x1d0] sm:$0xff]
    %v12487 = vld [vmem:[%s12 + $0x1d8] sm:$0xff]
    %v12488 = vld [vmem:[%s12 + $0x1e0] sm:$0xff]
    %v12489 = vld [vmem:[%s12 + $0x1e8] sm:$0xff]
    %v12490 = vld [vmem:[%s12 + $0x1f0] sm:$0xff]
    %v12491 = vld [vmem:[%s12 + $0x1f8] sm:$0xff]
    %v12492 = vld [vmem:[%s13] sm:$0x3]
    %v12494 = vlaneseq
    %v12495 = vshrl.u32 %v12494, 7
    %v12496 = vsub.s32 0, %v12495
    %v12497 = vrot.slane %v12492, %v12496
    %v12498 = vlaneseq
    %v12499 = vshrl.u32 %v12498, 7
    %v12500 = vsub.s32 1, %v12499
    %v12501 = vrot.slane %v12492, %v12500
    %v12568 = vunpack.c.l.b16 %v12428
    %v12569 = vunpack.c.h.b16 %v12428
    %v12570 = vunpack.c.l.b16 %v12429
    %v12571 = vunpack.c.h.b16 %v12429
    %v12572 = vunpack.c.l.b16 %v12430
    %v12573 = vunpack.c.h.b16 %v12430
    %v12574 = vunpack.c.l.b16 %v12431
    %v12575 = vunpack.c.h.b16 %v12431
    %v12576 = vunpack.c.l.b16 %v12432
    %v12577 = vunpack.c.h.b16 %v12432
    %v12578 = vunpack.c.l.b16 %v12433
    %v12579 = vunpack.c.h.b16 %v12433
    %v12580 = vunpack.c.l.b16 %v12434
    %v12581 = vunpack.c.h.b16 %v12434
    %v12582 = vunpack.c.l.b16 %v12435
    %v12583 = vunpack.c.h.b16 %v12435
    %v12584 = vunpack.c.l.b16 %v12436
    %v12585 = vunpack.c.h.b16 %v12436
    %v12586 = vunpack.c.l.b16 %v12437
    %v12587 = vunpack.c.h.b16 %v12437
    %v12588 = vunpack.c.l.b16 %v12438
    %v12589 = vunpack.c.h.b16 %v12438
    %v12590 = vunpack.c.l.b16 %v12439
    %v12591 = vunpack.c.h.b16 %v12439
    %v12592 = vunpack.c.l.b16 %v12440
    %v12593 = vunpack.c.h.b16 %v12440
    %v12594 = vunpack.c.l.b16 %v12441
    %v12595 = vunpack.c.h.b16 %v12441
    %v12596 = vunpack.c.l.b16 %v12442
    %v12597 = vunpack.c.h.b16 %v12442
    %v12598 = vunpack.c.l.b16 %v12443
    %v12599 = vunpack.c.h.b16 %v12443
    %v12600 = vunpack.c.l.b16 %v12444
    %v12601 = vunpack.c.h.b16 %v12444
    %v12602 = vunpack.c.l.b16 %v12445
    %v12603 = vunpack.c.h.b16 %v12445
    %v12604 = vunpack.c.l.b16 %v12446
    %v12605 = vunpack.c.h.b16 %v12446
    %v12606 = vunpack.c.l.b16 %v12447
    %v12607 = vunpack.c.h.b16 %v12447
    %v12608 = vunpack.c.l.b16 %v12448
    %v12609 = vunpack.c.h.b16 %v12448
    %v12610 = vunpack.c.l.b16 %v12449
    %v12611 = vunpack.c.h.b16 %v12449
    %v12612 = vunpack.c.l.b16 %v12450
    %v12613 = vunpack.c.h.b16 %v12450
    %v12614 = vunpack.c.l.b16 %v12451
    %v12615 = vunpack.c.h.b16 %v12451
    %v12616 = vunpack.c.l.b16 %v12452
    %v12617 = vunpack.c.h.b16 %v12452
    %v12618 = vunpack.c.l.b16 %v12453
    %v12619 = vunpack.c.h.b16 %v12453
    %v12620 = vunpack.c.l.b16 %v12454
    %v12621 = vunpack.c.h.b16 %v12454
    %v12622 = vunpack.c.l.b16 %v12455
    %v12623 = vunpack.c.h.b16 %v12455
    %v12624 = vunpack.c.l.b16 %v12456
    %v12625 = vunpack.c.h.b16 %v12456
    %v12626 = vunpack.c.l.b16 %v12457
    %v12627 = vunpack.c.h.b16 %v12457
    %v12628 = vunpack.c.l.b16 %v12458
    %v12629 = vunpack.c.h.b16 %v12458
    %v12630 = vunpack.c.l.b16 %v12459
    %v12631 = vunpack.c.h.b16 %v12459
    %v12632 = vunpack.c.l.b16 %v12460
    %v12633 = vunpack.c.h.b16 %v12460
    %v12634 = vunpack.c.l.b16 %v12461
    %v12635 = vunpack.c.h.b16 %v12461
    %v12636 = vunpack.c.l.b16 %v12462
    %v12637 = vunpack.c.h.b16 %v12462
    %v12638 = vunpack.c.l.b16 %v12463
    %v12639 = vunpack.c.h.b16 %v12463
    %v12640 = vunpack.c.l.b16 %v12464
    %v12641 = vunpack.c.h.b16 %v12464
    %v12642 = vunpack.c.l.b16 %v12465
    %v12643 = vunpack.c.h.b16 %v12465
    %v12644 = vunpack.c.l.b16 %v12466
    %v12645 = vunpack.c.h.b16 %v12466
    %v12646 = vunpack.c.l.b16 %v12467
    %v12647 = vunpack.c.h.b16 %v12467
    %v12648 = vunpack.c.l.b16 %v12468
    %v12649 = vunpack.c.h.b16 %v12468
    %v12650 = vunpack.c.l.b16 %v12469
    %v12651 = vunpack.c.h.b16 %v12469
    %v12652 = vunpack.c.l.b16 %v12470
    %v12653 = vunpack.c.h.b16 %v12470
    %v12654 = vunpack.c.l.b16 %v12471
    %v12655 = vunpack.c.h.b16 %v12471
    %v12656 = vunpack.c.l.b16 %v12472
    %v12657 = vunpack.c.h.b16 %v12472
    %v12658 = vunpack.c.l.b16 %v12473
    %v12659 = vunpack.c.h.b16 %v12473
    %v12660 = vunpack.c.l.b16 %v12474
    %v12661 = vunpack.c.h.b16 %v12474
    %v12662 = vunpack.c.l.b16 %v12475
    %v12663 = vunpack.c.h.b16 %v12475
    %v12664 = vunpack.c.l.b16 %v12476
    %v12665 = vunpack.c.h.b16 %v12476
    %v12666 = vunpack.c.l.b16 %v12477
    %v12667 = vunpack.c.h.b16 %v12477
    %v12668 = vunpack.c.l.b16 %v12478
    %v12669 = vunpack.c.h.b16 %v12478
    %v12670 = vunpack.c.l.b16 %v12479
    %v12671 = vunpack.c.h.b16 %v12479
    %v12672 = vunpack.c.l.b16 %v12480
    %v12673 = vunpack.c.h.b16 %v12480
    %v12674 = vunpack.c.l.b16 %v12481
    %v12675 = vunpack.c.h.b16 %v12481
    %v12676 = vunpack.c.l.b16 %v12482
    %v12677 = vunpack.c.h.b16 %v12482
    %v12678 = vunpack.c.l.b16 %v12483
    %v12679 = vunpack.c.h.b16 %v12483
    %v12680 = vunpack.c.l.b16 %v12484
    %v12681 = vunpack.c.h.b16 %v12484
    %v12682 = vunpack.c.l.b16 %v12485
    %v12683 = vunpack.c.h.b16 %v12485
    %v12684 = vunpack.c.l.b16 %v12486
    %v12685 = vunpack.c.h.b16 %v12486
    %v12686 = vunpack.c.l.b16 %v12487
    %v12687 = vunpack.c.h.b16 %v12487
    %v12688 = vunpack.c.l.b16 %v12488
    %v12689 = vunpack.c.h.b16 %v12488
    %v12690 = vunpack.c.l.b16 %v12489
    %v12691 = vunpack.c.h.b16 %v12489
    %v12692 = vunpack.c.l.b16 %v12490
    %v12693 = vunpack.c.h.b16 %v12490
    %v12694 = vunpack.c.l.b16 %v12491
    %v12695 = vunpack.c.h.b16 %v12491
    %v12696 = vpack.c.b16 %v12570, %v12568
    %v12697 = vpack.c.b16 %v12571, %v12569
    %v12698 = vpack.c.b16 %v12574, %v12572
    %v12699 = vpack.c.b16 %v12575, %v12573
    %v12700 = vpack.c.b16 %v12578, %v12576
    %v12701 = vpack.c.b16 %v12579, %v12577
    %v12702 = vpack.c.b16 %v12582, %v12580
    %v12703 = vpack.c.b16 %v12583, %v12581
    %v12704 = vpack.c.b16 %v12586, %v12584
    %v12705 = vpack.c.b16 %v12587, %v12585
    %v12706 = vpack.c.b16 %v12590, %v12588
    %v12707 = vpack.c.b16 %v12591, %v12589
    %v12708 = vpack.c.b16 %v12594, %v12592
    %v12709 = vpack.c.b16 %v12595, %v12593
    %v12710 = vpack.c.b16 %v12598, %v12596
    %v12711 = vpack.c.b16 %v12599, %v12597
    %v12712 = vpack.c.b16 %v12602, %v12600
    %v12713 = vpack.c.b16 %v12603, %v12601
    %v12714 = vpack.c.b16 %v12606, %v12604
    %v12715 = vpack.c.b16 %v12607, %v12605
    %v12716 = vpack.c.b16 %v12610, %v12608
    %v12717 = vpack.c.b16 %v12611, %v12609
    %v12718 = vpack.c.b16 %v12614, %v12612
    %v12719 = vpack.c.b16 %v12615, %v12613
    %v12720 = vpack.c.b16 %v12618, %v12616
    %v12721 = vpack.c.b16 %v12619, %v12617
    %v12722 = vpack.c.b16 %v12622, %v12620
    %v12723 = vpack.c.b16 %v12623, %v12621
    %v12724 = vpack.c.b16 %v12626, %v12624
    %v12725 = vpack.c.b16 %v12627, %v12625
    %v12726 = vpack.c.b16 %v12630, %v12628
    %v12727 = vpack.c.b16 %v12631, %v12629
    %v12728 = vpack.c.b16 %v12634, %v12632
    %v12729 = vpack.c.b16 %v12635, %v12633
    %v12730 = vpack.c.b16 %v12638, %v12636
    %v12731 = vpack.c.b16 %v12639, %v12637
    %v12732 = vpack.c.b16 %v12642, %v12640
    %v12733 = vpack.c.b16 %v12643, %v12641
    %v12734 = vpack.c.b16 %v12646, %v12644
    %v12735 = vpack.c.b16 %v12647, %v12645
    %v12736 = vpack.c.b16 %v12650, %v12648
    %v12737 = vpack.c.b16 %v12651, %v12649
    %v12738 = vpack.c.b16 %v12654, %v12652
    %v12739 = vpack.c.b16 %v12655, %v12653
    %v12740 = vpack.c.b16 %v12658, %v12656
    %v12741 = vpack.c.b16 %v12659, %v12657
    %v12742 = vpack.c.b16 %v12662, %v12660
    %v12743 = vpack.c.b16 %v12663, %v12661
    %v12744 = vpack.c.b16 %v12666, %v12664
    %v12745 = vpack.c.b16 %v12667, %v12665
    %v12746 = vpack.c.b16 %v12670, %v12668
    %v12747 = vpack.c.b16 %v12671, %v12669
    %v12748 = vpack.c.b16 %v12674, %v12672
    %v12749 = vpack.c.b16 %v12675, %v12673
    %v12750 = vpack.c.b16 %v12678, %v12676
    %v12751 = vpack.c.b16 %v12679, %v12677
    %v12752 = vpack.c.b16 %v12682, %v12680
    %v12753 = vpack.c.b16 %v12683, %v12681
    %v12754 = vpack.c.b16 %v12686, %v12684
    %v12755 = vpack.c.b16 %v12687, %v12685
    %v12756 = vpack.c.b16 %v12690, %v12688
    %v12757 = vpack.c.b16 %v12691, %v12689
    %v12758 = vpack.c.b16 %v12694, %v12692
    %v12759 = vpack.c.b16 %v12695, %v12693
    %12824 = vmatprep.subr.bf16.mxu0 %v12711
    %12825 = vmatpush1.bf16.msra.mxu0 %v12710
    %12826 = vmatprep.subr.bf16.mxu0 %v12709
    %12827 = vmatpush1.bf16.msra.mxu0 %v12708
    %12828 = vmatprep.subr.bf16.mxu0 %v12707
    %12829 = vmatpush1.bf16.msra.mxu0 %v12706
    %12830 = vmatprep.subr.bf16.mxu0 %v12705
    %12831 = vmatpush1.bf16.msra.mxu0 %v12704
    %12832 = vmatprep.subr.bf16.mxu0 %v12703
    %12833 = vmatpush1.bf16.msra.mxu0 %v12702
    %12834 = vmatprep.subr.bf16.mxu0 %v12701
    %12835 = vmatpush1.bf16.msra.mxu0 %v12700
    %12836 = vmatprep.subr.bf16.mxu0 %v12699
    %12837 = vmatpush1.bf16.msra.mxu0 %v12698
    %12838 = vmatprep.subr.bf16.mxu0 %v12697
    %12839 = vmatpush1.bf16.msra.mxu0 %v12696
    %12840 = vmatprep.subr.bf16.mxu0 %v12727
    %12841 = vmatpush2.bf16.msra.mxu0 %v12726
    %12842 = vmatprep.subr.bf16.mxu0 %v12725
    %12843 = vmatpush2.bf16.msra.mxu0 %v12724
    %12844 = vmatprep.subr.bf16.mxu0 %v12723
    %12845 = vmatpush2.bf16.msra.mxu0 %v12722
    %12846 = vmatprep.subr.bf16.mxu0 %v12721
    %12847 = vmatpush2.bf16.msra.mxu0 %v12720
    %12848 = vmatprep.subr.bf16.mxu0 %v12719
    %12849 = vmatpush2.bf16.msra.mxu0 %v12718
    %12850 = vmatprep.subr.bf16.mxu0 %v12717
    %12851 = vmatpush2.bf16.msra.mxu0 %v12716
    %12852 = vmatprep.subr.bf16.mxu0 %v12715
    %12853 = vmatpush2.bf16.msra.mxu0 %v12714
    %12854 = vmatprep.subr.bf16.mxu0 %v12713
    %12855 = vmatpush2.bf16.msra.mxu0 %v12712
    %12856 = vmatprep.mubr.bf16.mxu0 %v12425
    %12857 = vmatmul.mubr.bf16.gmra.mxu0 %v12424
    %v12858 = vpop.f32.mrf.mxu0
    %v12859 = vadd.f32 %v12497, %v12858
    %v12860 = vpop.f32.mrf.mxu0
    %v12861 = vadd.f32 %v12501, %v12860
    %v12862 = vpop.f32.mrf.mxu0
    %v12863 = vpop.f32.mrf.mxu0
    %12864 = vdwg.mxu0
    %12865 = vmatprep.subr.bf16.mxu0 %v12743
    %12866 = vmatpush1.bf16.msra.mxu0 %v12742
    %12867 = vmatprep.subr.bf16.mxu0 %v12741
    %12868 = vmatpush1.bf16.msra.mxu0 %v12740
    %12869 = vmatprep.subr.bf16.mxu0 %v12739
    %12870 = vmatpush1.bf16.msra.mxu0 %v12738
    %12871 = vmatprep.subr.bf16.mxu0 %v12737
    %12872 = vmatpush1.bf16.msra.mxu0 %v12736
    %12873 = vmatprep.subr.bf16.mxu0 %v12735
    %12874 = vmatpush1.bf16.msra.mxu0 %v12734
    %12875 = vmatprep.subr.bf16.mxu0 %v12733
    %12876 = vmatpush1.bf16.msra.mxu0 %v12732
    %12877 = vmatprep.subr.bf16.mxu0 %v12731
    %12878 = vmatpush1.bf16.msra.mxu0 %v12730
    %12879 = vmatprep.subr.bf16.mxu0 %v12729
    %12880 = vmatpush1.bf16.msra.mxu0 %v12728
    %12881 = vmatprep.subr.bf16.mxu0 %v12759
    %12882 = vmatpush2.bf16.msra.mxu0 %v12758
    %12883 = vmatprep.subr.bf16.mxu0 %v12757
    %12884 = vmatpush2.bf16.msra.mxu0 %v12756
    %12885 = vmatprep.subr.bf16.mxu0 %v12755
    %12886 = vmatpush2.bf16.msra.mxu0 %v12754
    %12887 = vmatprep.subr.bf16.mxu0 %v12753
    %12888 = vmatpush2.bf16.msra.mxu0 %v12752
    %12889 = vmatprep.subr.bf16.mxu0 %v12751
    %12890 = vmatpush2.bf16.msra.mxu0 %v12750
    %12891 = vmatprep.subr.bf16.mxu0 %v12749
    %12892 = vmatpush2.bf16.msra.mxu0 %v12748
    %12893 = vmatprep.subr.bf16.mxu0 %v12747
    %12894 = vmatpush2.bf16.msra.mxu0 %v12746
    %12895 = vmatprep.subr.bf16.mxu0 %v12745
    %12896 = vmatpush2.bf16.msra.mxu0 %v12744
    %12897 = vmatprep.mubr.bf16.mxu0 %v12427
    %12898 = vmatmul.mubr.bf16.gmra.mxu0 %v12426
    %v12899 = vpop.f32.mrf.mxu0
    %v12900 = vadd.f32 %v12859, %v12899
    %v12901 = vpop.f32.mrf.mxu0
    %v12902 = vadd.f32 %v12861, %v12901
    %v12903 = vpop.f32.mrf.mxu0
    %v12904 = vpop.f32.mrf.mxu0
    %12905 = vdwg.mxu0
    %v12906 = vmax.f32 %v12900, 0.0
    %v12907 = vmax.f32 %v12902, 0.0
    %v12908 = vpack.c.bf16 %v12420, %v12420
    %v12909 = vpack.c.bf16 %v12421, %v12421
    %v12910 = vpack.c.bf16 %v12422, %v12422
    %v12911 = vpack.c.bf16 %v12423, %v12423
    %v12912 = vld [vmem:[%s14] sm:$0xff]
    %v12913 = vld [vmem:[%s14 + $0x8] sm:$0xff]
    %v12914 = vld [vmem:[%s14 + $0x10] sm:$0xff]
    %v12915 = vld [vmem:[%s14 + $0x18] sm:$0xff]
    %v12916 = vld [vmem:[%s14 + $0x20] sm:$0xff]
    %v12917 = vld [vmem:[%s14 + $0x28] sm:$0xff]
    %v12918 = vld [vmem:[%s14 + $0x30] sm:$0xff]
    %v12919 = vld [vmem:[%s14 + $0x38] sm:$0xff]
    %v12920 = vld [vmem:[%s14 + $0x40] sm:$0xff]
    %v12921 = vld [vmem:[%s14 + $0x48] sm:$0xff]
    %v12922 = vld [vmem:[%s14 + $0x50] sm:$0xff]
    %v12923 = vld [vmem:[%s14 + $0x58] sm:$0xff]
    %v12924 = vld [vmem:[%s14 + $0x60] sm:$0xff]
    %v12925 = vld [vmem:[%s14 + $0x68] sm:$0xff]
    %v12926 = vld [vmem:[%s14 + $0x70] sm:$0xff]
    %v12927 = vld [vmem:[%s14 + $0x78] sm:$0xff]
    %v12928 = vld [vmem:[%s14 + $0x80] sm:$0xff]
    %v12929 = vld [vmem:[%s14 + $0x88] sm:$0xff]
    %v12930 = vld [vmem:[%s14 + $0x90] sm:$0xff]
    %v12931 = vld [vmem:[%s14 + $0x98] sm:$0xff]
    %v12932 = vld [vmem:[%s14 + $0xa0] sm:$0xff]
    %v12933 = vld [vmem:[%s14 + $0xa8] sm:$0xff]
    %v12934 = vld [vmem:[%s14 + $0xb0] sm:$0xff]
    %v12935 = vld [vmem:[%s14 + $0xb8] sm:$0xff]
    %v12936 = vld [vmem:[%s14 + $0xc0] sm:$0xff]
    %v12937 = vld [vmem:[%s14 + $0xc8] sm:$0xff]
    %v12938 = vld [vmem:[%s14 + $0xd0] sm:$0xff]
    %v12939 = vld [vmem:[%s14 + $0xd8] sm:$0xff]
    %v12940 = vld [vmem:[%s14 + $0xe0] sm:$0xff]
    %v12941 = vld [vmem:[%s14 + $0xe8] sm:$0xff]
    %v12942 = vld [vmem:[%s14 + $0xf0] sm:$0xff]
    %v12943 = vld [vmem:[%s14 + $0xf8] sm:$0xff]
    %v12944 = vld [vmem:[%s14 + $0x100] sm:$0xff]
    %v12945 = vld [vmem:[%s14 + $0x108] sm:$0xff]
    %v12946 = vld [vmem:[%s14 + $0x110] sm:$0xff]
    %v12947 = vld [vmem:[%s14 + $0x118] sm:$0xff]
    %v12948 = vld [vmem:[%s14 + $0x120] sm:$0xff]
    %v12949 = vld [vmem:[%s14 + $0x128] sm:$0xff]
    %v12950 = vld [vmem:[%s14 + $0x130] sm:$0xff]
    %v12951 = vld [vmem:[%s14 + $0x138] sm:$0xff]
    %v12952 = vld [vmem:[%s14 + $0x140] sm:$0xff]
    %v12953 = vld [vmem:[%s14 + $0x148] sm:$0xff]
    %v12954 = vld [vmem:[%s14 + $0x150] sm:$0xff]
    %v12955 = vld [vmem:[%s14 + $0x158] sm:$0xff]
    %v12956 = vld [vmem:[%s14 + $0x160] sm:$0xff]
    %v12957 = vld [vmem:[%s14 + $0x168] sm:$0xff]
    %v12958 = vld [vmem:[%s14 + $0x170] sm:$0xff]
    %v12959 = vld [vmem:[%s14 + $0x178] sm:$0xff]
    %v12960 = vld [vmem:[%s14 + $0x180] sm:$0xff]
    %v12961 = vld [vmem:[%s14 + $0x188] sm:$0xff]
    %v12962 = vld [vmem:[%s14 + $0x190] sm:$0xff]
    %v12963 = vld [vmem:[%s14 + $0x198] sm:$0xff]
    %v12964 = vld [vmem:[%s14 + $0x1a0] sm:$0xff]
    %v12965 = vld [vmem:[%s14 + $0x1a8] sm:$0xff]
    %v12966 = vld [vmem:[%s14 + $0x1b0] sm:$0xff]
    %v12967 = vld [vmem:[%s14 + $0x1b8] sm:$0xff]
    %v12968 = vld [vmem:[%s14 + $0x1c0] sm:$0xff]
    %v12969 = vld [vmem:[%s14 + $0x1c8] sm:$0xff]
    %v12970 = vld [vmem:[%s14 + $0x1d0] sm:$0xff]
    %v12971 = vld [vmem:[%s14 + $0x1d8] sm:$0xff]
    %v12972 = vld [vmem:[%s14 + $0x1e0] sm:$0xff]
    %v12973 = vld [vmem:[%s14 + $0x1e8] sm:$0xff]
    %v12974 = vld [vmem:[%s14 + $0x1f0] sm:$0xff]
    %v12975 = vld [vmem:[%s14 + $0x1f8] sm:$0xff]
    %v12976 = vld [vmem:[%s15] sm:$0x3]
    %v12978 = vlaneseq
    %v12979 = vshrl.u32 %v12978, 7
    %v12980 = vsub.s32 0, %v12979
    %v12981 = vrot.slane %v12976, %v12980
    %v12982 = vlaneseq
    %v12983 = vshrl.u32 %v12982, 7
    %v12984 = vsub.s32 1, %v12983
    %v12985 = vrot.slane %v12976, %v12984
    %v13052 = vunpack.c.l.b16 %v12912
    %v13053 = vunpack.c.h.b16 %v12912
    %v13054 = vunpack.c.l.b16 %v12913
    %v13055 = vunpack.c.h.b16 %v12913
    %v13056 = vunpack.c.l.b16 %v12914
    %v13057 = vunpack.c.h.b16 %v12914
    %v13058 = vunpack.c.l.b16 %v12915
    %v13059 = vunpack.c.h.b16 %v12915
    %v13060 = vunpack.c.l.b16 %v12916
    %v13061 = vunpack.c.h.b16 %v12916
    %v13062 = vunpack.c.l.b16 %v12917
    %v13063 = vunpack.c.h.b16 %v12917
    %v13064 = vunpack.c.l.b16 %v12918
    %v13065 = vunpack.c.h.b16 %v12918
    %v13066 = vunpack.c.l.b16 %v12919
    %v13067 = vunpack.c.h.b16 %v12919
    %v13068 = vunpack.c.l.b16 %v12920
    %v13069 = vunpack.c.h.b16 %v12920
    %v13070 = vunpack.c.l.b16 %v12921
    %v13071 = vunpack.c.h.b16 %v12921
    %v13072 = vunpack.c.l.b16 %v12922
    %v13073 = vunpack.c.h.b16 %v12922
    %v13074 = vunpack.c.l.b16 %v12923
    %v13075 = vunpack.c.h.b16 %v12923
    %v13076 = vunpack.c.l.b16 %v12924
    %v13077 = vunpack.c.h.b16 %v12924
    %v13078 = vunpack.c.l.b16 %v12925
    %v13079 = vunpack.c.h.b16 %v12925
    %v13080 = vunpack.c.l.b16 %v12926
    %v13081 = vunpack.c.h.b16 %v12926
    %v13082 = vunpack.c.l.b16 %v12927
    %v13083 = vunpack.c.h.b16 %v12927
    %v13084 = vunpack.c.l.b16 %v12928
    %v13085 = vunpack.c.h.b16 %v12928
    %v13086 = vunpack.c.l.b16 %v12929
    %v13087 = vunpack.c.h.b16 %v12929
    %v13088 = vunpack.c.l.b16 %v12930
    %v13089 = vunpack.c.h.b16 %v12930
    %v13090 = vunpack.c.l.b16 %v12931
    %v13091 = vunpack.c.h.b16 %v12931
    %v13092 = vunpack.c.l.b16 %v12932
    %v13093 = vunpack.c.h.b16 %v12932
    %v13094 = vunpack.c.l.b16 %v12933
    %v13095 = vunpack.c.h.b16 %v12933
    %v13096 = vunpack.c.l.b16 %v12934
    %v13097 = vunpack.c.h.b16 %v12934
    %v13098 = vunpack.c.l.b16 %v12935
    %v13099 = vunpack.c.h.b16 %v12935
    %v13100 = vunpack.c.l.b16 %v12936
    %v13101 = vunpack.c.h.b16 %v12936
    %v13102 = vunpack.c.l.b16 %v12937
    %v13103 = vunpack.c.h.b16 %v12937
    %v13104 = vunpack.c.l.b16 %v12938
    %v13105 = vunpack.c.h.b16 %v12938
    %v13106 = vunpack.c.l.b16 %v12939
    %v13107 = vunpack.c.h.b16 %v12939
    %v13108 = vunpack.c.l.b16 %v12940
    %v13109 = vunpack.c.h.b16 %v12940
    %v13110 = vunpack.c.l.b16 %v12941
    %v13111 = vunpack.c.h.b16 %v12941
    %v13112 = vunpack.c.l.b16 %v12942
    %v13113 = vunpack.c.h.b16 %v12942
    %v13114 = vunpack.c.l.b16 %v12943
    %v13115 = vunpack.c.h.b16 %v12943
    %v13116 = vunpack.c.l.b16 %v12944
    %v13117 = vunpack.c.h.b16 %v12944
    %v13118 = vunpack.c.l.b16 %v12945
    %v13119 = vunpack.c.h.b16 %v12945
    %v13120 = vunpack.c.l.b16 %v12946
    %v13121 = vunpack.c.h.b16 %v12946
    %v13122 = vunpack.c.l.b16 %v12947
    %v13123 = vunpack.c.h.b16 %v12947
    %v13124 = vunpack.c.l.b16 %v12948
    %v13125 = vunpack.c.h.b16 %v12948
    %v13126 = vunpack.c.l.b16 %v12949
    %v13127 = vunpack.c.h.b16 %v12949
    %v13128 = vunpack.c.l.b16 %v12950
    %v13129 = vunpack.c.h.b16 %v12950
    %v13130 = vunpack.c.l.b16 %v12951
    %v13131 = vunpack.c.h.b16 %v12951
    %v13132 = vunpack.c.l.b16 %v12952
    %v13133 = vunpack.c.h.b16 %v12952
    %v13134 = vunpack.c.l.b16 %v12953
    %v13135 = vunpack.c.h.b16 %v12953
    %v13136 = vunpack.c.l.b16 %v12954
    %v13137 = vunpack.c.h.b16 %v12954
    %v13138 = vunpack.c.l.b16 %v12955
    %v13139 = vunpack.c.h.b16 %v12955
    %v13140 = vunpack.c.l.b16 %v12956
    %v13141 = vunpack.c.h.b16 %v12956
    %v13142 = vunpack.c.l.b16 %v12957
    %v13143 = vunpack.c.h.b16 %v12957
    %v13144 = vunpack.c.l.b16 %v12958
    %v13145 = vunpack.c.h.b16 %v12958
    %v13146 = vunpack.c.l.b16 %v12959
    %v13147 = vunpack.c.h.b16 %v12959
    %v13148 = vunpack.c.l.b16 %v12960
    %v13149 = vunpack.c.h.b16 %v12960
    %v13150 = vunpack.c.l.b16 %v12961
    %v13151 = vunpack.c.h.b16 %v12961
    %v13152 = vunpack.c.l.b16 %v12962
    %v13153 = vunpack.c.h.b16 %v12962
    %v13154 = vunpack.c.l.b16 %v12963
    %v13155 = vunpack.c.h.b16 %v12963
    %v13156 = vunpack.c.l.b16 %v12964
    %v13157 = vunpack.c.h.b16 %v12964
    %v13158 = vunpack.c.l.b16 %v12965
    %v13159 = vunpack.c.h.b16 %v12965
    %v13160 = vunpack.c.l.b16 %v12966
    %v13161 = vunpack.c.h.b16 %v12966
    %v13162 = vunpack.c.l.b16 %v12967
    %v13163 = vunpack.c.h.b16 %v12967
    %v13164 = vunpack.c.l.b16 %v12968
    %v13165 = vunpack.c.h.b16 %v12968
    %v13166 = vunpack.c.l.b16 %v12969
    %v13167 = vunpack.c.h.b16 %v12969
    %v13168 = vunpack.c.l.b16 %v12970
    %v13169 = vunpack.c.h.b16 %v12970
    %v13170 = vunpack.c.l.b16 %v12971
    %v13171 = vunpack.c.h.b16 %v12971
    %v13172 = vunpack.c.l.b16 %v12972
    %v13173 = vunpack.c.h.b16 %v12972
    %v13174 = vunpack.c.l.b16 %v12973
    %v13175 = vunpack.c.h.b16 %v12973
    %v13176 = vunpack.c.l.b16 %v12974
    %v13177 = vunpack.c.h.b16 %v12974
    %v13178 = vunpack.c.l.b16 %v12975
    %v13179 = vunpack.c.h.b16 %v12975
    %v13180 = vpack.c.b16 %v13054, %v13052
    %v13181 = vpack.c.b16 %v13055, %v13053
    %v13182 = vpack.c.b16 %v13058, %v13056
    %v13183 = vpack.c.b16 %v13059, %v13057
    %v13184 = vpack.c.b16 %v13062, %v13060
    %v13185 = vpack.c.b16 %v13063, %v13061
    %v13186 = vpack.c.b16 %v13066, %v13064
    %v13187 = vpack.c.b16 %v13067, %v13065
    %v13188 = vpack.c.b16 %v13070, %v13068
    %v13189 = vpack.c.b16 %v13071, %v13069
    %v13190 = vpack.c.b16 %v13074, %v13072
    %v13191 = vpack.c.b16 %v13075, %v13073
    %v13192 = vpack.c.b16 %v13078, %v13076
    %v13193 = vpack.c.b16 %v13079, %v13077
    %v13194 = vpack.c.b16 %v13082, %v13080
    %v13195 = vpack.c.b16 %v13083, %v13081
    %v13196 = vpack.c.b16 %v13086, %v13084
    %v13197 = vpack.c.b16 %v13087, %v13085
    %v13198 = vpack.c.b16 %v13090, %v13088
    %v13199 = vpack.c.b16 %v13091, %v13089
    %v13200 = vpack.c.b16 %v13094, %v13092
    %v13201 = vpack.c.b16 %v13095, %v13093
    %v13202 = vpack.c.b16 %v13098, %v13096
    %v13203 = vpack.c.b16 %v13099, %v13097
    %v13204 = vpack.c.b16 %v13102, %v13100
    %v13205 = vpack.c.b16 %v13103, %v13101
    %v13206 = vpack.c.b16 %v13106, %v13104
    %v13207 = vpack.c.b16 %v13107, %v13105
    %v13208 = vpack.c.b16 %v13110, %v13108
    %v13209 = vpack.c.b16 %v13111, %v13109
    %v13210 = vpack.c.b16 %v13114, %v13112
    %v13211 = vpack.c.b16 %v13115, %v13113
    %v13212 = vpack.c.b16 %v13118, %v13116
    %v13213 = vpack.c.b16 %v13119, %v13117
    %v13214 = vpack.c.b16 %v13122, %v13120
    %v13215 = vpack.c.b16 %v13123, %v13121
    %v13216 = vpack.c.b16 %v13126, %v13124
    %v13217 = vpack.c.b16 %v13127, %v13125
    %v13218 = vpack.c.b16 %v13130, %v13128
    %v13219 = vpack.c.b16 %v13131, %v13129
    %v13220 = vpack.c.b16 %v13134, %v13132
    %v13221 = vpack.c.b16 %v13135, %v13133
    %v13222 = vpack.c.b16 %v13138, %v13136
    %v13223 = vpack.c.b16 %v13139, %v13137
    %v13224 = vpack.c.b16 %v13142, %v13140
    %v13225 = vpack.c.b16 %v13143, %v13141
    %v13226 = vpack.c.b16 %v13146, %v13144
    %v13227 = vpack.c.b16 %v13147, %v13145
    %v13228 = vpack.c.b16 %v13150, %v13148
    %v13229 = vpack.c.b16 %v13151, %v13149
    %v13230 = vpack.c.b16 %v13154, %v13152
    %v13231 = vpack.c.b16 %v13155, %v13153
    %v13232 = vpack.c.b16 %v13158, %v13156
    %v13233 = vpack.c.b16 %v13159, %v13157
    %v13234 = vpack.c.b16 %v13162, %v13160
    %v13235 = vpack.c.b16 %v13163, %v13161
    %v13236 = vpack.c.b16 %v13166, %v13164
    %v13237 = vpack.c.b16 %v13167, %v13165
    %v13238 = vpack.c.b16 %v13170, %v13168
    %v13239 = vpack.c.b16 %v13171, %v13169
    %v13240 = vpack.c.b16 %v13174, %v13172
    %v13241 = vpack.c.b16 %v13175, %v13173
    %v13242 = vpack.c.b16 %v13178, %v13176
    %v13243 = vpack.c.b16 %v13179, %v13177
    %13308 = vmatprep.subr.bf16.mxu0 %v13195
    %13309 = vmatpush1.bf16.msra.mxu0 %v13194
    %13310 = vmatprep.subr.bf16.mxu0 %v13193
    %13311 = vmatpush1.bf16.msra.mxu0 %v13192
    %13312 = vmatprep.subr.bf16.mxu0 %v13191
    %13313 = vmatpush1.bf16.msra.mxu0 %v13190
    %13314 = vmatprep.subr.bf16.mxu0 %v13189
    %13315 = vmatpush1.bf16.msra.mxu0 %v13188
    %13316 = vmatprep.subr.bf16.mxu0 %v13187
    %13317 = vmatpush1.bf16.msra.mxu0 %v13186
    %13318 = vmatprep.subr.bf16.mxu0 %v13185
    %13319 = vmatpush1.bf16.msra.mxu0 %v13184
    %13320 = vmatprep.subr.bf16.mxu0 %v13183
    %13321 = vmatpush1.bf16.msra.mxu0 %v13182
    %13322 = vmatprep.subr.bf16.mxu0 %v13181
    %13323 = vmatpush1.bf16.msra.mxu0 %v13180
    %13324 = vmatprep.subr.bf16.mxu0 %v13211
    %13325 = vmatpush2.bf16.msra.mxu0 %v13210
    %13326 = vmatprep.subr.bf16.mxu0 %v13209
    %13327 = vmatpush2.bf16.msra.mxu0 %v13208
    %13328 = vmatprep.subr.bf16.mxu0 %v13207
    %13329 = vmatpush2.bf16.msra.mxu0 %v13206
    %13330 = vmatprep.subr.bf16.mxu0 %v13205
    %13331 = vmatpush2.bf16.msra.mxu0 %v13204
    %13332 = vmatprep.subr.bf16.mxu0 %v13203
    %13333 = vmatpush2.bf16.msra.mxu0 %v13202
    %13334 = vmatprep.subr.bf16.mxu0 %v13201
    %13335 = vmatpush2.bf16.msra.mxu0 %v13200
    %13336 = vmatprep.subr.bf16.mxu0 %v13199
    %13337 = vmatpush2.bf16.msra.mxu0 %v13198
    %13338 = vmatprep.subr.bf16.mxu0 %v13197
    %13339 = vmatpush2.bf16.msra.mxu0 %v13196
    %13340 = vmatprep.mubr.bf16.mxu0 %v12909
    %13341 = vmatmul.mubr.bf16.gmra.mxu0 %v12908
    %v13342 = vpop.f32.mrf.mxu0
    %v13343 = vadd.f32 %v12981, %v13342
    %v13344 = vpop.f32.mrf.mxu0
    %v13345 = vadd.f32 %v12985, %v13344
    %v13346 = vpop.f32.mrf.mxu0
    %v13347 = vpop.f32.mrf.mxu0
    %13348 = vdwg.mxu0
    %13349 = vmatprep.subr.bf16.mxu0 %v13227
    %13350 = vmatpush1.bf16.msra.mxu0 %v13226
    %13351 = vmatprep.subr.bf16.mxu0 %v13225
    %13352 = vmatpush1.bf16.msra.mxu0 %v13224
    %13353 = vmatprep.subr.bf16.mxu0 %v13223
    %13354 = vmatpush1.bf16.msra.mxu0 %v13222
    %13355 = vmatprep.subr.bf16.mxu0 %v13221
    %13356 = vmatpush1.bf16.msra.mxu0 %v13220
    %13357 = vmatprep.subr.bf16.mxu0 %v13219
    %13358 = vmatpush1.bf16.msra.mxu0 %v13218
    %13359 = vmatprep.subr.bf16.mxu0 %v13217
    %13360 = vmatpush1.bf16.msra.mxu0 %v13216
    %13361 = vmatprep.subr.bf16.mxu0 %v13215
    %13362 = vmatpush1.bf16.msra.mxu0 %v13214
    %13363 = vmatprep.subr.bf16.mxu0 %v13213
    %13364 = vmatpush1.bf16.msra.mxu0 %v13212
    %13365 = vmatprep.subr.bf16.mxu0 %v13243
    %13366 = vmatpush2.bf16.msra.mxu0 %v13242
    %13367 = vmatprep.subr.bf16.mxu0 %v13241
    %13368 = vmatpush2.bf16.msra.mxu0 %v13240
    %13369 = vmatprep.subr.bf16.mxu0 %v13239
    %13370 = vmatpush2.bf16.msra.mxu0 %v13238
    %13371 = vmatprep.subr.bf16.mxu0 %v13237
    %13372 = vmatpush2.bf16.msra.mxu0 %v13236
    %13373 = vmatprep.subr.bf16.mxu0 %v13235
    %13374 = vmatpush2.bf16.msra.mxu0 %v13234
    %13375 = vmatprep.subr.bf16.mxu0 %v13233
    %13376 = vmatpush2.bf16.msra.mxu0 %v13232
    %13377 = vmatprep.subr.bf16.mxu0 %v13231
    %13378 = vmatpush2.bf16.msra.mxu0 %v13230
    %13379 = vmatprep.subr.bf16.mxu0 %v13229
    %13380 = vmatpush2.bf16.msra.mxu0 %v13228
    %13381 = vmatprep.mubr.bf16.mxu0 %v12911
    %13382 = vmatmul.mubr.bf16.gmra.mxu0 %v12910
    %v13383 = vpop.f32.mrf.mxu0
    %v13384 = vadd.f32 %v13343, %v13383
    %v13385 = vpop.f32.mrf.mxu0
    %v13386 = vadd.f32 %v13345, %v13385
    %v13387 = vpop.f32.mrf.mxu0
    %v13388 = vpop.f32.mrf.mxu0
    %13389 = vdwg.mxu0
    %v13390 = vmax.f32 %v13384, 0.0
    %v13391 = vmax.f32 %v13386, 0.0
    %v13392 = vpack.c.bf16 %v12906, %v12906
    %v13393 = vpack.c.bf16 %v12907, %v12907
    %v13394 = vld [vmem:[%s16] sm:$0xf]
    %v13395 = vld [vmem:[%s16 + $0x4] sm:$0xf]
    %v13396 = vld [vmem:[%s16 + $0x8] sm:$0xf]
    %v13397 = vld [vmem:[%s16 + $0xc] sm:$0xf]
    %v13398 = vld [vmem:[%s16 + $0x10] sm:$0xf]
    %v13399 = vld [vmem:[%s16 + $0x14] sm:$0xf]
    %v13400 = vld [vmem:[%s16 + $0x18] sm:$0xf]
    %v13401 = vld [vmem:[%s16 + $0x1c] sm:$0xf]
    %v13402 = vld [vmem:[%s16 + $0x20] sm:$0xf]
    %v13403 = vld [vmem:[%s16 + $0x24] sm:$0xf]
    %v13404 = vld [vmem:[%s16 + $0x28] sm:$0xf]
    %v13405 = vld [vmem:[%s16 + $0x2c] sm:$0xf]
    %v13406 = vld [vmem:[%s16 + $0x30] sm:$0xf]
    %v13407 = vld [vmem:[%s16 + $0x34] sm:$0xf]
    %v13408 = vld [vmem:[%s16 + $0x38] sm:$0xf]
    %v13409 = vld [vmem:[%s16 + $0x3c] sm:$0xf]
    %v13410 = vld [vmem:[%s16 + $0x40] sm:$0xf]
    %v13411 = vld [vmem:[%s16 + $0x44] sm:$0xf]
    %v13412 = vld [vmem:[%s16 + $0x48] sm:$0xf]
    %v13413 = vld [vmem:[%s16 + $0x4c] sm:$0xf]
    %v13414 = vld [vmem:[%s16 + $0x50] sm:$0xf]
    %v13415 = vld [vmem:[%s16 + $0x54] sm:$0xf]
    %v13416 = vld [vmem:[%s16 + $0x58] sm:$0xf]
    %v13417 = vld [vmem:[%s16 + $0x5c] sm:$0xf]
    %v13418 = vld [vmem:[%s16 + $0x60] sm:$0xf]
    %v13419 = vld [vmem:[%s16 + $0x64] sm:$0xf]
    %v13420 = vld [vmem:[%s16 + $0x68] sm:$0xf]
    %v13421 = vld [vmem:[%s16 + $0x6c] sm:$0xf]
    %v13422 = vld [vmem:[%s16 + $0x70] sm:$0xf]
    %v13423 = vld [vmem:[%s16 + $0x74] sm:$0xf]
    %v13424 = vld [vmem:[%s16 + $0x78] sm:$0xf]
    %v13425 = vld [vmem:[%s16 + $0x7c] sm:$0xf]
    %v13426 = vld [vmem:[%s17] sm:$0x1]
    %v13428 = vlaneseq
    %v13429 = vshrl.u32 %v13428, 7
    %v13430 = vsub.s32 0, %v13429
    %v13431 = vrot.slane %v13426, %v13430
    %v13465 = vunpack.c.l.b16 %v13394
    %v13466 = vunpack.c.l.b16 %v13395
    %v13467 = vunpack.c.l.b16 %v13396
    %v13468 = vunpack.c.l.b16 %v13397
    %v13469 = vunpack.c.l.b16 %v13398
    %v13470 = vunpack.c.l.b16 %v13399
    %v13471 = vunpack.c.l.b16 %v13400
    %v13472 = vunpack.c.l.b16 %v13401
    %v13473 = vunpack.c.l.b16 %v13402
    %v13474 = vunpack.c.l.b16 %v13403
    %v13475 = vunpack.c.l.b16 %v13404
    %v13476 = vunpack.c.l.b16 %v13405
    %v13477 = vunpack.c.l.b16 %v13406
    %v13478 = vunpack.c.l.b16 %v13407
    %v13479 = vunpack.c.l.b16 %v13408
    %v13480 = vunpack.c.l.b16 %v13409
    %v13481 = vunpack.c.l.b16 %v13410
    %v13482 = vunpack.c.l.b16 %v13411
    %v13483 = vunpack.c.l.b16 %v13412
    %v13484 = vunpack.c.l.b16 %v13413
    %v13485 = vunpack.c.l.b16 %v13414
    %v13486 = vunpack.c.l.b16 %v13415
    %v13487 = vunpack.c.l.b16 %v13416
    %v13488 = vunpack.c.l.b16 %v13417
    %v13489 = vunpack.c.l.b16 %v13418
    %v13490 = vunpack.c.l.b16 %v13419
    %v13491 = vunpack.c.l.b16 %v13420
    %v13492 = vunpack.c.l.b16 %v13421
    %v13493 = vunpack.c.l.b16 %v13422
    %v13494 = vunpack.c.l.b16 %v13423
    %v13495 = vunpack.c.l.b16 %v13424
    %v13496 = vunpack.c.l.b16 %v13425
    %v13497 = vpack.c.b16 %v13466, %v13465
    %v13498 = vpack.c.b16 %v13468, %v13467
    %v13499 = vpack.c.b16 %v13470, %v13469
    %v13500 = vpack.c.b16 %v13472, %v13471
    %v13501 = vpack.c.b16 %v13474, %v13473
    %v13502 = vpack.c.b16 %v13476, %v13475
    %v13503 = vpack.c.b16 %v13478, %v13477
    %v13504 = vpack.c.b16 %v13480, %v13479
    %v13505 = vpack.c.b16 %v13482, %v13481
    %v13506 = vpack.c.b16 %v13484, %v13483
    %v13507 = vpack.c.b16 %v13486, %v13485
    %v13508 = vpack.c.b16 %v13488, %v13487
    %v13509 = vpack.c.b16 %v13490, %v13489
    %v13510 = vpack.c.b16 %v13492, %v13491
    %v13511 = vpack.c.b16 %v13494, %v13493
    %v13512 = vpack.c.b16 %v13496, %v13495
    %13529 = vmatprep.subr.bf16.mxu0 0
    %13530 = vmatpush1.bf16.msra.mxu0 %v13504
    %13531 = vmatprep.subr.bf16.mxu0 0
    %13532 = vmatpush1.bf16.msra.mxu0 %v13503
    %13533 = vmatprep.subr.bf16.mxu0 0
    %13534 = vmatpush1.bf16.msra.mxu0 %v13502
    %13535 = vmatprep.subr.bf16.mxu0 0
    %13536 = vmatpush1.bf16.msra.mxu0 %v13501
    %13537 = vmatprep.subr.bf16.mxu0 0
    %13538 = vmatpush1.bf16.msra.mxu0 %v13500
    %13539 = vmatprep.subr.bf16.mxu0 0
    %13540 = vmatpush1.bf16.msra.mxu0 %v13499
    %13541 = vmatprep.subr.bf16.mxu0 0
    %13542 = vmatpush1.bf16.msra.mxu0 %v13498
    %13543 = vmatprep.subr.bf16.mxu0 0
    %13544 = vmatpush1.bf16.msra.mxu0 %v13497
    %13545 = vmatprep.subr.bf16.mxu0 0
    %13546 = vmatpush2.bf16.msra.mxu0 %v13512
    %13547 = vmatprep.subr.bf16.mxu0 0
    %13548 = vmatpush2.bf16.msra.mxu0 %v13511
    %13549 = vmatprep.subr.bf16.mxu0 0
    %13550 = vmatpush2.bf16.msra.mxu0 %v13510
    %13551 = vmatprep.subr.bf16.mxu0 0
    %13552 = vmatpush2.bf16.msra.mxu0 %v13509
    %13553 = vmatprep.subr.bf16.mxu0 0
    %13554 = vmatpush2.bf16.msra.mxu0 %v13508
    %13555 = vmatprep.subr.bf16.mxu0 0
    %13556 = vmatpush2.bf16.msra.mxu0 %v13507
    %13557 = vmatprep.subr.bf16.mxu0 0
    %13558 = vmatpush2.bf16.msra.mxu0 %v13506
    %13559 = vmatprep.subr.bf16.mxu0 0
    %13560 = vmatpush2.bf16.msra.mxu0 %v13505
    %13561 = vmatprep.mubr.bf16.mxu0 %v13393
    %13562 = vmatmul.mubr.bf16.gmra.mxu0 %v13392
    %v13563 = vpop.f32.mrf.mxu0
    %v13564 = vadd.f32 %v13431, %v13563
    %v13565 = vpop.f32.mrf.mxu0
    %v13566 = vpop.f32.mrf.mxu0
    %v13567 = vpop.f32.mrf.mxu0
    %13568 = vdwg.mxu0
    %v13569 = vmax.f32 %v13564, 0.0
    %v13570 = vpack.c.bf16 %v13390, %v13390
    %v13571 = vpack.c.bf16 %v13391, %v13391
    %v13572 = vld [vmem:[%s18] sm:$0xf]
    %v13573 = vld [vmem:[%s18 + $0x4] sm:$0xf]
    %v13574 = vld [vmem:[%s18 + $0x8] sm:$0xf]
    %v13575 = vld [vmem:[%s18 + $0xc] sm:$0xf]
    %v13576 = vld [vmem:[%s18 + $0x10] sm:$0xf]
    %v13577 = vld [vmem:[%s18 + $0x14] sm:$0xf]
    %v13578 = vld [vmem:[%s18 + $0x18] sm:$0xf]
    %v13579 = vld [vmem:[%s18 + $0x1c] sm:$0xf]
    %v13580 = vld [vmem:[%s18 + $0x20] sm:$0xf]
    %v13581 = vld [vmem:[%s18 + $0x24] sm:$0xf]
    %v13582 = vld [vmem:[%s18 + $0x28] sm:$0xf]
    %v13583 = vld [vmem:[%s18 + $0x2c] sm:$0xf]
    %v13584 = vld [vmem:[%s18 + $0x30] sm:$0xf]
    %v13585 = vld [vmem:[%s18 + $0x34] sm:$0xf]
    %v13586 = vld [vmem:[%s18 + $0x38] sm:$0xf]
    %v13587 = vld [vmem:[%s18 + $0x3c] sm:$0xf]
    %v13588 = vld [vmem:[%s18 + $0x40] sm:$0xf]
    %v13589 = vld [vmem:[%s18 + $0x44] sm:$0xf]
    %v13590 = vld [vmem:[%s18 + $0x48] sm:$0xf]
    %v13591 = vld [vmem:[%s18 + $0x4c] sm:$0xf]
    %v13592 = vld [vmem:[%s18 + $0x50] sm:$0xf]
    %v13593 = vld [vmem:[%s18 + $0x54] sm:$0xf]
    %v13594 = vld [vmem:[%s18 + $0x58] sm:$0xf]
    %v13595 = vld [vmem:[%s18 + $0x5c] sm:$0xf]
    %v13596 = vld [vmem:[%s18 + $0x60] sm:$0xf]
    %v13597 = vld [vmem:[%s18 + $0x64] sm:$0xf]
    %v13598 = vld [vmem:[%s18 + $0x68] sm:$0xf]
    %v13599 = vld [vmem:[%s18 + $0x6c] sm:$0xf]
    %v13600 = vld [vmem:[%s18 + $0x70] sm:$0xf]
    %v13601 = vld [vmem:[%s18 + $0x74] sm:$0xf]
    %v13602 = vld [vmem:[%s18 + $0x78] sm:$0xf]
    %v13603 = vld [vmem:[%s18 + $0x7c] sm:$0xf]
    %v13604 = vld [vmem:[%s19] sm:$0x1]
    %v13606 = vlaneseq
    %v13607 = vshrl.u32 %v13606, 7
    %v13608 = vsub.s32 0, %v13607
    %v13609 = vrot.slane %v13604, %v13608
    %v13643 = vunpack.c.l.b16 %v13572
    %v13644 = vunpack.c.l.b16 %v13573
    %v13645 = vunpack.c.l.b16 %v13574
    %v13646 = vunpack.c.l.b16 %v13575
    %v13647 = vunpack.c.l.b16 %v13576
    %v13648 = vunpack.c.l.b16 %v13577
    %v13649 = vunpack.c.l.b16 %v13578
    %v13650 = vunpack.c.l.b16 %v13579
    %v13651 = vunpack.c.l.b16 %v13580
    %v13652 = vunpack.c.l.b16 %v13581
    %v13653 = vunpack.c.l.b16 %v13582
    %v13654 = vunpack.c.l.b16 %v13583
    %v13655 = vunpack.c.l.b16 %v13584
    %v13656 = vunpack.c.l.b16 %v13585
    %v13657 = vunpack.c.l.b16 %v13586
    %v13658 = vunpack.c.l.b16 %v13587
    %v13659 = vunpack.c.l.b16 %v13588
    %v13660 = vunpack.c.l.b16 %v13589
    %v13661 = vunpack.c.l.b16 %v13590
    %v13662 = vunpack.c.l.b16 %v13591
    %v13663 = vunpack.c.l.b16 %v13592
    %v13664 = vunpack.c.l.b16 %v13593
    %v13665 = vunpack.c.l.b16 %v13594
    %v13666 = vunpack.c.l.b16 %v13595
    %v13667 = vunpack.c.l.b16 %v13596
    %v13668 = vunpack.c.l.b16 %v13597
    %v13669 = vunpack.c.l.b16 %v13598
    %v13670 = vunpack.c.l.b16 %v13599
    %v13671 = vunpack.c.l.b16 %v13600
    %v13672 = vunpack.c.l.b16 %v13601
    %v13673 = vunpack.c.l.b16 %v13602
    %v13674 = vunpack.c.l.b16 %v13603
    %v13675 = vpack.c.b16 %v13644, %v13643
    %v13676 = vpack.c.b16 %v13646, %v13645
    %v13677 = vpack.c.b16 %v13648, %v13647
    %v13678 = vpack.c.b16 %v13650, %v13649
    %v13679 = vpack.c.b16 %v13652, %v13651
    %v13680 = vpack.c.b16 %v13654, %v13653
    %v13681 = vpack.c.b16 %v13656, %v13655
    %v13682 = vpack.c.b16 %v13658, %v13657
    %v13683 = vpack.c.b16 %v13660, %v13659
    %v13684 = vpack.c.b16 %v13662, %v13661
    %v13685 = vpack.c.b16 %v13664, %v13663
    %v13686 = vpack.c.b16 %v13666, %v13665
    %v13687 = vpack.c.b16 %v13668, %v13667
    %v13688 = vpack.c.b16 %v13670, %v13669
    %v13689 = vpack.c.b16 %v13672, %v13671
    %v13690 = vpack.c.b16 %v13674, %v13673
    %13707 = vmatprep.subr.bf16.mxu0 0
    %13708 = vmatpush1.bf16.msra.mxu0 %v13682
    %13709 = vmatprep.subr.bf16.mxu0 0
    %13710 = vmatpush1.bf16.msra.mxu0 %v13681
    %13711 = vmatprep.subr.bf16.mxu0 0
    %13712 = vmatpush1.bf16.msra.mxu0 %v13680
    %13713 = vmatprep.subr.bf16.mxu0 0
    %13714 = vmatpush1.bf16.msra.mxu0 %v13679
    %13715 = vmatprep.subr.bf16.mxu0 0
    %13716 = vmatpush1.bf16.msra.mxu0 %v13678
    %13717 = vmatprep.subr.bf16.mxu0 0
    %13718 = vmatpush1.bf16.msra.mxu0 %v13677
    %13719 = vmatprep.subr.bf16.mxu0 0
    %13720 = vmatpush1.bf16.msra.mxu0 %v13676
    %13721 = vmatprep.subr.bf16.mxu0 0
    %13722 = vmatpush1.bf16.msra.mxu0 %v13675
    %13723 = vmatprep.subr.bf16.mxu0 0
    %13724 = vmatpush2.bf16.msra.mxu0 %v13690
    %13725 = vmatprep.subr.bf16.mxu0 0
    %13726 = vmatpush2.bf16.msra.mxu0 %v13689
    %13727 = vmatprep.subr.bf16.mxu0 0
    %13728 = vmatpush2.bf16.msra.mxu0 %v13688
    %13729 = vmatprep.subr.bf16.mxu0 0
    %13730 = vmatpush2.bf16.msra.mxu0 %v13687
    %13731 = vmatprep.subr.bf16.mxu0 0
    %13732 = vmatpush2.bf16.msra.mxu0 %v13686
    %13733 = vmatprep.subr.bf16.mxu0 0
    %13734 = vmatpush2.bf16.msra.mxu0 %v13685
    %13735 = vmatprep.subr.bf16.mxu0 0
    %13736 = vmatpush2.bf16.msra.mxu0 %v13684
    %13737 = vmatprep.subr.bf16.mxu0 0
    %13738 = vmatpush2.bf16.msra.mxu0 %v13683
    %13739 = vmatprep.mubr.bf16.mxu0 %v13571
    %13740 = vmatmul.mubr.bf16.gmra.mxu0 %v13570
    %v13741 = vpop.f32.mrf.mxu0
    %v13742 = vadd.f32 %v13609, %v13741
    %v13743 = vpop.f32.mrf.mxu0
    %v13744 = vpop.f32.mrf.mxu0
    %v13745 = vpop.f32.mrf.mxu0
    %13746 = vdwg.mxu0
    %v13747 = vmax.f32 %v13742, 0.0
    %vm13748 = vcmask 254976
    %13749 = vst.msk [vmem:[#allocation6] sm:$0x3] %vm13748, %v13569
    %13750 = vst.msk [vmem:[#allocation8] sm:$0x3] %vm13748, %v13747
    %v13751 = vld [vmem:[%s20] sm:$0xff]
    %v13752 = vld [vmem:[%s20 + $0x8] sm:$0xff]
    %v13753 = vld [vmem:[%s20 + $0x10] sm:$0xff]
    %v13754 = vld [vmem:[%s20 + $0x18] sm:$0xff]
    %v13755 = vld [vmem:[#allocation3] sm:$0x1]
    %v13757 = vlaneseq
    %v13758 = vshrl.u32 %v13757, 7
    %v13759 = vsub.s32 0, %v13758
    %v13760 = vrot.slane %v13755, %v13759
    %v13763 = vsel %vm3418, %v13569, 0
    %13765 = vmatprep.subr.mxu0 0.0
    %13766 = vmatpush1.msra.mxu0 0.0
    %13767 = vmatprep.subr.mxu0 0.0
    %13768 = vmatpush1.msra.mxu0 0.0
    %13769 = vmatprep.subr.mxu0 0.0
    %13770 = vmatpush1.msra.mxu0 0.0
    %13771 = vmatprep.subr.mxu0 0.0
    %13772 = vmatpush1.msra.mxu0 0.0
    %13773 = vmatprep.subr.mxu0 0.0
    %13774 = vmatpush1.msra.mxu0 0.0
    %13775 = vmatprep.subr.mxu0 0.0
    %13776 = vmatpush1.msra.mxu0 0.0
    %13777 = vmatprep.subr.mxu0 0.0
    %13778 = vmatpush1.msra.mxu0 0.0
    %13779 = vmatprep.subr.mxu0 0.0
    %13780 = vmatpush1.msra.mxu0 0.0
    %13781 = vmatprep.subr.mxu0 0.0
    %13782 = vmatpush1.msra.mxu0 0.0
    %13783 = vmatprep.subr.mxu0 0.0
    %13784 = vmatpush1.msra.mxu0 0.0
    %13785 = vmatprep.subr.mxu0 0.0
    %13786 = vmatpush1.msra.mxu0 0.0
    %13787 = vmatprep.subr.mxu0 0.0
    %13788 = vmatpush1.msra.mxu0 0.0
    %13789 = vmatprep.subr.mxu0 0.0
    %13790 = vmatpush1.msra.mxu0 %v13754
    %13791 = vmatprep.subr.mxu0 0.0
    %13792 = vmatpush1.msra.mxu0 %v13753
    %13793 = vmatprep.subr.mxu0 0.0
    %13794 = vmatpush1.msra.mxu0 %v13752
    %13795 = vmatprep.subr.mxu0 0.0
    %13796 = vmatpush1.msra.mxu0 %v13751
    %13797 = vmatprep.subr.mxu0 0.0
    %13798 = vmatpush2.msra.mxu0 0.0
    %13799 = vmatprep.subr.mxu0 0.0
    %13800 = vmatpush2.msra.mxu0 0.0
    %13801 = vmatprep.subr.mxu0 0.0
    %13802 = vmatpush2.msra.mxu0 0.0
    %13803 = vmatprep.subr.mxu0 0.0
    %13804 = vmatpush2.msra.mxu0 0.0
    %13805 = vmatprep.subr.mxu0 0.0
    %13806 = vmatpush2.msra.mxu0 0.0
    %13807 = vmatprep.subr.mxu0 0.0
    %13808 = vmatpush2.msra.mxu0 0.0
    %13809 = vmatprep.subr.mxu0 0.0
    %13810 = vmatpush2.msra.mxu0 0.0
    %13811 = vmatprep.subr.mxu0 0.0
    %13812 = vmatpush2.msra.mxu0 0.0
    %13813 = vmatprep.subr.mxu0 0.0
    %13814 = vmatpush2.msra.mxu0 0.0
    %13815 = vmatprep.subr.mxu0 0.0
    %13816 = vmatpush2.msra.mxu0 0.0
    %13817 = vmatprep.subr.mxu0 0.0
    %13818 = vmatpush2.msra.mxu0 0.0
    %13819 = vmatprep.subr.mxu0 0.0
    %13820 = vmatpush2.msra.mxu0 0.0
    %13821 = vmatprep.subr.mxu0 0.0
    %13822 = vmatpush2.msra.mxu0 0.0
    %13823 = vmatprep.subr.mxu0 0.0
    %13824 = vmatpush2.msra.mxu0 0.0
    %13825 = vmatprep.subr.mxu0 0.0
    %13826 = vmatpush2.msra.mxu0 0.0
    %13827 = vmatprep.subr.mxu0 0.0
    %13828 = vmatpush2.msra.mxu0 0.0
    %13829 = vmatprep.mubr.f32.mxu0 0.0
    %13830 = vmatmul.mubr.f32.gmra.mxu0 %v13763
    %v13831 = vpop.f32.mrf.mxu0
    %v13832 = vadd.f32 %v13760, %v13831
    %v13833 = vpop.f32.mrf.mxu0
    %13834 = vdwg.mxu0
    %v13835 = vld [vmem:[%s22] sm:$0xff]
    %v13836 = vld [vmem:[%s22 + $0x8] sm:$0xff]
    %v13837 = vld [vmem:[%s22 + $0x10] sm:$0xff]
    %v13838 = vld [vmem:[%s22 + $0x18] sm:$0xff]
    %v13839 = vld [vmem:[%s23] sm:$0x1]
    %v13841 = vlaneseq
    %v13842 = vshrl.u32 %v13841, 7
    %v13843 = vsub.s32 0, %v13842
    %v13844 = vrot.slane %v13839, %v13843
    %v13847 = vsel %vm3418, %v13747, 0
    %13849 = vmatprep.subr.mxu0 0.0
    %13850 = vmatpush1.msra.mxu0 0.0
    %13851 = vmatprep.subr.mxu0 0.0
    %13852 = vmatpush1.msra.mxu0 0.0
    %13853 = vmatprep.subr.mxu0 0.0
    %13854 = vmatpush1.msra.mxu0 0.0
    %13855 = vmatprep.subr.mxu0 0.0
    %13856 = vmatpush1.msra.mxu0 0.0
    %13857 = vmatprep.subr.mxu0 0.0
    %13858 = vmatpush1.msra.mxu0 0.0
    %13859 = vmatprep.subr.mxu0 0.0
    %13860 = vmatpush1.msra.mxu0 0.0
    %13861 = vmatprep.subr.mxu0 0.0
    %13862 = vmatpush1.msra.mxu0 0.0
    %13863 = vmatprep.subr.mxu0 0.0
    %13864 = vmatpush1.msra.mxu0 0.0
    %13865 = vmatprep.subr.mxu0 0.0
    %13866 = vmatpush1.msra.mxu0 0.0
    %13867 = vmatprep.subr.mxu0 0.0
    %13868 = vmatpush1.msra.mxu0 0.0
    %13869 = vmatprep.subr.mxu0 0.0
    %13870 = vmatpush1.msra.mxu0 0.0
    %13871 = vmatprep.subr.mxu0 0.0
    %13872 = vmatpush1.msra.mxu0 0.0
    %13873 = vmatprep.subr.mxu0 0.0
    %13874 = vmatpush1.msra.mxu0 %v13838
    %13875 = vmatprep.subr.mxu0 0.0
    %13876 = vmatpush1.msra.mxu0 %v13837
    %13877 = vmatprep.subr.mxu0 0.0
    %13878 = vmatpush1.msra.mxu0 %v13836
    %13879 = vmatprep.subr.mxu0 0.0
    %13880 = vmatpush1.msra.mxu0 %v13835
    %13881 = vmatprep.subr.mxu0 0.0
    %13882 = vmatpush2.msra.mxu0 0.0
    %13883 = vmatprep.subr.mxu0 0.0
    %13884 = vmatpush2.msra.mxu0 0.0
    %13885 = vmatprep.subr.mxu0 0.0
    %13886 = vmatpush2.msra.mxu0 0.0
    %13887 = vmatprep.subr.mxu0 0.0
    %13888 = vmatpush2.msra.mxu0 0.0
    %13889 = vmatprep.subr.mxu0 0.0
    %13890 = vmatpush2.msra.mxu0 0.0
    %13891 = vmatprep.subr.mxu0 0.0
    %13892 = vmatpush2.msra.mxu0 0.0
    %13893 = vmatprep.subr.mxu0 0.0
    %13894 = vmatpush2.msra.mxu0 0.0
    %13895 = vmatprep.subr.mxu0 0.0
    %13896 = vmatpush2.msra.mxu0 0.0
    %13897 = vmatprep.subr.mxu0 0.0
    %13898 = vmatpush2.msra.mxu0 0.0
    %13899 = vmatprep.subr.mxu0 0.0
    %13900 = vmatpush2.msra.mxu0 0.0
    %13901 = vmatprep.subr.mxu0 0.0
    %13902 = vmatpush2.msra.mxu0 0.0
    %13903 = vmatprep.subr.mxu0 0.0
    %13904 = vmatpush2.msra.mxu0 0.0
    %13905 = vmatprep.subr.mxu0 0.0
    %13906 = vmatpush2.msra.mxu0 0.0
    %13907 = vmatprep.subr.mxu0 0.0
    %13908 = vmatpush2.msra.mxu0 0.0
    %13909 = vmatprep.subr.mxu0 0.0
    %13910 = vmatpush2.msra.mxu0 0.0
    %13911 = vmatprep.subr.mxu0 0.0
    %13912 = vmatpush2.msra.mxu0 0.0
    %13913 = vmatprep.mubr.f32.mxu0 0.0
    %13914 = vmatmul.mubr.f32.gmra.mxu0 %v13847
    %v13915 = vpop.f32.mrf.mxu0
    %v13916 = vadd.f32 %v13844, %v13915
    %v13917 = vpop.f32.mrf.mxu0
    %13918 = vdwg.mxu0
    %v13919 = vxor.u32 %v13832, 2147483648
    %v13920 = vmul.f32 %v13919, 1.442695
    %v13921 = vpow.pop %v13920
    %v13922 = vadd.f32 %v13921, 1.0
    %v13923 = vrcp.pop %v13922
    %v13924 = vmul.f32 1.0, %v13923
    %v13925 = vmul.f32 %v13924, 6.0
    %v13926 = vadd.f32 %v13925, -3.0
    %v13927 = vxor.u32 %v13916, 2147483648
    %v13928 = vmul.f32 %v13927, 1.442695
    %v13929 = vpow.pop %v13928
    %v13930 = vadd.f32 %v13929, 1.0
    %v13931 = vrcp.pop %v13930
    %v13932 = vmul.f32 1.0, %v13931
    %vm13933 = vcmask 1024
    %13934 = vst.msk [vmem:[%s27] sm:$0x3] %vm13933, %v13926
    %vm13935 = vcmask 9216
    %13936 = vst.msk [vmem:[#allocation9] sm:$0x3] %vm13935, %v13932
    // Predicated region
    $region98: #{pathnet_resnet_forward.1} parent=1 // pred_check
      _
    $region99: #{pathnet_resnet_forward.1} parent=1 // pred_check_branch
      %13938 = sbr.rel (0) target = $region101
    $region100: #{pathnet_resnet_forward.1} parent=1 // pred_region
      %s13940 = ssub.s32 256, 256
      %13941 = vsyncadd [#allocation5], %s13940
      %s13943 = sshll.u32 [#allocation4], 4
      %s13944 = int_to_ptr.vmem [resolvable:$true] %s13943
      %13946 = dma.vmem_to_hbm [thread:$0]  %s13944, 256, %s24, [#allocation5]
    $region101: #{pathnet_resnet_forward.1} parent=1 // pred_fallthru
      _
    // Predicated region
    $region102: #{pathnet_resnet_forward.1} parent=1 // pred_check
      _
    $region103: #{pathnet_resnet_forward.1} parent=1 // pred_check_branch
      %13948 = sbr.rel (0) target = $region105
    $region104: #{pathnet_resnet_forward.1} parent=1 // pred_region
      %s13950 = ssub.s32 32, 32
      %13951 = vsyncadd [#allocation7], %s13950
      %s13953 = sshll.u32 [#allocation6], 4
      %s13954 = int_to_ptr.vmem [resolvable:$true] %s13953
      %13956 = dma.vmem_to_hbm [thread:$0]  %s13954, 32, %s25, [#allocation7]
    $region105: #{pathnet_resnet_forward.1} parent=1 // pred_fallthru
      _
    // Predicated region
    $region106: #{pathnet_resnet_forward.1} parent=1 // pred_check
      _
    $region107: #{pathnet_resnet_forward.1} parent=1 // pred_check_branch
      %13958 = sbr.rel (0) target = $region109
    $region108: #{pathnet_resnet_forward.1} parent=1 // pred_region
      %s13960 = ssub.s32 32, 32
      %13961 = vsyncadd [#allocation7], %s13960
      %s13963 = sshll.u32 [#allocation8], 4
      %s13964 = int_to_ptr.vmem [resolvable:$true] %s13963
      %13966 = dma.vmem_to_hbm [thread:$0]  %s13964, 32, %s26, [#allocation7]
    $region109: #{pathnet_resnet_forward.1} parent=1 // pred_fallthru
      _
    // Predicated region
    $region110: #{pathnet_resnet_forward.1} parent=1 // pred_check
      _
    $region111: #{pathnet_resnet_forward.1} parent=1 // pred_check_branch
      %13968 = sbr.rel (0) target = $region113
    $region112: #{pathnet_resnet_forward.1} parent=1 // pred_region
      _
    $region113: #{pathnet_resnet_forward.1} parent=1 // pred_fallthru
      _
    // Predicated region
    $region114: #{pathnet_resnet_forward.1} parent=1 // pred_check
      _
    $region115: #{pathnet_resnet_forward.1} parent=1 // pred_check_branch
      %13970 = sbr.rel (0) target = $region117
    $region116: #{pathnet_resnet_forward.1} parent=1 // pred_region
      %s13972 = ssub.s32 32, 32
      %13973 = vsyncadd [#allocation10], %s13972
      %s13975 = sshll.u32 [#allocation9], 4
      %s13976 = int_to_ptr.vmem [resolvable:$true] %s13975
      %13978 = dma.vmem_to_hbm [thread:$0]  %s13976, 32, %s28, [#allocation10]
    $region117: #{pathnet_resnet_forward.1} parent=1 // pred_fallthru
      _
    // Predicated region
    $region118: #{pathnet_resnet_forward.1} parent=1 // pred_check
      _
    $region119: #{pathnet_resnet_forward.1} parent=1 // pred_check_branch
      %13980 = sbr.rel (0) target = $region121
    $region120: #{pathnet_resnet_forward.1} parent=1 // pred_region
      %13981 = dma.done [#allocation5], 256
    $region121: #{pathnet_resnet_forward.1} parent=1 // pred_fallthru
      _
    // Predicated region
    $region122: #{pathnet_resnet_forward.1} parent=1 // pred_check
      _
    $region123: #{pathnet_resnet_forward.1} parent=1 // pred_check_branch
      %13983 = sbr.rel (0) target = $region125
    $region124: #{pathnet_resnet_forward.1} parent=1 // pred_region
      %13984 = dma.done [#allocation7], 32
    $region125: #{pathnet_resnet_forward.1} parent=1 // pred_fallthru
      _
    // Predicated region
    $region126: #{pathnet_resnet_forward.1} parent=1 // pred_check
      _
    $region127: #{pathnet_resnet_forward.1} parent=1 // pred_check_branch
      %13986 = sbr.rel (0) target = $region129
    $region128: #{pathnet_resnet_forward.1} parent=1 // pred_region
      %13987 = dma.done [#allocation7], 32
    $region129: #{pathnet_resnet_forward.1} parent=1 // pred_fallthru
      _
    // Predicated region
    $region130: #{pathnet_resnet_forward.1} parent=1 // pred_check
      _
    $region131: #{pathnet_resnet_forward.1} parent=1 // pred_check_branch
      %13989 = sbr.rel (0) target = $region133
    $region132: #{pathnet_resnet_forward.1} parent=1 // pred_region
      _
    $region133: #{pathnet_resnet_forward.1} parent=1 // pred_fallthru
      _
    // Predicated region
    $region134: #{pathnet_resnet_forward.1} parent=1 // pred_check
      _
    $region135: #{pathnet_resnet_forward.1} parent=1 // pred_check_branch
      %13991 = sbr.rel (0) target = $region137
    $region136: #{pathnet_resnet_forward.1} parent=1 // pred_region
      %13992 = dma.done [#allocation10], 32
    $region137: #{pathnet_resnet_forward.1} parent=1 // pred_fallthru
      _
    %13993 = vsyncpa [#allocation5], 1
    %13994 = vsyncpa [#allocation7], 1
    %13995 = vsyncpa [#allocation10], 1

</llo_original>
